<compile_context>
chip_gen: v7x
topology: tpu7x:2x2x1
jax: 0.10.0
libtpu: 0.0.40
codegen_flags: <defaults>
</compile_context>

<pallas_src>
import math

import jax
import jax.numpy as jnp
from jax.experimental import pallas as pl
from jax.experimental.pallas import tpu as pltpu

LANES = 128
_VMEM_LIMIT = 32 * 1024 * 1024


def _round_up(x, m):
    return ((x + m - 1) // m) * m


def _cdiv(a, b):
    return -(-a // b)


# ----------------------------------------------------------------------------
# Pallas kernels
# ----------------------------------------------------------------------------
def _conv_mm_kernel(p_ref, w_ref, b_ref, o_ref):
    """One M-tile of (im2col patches) @ (conv weight) + bias; bf16 output."""
    acc = jnp.dot(p_ref[...], w_ref[...], preferred_element_type=jnp.float32)
    o_ref[...] = (acc + b_ref[...]).astype(o_ref.dtype)


def _make_tail_kernel(B, H3, W3, C3, H4, W4, C4, H5, W5, C5, KS4, KS5):
    """Fused conv3 -> conv4 -> conv5 -> fc1 -> fc2 -> fc3 -> prediction.

    conv3 consumes wrapper-built im2col patches; conv4/conv5 patches are built
    in-kernel with static row-block copies into VMEM scratch (their inputs are
    the in-kernel conv3/conv4 outputs, so nothing round-trips HBM).  The NCHW
    flatten is folded into fc1's (h, w, c)-ordered weight rows.  The reference
    forward applies no activations, so the chain is purely affine.
    """
    def kernel(p3_ref, w3_ref, b3_ref, w4_ref, b4_ref, w5_ref, b5_ref,
               w1_ref, b1_ref, w2_ref, b2_ref, wf3_ref, bf3_ref, wp_ref, bp_ref,
               o_ref, c3_ref, p4_ref, c4_ref, p5_ref, c5_ref, flat_ref):
        f32 = jnp.float32
        bf16 = jnp.bfloat16

        # conv3  (rows ordered (b, h, w), channels on lanes)
        c3_ref[...] = (jnp.dot(p3_ref[...], w3_ref[...],
                               preferred_element_type=f32) + b3_ref[...])

        # conv4: in-VMEM im2col (static copies) + one matmul.
        for b in range(B):
            for oh in range(H4):
                dst = (b * H4 + oh) * W4
                for kh in range(KS4):
                    for kw in range(KS4):
                        src = (b * H3 + oh + kh) * W3 + kw
                        col = (kh * KS4 + kw) * C3
                        p4_ref[dst:dst + W4, col:col + C3] = \
                            c3_ref[src:src + W4, :]
        c4_ref[...] = (jnp.dot(p4_ref[...].astype(bf16), w4_ref[...],
                               preferred_element_type=f32) + b4_ref[...])

        # conv5: same in-VMEM im2col.
        for b in range(B):
            for oh in range(H5):
                dst = (b * H5 + oh) * W5
                for kh in range(KS5):
                    for kw in range(KS5):
                        src = (b * H4 + oh + kh) * W4 + kw
                        col = (kh * KS5 + kw) * C4
                        p5_ref[dst:dst + W5, col:col + C4] = \
                            c4_ref[src:src + W5, :]
        c5_ref[...] = (jnp.dot(p5_ref[...].astype(bf16), w5_ref[...],
                               preferred_element_type=f32) + b5_ref[...])

        # Flatten each sample into (h, w, c) lane order; fc1's weight rows were
        # permuted at trace time from torch's (c, h, w) view order to match.
        for b in range(B):
            for h in range(H5):
                for w in range(W5):
                    src = (b * H5 + h) * W5 + w
                    col = (h * W5 + w) * C5
                    flat_ref[b:b + 1, col:col + C5] = c5_ref[src:src + 1, :]

        # fc1 -> fc2 -> fc3 -> prediction (bf16 operands, f32 accumulation).
        h1 = jnp.dot(flat_ref[...].astype(bf16), w1_ref[...],
                     preferred_element_type=f32) + b1_ref[...]
        h2 = jnp.dot(h1.astype(bf16), w2_ref[...],
                     preferred_element_type=f32) + b2_ref[...]
        h3 = jnp.dot(h2.astype(bf16), wf3_ref[...],
                     preferred_element_type=f32) + bf3_ref[...]
        o_ref[...] = jnp.dot(h3.astype(bf16), wp_ref[...],
                             preferred_element_type=f32) + bp_ref[...]

    return kernel


# ----------------------------------------------------------------------------
# pallas_call helpers
# ----------------------------------------------------------------------------
def _single_block_call(kernel, arrays, out_shape, scratch_shapes=()):
    """grid=(1,) pallas_call with one full-array VMEM block per operand."""
    in_specs = [pl.BlockSpec(a.shape, (lambda i, nd=a.ndim: (0,) * nd))
                for a in arrays]
    out_specs = pl.BlockSpec(out_shape.shape,
                             (lambda i, nd=len(out_shape.shape): (0,) * nd))
    return pl.pallas_call(
        kernel,
        out_shape=out_shape,
        grid=(1,),
        in_specs=in_specs,
        out_specs=out_specs,
        scratch_shapes=list(scratch_shapes),
        compiler_params=pltpu.CompilerParams(
            dimension_semantics=("arbitrary",),
            vmem_limit_bytes=_VMEM_LIMIT),
    )(*arrays)


# ----------------------------------------------------------------------------
# Glue (pure indexing, no MACs) + weight preparation
# ----------------------------------------------------------------------------
def _im2col(x_nhwc, kh, kw, stride):
    """(N,H,W,C) -> bf16 patches (N*OH*OW, KH*KW*C), tap-major columns."""
    N, H, W, C = x_nhwc.shape
    OH = (H - kh) // stride + 1
    OW = (W - kw) // stride + 1
    taps = [x_nhwc[:, i:i + stride * OH:stride, j:j + stride * OW:stride, :]
            for i in range(kh) for j in range(kw)]
    p = jnp.concatenate(taps, axis=-1).reshape(N * OH * OW, kh * kw * C)
    return p.astype(jnp.bfloat16), (OH, OW)


def _pad2(a, rows, cols):
    r, c = a.shape
    if rows == r and cols == c:
        return a
    return jnp.pad(a, ((0, rows - r), (0, cols - c)))


def _conv_weight(w_torch, k_pad):
    """torch (Cout,Cin,KH,KW) -> bf16 (k_pad, Cout), rows ordered (kh,kw,cin)."""
    Cout, Cin, KH, KW = w_torch.shape
    w2 = jnp.transpose(w_torch, (2, 3, 1, 0)).reshape(KH * KW * Cin, Cout)
    return _pad2(w2.astype(jnp.bfloat16), k_pad, Cout)


def _bias_row(b):
    return b.reshape(1, -1).astype(jnp.float32)


def _choose_tm(m, target=1024):
    """Row-tile: ~target rows, at least 2 tiles (v7x has 2 TCs), multiple of 16."""
    n_tiles = max(2, _cdiv(m, target))
    return _round_up(_cdiv(m, n_tiles), 16)


# ----------------------------------------------------------------------------
# conv1 / conv2: im2col glue + M-tiled, M-parallel Pallas matmul
# ----------------------------------------------------------------------------
def conv2d_tiled(x_nhwc, w_torch, b, stride):
    """Returns (N, OH, OW, Cout) in bf16 (real channels only, no lane padding)."""
    N = x_nhwc.shape[0]
    Cout, _, KH, KW = w_torch.shape
    patches, (OH, OW) = _im2col(x_nhwc, KH, KW, stride)
    M, K = patches.shape
    Kp = _round_up(K, 16)           # bf16 sublane pack; NOT 128 (HBM inflation)
    tm = _choose_tm(M)
    Mp = _round_up(M, tm)
    patches = _pad2(patches, Mp, Kp)
    wk = _conv_weight(w_torch, Kp)
    bk = _bias_row(b)
    out = pl.pallas_call(
        _conv_mm_kernel,
        out_shape=jax.ShapeDtypeStruct((Mp, Cout), jnp.bfloat16),
        grid=(Mp // tm,),
        in_specs=[pl.BlockSpec((tm, Kp), lambda i: (i, 0)),
                  pl.BlockSpec((Kp, Cout), lambda i: (0, 0)),
                  pl.BlockSpec((1, Cout), lambda i: (0, 0))],
        out_specs=pl.BlockSpec((tm, Cout), lambda i: (i, 0)),
        compiler_params=pltpu.CompilerParams(
            dimension_semantics=("parallel",),
            vmem_limit_bytes=_VMEM_LIMIT),
    )(patches, wk, bk)
    return out[:M].reshape(N, OH, OW, Cout)


# ----------------------------------------------------------------------------
# Fused tail: conv3 + conv4 + conv5 + fc1 + fc2 + fc3 + prediction
# ----------------------------------------------------------------------------
def fused_tail(x_nhwc, params, output_dim):
    B = x_nhwc.shape[0]
    w3_t, w4_t, w5_t = params['conv3_w'], params['conv4_w'], params['conv5_w']
    C3, _, KS3, _ = w3_t.shape
    C4, _, KS4, _ = w4_t.shape
    C5, _, KS5, _ = w5_t.shape

    # conv3 patches built in the wrapper (its input comes from HBM anyway).
    p3, (H3, W3) = _im2col(x_nhwc, KS3, KS3, 2)
    K3p = _round_up(p3.shape[1], 16)
    p3 = _pad2(p3, p3.shape[0], K3p)

    H4, W4 = H3 - KS4 + 1, W3 - KS4 + 1
    H5, W5 = H4 - KS5 + 1, W4 - KS5 + 1

    w3 = _conv_weight(w3_t, K3p)
    w4 = _conv_weight(w4_t, KS4 * KS4 * C3)
    w5 = _conv_weight(w5_t, KS5 * KS5 * C4)
    b3 = _bias_row(params['conv3_b'])
    b4 = _bias_row(params['conv4_b'])
    b5 = _bias_row(params['conv5_b'])

    # fc1: permute rows from torch's (c, h, w) flatten order to our (h, w, c).
    n_fc1 = params['fc1_w'].shape[0]
    w1 = (jnp.transpose(params['fc1_w'])            # (C5*H5*W5, n_fc1), (c,h,w)
          .reshape(C5, H5 * W5, n_fc1)
          .transpose(1, 0, 2)
          .reshape(H5 * W5 * C5, n_fc1)
          .astype(jnp.bfloat16))
    b1 = _bias_row(params['fc1_b'])
    w2 = jnp.transpose(params['fc2_w']).astype(jnp.bfloat16)
    b2 = _bias_row(params['fc2_b'])
    wf3 = jnp.transpose(params['fc3_w']).astype(jnp.bfloat16)
    bf3 = _bias_row(params['fc3_b'])
    # Prediction layer padded to 128 output lanes (sliced off after the call).
    wp = _pad2(jnp.transpose(params['pred_w']).astype(jnp.bfloat16),
               params['pred_w'].shape[1], LANES)
    bp = _pad2(_bias_row(params['pred_b']), 1, LANES)

    kernel = _make_tail_kernel(B, H3, W3, C3, H4, W4, C4, H5, W5, C5, KS4, KS5)
    scratch = [
        pltpu.VMEM((B * H3 * W3, C3), jnp.float32),               # conv3 out
        pltpu.VMEM((B * H4 * W4, KS4 * KS4 * C3), jnp.float32),   # conv4 patches
        pltpu.VMEM((B * H4 * W4, C4), jnp.float32),               # conv4 out
        pltpu.VMEM((B * H5 * W5, KS5 * KS5 * C4), jnp.float32),   # conv5 patches
        pltpu.VMEM((B * H5 * W5, C5), jnp.float32),               # conv5 out
        pltpu.VMEM((B, H5 * W5 * C5), jnp.float32),               # flat features
    ]
    out = _single_block_call(
        kernel,
        [p3, w3, b3, w4, b4, w5, b5, w1, b1, w2, b2, wf3, bf3, wp, bp],
        jax.ShapeDtypeStruct((B, LANES), jnp.float32),
        scratch_shapes=scratch)
    return out[:, :output_dim]


# ----------------------------------------------------------------------------
# Parameters (deterministic synthetic init, PyTorch weight shapes)
# ----------------------------------------------------------------------------
def init_params(key, *, input_channels=3, output_dim=1):
    ks = iter(jax.random.split(key, 32))

    def rnd(shape, fan_in):
        return jax.random.normal(next(ks), shape, jnp.float32) / math.sqrt(fan_in)

    p = {}
    p['conv1_w'] = rnd((24, input_channels, 5, 5), input_channels * 25)
    p['conv1_b'] = rnd((24,), input_channels * 25)
    p['conv2_w'] = rnd((36, 24, 5, 5), 24 * 25)
    p['conv2_b'] = rnd((36,), 24 * 25)
    p['conv3_w'] = rnd((48, 36, 5, 5), 36 * 25)
    p['conv3_b'] = rnd((48,), 36 * 25)
    p['conv4_w'] = rnd((64, 48, 3, 3), 48 * 9)
    p['conv4_b'] = rnd((64,), 48 * 9)
    p['conv5_w'] = rnd((64, 64, 3, 3), 64 * 9)
    p['conv5_b'] = rnd((64,), 64 * 9)
    p['fc1_w'] = rnd((100, 64 * 1 * 18), 64 * 18)
    p['fc1_b'] = rnd((100,), 64 * 18)
    p['fc2_w'] = rnd((50, 100), 100)
    p['fc2_b'] = rnd((50,), 100)
    p['fc3_w'] = rnd((10, 50), 50)
    p['fc3_b'] = rnd((10,), 50)
    p['pred_w'] = rnd((output_dim, 10), 10)
    p['pred_b'] = rnd((output_dim,), 10)
    return p


# ----------------------------------------------------------------------------
# Full forward pass (matches PilotNet.forward: conv1..5 -> flatten -> fc1..pred)
# ----------------------------------------------------------------------------
def pilotnet_forward(params, x):
    # x: (B, C, H, W) NCHW, exactly like the PyTorch module.
    y = jnp.transpose(x, (0, 2, 3, 1)).astype(jnp.float32)        # NHWC
    y = conv2d_tiled(y, params['conv1_w'], params['conv1_b'], stride=2)
    y = conv2d_tiled(y, params['conv2_w'], params['conv2_b'], stride=2)
    out_dim = params['pred_w'].shape[0]
    return fused_tail(y, params, out_dim)                          # (B, out_dim)


# ----------------------------------------------------------------------------
if __name__ == "__main__":
    key = jax.random.PRNGKey(0)
    k_params, k_x = jax.random.split(key)

    # H=66, W=200 are forced by the module's fc1 = Linear(64*1*18, 100) flatten;
    # the free hyperparameters (batch, channels, output dim) are kept small.
    B, CIN, H, W, OUT = 2, 3, 66, 200, 1
    params = init_params(k_params, input_channels=CIN, output_dim=OUT)
    x = jax.random.normal(k_x, (B, CIN, H, W), dtype=jnp.float32)

    fwd = jax.jit(pilotnet_forward)
    out = jax.block_until_ready(fwd(params, x))
    assert out.shape == (B, OUT), out.shape
    assert bool(jnp.all(jnp.isfinite(out)))
    print("KERNEL_OK")
</pallas_src>

<mosaic_0001>
module attributes {stable_mosaic.version = 11 : i64} {
  func.func @_conv_mm_kernel(%arg0: i32, %arg1: memref<1024x80xbf16, #tpu.memory_space<vmem>>, %arg2: memref<80x24xbf16, #tpu.memory_space<vmem>>, %arg3: memref<1x24xf32, #tpu.memory_space<vmem>>, %arg4: memref<1024x24xbf16, #tpu.memory_space<vmem>>) attributes {dimension_semantics = [#tpu.dimension_semantics<parallel>], iteration_bounds = array<i64: 6>, scalar_prefetch = 0 : i64, scratch_operands = 0 : i64, tpu.core_type = #tpu.core_type<tc>, window_params = [{transform_indices = @transform_0, window_bounds = array<i64: 1024, 80>}, {pipeline_mode = #tpu.pipeline_mode<synchronous>, transform_indices = @transform_1, window_bounds = array<i64: 80, 24>}, {pipeline_mode = #tpu.pipeline_mode<synchronous>, transform_indices = @transform_2, window_bounds = array<i64: 1, 24>}, {transform_indices = @transform_3, window_bounds = array<i64: 1024, 24>}]} {
    %c0 = arith.constant 0 : index
    %c0_0 = arith.constant 0 : index
    %0 = vector.load %arg1[%c0, %c0_0] : memref<1024x80xbf16, #tpu.memory_space<vmem>>, vector<1024x80xbf16>
    %c0_1 = arith.constant 0 : index
    %c0_2 = arith.constant 0 : index
    %1 = vector.load %arg2[%c0_1, %c0_2] : memref<80x24xbf16, #tpu.memory_space<vmem>>, vector<80x24xbf16>
    %cst = arith.constant dense<0.000000e+00> : vector<1024x24xf32>
    %2 = tpu.matmul %0, %1, %cst {dimension_numbers = #tpu.dot_dimension_numbers<[1], [0], [0], [1], [0, 0, 1, 1], [], []>} : vector<1024x80xbf16>, vector<80x24xbf16>, vector<1024x24xf32> -> vector<1024x24xf32>
    %c0_3 = arith.constant 0 : index
    %c0_4 = arith.constant 0 : index
    %3 = vector.load %arg3[%c0_3, %c0_4] : memref<1x24xf32, #tpu.memory_space<vmem>>, vector<1x24xf32>
    %4 = vector.broadcast %3 : vector<1x24xf32> to vector<1024x24xf32>
    %5 = arith.addf %2, %4 : vector<1024x24xf32>
    %6 = arith.truncf %5 : vector<1024x24xf32> to vector<1024x24xbf16>
    %c0_5 = arith.constant 0 : index
    %c0_6 = arith.constant 0 : index
    %7 = vector.load %arg4[%c0_5, %c0_6] : memref<1024x24xbf16, #tpu.memory_space<vmem>>, vector<1024x24xbf16>
    tpu.vector_store %arg4[%c0_5, %c0_6], %6 {strides = array<i32>} : memref<1024x24xbf16, #tpu.memory_space<vmem>>, vector<1024x24xbf16>,
    return
  }
  func.func @transform_0(%arg0: i32) -> (i32, i32) {
    %c0_i32 = arith.constant 0 : i32
    %c0_i32_0 = arith.constant 0 : i32
    return %arg0, %c0_i32 : i32, i32
  }
  func.func @transform_1(%arg0: i32) -> (i32, i32) {
    %c0_i32 = arith.constant 0 : i32
    %c0_i32_0 = arith.constant 0 : i32
    %c0_i32_1 = arith.constant 0 : i32
    return %c0_i32, %c0_i32_0 : i32, i32
  }
  func.func @transform_2(%arg0: i32) -> (i32, i32) {
    %c0_i32 = arith.constant 0 : i32
    %c0_i32_0 = arith.constant 0 : i32
    %c0_i32_1 = arith.constant 0 : i32
    return %c0_i32, %c0_i32_0 : i32, i32
  }
  func.func @transform_3(%arg0: i32) -> (i32, i32) {
    %c0_i32 = arith.constant 0 : i32
    %c0_i32_0 = arith.constant 0 : i32
    return %arg0, %c0_i32 : i32, i32
  }
}

module attributes {stable_mosaic.version = 11 : i64} {
  func.func @_conv_mm_kernel(%arg0: i32, %arg1: memref<672x608xbf16, #tpu.memory_space<vmem>>, %arg2: memref<608x36xbf16, #tpu.memory_space<vmem>>, %arg3: memref<1x36xf32, #tpu.memory_space<vmem>>, %arg4: memref<672x36xbf16, #tpu.memory_space<vmem>>) attributes {dimension_semantics = [#tpu.dimension_semantics<parallel>], iteration_bounds = array<i64: 2>, scalar_prefetch = 0 : i64, scratch_operands = 0 : i64, tpu.core_type = #tpu.core_type<tc>, window_params = [{transform_indices = @transform_0, window_bounds = array<i64: 672, 608>}, {pipeline_mode = #tpu.pipeline_mode<synchronous>, transform_indices = @transform_1, window_bounds = array<i64: 608, 36>}, {pipeline_mode = #tpu.pipeline_mode<synchronous>, transform_indices = @transform_2, window_bounds = array<i64: 1, 36>}, {transform_indices = @transform_3, window_bounds = array<i64: 672, 36>}]} {
    %c0 = arith.constant 0 : index
    %c0_0 = arith.constant 0 : index
    %0 = vector.load %arg1[%c0, %c0_0] : memref<672x608xbf16, #tpu.memory_space<vmem>>, vector<672x608xbf16>
    %c0_1 = arith.constant 0 : index
    %c0_2 = arith.constant 0 : index
    %1 = vector.load %arg2[%c0_1, %c0_2] : memref<608x36xbf16, #tpu.memory_space<vmem>>, vector<608x36xbf16>
    %cst = arith.constant dense<0.000000e+00> : vector<672x36xf32>
    %2 = tpu.matmul %0, %1, %cst {dimension_numbers = #tpu.dot_dimension_numbers<[1], [0], [0], [1], [0, 0, 1, 1], [], []>} : vector<672x608xbf16>, vector<608x36xbf16>, vector<672x36xf32> -> vector<672x36xf32>
    %c0_3 = arith.constant 0 : index
    %c0_4 = arith.constant 0 : index
    %3 = vector.load %arg3[%c0_3, %c0_4] : memref<1x36xf32, #tpu.memory_space<vmem>>, vector<1x36xf32>
    %4 = vector.broadcast %3 : vector<1x36xf32> to vector<672x36xf32>
    %5 = arith.addf %2, %4 : vector<672x36xf32>
    %6 = arith.truncf %5 : vector<672x36xf32> to vector<672x36xbf16>
    %c0_5 = arith.constant 0 : index
    %c0_6 = arith.constant 0 : index
    %7 = vector.load %arg4[%c0_5, %c0_6] : memref<672x36xbf16, #tpu.memory_space<vmem>>, vector<672x36xbf16>
    tpu.vector_store %arg4[%c0_5, %c0_6], %6 {strides = array<i32>} : memref<672x36xbf16, #tpu.memory_space<vmem>>, vector<672x36xbf16>,
    return
  }
  func.func @transform_0(%arg0: i32) -> (i32, i32) {
    %c0_i32 = arith.constant 0 : i32
    %c0_i32_0 = arith.constant 0 : i32
    return %arg0, %c0_i32 : i32, i32
  }
  func.func @transform_1(%arg0: i32) -> (i32, i32) {
    %c0_i32 = arith.constant 0 : i32
    %c0_i32_0 = arith.constant 0 : i32
    %c0_i32_1 = arith.constant 0 : i32
    return %c0_i32, %c0_i32_0 : i32, i32
  }
  func.func @transform_2(%arg0: i32) -> (i32, i32) {
    %c0_i32 = arith.constant 0 : i32
    %c0_i32_0 = arith.constant 0 : i32
    %c0_i32_1 = arith.constant 0 : i32
    return %c0_i32, %c0_i32_0 : i32, i32
  }
  func.func @transform_3(%arg0: i32) -> (i32, i32) {
    %c0_i32 = arith.constant 0 : i32
    %c0_i32_0 = arith.constant 0 : i32
    return %arg0, %c0_i32 : i32, i32
  }
}

module attributes {stable_mosaic.version = 11 : i64} {
  func.func @kernel(%arg0: i32, %arg1: memref<220x912xbf16, #tpu.memory_space<vmem>>, %arg2: memref<912x48xbf16, #tpu.memory_space<vmem>>, %arg3: memref<1x48xf32, #tpu.memory_space<vmem>>, %arg4: memref<432x64xbf16, #tpu.memory_space<vmem>>, %arg5: memref<1x64xf32, #tpu.memory_space<vmem>>, %arg6: memref<576x64xbf16, #tpu.memory_space<vmem>>, %arg7: memref<1x64xf32, #tpu.memory_space<vmem>>, %arg8: memref<1152x100xbf16, #tpu.memory_space<vmem>>, %arg9: memref<1x100xf32, #tpu.memory_space<vmem>>, %arg10: memref<100x50xbf16, #tpu.memory_space<vmem>>, %arg11: memref<1x50xf32, #tpu.memory_space<vmem>>, %arg12: memref<50x10xbf16, #tpu.memory_space<vmem>>, %arg13: memref<1x10xf32, #tpu.memory_space<vmem>>, %arg14: memref<10x128xbf16, #tpu.memory_space<vmem>>, %arg15: memref<1x128xf32, #tpu.memory_space<vmem>>, %arg16: memref<2x128xf32, #tpu.memory_space<vmem>>, %arg17: memref<220x48xf32, #tpu.memory_space<vmem>>, %arg18: memref<120x432xf32, #tpu.memory_space<vmem>>, %arg19: memref<120x64xf32, #tpu.memory_space<vmem>>, %arg20: memref<36x576xf32, #tpu.memory_space<vmem>>, %arg21: memref<36x64xf32, #tpu.memory_space<vmem>>, %arg22: memref<2x1152xf32, #tpu.memory_space<vmem>>) attributes {dimension_semantics = [#tpu.dimension_semantics<arbitrary>], iteration_bounds = array<i64: 1>, scalar_prefetch = 0 : i64, scratch_operands = 6 : i64, tpu.core_type = #tpu.core_type<tc>, window_params = [{pipeline_mode = #tpu.pipeline_mode<synchronous>, transform_indices = @transform_0, window_bounds = array<i64: 220, 912>}, {pipeline_mode = #tpu.pipeline_mode<synchronous>, transform_indices = @transform_1, window_bounds = array<i64: 912, 48>}, {pipeline_mode = #tpu.pipeline_mode<synchronous>, transform_indices = @transform_2, window_bounds = array<i64: 1, 48>}, {pipeline_mode = #tpu.pipeline_mode<synchronous>, transform_indices = @transform_3, window_bounds = array<i64: 432, 64>}, {pipeline_mode = #tpu.pipeline_mode<synchronous>, transform_indices = @transform_4, window_bounds = array<i64: 1, 64>}, {pipeline_mode = #tpu.pipeline_mode<synchronous>, transform_indices = @transform_5, window_bounds = array<i64: 576, 64>}, {pipeline_mode = #tpu.pipeline_mode<synchronous>, transform_indices = @transform_6, window_bounds = array<i64: 1, 64>}, {pipeline_mode = #tpu.pipeline_mode<synchronous>, transform_indices = @transform_7, window_bounds = array<i64: 1152, 100>}, {pipeline_mode = #tpu.pipeline_mode<synchronous>, transform_indices = @transform_8, window_bounds = array<i64: 1, 100>}, {pipeline_mode = #tpu.pipeline_mode<synchronous>, transform_indices = @transform_9, window_bounds = array<i64: 100, 50>}, {pipeline_mode = #tpu.pipeline_mode<synchronous>, transform_indices = @transform_10, window_bounds = array<i64: 1, 50>}, {pipeline_mode = #tpu.pipeline_mode<synchronous>, transform_indices = @transform_11, window_bounds = array<i64: 50, 10>}, {pipeline_mode = #tpu.pipeline_mode<synchronous>, transform_indices = @transform_12, window_bounds = array<i64: 1, 10>}, {pipeline_mode = #tpu.pipeline_mode<synchronous>, transform_indices = @transform_13, window_bounds = array<i64: 10, 128>}, {pipeline_mode = #tpu.pipeline_mode<synchronous>, transform_indices = @transform_14, window_bounds = array<i64: 1, 128>}, {pipeline_mode = #tpu.pipeline_mode<synchronous>, transform_indices = @transform_15, window_bounds = array<i64: 2, 128>}]} {
    %c0 = arith.constant 0 : index
    %c0_0 = arith.constant 0 : index
    %0 = vector.load %arg1[%c0, %c0_0] : memref<220x912xbf16, #tpu.memory_space<vmem>>, vector<220x912xbf16>
    %c0_1 = arith.constant 0 : index
    %c0_2 = arith.constant 0 : index
    %1 = vector.load %arg2[%c0_1, %c0_2] : memref<912x48xbf16, #tpu.memory_space<vmem>>, vector<912x48xbf16>
    %cst = arith.constant dense<0.000000e+00> : vector<220x48xf32>
    %2 = tpu.matmul %0, %1, %cst {dimension_numbers = #tpu.dot_dimension_numbers<[1], [0], [0], [1], [0, 0, 1, 1], [], []>} : vector<220x912xbf16>, vector<912x48xbf16>, vector<220x48xf32> -> vector<220x48xf32>
    %c0_3 = arith.constant 0 : index
    %c0_4 = arith.constant 0 : index
    %3 = vector.load %arg3[%c0_3, %c0_4] : memref<1x48xf32, #tpu.memory_space<vmem>>, vector<1x48xf32>
    %4 = vector.broadcast %3 : vector<1x48xf32> to vector<220x48xf32>
    %5 = arith.addf %2, %4 : vector<220x48xf32>
    %c0_5 = arith.constant 0 : index
    %c0_6 = arith.constant 0 : index
    %6 = vector.load %arg17[%c0_5, %c0_6] : memref<220x48xf32, #tpu.memory_space<vmem>>, vector<220x48xf32>
    tpu.vector_store %arg17[%c0_5, %c0_6], %5 {strides = array<i32>} : memref<220x48xf32, #tpu.memory_space<vmem>>, vector<220x48xf32>,
    %c0_7 = arith.constant 0 : index
    %c0_8 = arith.constant 0 : index
    %7 = vector.load %arg17[%c0_7, %c0_8] : memref<220x48xf32, #tpu.memory_space<vmem>>, vector<20x48xf32>
    %c0_9 = arith.constant 0 : index
    %c0_10 = arith.constant 0 : index
    %8 = vector.load %arg18[%c0_9, %c0_10] : memref<120x432xf32, #tpu.memory_space<vmem>>, vector<20x48xf32>
    tpu.vector_store %arg18[%c0_9, %c0_10], %7 {strides = array<i32>} : memref<120x432xf32, #tpu.memory_space<vmem>>, vector<20x48xf32>,
    %c1 = arith.constant 1 : index
    %c0_11 = arith.constant 0 : index
    %9 = vector.load %arg17[%c1, %c0_11] : memref<220x48xf32, #tpu.memory_space<vmem>>, vector<20x48xf32>
    %c0_12 = arith.constant 0 : index
    %c48 = arith.constant 48 : index
    %10 = vector.load %arg18[%c0_12, %c48] : memref<120x432xf32, #tpu.memory_space<vmem>>, vector<20x48xf32>
    tpu.vector_store %arg18[%c0_12, %c48], %9 {strides = array<i32>} : memref<120x432xf32, #tpu.memory_space<vmem>>, vector<20x48xf32>,
    %c2 = arith.constant 2 : index
    %c0_13 = arith.constant 0 : index
    %11 = vector.load %arg17[%c2, %c0_13] : memref<220x48xf32, #tpu.memory_space<vmem>>, vector<20x48xf32>
    %c0_14 = arith.constant 0 : index
    %c96 = arith.constant 96 : index
    %12 = vector.load %arg18[%c0_14, %c96] : memref<120x432xf32, #tpu.memory_space<vmem>>, vector<20x48xf32>
    tpu.vector_store %arg18[%c0_14, %c96], %11 {strides = array<i32>} : memref<120x432xf32, #tpu.memory_space<vmem>>, vector<20x48xf32>,
    %c22 = arith.constant 22 : index
    %c0_15 = arith.constant 0 : index
    %13 = vector.load %arg17[%c22, %c0_15] : memref<220x48xf32, #tpu.memory_space<vmem>>, vector<20x48xf32>
    %c0_16 = arith.constant 0 : index
    %c144 = arith.constant 144 : index
    %14 = vector.load %arg18[%c0_16, %c144] : memref<120x432xf32, #tpu.memory_space<vmem>>, vector<20x48xf32>
    tpu.vector_store %arg18[%c0_16, %c144], %13 {strides = array<i32>} : memref<120x432xf32, #tpu.memory_space<vmem>>, vector<20x48xf32>,
    %c23 = arith.constant 23 : index
    %c0_17 = arith.constant 0 : index
    %15 = vector.load %arg17[%c23, %c0_17] : memref<220x48xf32, #tpu.memory_space<vmem>>, vector<20x48xf32>
    %c0_18 = arith.constant 0 : index
    %c192 = arith.constant 192 : index
    %16 = vector.load %arg18[%c0_18, %c192] : memref<120x432xf32, #tpu.memory_space<vmem>>, vector<20x48xf32>
    tpu.vector_store %arg18[%c0_18, %c192], %15 {strides = array<i32>} : memref<120x432xf32, #tpu.memory_space<vmem>>, vector<20x48xf32>,
    %c24 = arith.constant 24 : index
    %c0_19 = arith.constant 0 : index
    %17 = vector.load %arg17[%c24, %c0_19] : memref<220x48xf32, #tpu.memory_space<vmem>>, vector<20x48xf32>
    %c0_20 = arith.constant 0 : index
    %c240 = arith.constant 240 : index
    %18 = vector.load %arg18[%c0_20, %c240] : memref<120x432xf32, #tpu.memory_space<vmem>>, vector<20x48xf32>
    tpu.vector_store %arg18[%c0_20, %c240], %17 {strides = array<i32>} : memref<120x432xf32, #tpu.memory_space<vmem>>, vector<20x48xf32>,
    %c44 = arith.constant 44 : index
    %c0_21 = arith.constant 0 : index
    %19 = vector.load %arg17[%c44, %c0_21] : memref<220x48xf32, #tpu.memory_space<vmem>>, vector<20x48xf32>
    %c0_22 = arith.constant 0 : index
    %c288 = arith.constant 288 : index
    %20 = vector.load %arg18[%c0_22, %c288] : memref<120x432xf32, #tpu.memory_space<vmem>>, vector<20x48xf32>
    tpu.vector_store %arg18[%c0_22, %c288], %19 {strides = array<i32>} : memref<120x432xf32, #tpu.memory_space<vmem>>, vector<20x48xf32>,
    %c45 = arith.constant 45 : index
    %c0_23 = arith.constant 0 : index
    %21 = vector.load %arg17[%c45, %c0_23] : memref<220x48xf32, #tpu.memory_space<vmem>>, vector<20x48xf32>
    %c0_24 = arith.constant 0 : index
    %c336 = arith.constant 336 : index
    %22 = vector.load %arg18[%c0_24, %c336] : memref<120x432xf32, #tpu.memory_space<vmem>>, vector<20x48xf32>
    tpu.vector_store %arg18[%c0_24, %c336], %21 {strides = array<i32>} : memref<120x432xf32, #tpu.memory_space<vmem>>, vector<20x48xf32>,
    %c46 = arith.constant 46 : index
    %c0_25 = arith.constant 0 : index
    %23 = vector.load %arg17[%c46, %c0_25] : memref<220x48xf32, #tpu.memory_space<vmem>>, vector<20x48xf32>
    %c0_26 = arith.constant 0 : index
    %c384 = arith.constant 384 : index
    %24 = vector.load %arg18[%c0_26, %c384] : memref<120x432xf32, #tpu.memory_space<vmem>>, vector<20x48xf32>
    tpu.vector_store %arg18[%c0_26, %c384], %23 {strides = array<i32>} : memref<120x432xf32, #tpu.memory_space<vmem>>, vector<20x48xf32>,
    %c22_27 = arith.constant 22 : index
    %c0_28 = arith.constant 0 : index
    %25 = vector.load %arg17[%c22_27, %c0_28] : memref<220x48xf32, #tpu.memory_space<vmem>>, vector<20x48xf32>
    %c20 = arith.constant 20 : index
    %c0_29 = arith.constant 0 : index
    %26 = vector.load %arg18[%c20, %c0_29] : memref<120x432xf32, #tpu.memory_space<vmem>>, vector<20x48xf32>
    tpu.vector_store %arg18[%c20, %c0_29], %25 {strides = array<i32>} : memref<120x432xf32, #tpu.memory_space<vmem>>, vector<20x48xf32>,
    %c23_30 = arith.constant 23 : index
    %c0_31 = arith.constant 0 : index
    %27 = vector.load %arg17[%c23_30, %c0_31] : memref<220x48xf32, #tpu.memory_space<vmem>>, vector<20x48xf32>
    %c20_32 = arith.constant 20 : index
    %c48_33 = arith.constant 48 : index
    %28 = vector.load %arg18[%c20_32, %c48_33] : memref<120x432xf32, #tpu.memory_space<vmem>>, vector<20x48xf32>
    tpu.vector_store %arg18[%c20_32, %c48_33], %27 {strides = array<i32>} : memref<120x432xf32, #tpu.memory_space<vmem>>, vector<20x48xf32>,
    %c24_34 = arith.constant 24 : index
    %c0_35 = arith.constant 0 : index
    %29 = vector.load %arg17[%c24_34, %c0_35] : memref<220x48xf32, #tpu.memory_space<vmem>>, vector<20x48xf32>
    %c20_36 = arith.constant 20 : index
    %c96_37 = arith.constant 96 : index
    %30 = vector.load %arg18[%c20_36, %c96_37] : memref<120x432xf32, #tpu.memory_space<vmem>>, vector<20x48xf32>
    tpu.vector_store %arg18[%c20_36, %c96_37], %29 {strides = array<i32>} : memref<120x432xf32, #tpu.memory_space<vmem>>, vector<20x48xf32>,
    %c44_38 = arith.constant 44 : index
    %c0_39 = arith.constant 0 : index
    %31 = vector.load %arg17[%c44_38, %c0_39] : memref<220x48xf32, #tpu.memory_space<vmem>>, vector<20x48xf32>
    %c20_40 = arith.constant 20 : index
    %c144_41 = arith.constant 144 : index
    %32 = vector.load %arg18[%c20_40, %c144_41] : memref<120x432xf32, #tpu.memory_space<vmem>>, vector<20x48xf32>
    tpu.vector_store %arg18[%c20_40, %c144_41], %31 {strides = array<i32>} : memref<120x432xf32, #tpu.memory_space<vmem>>, vector<20x48xf32>,
    %c45_42 = arith.constant 45 : index
    %c0_43 = arith.constant 0 : index
    %33 = vector.load %arg17[%c45_42, %c0_43] : memref<220x48xf32, #tpu.memory_space<vmem>>, vector<20x48xf32>
    %c20_44 = arith.constant 20 : index
    %c192_45 = arith.constant 192 : index
    %34 = vector.load %arg18[%c20_44, %c192_45] : memref<120x432xf32, #tpu.memory_space<vmem>>, vector<20x48xf32>
    tpu.vector_store %arg18[%c20_44, %c192_45], %33 {strides = array<i32>} : memref<120x432xf32, #tpu.memory_space<vmem>>, vector<20x48xf32>,
    %c46_46 = arith.constant 46 : index
    %c0_47 = arith.constant 0 : index
    %35 = vector.load %arg17[%c46_46, %c0_47] : memref<220x48xf32, #tpu.memory_space<vmem>>, vector<20x48xf32>
    %c20_48 = arith.constant 20 : index
    %c240_49 = arith.constant 240 : index
    %36 = vector.load %arg18[%c20_48, %c240_49] : memref<120x432xf32, #tpu.memory_space<vmem>>, vector<20x48xf32>
    tpu.vector_store %arg18[%c20_48, %c240_49], %35 {strides = array<i32>} : memref<120x432xf32, #tpu.memory_space<vmem>>, vector<20x48xf32>,
    %c66 = arith.constant 66 : index
    %c0_50 = arith.constant 0 : index
    %37 = vector.load %arg17[%c66, %c0_50] : memref<220x48xf32, #tpu.memory_space<vmem>>, vector<20x48xf32>
    %c20_51 = arith.constant 20 : index
    %c288_52 = arith.constant 288 : index
    %38 = vector.load %arg18[%c20_51, %c288_52] : memref<120x432xf32, #tpu.memory_space<vmem>>, vector<20x48xf32>
    tpu.vector_store %arg18[%c20_51, %c288_52], %37 {strides = array<i32>} : memref<120x432xf32, #tpu.memory_space<vmem>>, vector<20x48xf32>,
    %c67 = arith.constant 67 : index
    %c0_53 = arith.constant 0 : index
    %39 = vector.load %arg17[%c67, %c0_53] : memref<220x48xf32, #tpu.memory_space<vmem>>, vector<20x48xf32>
    %c20_54 = arith.constant 20 : index
    %c336_55 = arith.constant 336 : index
    %40 = vector.load %arg18[%c20_54, %c336_55] : memref<120x432xf32, #tpu.memory_space<vmem>>, vector<20x48xf32>
    tpu.vector_store %arg18[%c20_54, %c336_55], %39 {strides = array<i32>} : memref<120x432xf32, #tpu.memory_space<vmem>>, vector<20x48xf32>,
    %c68 = arith.constant 68 : index
    %c0_56 = arith.constant 0 : index
    %41 = vector.load %arg17[%c68, %c0_56] : memref<220x48xf32, #tpu.memory_space<vmem>>, vector<20x48xf32>
    %c20_57 = arith.constant 20 : index
    %c384_58 = arith.constant 384 : index
    %42 = vector.load %arg18[%c20_57, %c384_58] : memref<120x432xf32, #tpu.memory_space<vmem>>, vector<20x48xf32>
    tpu.vector_store %arg18[%c20_57, %c384_58], %41 {strides = array<i32>} : memref<120x432xf32, #tpu.memory_space<vmem>>, vector<20x48xf32>,
    %c44_59 = arith.constant 44 : index
    %c0_60 = arith.constant 0 : index
    %43 = vector.load %arg17[%c44_59, %c0_60] : memref<220x48xf32, #tpu.memory_space<vmem>>, vector<20x48xf32>
    %c40 = arith.constant 40 : index
    %c0_61 = arith.constant 0 : index
    %44 = vector.load %arg18[%c40, %c0_61] : memref<120x432xf32, #tpu.memory_space<vmem>>, vector<20x48xf32>
    tpu.vector_store %arg18[%c40, %c0_61], %43 {strides = array<i32>} : memref<120x432xf32, #tpu.memory_space<vmem>>, vector<20x48xf32>,
    %c45_62 = arith.constant 45 : index
    %c0_63 = arith.constant 0 : index
    %45 = vector.load %arg17[%c45_62, %c0_63] : memref<220x48xf32, #tpu.memory_space<vmem>>, vector<20x48xf32>
    %c40_64 = arith.constant 40 : index
    %c48_65 = arith.constant 48 : index
    %46 = vector.load %arg18[%c40_64, %c48_65] : memref<120x432xf32, #tpu.memory_space<vmem>>, vector<20x48xf32>
    tpu.vector_store %arg18[%c40_64, %c48_65], %45 {strides = array<i32>} : memref<120x432xf32, #tpu.memory_space<vmem>>, vector<20x48xf32>,
    %c46_66 = arith.constant 46 : index
    %c0_67 = arith.constant 0 : index
    %47 = vector.load %arg17[%c46_66, %c0_67] : memref<220x48xf32, #tpu.memory_space<vmem>>, vector<20x48xf32>
    %c40_68 = arith.constant 40 : index
    %c96_69 = arith.constant 96 : index
    %48 = vector.load %arg18[%c40_68, %c96_69] : memref<120x432xf32, #tpu.memory_space<vmem>>, vector<20x48xf32>
    tpu.vector_store %arg18[%c40_68, %c96_69], %47 {strides = array<i32>} : memref<120x432xf32, #tpu.memory_space<vmem>>, vector<20x48xf32>,
    %c66_70 = arith.constant 66 : index
    %c0_71 = arith.constant 0 : index
    %49 = vector.load %arg17[%c66_70, %c0_71] : memref<220x48xf32, #tpu.memory_space<vmem>>, vector<20x48xf32>
    %c40_72 = arith.constant 40 : index
    %c144_73 = arith.constant 144 : index
    %50 = vector.load %arg18[%c40_72, %c144_73] : memref<120x432xf32, #tpu.memory_space<vmem>>, vector<20x48xf32>
    tpu.vector_store %arg18[%c40_72, %c144_73], %49 {strides = array<i32>} : memref<120x432xf32, #tpu.memory_space<vmem>>, vector<20x48xf32>,
    %c67_74 = arith.constant 67 : index
    %c0_75 = arith.constant 0 : index
    %51 = vector.load %arg17[%c67_74, %c0_75] : memref<220x48xf32, #tpu.memory_space<vmem>>, vector<20x48xf32>
    %c40_76 = arith.constant 40 : index
    %c192_77 = arith.constant 192 : index
    %52 = vector.load %arg18[%c40_76, %c192_77] : memref<120x432xf32, #tpu.memory_space<vmem>>, vector<20x48xf32>
    tpu.vector_store %arg18[%c40_76, %c192_77], %51 {strides = array<i32>} : memref<120x432xf32, #tpu.memory_space<vmem>>, vector<20x48xf32>,
    %c68_78 = arith.constant 68 : index
    %c0_79 = arith.constant 0 : index
    %53 = vector.load %arg17[%c68_78, %c0_79] : memref<220x48xf32, #tpu.memory_space<vmem>>, vector<20x48xf32>
    %c40_80 = arith.constant 40 : index
    %c240_81 = arith.constant 240 : index
    %54 = vector.load %arg18[%c40_80, %c240_81] : memref<120x432xf32, #tpu.memory_space<vmem>>, vector<20x48xf32>
    tpu.vector_store %arg18[%c40_80, %c240_81], %53 {strides = array<i32>} : memref<120x432xf32, #tpu.memory_space<vmem>>, vector<20x48xf32>,
    %c88 = arith.constant 88 : index
    %c0_82 = arith.constant 0 : index
    %55 = vector.load %arg17[%c88, %c0_82] : memref<220x48xf32, #tpu.memory_space<vmem>>, vector<20x48xf32>
    %c40_83 = arith.constant 40 : index
    %c288_84 = arith.constant 288 : index
    %56 = vector.load %arg18[%c40_83, %c288_84] : memref<120x432xf32, #tpu.memory_space<vmem>>, vector<20x48xf32>
    tpu.vector_store %arg18[%c40_83, %c288_84], %55 {strides = array<i32>} : memref<120x432xf32, #tpu.memory_space<vmem>>, vector<20x48xf32>,
    %c89 = arith.constant 89 : index
    %c0_85 = arith.constant 0 : index
    %57 = vector.load %arg17[%c89, %c0_85] : memref<220x48xf32, #tpu.memory_space<vmem>>, vector<20x48xf32>
    %c40_86 = arith.constant 40 : index
    %c336_87 = arith.constant 336 : index
    %58 = vector.load %arg18[%c40_86, %c336_87] : memref<120x432xf32, #tpu.memory_space<vmem>>, vector<20x48xf32>
    tpu.vector_store %arg18[%c40_86, %c336_87], %57 {strides = array<i32>} : memref<120x432xf32, #tpu.memory_space<vmem>>, vector<20x48xf32>,
    %c90 = arith.constant 90 : index
    %c0_88 = arith.constant 0 : index
    %59 = vector.load %arg17[%c90, %c0_88] : memref<220x48xf32, #tpu.memory_space<vmem>>, vector<20x48xf32>
    %c40_89 = arith.constant 40 : index
    %c384_90 = arith.constant 384 : index
    %60 = vector.load %arg18[%c40_89, %c384_90] : memref<120x432xf32, #tpu.memory_space<vmem>>, vector<20x48xf32>
    tpu.vector_store %arg18[%c40_89, %c384_90], %59 {strides = array<i32>} : memref<120x432xf32, #tpu.memory_space<vmem>>, vector<20x48xf32>,
    %c110 = arith.constant 110 : index
    %c0_91 = arith.constant 0 : index
    %61 = vector.load %arg17[%c110, %c0_91] : memref<220x48xf32, #tpu.memory_space<vmem>>, vector<20x48xf32>
    %c60 = arith.constant 60 : index
    %c0_92 = arith.constant 0 : index
    %62 = vector.load %arg18[%c60, %c0_92] : memref<120x432xf32, #tpu.memory_space<vmem>>, vector<20x48xf32>
    tpu.vector_store %arg18[%c60, %c0_92], %61 {strides = array<i32>} : memref<120x432xf32, #tpu.memory_space<vmem>>, vector<20x48xf32>,
    %c111 = arith.constant 111 : index
    %c0_93 = arith.constant 0 : index
    %63 = vector.load %arg17[%c111, %c0_93] : memref<220x48xf32, #tpu.memory_space<vmem>>, vector<20x48xf32>
    %c60_94 = arith.constant 60 : index
    %c48_95 = arith.constant 48 : index
    %64 = vector.load %arg18[%c60_94, %c48_95] : memref<120x432xf32, #tpu.memory_space<vmem>>, vector<20x48xf32>
    tpu.vector_store %arg18[%c60_94, %c48_95], %63 {strides = array<i32>} : memref<120x432xf32, #tpu.memory_space<vmem>>, vector<20x48xf32>,
    %c112 = arith.constant 112 : index
    %c0_96 = arith.constant 0 : index
    %65 = vector.load %arg17[%c112, %c0_96] : memref<220x48xf32, #tpu.memory_space<vmem>>, vector<20x48xf32>
    %c60_97 = arith.constant 60 : index
    %c96_98 = arith.constant 96 : index
    %66 = vector.load %arg18[%c60_97, %c96_98] : memref<120x432xf32, #tpu.memory_space<vmem>>, vector<20x48xf32>
    tpu.vector_store %arg18[%c60_97, %c96_98], %65 {strides = array<i32>} : memref<120x432xf32, #tpu.memory_space<vmem>>, vector<20x48xf32>,
    %c132 = arith.constant 132 : index
    %c0_99 = arith.constant 0 : index
    %67 = vector.load %arg17[%c132, %c0_99] : memref<220x48xf32, #tpu.memory_space<vmem>>, vector<20x48xf32>
    %c60_100 = arith.constant 60 : index
    %c144_101 = arith.constant 144 : index
    %68 = vector.load %arg18[%c60_100, %c144_101] : memref<120x432xf32, #tpu.memory_space<vmem>>, vector<20x48xf32>
    tpu.vector_store %arg18[%c60_100, %c144_101], %67 {strides = array<i32>} : memref<120x432xf32, #tpu.memory_space<vmem>>, vector<20x48xf32>,
    %c133 = arith.constant 133 : index
    %c0_102 = arith.constant 0 : index
    %69 = vector.load %arg17[%c133, %c0_102] : memref<220x48xf32, #tpu.memory_space<vmem>>, vector<20x48xf32>
    %c60_103 = arith.constant 60 : index
    %c192_104 = arith.constant 192 : index
    %70 = vector.load %arg18[%c60_103, %c192_104] : memref<120x432xf32, #tpu.memory_space<vmem>>, vector<20x48xf32>
    tpu.vector_store %arg18[%c60_103, %c192_104], %69 {strides = array<i32>} : memref<120x432xf32, #tpu.memory_space<vmem>>, vector<20x48xf32>,
    %c134 = arith.constant 134 : index
    %c0_105 = arith.constant 0 : index
    %71 = vector.load %arg17[%c134, %c0_105] : memref<220x48xf32, #tpu.memory_space<vmem>>, vector<20x48xf32>
    %c60_106 = arith.constant 60 : index
    %c240_107 = arith.constant 240 : index
    %72 = vector.load %arg18[%c60_106, %c240_107] : memref<120x432xf32, #tpu.memory_space<vmem>>, vector<20x48xf32>
    tpu.vector_store %arg18[%c60_106, %c240_107], %71 {strides = array<i32>} : memref<120x432xf32, #tpu.memory_space<vmem>>, vector<20x48xf32>,
    %c154 = arith.constant 154 : index
    %c0_108 = arith.constant 0 : index
    %73 = vector.load %arg17[%c154, %c0_108] : memref<220x48xf32, #tpu.memory_space<vmem>>, vector<20x48xf32>
    %c60_109 = arith.constant 60 : index
    %c288_110 = arith.constant 288 : index
    %74 = vector.load %arg18[%c60_109, %c288_110] : memref<120x432xf32, #tpu.memory_space<vmem>>, vector<20x48xf32>
    tpu.vector_store %arg18[%c60_109, %c288_110], %73 {strides = array<i32>} : memref<120x432xf32, #tpu.memory_space<vmem>>, vector<20x48xf32>,
    %c155 = arith.constant 155 : index
    %c0_111 = arith.constant 0 : index
    %75 = vector.load %arg17[%c155, %c0_111] : memref<220x48xf32, #tpu.memory_space<vmem>>, vector<20x48xf32>
    %c60_112 = arith.constant 60 : index
    %c336_113 = arith.constant 336 : index
    %76 = vector.load %arg18[%c60_112, %c336_113] : memref<120x432xf32, #tpu.memory_space<vmem>>, vector<20x48xf32>
    tpu.vector_store %arg18[%c60_112, %c336_113], %75 {strides = array<i32>} : memref<120x432xf32, #tpu.memory_space<vmem>>, vector<20x48xf32>,
    %c156 = arith.constant 156 : index
    %c0_114 = arith.constant 0 : index
    %77 = vector.load %arg17[%c156, %c0_114] : memref<220x48xf32, #tpu.memory_space<vmem>>, vector<20x48xf32>
    %c60_115 = arith.constant 60 : index
    %c384_116 = arith.constant 384 : index
    %78 = vector.load %arg18[%c60_115, %c384_116] : memref<120x432xf32, #tpu.memory_space<vmem>>, vector<20x48xf32>
    tpu.vector_store %arg18[%c60_115, %c384_116], %77 {strides = array<i32>} : memref<120x432xf32, #tpu.memory_space<vmem>>, vector<20x48xf32>,
    %c132_117 = arith.constant 132 : index
    %c0_118 = arith.constant 0 : index
    %79 = vector.load %arg17[%c132_117, %c0_118] : memref<220x48xf32, #tpu.memory_space<vmem>>, vector<20x48xf32>
    %c80 = arith.constant 80 : index
    %c0_119 = arith.constant 0 : index
    %80 = vector.load %arg18[%c80, %c0_119] : memref<120x432xf32, #tpu.memory_space<vmem>>, vector<20x48xf32>
    tpu.vector_store %arg18[%c80, %c0_119], %79 {strides = array<i32>} : memref<120x432xf32, #tpu.memory_space<vmem>>, vector<20x48xf32>,
    %c133_120 = arith.constant 133 : index
    %c0_121 = arith.constant 0 : index
    %81 = vector.load %arg17[%c133_120, %c0_121] : memref<220x48xf32, #tpu.memory_space<vmem>>, vector<20x48xf32>
    %c80_122 = arith.constant 80 : index
    %c48_123 = arith.constant 48 : index
    %82 = vector.load %arg18[%c80_122, %c48_123] : memref<120x432xf32, #tpu.memory_space<vmem>>, vector<20x48xf32>
    tpu.vector_store %arg18[%c80_122, %c48_123], %81 {strides = array<i32>} : memref<120x432xf32, #tpu.memory_space<vmem>>, vector<20x48xf32>,
    %c134_124 = arith.constant 134 : index
    %c0_125 = arith.constant 0 : index
    %83 = vector.load %arg17[%c134_124, %c0_125] : memref<220x48xf32, #tpu.memory_space<vmem>>, vector<20x48xf32>
    %c80_126 = arith.constant 80 : index
    %c96_127 = arith.constant 96 : index
    %84 = vector.load %arg18[%c80_126, %c96_127] : memref<120x432xf32, #tpu.memory_space<vmem>>, vector<20x48xf32>
    tpu.vector_store %arg18[%c80_126, %c96_127], %83 {strides = array<i32>} : memref<120x432xf32, #tpu.memory_space<vmem>>, vector<20x48xf32>,
    %c154_128 = arith.constant 154 : index
    %c0_129 = arith.constant 0 : index
    %85 = vector.load %arg17[%c154_128, %c0_129] : memref<220x48xf32, #tpu.memory_space<vmem>>, vector<20x48xf32>
    %c80_130 = arith.constant 80 : index
    %c144_131 = arith.constant 144 : index
    %86 = vector.load %arg18[%c80_130, %c144_131] : memref<120x432xf32, #tpu.memory_space<vmem>>, vector<20x48xf32>
    tpu.vector_store %arg18[%c80_130, %c144_131], %85 {strides = array<i32>} : memref<120x432xf32, #tpu.memory_space<vmem>>, vector<20x48xf32>,
    %c155_132 = arith.constant 155 : index
    %c0_133 = arith.constant 0 : index
    %87 = vector.load %arg17[%c155_132, %c0_133] : memref<220x48xf32, #tpu.memory_space<vmem>>, vector<20x48xf32>
    %c80_134 = arith.constant 80 : index
    %c192_135 = arith.constant 192 : index
    %88 = vector.load %arg18[%c80_134, %c192_135] : memref<120x432xf32, #tpu.memory_space<vmem>>, vector<20x48xf32>
    tpu.vector_store %arg18[%c80_134, %c192_135], %87 {strides = array<i32>} : memref<120x432xf32, #tpu.memory_space<vmem>>, vector<20x48xf32>,
    %c156_136 = arith.constant 156 : index
    %c0_137 = arith.constant 0 : index
    %89 = vector.load %arg17[%c156_136, %c0_137] : memref<220x48xf32, #tpu.memory_space<vmem>>, vector<20x48xf32>
    %c80_138 = arith.constant 80 : index
    %c240_139 = arith.constant 240 : index
    %90 = vector.load %arg18[%c80_138, %c240_139] : memref<120x432xf32, #tpu.memory_space<vmem>>, vector<20x48xf32>
    tpu.vector_store %arg18[%c80_138, %c240_139], %89 {strides = array<i32>} : memref<120x432xf32, #tpu.memory_space<vmem>>, vector<20x48xf32>,
    %c176 = arith.constant 176 : index
    %c0_140 = arith.constant 0 : index
    %91 = vector.load %arg17[%c176, %c0_140] : memref<220x48xf32, #tpu.memory_space<vmem>>, vector<20x48xf32>
    %c80_141 = arith.constant 80 : index
    %c288_142 = arith.constant 288 : index
    %92 = vector.load %arg18[%c80_141, %c288_142] : memref<120x432xf32, #tpu.memory_space<vmem>>, vector<20x48xf32>
    tpu.vector_store %arg18[%c80_141, %c288_142], %91 {strides = array<i32>} : memref<120x432xf32, #tpu.memory_space<vmem>>, vector<20x48xf32>,
    %c177 = arith.constant 177 : index
    %c0_143 = arith.constant 0 : index
    %93 = vector.load %arg17[%c177, %c0_143] : memref<220x48xf32, #tpu.memory_space<vmem>>, vector<20x48xf32>
    %c80_144 = arith.constant 80 : index
    %c336_145 = arith.constant 336 : index
    %94 = vector.load %arg18[%c80_144, %c336_145] : memref<120x432xf32, #tpu.memory_space<vmem>>, vector<20x48xf32>
    tpu.vector_store %arg18[%c80_144, %c336_145], %93 {strides = array<i32>} : memref<120x432xf32, #tpu.memory_space<vmem>>, vector<20x48xf32>,
    %c178 = arith.constant 178 : index
    %c0_146 = arith.constant 0 : index
    %95 = vector.load %arg17[%c178, %c0_146] : memref<220x48xf32, #tpu.memory_space<vmem>>, vector<20x48xf32>
    %c80_147 = arith.constant 80 : index
    %c384_148 = arith.constant 384 : index
    %96 = vector.load %arg18[%c80_147, %c384_148] : memref<120x432xf32, #tpu.memory_space<vmem>>, vector<20x48xf32>
    tpu.vector_store %arg18[%c80_147, %c384_148], %95 {strides = array<i32>} : memref<120x432xf32, #tpu.memory_space<vmem>>, vector<20x48xf32>,
    %c154_149 = arith.constant 154 : index
    %c0_150 = arith.constant 0 : index
    %97 = vector.load %arg17[%c154_149, %c0_150] : memref<220x48xf32, #tpu.memory_space<vmem>>, vector<20x48xf32>
    %c100 = arith.constant 100 : index
    %c0_151 = arith.constant 0 : index
    %98 = vector.load %arg18[%c100, %c0_151] : memref<120x432xf32, #tpu.memory_space<vmem>>, vector<20x48xf32>
    tpu.vector_store %arg18[%c100, %c0_151], %97 {strides = array<i32>} : memref<120x432xf32, #tpu.memory_space<vmem>>, vector<20x48xf32>,
    %c155_152 = arith.constant 155 : index
    %c0_153 = arith.constant 0 : index
    %99 = vector.load %arg17[%c155_152, %c0_153] : memref<220x48xf32, #tpu.memory_space<vmem>>, vector<20x48xf32>
    %c100_154 = arith.constant 100 : index
    %c48_155 = arith.constant 48 : index
    %100 = vector.load %arg18[%c100_154, %c48_155] : memref<120x432xf32, #tpu.memory_space<vmem>>, vector<20x48xf32>
    tpu.vector_store %arg18[%c100_154, %c48_155], %99 {strides = array<i32>} : memref<120x432xf32, #tpu.memory_space<vmem>>, vector<20x48xf32>,
    %c156_156 = arith.constant 156 : index
    %c0_157 = arith.constant 0 : index
    %101 = vector.load %arg17[%c156_156, %c0_157] : memref<220x48xf32, #tpu.memory_space<vmem>>, vector<20x48xf32>
    %c100_158 = arith.constant 100 : index
    %c96_159 = arith.constant 96 : index
    %102 = vector.load %arg18[%c100_158, %c96_159] : memref<120x432xf32, #tpu.memory_space<vmem>>, vector<20x48xf32>
    tpu.vector_store %arg18[%c100_158, %c96_159], %101 {strides = array<i32>} : memref<120x432xf32, #tpu.memory_space<vmem>>, vector<20x48xf32>,
    %c176_160 = arith.constant 176 : index
    %c0_161 = arith.constant 0 : index
    %103 = vector.load %arg17[%c176_160, %c0_161] : memref<220x48xf32, #tpu.memory_space<vmem>>, vector<20x48xf32>
    %c100_162 = arith.constant 100 : index
    %c144_163 = arith.constant 144 : index
    %104 = vector.load %arg18[%c100_162, %c144_163] : memref<120x432xf32, #tpu.memory_space<vmem>>, vector<20x48xf32>
    tpu.vector_store %arg18[%c100_162, %c144_163], %103 {strides = array<i32>} : memref<120x432xf32, #tpu.memory_space<vmem>>, vector<20x48xf32>,
    %c177_164 = arith.constant 177 : index
    %c0_165 = arith.constant 0 : index
    %105 = vector.load %arg17[%c177_164, %c0_165] : memref<220x48xf32, #tpu.memory_space<vmem>>, vector<20x48xf32>
    %c100_166 = arith.constant 100 : index
    %c192_167 = arith.constant 192 : index
    %106 = vector.load %arg18[%c100_166, %c192_167] : memref<120x432xf32, #tpu.memory_space<vmem>>, vector<20x48xf32>
    tpu.vector_store %arg18[%c100_166, %c192_167], %105 {strides = array<i32>} : memref<120x432xf32, #tpu.memory_space<vmem>>, vector<20x48xf32>,
    %c178_168 = arith.constant 178 : index
    %c0_169 = arith.constant 0 : index
    %107 = vector.load %arg17[%c178_168, %c0_169] : memref<220x48xf32, #tpu.memory_space<vmem>>, vector<20x48xf32>
    %c100_170 = arith.constant 100 : index
    %c240_171 = arith.constant 240 : index
    %108 = vector.load %arg18[%c100_170, %c240_171] : memref<120x432xf32, #tpu.memory_space<vmem>>, vector<20x48xf32>
    tpu.vector_store %arg18[%c100_170, %c240_171], %107 {strides = array<i32>} : memref<120x432xf32, #tpu.memory_space<vmem>>, vector<20x48xf32>,
    %c198 = arith.constant 198 : index
    %c0_172 = arith.constant 0 : index
    %109 = vector.load %arg17[%c198, %c0_172] : memref<220x48xf32, #tpu.memory_space<vmem>>, vector<20x48xf32>
    %c100_173 = arith.constant 100 : index
    %c288_174 = arith.constant 288 : index
    %110 = vector.load %arg18[%c100_173, %c288_174] : memref<120x432xf32, #tpu.memory_space<vmem>>, vector<20x48xf32>
    tpu.vector_store %arg18[%c100_173, %c288_174], %109 {strides = array<i32>} : memref<120x432xf32, #tpu.memory_space<vmem>>, vector<20x48xf32>,
    %c199 = arith.constant 199 : index
    %c0_175 = arith.constant 0 : index
    %111 = vector.load %arg17[%c199, %c0_175] : memref<220x48xf32, #tpu.memory_space<vmem>>, vector<20x48xf32>
    %c100_176 = arith.constant 100 : index
    %c336_177 = arith.constant 336 : index
    %112 = vector.load %arg18[%c100_176, %c336_177] : memref<120x432xf32, #tpu.memory_space<vmem>>, vector<20x48xf32>
    tpu.vector_store %arg18[%c100_176, %c336_177], %111 {strides = array<i32>} : memref<120x432xf32, #tpu.memory_space<vmem>>, vector<20x48xf32>,
    %c200 = arith.constant 200 : index
    %c0_178 = arith.constant 0 : index
    %113 = vector.load %arg17[%c200, %c0_178] : memref<220x48xf32, #tpu.memory_space<vmem>>, vector<20x48xf32>
    %c100_179 = arith.constant 100 : index
    %c384_180 = arith.constant 384 : index
    %114 = vector.load %arg18[%c100_179, %c384_180] : memref<120x432xf32, #tpu.memory_space<vmem>>, vector<20x48xf32>
    tpu.vector_store %arg18[%c100_179, %c384_180], %113 {strides = array<i32>} : memref<120x432xf32, #tpu.memory_space<vmem>>, vector<20x48xf32>,
    %c0_181 = arith.constant 0 : index
    %c0_182 = arith.constant 0 : index
    %115 = vector.load %arg18[%c0_181, %c0_182] : memref<120x432xf32, #tpu.memory_space<vmem>>, vector<120x432xf32>
    %116 = arith.truncf %115 : vector<120x432xf32> to vector<120x432xbf16>
    %c0_183 = arith.constant 0 : index
    %c0_184 = arith.constant 0 : index
    %117 = vector.load %arg4[%c0_183, %c0_184] : memref<432x64xbf16, #tpu.memory_space<vmem>>, vector<432x64xbf16>
    %cst_185 = arith.constant dense<0.000000e+00> : vector<120x64xf32>
    %118 = tpu.matmul %116, %117, %cst_185 {dimension_numbers = #tpu.dot_dimension_numbers<[1], [0], [0], [1], [0, 0, 1, 1], [], []>} : vector<120x432xbf16>, vector<432x64xbf16>, vector<120x64xf32> -> vector<120x64xf32>
    %c0_186 = arith.constant 0 : index
    %c0_187 = arith.constant 0 : index
    %119 = vector.load %arg5[%c0_186, %c0_187] : memref<1x64xf32, #tpu.memory_space<vmem>>, vector<1x64xf32>
    %120 = vector.broadcast %119 : vector<1x64xf32> to vector<120x64xf32>
    %121 = arith.addf %118, %120 : vector<120x64xf32>
    %c0_188 = arith.constant 0 : index
    %c0_189 = arith.constant 0 : index
    %122 = vector.load %arg19[%c0_188, %c0_189] : memref<120x64xf32, #tpu.memory_space<vmem>>, vector<120x64xf32>
    tpu.vector_store %arg19[%c0_188, %c0_189], %121 {strides = array<i32>} : memref<120x64xf32, #tpu.memory_space<vmem>>, vector<120x64xf32>,
    %c0_190 = arith.constant 0 : index
    %c0_191 = arith.constant 0 : index
    %123 = vector.load %arg19[%c0_190, %c0_191] : memref<120x64xf32, #tpu.memory_space<vmem>>, vector<18x64xf32>
    %c0_192 = arith.constant 0 : index
    %c0_193 = arith.constant 0 : index
    %124 = vector.load %arg20[%c0_192, %c0_193] : memref<36x576xf32, #tpu.memory_space<vmem>>, vector<18x64xf32>
    tpu.vector_store %arg20[%c0_192, %c0_193], %123 {strides = array<i32>} : memref<36x576xf32, #tpu.memory_space<vmem>>, vector<18x64xf32>,
    %c1_194 = arith.constant 1 : index
    %c0_195 = arith.constant 0 : index
    %125 = vector.load %arg19[%c1_194, %c0_195] : memref<120x64xf32, #tpu.memory_space<vmem>>, vector<18x64xf32>
    %c0_196 = arith.constant 0 : index
    %c64 = arith.constant 64 : index
    %126 = vector.load %arg20[%c0_196, %c64] : memref<36x576xf32, #tpu.memory_space<vmem>>, vector<18x64xf32>
    tpu.vector_store %arg20[%c0_196, %c64], %125 {strides = array<i32>} : memref<36x576xf32, #tpu.memory_space<vmem>>, vector<18x64xf32>,
    %c2_197 = arith.constant 2 : index
    %c0_198 = arith.constant 0 : index
    %127 = vector.load %arg19[%c2_197, %c0_198] : memref<120x64xf32, #tpu.memory_space<vmem>>, vector<18x64xf32>
    %c0_199 = arith.constant 0 : index
    %c128 = arith.constant 128 : index
    %128 = vector.load %arg20[%c0_199, %c128] : memref<36x576xf32, #tpu.memory_space<vmem>>, vector<18x64xf32>
    tpu.vector_store %arg20[%c0_199, %c128], %127 {strides = array<i32>} : memref<36x576xf32, #tpu.memory_space<vmem>>, vector<18x64xf32>,
    %c20_200 = arith.constant 20 : index
    %c0_201 = arith.constant 0 : index
    %129 = vector.load %arg19[%c20_200, %c0_201] : memref<120x64xf32, #tpu.memory_space<vmem>>, vector<18x64xf32>
    %c0_202 = arith.constant 0 : index
    %c192_203 = arith.constant 192 : index
    %130 = vector.load %arg20[%c0_202, %c192_203] : memref<36x576xf32, #tpu.memory_space<vmem>>, vector<18x64xf32>
    tpu.vector_store %arg20[%c0_202, %c192_203], %129 {strides = array<i32>} : memref<36x576xf32, #tpu.memory_space<vmem>>, vector<18x64xf32>,
    %c21 = arith.constant 21 : index
    %c0_204 = arith.constant 0 : index
    %131 = vector.load %arg19[%c21, %c0_204] : memref<120x64xf32, #tpu.memory_space<vmem>>, vector<18x64xf32>
    %c0_205 = arith.constant 0 : index
    %c256 = arith.constant 256 : index
    %132 = vector.load %arg20[%c0_205, %c256] : memref<36x576xf32, #tpu.memory_space<vmem>>, vector<18x64xf32>
    tpu.vector_store %arg20[%c0_205, %c256], %131 {strides = array<i32>} : memref<36x576xf32, #tpu.memory_space<vmem>>, vector<18x64xf32>,
    %c22_206 = arith.constant 22 : index
    %c0_207 = arith.constant 0 : index
    %133 = vector.load %arg19[%c22_206, %c0_207] : memref<120x64xf32, #tpu.memory_space<vmem>>, vector<18x64xf32>
    %c0_208 = arith.constant 0 : index
    %c320 = arith.constant 320 : index
    %134 = vector.load %arg20[%c0_208, %c320] : memref<36x576xf32, #tpu.memory_space<vmem>>, vector<18x64xf32>
    tpu.vector_store %arg20[%c0_208, %c320], %133 {strides = array<i32>} : memref<36x576xf32, #tpu.memory_space<vmem>>, vector<18x64xf32>,
    %c40_209 = arith.constant 40 : index
    %c0_210 = arith.constant 0 : index
    %135 = vector.load %arg19[%c40_209, %c0_210] : memref<120x64xf32, #tpu.memory_space<vmem>>, vector<18x64xf32>
    %c0_211 = arith.constant 0 : index
    %c384_212 = arith.constant 384 : index
    %136 = vector.load %arg20[%c0_211, %c384_212] : memref<36x576xf32, #tpu.memory_space<vmem>>, vector<18x64xf32>
    tpu.vector_store %arg20[%c0_211, %c384_212], %135 {strides = array<i32>} : memref<36x576xf32, #tpu.memory_space<vmem>>, vector<18x64xf32>,
    %c41 = arith.constant 41 : index
    %c0_213 = arith.constant 0 : index
    %137 = vector.load %arg19[%c41, %c0_213] : memref<120x64xf32, #tpu.memory_space<vmem>>, vector<18x64xf32>
    %c0_214 = arith.constant 0 : index
    %c448 = arith.constant 448 : index
    %138 = vector.load %arg20[%c0_214, %c448] : memref<36x576xf32, #tpu.memory_space<vmem>>, vector<18x64xf32>
    tpu.vector_store %arg20[%c0_214, %c448], %137 {strides = array<i32>} : memref<36x576xf32, #tpu.memory_space<vmem>>, vector<18x64xf32>,
    %c42 = arith.constant 42 : index
    %c0_215 = arith.constant 0 : index
    %139 = vector.load %arg19[%c42, %c0_215] : memref<120x64xf32, #tpu.memory_space<vmem>>, vector<18x64xf32>
    %c0_216 = arith.constant 0 : index
    %c512 = arith.constant 512 : index
    %140 = vector.load %arg20[%c0_216, %c512] : memref<36x576xf32, #tpu.memory_space<vmem>>, vector<18x64xf32>
    tpu.vector_store %arg20[%c0_216, %c512], %139 {strides = array<i32>} : memref<36x576xf32, #tpu.memory_space<vmem>>, vector<18x64xf32>,
    %c60_217 = arith.constant 60 : index
    %c0_218 = arith.constant 0 : index
    %141 = vector.load %arg19[%c60_217, %c0_218] : memref<120x64xf32, #tpu.memory_space<vmem>>, vector<18x64xf32>
    %c18 = arith.constant 18 : index
    %c0_219 = arith.constant 0 : index
    %142 = vector.load %arg20[%c18, %c0_219] : memref<36x576xf32, #tpu.memory_space<vmem>>, vector<18x64xf32>
    tpu.vector_store %arg20[%c18, %c0_219], %141 {strides = array<i32>} : memref<36x576xf32, #tpu.memory_space<vmem>>, vector<18x64xf32>,
    %c61 = arith.constant 61 : index
    %c0_220 = arith.constant 0 : index
    %143 = vector.load %arg19[%c61, %c0_220] : memref<120x64xf32, #tpu.memory_space<vmem>>, vector<18x64xf32>
    %c18_221 = arith.constant 18 : index
    %c64_222 = arith.constant 64 : index
    %144 = vector.load %arg20[%c18_221, %c64_222] : memref<36x576xf32, #tpu.memory_space<vmem>>, vector<18x64xf32>
    tpu.vector_store %arg20[%c18_221, %c64_222], %143 {strides = array<i32>} : memref<36x576xf32, #tpu.memory_space<vmem>>, vector<18x64xf32>,
    %c62 = arith.constant 62 : index
    %c0_223 = arith.constant 0 : index
    %145 = vector.load %arg19[%c62, %c0_223] : memref<120x64xf32, #tpu.memory_space<vmem>>, vector<18x64xf32>
    %c18_224 = arith.constant 18 : index
    %c128_225 = arith.constant 128 : index
    %146 = vector.load %arg20[%c18_224, %c128_225] : memref<36x576xf32, #tpu.memory_space<vmem>>, vector<18x64xf32>
    tpu.vector_store %arg20[%c18_224, %c128_225], %145 {strides = array<i32>} : memref<36x576xf32, #tpu.memory_space<vmem>>, vector<18x64xf32>,
    %c80_226 = arith.constant 80 : index
    %c0_227 = arith.constant 0 : index
    %147 = vector.load %arg19[%c80_226, %c0_227] : memref<120x64xf32, #tpu.memory_space<vmem>>, vector<18x64xf32>
    %c18_228 = arith.constant 18 : index
    %c192_229 = arith.constant 192 : index
    %148 = vector.load %arg20[%c18_228, %c192_229] : memref<36x576xf32, #tpu.memory_space<vmem>>, vector<18x64xf32>
    tpu.vector_store %arg20[%c18_228, %c192_229], %147 {strides = array<i32>} : memref<36x576xf32, #tpu.memory_space<vmem>>, vector<18x64xf32>,
    %c81 = arith.constant 81 : index
    %c0_230 = arith.constant 0 : index
    %149 = vector.load %arg19[%c81, %c0_230] : memref<120x64xf32, #tpu.memory_space<vmem>>, vector<18x64xf32>
    %c18_231 = arith.constant 18 : index
    %c256_232 = arith.constant 256 : index
    %150 = vector.load %arg20[%c18_231, %c256_232] : memref<36x576xf32, #tpu.memory_space<vmem>>, vector<18x64xf32>
    tpu.vector_store %arg20[%c18_231, %c256_232], %149 {strides = array<i32>} : memref<36x576xf32, #tpu.memory_space<vmem>>, vector<18x64xf32>,
    %c82 = arith.constant 82 : index
    %c0_233 = arith.constant 0 : index
    %151 = vector.load %arg19[%c82, %c0_233] : memref<120x64xf32, #tpu.memory_space<vmem>>, vector<18x64xf32>
    %c18_234 = arith.constant 18 : index
    %c320_235 = arith.constant 320 : index
    %152 = vector.load %arg20[%c18_234, %c320_235] : memref<36x576xf32, #tpu.memory_space<vmem>>, vector<18x64xf32>
    tpu.vector_store %arg20[%c18_234, %c320_235], %151 {strides = array<i32>} : memref<36x576xf32, #tpu.memory_space<vmem>>, vector<18x64xf32>,
    %c100_236 = arith.constant 100 : index
    %c0_237 = arith.constant 0 : index
    %153 = vector.load %arg19[%c100_236, %c0_237] : memref<120x64xf32, #tpu.memory_space<vmem>>, vector<18x64xf32>
    %c18_238 = arith.constant 18 : index
    %c384_239 = arith.constant 384 : index
    %154 = vector.load %arg20[%c18_238, %c384_239] : memref<36x576xf32, #tpu.memory_space<vmem>>, vector<18x64xf32>
    tpu.vector_store %arg20[%c18_238, %c384_239], %153 {strides = array<i32>} : memref<36x576xf32, #tpu.memory_space<vmem>>, vector<18x64xf32>,
    %c101 = arith.constant 101 : index
    %c0_240 = arith.constant 0 : index
    %155 = vector.load %arg19[%c101, %c0_240] : memref<120x64xf32, #tpu.memory_space<vmem>>, vector<18x64xf32>
    %c18_241 = arith.constant 18 : index
    %c448_242 = arith.constant 448 : index
    %156 = vector.load %arg20[%c18_241, %c448_242] : memref<36x576xf32, #tpu.memory_space<vmem>>, vector<18x64xf32>
    tpu.vector_store %arg20[%c18_241, %c448_242], %155 {strides = array<i32>} : memref<36x576xf32, #tpu.memory_space<vmem>>, vector<18x64xf32>,
    %c102 = arith.constant 102 : index
    %c0_243 = arith.constant 0 : index
    %157 = vector.load %arg19[%c102, %c0_243] : memref<120x64xf32, #tpu.memory_space<vmem>>, vector<18x64xf32>
    %c18_244 = arith.constant 18 : index
    %c512_245 = arith.constant 512 : index
    %158 = vector.load %arg20[%c18_244, %c512_245] : memref<36x576xf32, #tpu.memory_space<vmem>>, vector<18x64xf32>
    tpu.vector_store %arg20[%c18_244, %c512_245], %157 {strides = array<i32>} : memref<36x576xf32, #tpu.memory_space<vmem>>, vector<18x64xf32>,
    %c0_246 = arith.constant 0 : index
    %c0_247 = arith.constant 0 : index
    %159 = vector.load %arg20[%c0_246, %c0_247] : memref<36x576xf32, #tpu.memory_space<vmem>>, vector<36x576xf32>
    %160 = arith.truncf %159 : vector<36x576xf32> to vector<36x576xbf16>
    %c0_248 = arith.constant 0 : index
    %c0_249 = arith.constant 0 : index
    %161 = vector.load %arg6[%c0_248, %c0_249] : memref<576x64xbf16, #tpu.memory_space<vmem>>, vector<576x64xbf16>
    %cst_250 = arith.constant dense<0.000000e+00> : vector<36x64xf32>
    %162 = tpu.matmul %160, %161, %cst_250 {dimension_numbers = #tpu.dot_dimension_numbers<[1], [0], [0], [1], [0, 0, 1, 1], [], []>} : vector<36x576xbf16>, vector<576x64xbf16>, vector<36x64xf32> -> vector<36x64xf32>
    %c0_251 = arith.constant 0 : index
    %c0_252 = arith.constant 0 : index
    %163 = vector.load %arg7[%c0_251, %c0_252] : memref<1x64xf32, #tpu.memory_space<vmem>>, vector<1x64xf32>
    %164 = vector.broadcast %163 : vector<1x64xf32> to vector<36x64xf32>
    %165 = arith.addf %162, %164 : vector<36x64xf32>
    %c0_253 = arith.constant 0 : index
    %c0_254 = arith.constant 0 : index
    %166 = vector.load %arg21[%c0_253, %c0_254] : memref<36x64xf32, #tpu.memory_space<vmem>>, vector<36x64xf32>
    tpu.vector_store %arg21[%c0_253, %c0_254], %165 {strides = array<i32>} : memref<36x64xf32, #tpu.memory_space<vmem>>, vector<36x64xf32>,
    %c0_255 = arith.constant 0 : index
    %c0_256 = arith.constant 0 : index
    %167 = vector.load %arg21[%c0_255, %c0_256] : memref<36x64xf32, #tpu.memory_space<vmem>>, vector<1x64xf32>
    %c0_257 = arith.constant 0 : index
    %c0_258 = arith.constant 0 : index
    %168 = vector.load %arg22[%c0_257, %c0_258] : memref<2x1152xf32, #tpu.memory_space<vmem>>, vector<1x64xf32>
    tpu.vector_store %arg22[%c0_257, %c0_258], %167 {strides = array<i32>} : memref<2x1152xf32, #tpu.memory_space<vmem>>, vector<1x64xf32>,
    %c1_259 = arith.constant 1 : index
    %c0_260 = arith.constant 0 : index
    %169 = vector.load %arg21[%c1_259, %c0_260] : memref<36x64xf32, #tpu.memory_space<vmem>>, vector<1x64xf32>
    %c0_261 = arith.constant 0 : index
    %c64_262 = arith.constant 64 : index
    %170 = vector.load %arg22[%c0_261, %c64_262] : memref<2x1152xf32, #tpu.memory_space<vmem>>, vector<1x64xf32>
    tpu.vector_store %arg22[%c0_261, %c64_262], %169 {strides = array<i32>} : memref<2x1152xf32, #tpu.memory_space<vmem>>, vector<1x64xf32>,
    %c2_263 = arith.constant 2 : index
    %c0_264 = arith.constant 0 : index
    %171 = vector.load %arg21[%c2_263, %c0_264] : memref<36x64xf32, #tpu.memory_space<vmem>>, vector<1x64xf32>
    %c0_265 = arith.constant 0 : index
    %c128_266 = arith.constant 128 : index
    %172 = vector.load %arg22[%c0_265, %c128_266] : memref<2x1152xf32, #tpu.memory_space<vmem>>, vector<1x64xf32>
    tpu.vector_store %arg22[%c0_265, %c128_266], %171 {strides = array<i32>} : memref<2x1152xf32, #tpu.memory_space<vmem>>, vector<1x64xf32>,
    %c3 = arith.constant 3 : index
    %c0_267 = arith.constant 0 : index
    %173 = vector.load %arg21[%c3, %c0_267] : memref<36x64xf32, #tpu.memory_space<vmem>>, vector<1x64xf32>
    %c0_268 = arith.constant 0 : index
    %c192_269 = arith.constant 192 : index
    %174 = vector.load %arg22[%c0_268, %c192_269] : memref<2x1152xf32, #tpu.memory_space<vmem>>, vector<1x64xf32>
    tpu.vector_store %arg22[%c0_268, %c192_269], %173 {strides = array<i32>} : memref<2x1152xf32, #tpu.memory_space<vmem>>, vector<1x64xf32>,
    %c4 = arith.constant 4 : index
    %c0_270 = arith.constant 0 : index
    %175 = vector.load %arg21[%c4, %c0_270] : memref<36x64xf32, #tpu.memory_space<vmem>>, vector<1x64xf32>
    %c0_271 = arith.constant 0 : index
    %c256_272 = arith.constant 256 : index
    %176 = vector.load %arg22[%c0_271, %c256_272] : memref<2x1152xf32, #tpu.memory_space<vmem>>, vector<1x64xf32>
    tpu.vector_store %arg22[%c0_271, %c256_272], %175 {strides = array<i32>} : memref<2x1152xf32, #tpu.memory_space<vmem>>, vector<1x64xf32>,
    %c5 = arith.constant 5 : index
    %c0_273 = arith.constant 0 : index
    %177 = vector.load %arg21[%c5, %c0_273] : memref<36x64xf32, #tpu.memory_space<vmem>>, vector<1x64xf32>
    %c0_274 = arith.constant 0 : index
    %c320_275 = arith.constant 320 : index
    %178 = vector.load %arg22[%c0_274, %c320_275] : memref<2x1152xf32, #tpu.memory_space<vmem>>, vector<1x64xf32>
    tpu.vector_store %arg22[%c0_274, %c320_275], %177 {strides = array<i32>} : memref<2x1152xf32, #tpu.memory_space<vmem>>, vector<1x64xf32>,
    %c6 = arith.constant 6 : index
    %c0_276 = arith.constant 0 : index
    %179 = vector.load %arg21[%c6, %c0_276] : memref<36x64xf32, #tpu.memory_space<vmem>>, vector<1x64xf32>
    %c0_277 = arith.constant 0 : index
    %c384_278 = arith.constant 384 : index
    %180 = vector.load %arg22[%c0_277, %c384_278] : memref<2x1152xf32, #tpu.memory_space<vmem>>, vector<1x64xf32>
    tpu.vector_store %arg22[%c0_277, %c384_278], %179 {strides = array<i32>} : memref<2x1152xf32, #tpu.memory_space<vmem>>, vector<1x64xf32>,
    %c7 = arith.constant 7 : index
    %c0_279 = arith.constant 0 : index
    %181 = vector.load %arg21[%c7, %c0_279] : memref<36x64xf32, #tpu.memory_space<vmem>>, vector<1x64xf32>
    %c0_280 = arith.constant 0 : index
    %c448_281 = arith.constant 448 : index
    %182 = vector.load %arg22[%c0_280, %c448_281] : memref<2x1152xf32, #tpu.memory_space<vmem>>, vector<1x64xf32>
    tpu.vector_store %arg22[%c0_280, %c448_281], %181 {strides = array<i32>} : memref<2x1152xf32, #tpu.memory_space<vmem>>, vector<1x64xf32>,
    %c8 = arith.constant 8 : index
    %c0_282 = arith.constant 0 : index
    %183 = vector.load %arg21[%c8, %c0_282] : memref<36x64xf32, #tpu.memory_space<vmem>>, vector<1x64xf32>
    %c0_283 = arith.constant 0 : index
    %c512_284 = arith.constant 512 : index
    %184 = vector.load %arg22[%c0_283, %c512_284] : memref<2x1152xf32, #tpu.memory_space<vmem>>, vector<1x64xf32>
    tpu.vector_store %arg22[%c0_283, %c512_284], %183 {strides = array<i32>} : memref<2x1152xf32, #tpu.memory_space<vmem>>, vector<1x64xf32>,
    %c9 = arith.constant 9 : index
    %c0_285 = arith.constant 0 : index
    %185 = vector.load %arg21[%c9, %c0_285] : memref<36x64xf32, #tpu.memory_space<vmem>>, vector<1x64xf32>
    %c0_286 = arith.constant 0 : index
    %c576 = arith.constant 576 : index
    %186 = vector.load %arg22[%c0_286, %c576] : memref<2x1152xf32, #tpu.memory_space<vmem>>, vector<1x64xf32>
    tpu.vector_store %arg22[%c0_286, %c576], %185 {strides = array<i32>} : memref<2x1152xf32, #tpu.memory_space<vmem>>, vector<1x64xf32>,
    %c10 = arith.constant 10 : index
    %c0_287 = arith.constant 0 : index
    %187 = vector.load %arg21[%c10, %c0_287] : memref<36x64xf32, #tpu.memory_space<vmem>>, vector<1x64xf32>
    %c0_288 = arith.constant 0 : index
    %c640 = arith.constant 640 : index
    %188 = vector.load %arg22[%c0_288, %c640] : memref<2x1152xf32, #tpu.memory_space<vmem>>, vector<1x64xf32>
    tpu.vector_store %arg22[%c0_288, %c640], %187 {strides = array<i32>} : memref<2x1152xf32, #tpu.memory_space<vmem>>, vector<1x64xf32>,
    %c11 = arith.constant 11 : index
    %c0_289 = arith.constant 0 : index
    %189 = vector.load %arg21[%c11, %c0_289] : memref<36x64xf32, #tpu.memory_space<vmem>>, vector<1x64xf32>
    %c0_290 = arith.constant 0 : index
    %c704 = arith.constant 704 : index
    %190 = vector.load %arg22[%c0_290, %c704] : memref<2x1152xf32, #tpu.memory_space<vmem>>, vector<1x64xf32>
    tpu.vector_store %arg22[%c0_290, %c704], %189 {strides = array<i32>} : memref<2x1152xf32, #tpu.memory_space<vmem>>, vector<1x64xf32>,
    %c12 = arith.constant 12 : index
    %c0_291 = arith.constant 0 : index
    %191 = vector.load %arg21[%c12, %c0_291] : memref<36x64xf32, #tpu.memory_space<vmem>>, vector<1x64xf32>
    %c0_292 = arith.constant 0 : index
    %c768 = arith.constant 768 : index
    %192 = vector.load %arg22[%c0_292, %c768] : memref<2x1152xf32, #tpu.memory_space<vmem>>, vector<1x64xf32>
    tpu.vector_store %arg22[%c0_292, %c768], %191 {strides = array<i32>} : memref<2x1152xf32, #tpu.memory_space<vmem>>, vector<1x64xf32>,
    %c13 = arith.constant 13 : index
    %c0_293 = arith.constant 0 : index
    %193 = vector.load %arg21[%c13, %c0_293] : memref<36x64xf32, #tpu.memory_space<vmem>>, vector<1x64xf32>
    %c0_294 = arith.constant 0 : index
    %c832 = arith.constant 832 : index
    %194 = vector.load %arg22[%c0_294, %c832] : memref<2x1152xf32, #tpu.memory_space<vmem>>, vector<1x64xf32>
    tpu.vector_store %arg22[%c0_294, %c832], %193 {strides = array<i32>} : memref<2x1152xf32, #tpu.memory_space<vmem>>, vector<1x64xf32>,
    %c14 = arith.constant 14 : index
    %c0_295 = arith.constant 0 : index
    %195 = vector.load %arg21[%c14, %c0_295] : memref<36x64xf32, #tpu.memory_space<vmem>>, vector<1x64xf32>
    %c0_296 = arith.constant 0 : index
    %c896 = arith.constant 896 : index
    %196 = vector.load %arg22[%c0_296, %c896] : memref<2x1152xf32, #tpu.memory_space<vmem>>, vector<1x64xf32>
    tpu.vector_store %arg22[%c0_296, %c896], %195 {strides = array<i32>} : memref<2x1152xf32, #tpu.memory_space<vmem>>, vector<1x64xf32>,
    %c15 = arith.constant 15 : index
    %c0_297 = arith.constant 0 : index
    %197 = vector.load %arg21[%c15, %c0_297] : memref<36x64xf32, #tpu.memory_space<vmem>>, vector<1x64xf32>
    %c0_298 = arith.constant 0 : index
    %c960 = arith.constant 960 : index
    %198 = vector.load %arg22[%c0_298, %c960] : memref<2x1152xf32, #tpu.memory_space<vmem>>, vector<1x64xf32>
    tpu.vector_store %arg22[%c0_298, %c960], %197 {strides = array<i32>} : memref<2x1152xf32, #tpu.memory_space<vmem>>, vector<1x64xf32>,
    %c16 = arith.constant 16 : index
    %c0_299 = arith.constant 0 : index
    %199 = vector.load %arg21[%c16, %c0_299] : memref<36x64xf32, #tpu.memory_space<vmem>>, vector<1x64xf32>
    %c0_300 = arith.constant 0 : index
    %c1024 = arith.constant 1024 : index
    %200 = vector.load %arg22[%c0_300, %c1024] : memref<2x1152xf32, #tpu.memory_space<vmem>>, vector<1x64xf32>
    tpu.vector_store %arg22[%c0_300, %c1024], %199 {strides = array<i32>} : memref<2x1152xf32, #tpu.memory_space<vmem>>, vector<1x64xf32>,
    %c17 = arith.constant 17 : index
    %c0_301 = arith.constant 0 : index
    %201 = vector.load %arg21[%c17, %c0_301] : memref<36x64xf32, #tpu.memory_space<vmem>>, vector<1x64xf32>
    %c0_302 = arith.constant 0 : index
    %c1088 = arith.constant 1088 : index
    %202 = vector.load %arg22[%c0_302, %c1088] : memref<2x1152xf32, #tpu.memory_space<vmem>>, vector<1x64xf32>
    tpu.vector_store %arg22[%c0_302, %c1088], %201 {strides = array<i32>} : memref<2x1152xf32, #tpu.memory_space<vmem>>, vector<1x64xf32>,
    %c18_303 = arith.constant 18 : index
    %c0_304 = arith.constant 0 : index
    %203 = vector.load %arg21[%c18_303, %c0_304] : memref<36x64xf32, #tpu.memory_space<vmem>>, vector<1x64xf32>
    %c1_305 = arith.constant 1 : index
    %c0_306 = arith.constant 0 : index
    %204 = vector.load %arg22[%c1_305, %c0_306] : memref<2x1152xf32, #tpu.memory_space<vmem>>, vector<1x64xf32>
    tpu.vector_store %arg22[%c1_305, %c0_306], %203 {strides = array<i32>} : memref<2x1152xf32, #tpu.memory_space<vmem>>, vector<1x64xf32>,
    %c19 = arith.constant 19 : index
    %c0_307 = arith.constant 0 : index
    %205 = vector.load %arg21[%c19, %c0_307] : memref<36x64xf32, #tpu.memory_space<vmem>>, vector<1x64xf32>
    %c1_308 = arith.constant 1 : index
    %c64_309 = arith.constant 64 : index
    %206 = vector.load %arg22[%c1_308, %c64_309] : memref<2x1152xf32, #tpu.memory_space<vmem>>, vector<1x64xf32>
    tpu.vector_store %arg22[%c1_308, %c64_309], %205 {strides = array<i32>} : memref<2x1152xf32, #tpu.memory_space<vmem>>, vector<1x64xf32>,
    %c20_310 = arith.constant 20 : index
    %c0_311 = arith.constant 0 : index
    %207 = vector.load %arg21[%c20_310, %c0_311] : memref<36x64xf32, #tpu.memory_space<vmem>>, vector<1x64xf32>
    %c1_312 = arith.constant 1 : index
    %c128_313 = arith.constant 128 : index
    %208 = vector.load %arg22[%c1_312, %c128_313] : memref<2x1152xf32, #tpu.memory_space<vmem>>, vector<1x64xf32>
    tpu.vector_store %arg22[%c1_312, %c128_313], %207 {strides = array<i32>} : memref<2x1152xf32, #tpu.memory_space<vmem>>, vector<1x64xf32>,
    %c21_314 = arith.constant 21 : index
    %c0_315 = arith.constant 0 : index
    %209 = vector.load %arg21[%c21_314, %c0_315] : memref<36x64xf32, #tpu.memory_space<vmem>>, vector<1x64xf32>
    %c1_316 = arith.constant 1 : index
    %c192_317 = arith.constant 192 : index
    %210 = vector.load %arg22[%c1_316, %c192_317] : memref<2x1152xf32, #tpu.memory_space<vmem>>, vector<1x64xf32>
    tpu.vector_store %arg22[%c1_316, %c192_317], %209 {strides = array<i32>} : memref<2x1152xf32, #tpu.memory_space<vmem>>, vector<1x64xf32>,
    %c22_318 = arith.constant 22 : index
    %c0_319 = arith.constant 0 : index
    %211 = vector.load %arg21[%c22_318, %c0_319] : memref<36x64xf32, #tpu.memory_space<vmem>>, vector<1x64xf32>
    %c1_320 = arith.constant 1 : index
    %c256_321 = arith.constant 256 : index
    %212 = vector.load %arg22[%c1_320, %c256_321] : memref<2x1152xf32, #tpu.memory_space<vmem>>, vector<1x64xf32>
    tpu.vector_store %arg22[%c1_320, %c256_321], %211 {strides = array<i32>} : memref<2x1152xf32, #tpu.memory_space<vmem>>, vector<1x64xf32>,
    %c23_322 = arith.constant 23 : index
    %c0_323 = arith.constant 0 : index
    %213 = vector.load %arg21[%c23_322, %c0_323] : memref<36x64xf32, #tpu.memory_space<vmem>>, vector<1x64xf32>
    %c1_324 = arith.constant 1 : index
    %c320_325 = arith.constant 320 : index
    %214 = vector.load %arg22[%c1_324, %c320_325] : memref<2x1152xf32, #tpu.memory_space<vmem>>, vector<1x64xf32>
    tpu.vector_store %arg22[%c1_324, %c320_325], %213 {strides = array<i32>} : memref<2x1152xf32, #tpu.memory_space<vmem>>, vector<1x64xf32>,
    %c24_326 = arith.constant 24 : index
    %c0_327 = arith.constant 0 : index
    %215 = vector.load %arg21[%c24_326, %c0_327] : memref<36x64xf32, #tpu.memory_space<vmem>>, vector<1x64xf32>
    %c1_328 = arith.constant 1 : index
    %c384_329 = arith.constant 384 : index
    %216 = vector.load %arg22[%c1_328, %c384_329] : memref<2x1152xf32, #tpu.memory_space<vmem>>, vector<1x64xf32>
    tpu.vector_store %arg22[%c1_328, %c384_329], %215 {strides = array<i32>} : memref<2x1152xf32, #tpu.memory_space<vmem>>, vector<1x64xf32>,
    %c25 = arith.constant 25 : index
    %c0_330 = arith.constant 0 : index
    %217 = vector.load %arg21[%c25, %c0_330] : memref<36x64xf32, #tpu.memory_space<vmem>>, vector<1x64xf32>
    %c1_331 = arith.constant 1 : index
    %c448_332 = arith.constant 448 : index
    %218 = vector.load %arg22[%c1_331, %c448_332] : memref<2x1152xf32, #tpu.memory_space<vmem>>, vector<1x64xf32>
    tpu.vector_store %arg22[%c1_331, %c448_332], %217 {strides = array<i32>} : memref<2x1152xf32, #tpu.memory_space<vmem>>, vector<1x64xf32>,
    %c26 = arith.constant 26 : index
    %c0_333 = arith.constant 0 : index
    %219 = vector.load %arg21[%c26, %c0_333] : memref<36x64xf32, #tpu.memory_space<vmem>>, vector<1x64xf32>
    %c1_334 = arith.constant 1 : index
    %c512_335 = arith.constant 512 : index
    %220 = vector.load %arg22[%c1_334, %c512_335] : memref<2x1152xf32, #tpu.memory_space<vmem>>, vector<1x64xf32>
    tpu.vector_store %arg22[%c1_334, %c512_335], %219 {strides = array<i32>} : memref<2x1152xf32, #tpu.memory_space<vmem>>, vector<1x64xf32>,
    %c27 = arith.constant 27 : index
    %c0_336 = arith.constant 0 : index
    %221 = vector.load %arg21[%c27, %c0_336] : memref<36x64xf32, #tpu.memory_space<vmem>>, vector<1x64xf32>
    %c1_337 = arith.constant 1 : index
    %c576_338 = arith.constant 576 : index
    %222 = vector.load %arg22[%c1_337, %c576_338] : memref<2x1152xf32, #tpu.memory_space<vmem>>, vector<1x64xf32>
    tpu.vector_store %arg22[%c1_337, %c576_338], %221 {strides = array<i32>} : memref<2x1152xf32, #tpu.memory_space<vmem>>, vector<1x64xf32>,
    %c28 = arith.constant 28 : index
    %c0_339 = arith.constant 0 : index
    %223 = vector.load %arg21[%c28, %c0_339] : memref<36x64xf32, #tpu.memory_space<vmem>>, vector<1x64xf32>
    %c1_340 = arith.constant 1 : index
    %c640_341 = arith.constant 640 : index
    %224 = vector.load %arg22[%c1_340, %c640_341] : memref<2x1152xf32, #tpu.memory_space<vmem>>, vector<1x64xf32>
    tpu.vector_store %arg22[%c1_340, %c640_341], %223 {strides = array<i32>} : memref<2x1152xf32, #tpu.memory_space<vmem>>, vector<1x64xf32>,
    %c29 = arith.constant 29 : index
    %c0_342 = arith.constant 0 : index
    %225 = vector.load %arg21[%c29, %c0_342] : memref<36x64xf32, #tpu.memory_space<vmem>>, vector<1x64xf32>
    %c1_343 = arith.constant 1 : index
    %c704_344 = arith.constant 704 : index
    %226 = vector.load %arg22[%c1_343, %c704_344] : memref<2x1152xf32, #tpu.memory_space<vmem>>, vector<1x64xf32>
    tpu.vector_store %arg22[%c1_343, %c704_344], %225 {strides = array<i32>} : memref<2x1152xf32, #tpu.memory_space<vmem>>, vector<1x64xf32>,
    %c30 = arith.constant 30 : index
    %c0_345 = arith.constant 0 : index
    %227 = vector.load %arg21[%c30, %c0_345] : memref<36x64xf32, #tpu.memory_space<vmem>>, vector<1x64xf32>
    %c1_346 = arith.constant 1 : index
    %c768_347 = arith.constant 768 : index
    %228 = vector.load %arg22[%c1_346, %c768_347] : memref<2x1152xf32, #tpu.memory_space<vmem>>, vector<1x64xf32>
    tpu.vector_store %arg22[%c1_346, %c768_347], %227 {strides = array<i32>} : memref<2x1152xf32, #tpu.memory_space<vmem>>, vector<1x64xf32>,
    %c31 = arith.constant 31 : index
    %c0_348 = arith.constant 0 : index
    %229 = vector.load %arg21[%c31, %c0_348] : memref<36x64xf32, #tpu.memory_space<vmem>>, vector<1x64xf32>
    %c1_349 = arith.constant 1 : index
    %c832_350 = arith.constant 832 : index
    %230 = vector.load %arg22[%c1_349, %c832_350] : memref<2x1152xf32, #tpu.memory_space<vmem>>, vector<1x64xf32>
    tpu.vector_store %arg22[%c1_349, %c832_350], %229 {strides = array<i32>} : memref<2x1152xf32, #tpu.memory_space<vmem>>, vector<1x64xf32>,
    %c32 = arith.constant 32 : index
    %c0_351 = arith.constant 0 : index
    %231 = vector.load %arg21[%c32, %c0_351] : memref<36x64xf32, #tpu.memory_space<vmem>>, vector<1x64xf32>
    %c1_352 = arith.constant 1 : index
    %c896_353 = arith.constant 896 : index
    %232 = vector.load %arg22[%c1_352, %c896_353] : memref<2x1152xf32, #tpu.memory_space<vmem>>, vector<1x64xf32>
    tpu.vector_store %arg22[%c1_352, %c896_353], %231 {strides = array<i32>} : memref<2x1152xf32, #tpu.memory_space<vmem>>, vector<1x64xf32>,
    %c33 = arith.constant 33 : index
    %c0_354 = arith.constant 0 : index
    %233 = vector.load %arg21[%c33, %c0_354] : memref<36x64xf32, #tpu.memory_space<vmem>>, vector<1x64xf32>
    %c1_355 = arith.constant 1 : index
    %c960_356 = arith.constant 960 : index
    %234 = vector.load %arg22[%c1_355, %c960_356] : memref<2x1152xf32, #tpu.memory_space<vmem>>, vector<1x64xf32>
    tpu.vector_store %arg22[%c1_355, %c960_356], %233 {strides = array<i32>} : memref<2x1152xf32, #tpu.memory_space<vmem>>, vector<1x64xf32>,
    %c34 = arith.constant 34 : index
    %c0_357 = arith.constant 0 : index
    %235 = vector.load %arg21[%c34, %c0_357] : memref<36x64xf32, #tpu.memory_space<vmem>>, vector<1x64xf32>
    %c1_358 = arith.constant 1 : index
    %c1024_359 = arith.constant 1024 : index
    %236 = vector.load %arg22[%c1_358, %c1024_359] : memref<2x1152xf32, #tpu.memory_space<vmem>>, vector<1x64xf32>
    tpu.vector_store %arg22[%c1_358, %c1024_359], %235 {strides = array<i32>} : memref<2x1152xf32, #tpu.memory_space<vmem>>, vector<1x64xf32>,
    %c35 = arith.constant 35 : index
    %c0_360 = arith.constant 0 : index
    %237 = vector.load %arg21[%c35, %c0_360] : memref<36x64xf32, #tpu.memory_space<vmem>>, vector<1x64xf32>
    %c1_361 = arith.constant 1 : index
    %c1088_362 = arith.constant 1088 : index
    %238 = vector.load %arg22[%c1_361, %c1088_362] : memref<2x1152xf32, #tpu.memory_space<vmem>>, vector<1x64xf32>
    tpu.vector_store %arg22[%c1_361, %c1088_362], %237 {strides = array<i32>} : memref<2x1152xf32, #tpu.memory_space<vmem>>, vector<1x64xf32>,
    %c0_363 = arith.constant 0 : index
    %c0_364 = arith.constant 0 : index
    %239 = vector.load %arg22[%c0_363, %c0_364] : memref<2x1152xf32, #tpu.memory_space<vmem>>, vector<2x1152xf32>
    %240 = arith.truncf %239 : vector<2x1152xf32> to vector<2x1152xbf16>
    %c0_365 = arith.constant 0 : index
    %c0_366 = arith.constant 0 : index
    %241 = vector.load %arg8[%c0_365, %c0_366] : memref<1152x100xbf16, #tpu.memory_space<vmem>>, vector<1152x100xbf16>
    %cst_367 = arith.constant dense<0.000000e+00> : vector<2x100xf32>
    %242 = tpu.matmul %240, %241, %cst_367 {dimension_numbers = #tpu.dot_dimension_numbers<[1], [0], [0], [1], [0, 0, 1, 1], [], []>} : vector<2x1152xbf16>, vector<1152x100xbf16>, vector<2x100xf32> -> vector<2x100xf32>
    %c0_368 = arith.constant 0 : index
    %c0_369 = arith.constant 0 : index
    %243 = vector.load %arg9[%c0_368, %c0_369] : memref<1x100xf32, #tpu.memory_space<vmem>>, vector<1x100xf32>
    %244 = vector.broadcast %243 : vector<1x100xf32> to vector<2x100xf32>
    %245 = arith.addf %242, %244 : vector<2x100xf32>
    %246 = arith.truncf %245 : vector<2x100xf32> to vector<2x100xbf16>
    %c0_370 = arith.constant 0 : index
    %c0_371 = arith.constant 0 : index
    %247 = vector.load %arg10[%c0_370, %c0_371] : memref<100x50xbf16, #tpu.memory_space<vmem>>, vector<100x50xbf16>
    %cst_372 = arith.constant dense<0.000000e+00> : vector<2x50xf32>
    %248 = tpu.matmul %246, %247, %cst_372 {dimension_numbers = #tpu.dot_dimension_numbers<[1], [0], [0], [1], [0, 0, 1, 1], [], []>} : vector<2x100xbf16>, vector<100x50xbf16>, vector<2x50xf32> -> vector<2x50xf32>
    %c0_373 = arith.constant 0 : index
    %c0_374 = arith.constant 0 : index
    %249 = vector.load %arg11[%c0_373, %c0_374] : memref<1x50xf32, #tpu.memory_space<vmem>>, vector<1x50xf32>
    %250 = vector.broadcast %249 : vector<1x50xf32> to vector<2x50xf32>
    %251 = arith.addf %248, %250 : vector<2x50xf32>
    %252 = arith.truncf %251 : vector<2x50xf32> to vector<2x50xbf16>
    %c0_375 = arith.constant 0 : index
    %c0_376 = arith.constant 0 : index
    %253 = vector.load %arg12[%c0_375, %c0_376] : memref<50x10xbf16, #tpu.memory_space<vmem>>, vector<50x10xbf16>
    %cst_377 = arith.constant dense<0.000000e+00> : vector<2x10xf32>
    %254 = tpu.matmul %252, %253, %cst_377 {dimension_numbers = #tpu.dot_dimension_numbers<[1], [0], [0], [1], [0, 0, 1, 1], [], []>} : vector<2x50xbf16>, vector<50x10xbf16>, vector<2x10xf32> -> vector<2x10xf32>
    %c0_378 = arith.constant 0 : index
    %c0_379 = arith.constant 0 : index
    %255 = vector.load %arg13[%c0_378, %c0_379] : memref<1x10xf32, #tpu.memory_space<vmem>>, vector<1x10xf32>
    %256 = vector.broadcast %255 : vector<1x10xf32> to vector<2x10xf32>
    %257 = arith.addf %254, %256 : vector<2x10xf32>
    %258 = arith.truncf %257 : vector<2x10xf32> to vector<2x10xbf16>
    %c0_380 = arith.constant 0 : index
    %c0_381 = arith.constant 0 : index
    %259 = vector.load %arg14[%c0_380, %c0_381] : memref<10x128xbf16, #tpu.memory_space<vmem>>, vector<10x128xbf16>
    %cst_382 = arith.constant dense<0.000000e+00> : vector<2x128xf32>
    %260 = tpu.matmul %258, %259, %cst_382 {dimension_numbers = #tpu.dot_dimension_numbers<[1], [0], [0], [1], [0, 0, 1, 1], [], []>} : vector<2x10xbf16>, vector<10x128xbf16>, vector<2x128xf32> -> vector<2x128xf32>
    %c0_383 = arith.constant 0 : index
    %c0_384 = arith.constant 0 : index
    %261 = vector.load %arg15[%c0_383, %c0_384] : memref<1x128xf32, #tpu.memory_space<vmem>>, vector<1x128xf32>
    %262 = vector.broadcast %261 : vector<1x128xf32> to vector<2x128xf32>
    %263 = arith.addf %260, %262 : vector<2x128xf32>
    %c0_385 = arith.constant 0 : index
    %c0_386 = arith.constant 0 : index
    %264 = vector.load %arg16[%c0_385, %c0_386] : memref<2x128xf32, #tpu.memory_space<vmem>>, vector<2x128xf32>
    tpu.vector_store %arg16[%c0_385, %c0_386], %263 {strides = array<i32>} : memref<2x128xf32, #tpu.memory_space<vmem>>, vector<2x128xf32>,
    return
  }
  func.func @transform_0(%arg0: i32) -> (i32, i32) {
    %c0_i32 = arith.constant 0 : i32
    %c0_i32_0 = arith.constant 0 : i32
    %c0_i32_1 = arith.constant 0 : i32
    return %c0_i32, %c0_i32_0 : i32, i32
  }
  func.func @transform_1(%arg0: i32) -> (i32, i32) {
    %c0_i32 = arith.constant 0 : i32
    %c0_i32_0 = arith.constant 0 : i32
    %c0_i32_1 = arith.constant 0 : i32
    return %c0_i32, %c0_i32_0 : i32, i32
  }
  func.func @transform_2(%arg0: i32) -> (i32, i32) {
    %c0_i32 = arith.constant 0 : i32
    %c0_i32_0 = arith.constant 0 : i32
    %c0_i32_1 = arith.constant 0 : i32
    return %c0_i32, %c0_i32_0 : i32, i32
  }
  func.func @transform_3(%arg0: i32) -> (i32, i32) {
    %c0_i32 = arith.constant 0 : i32
    %c0_i32_0 = arith.constant 0 : i32
    %c0_i32_1 = arith.constant 0 : i32
    return %c0_i32, %c0_i32_0 : i32, i32
  }
  func.func @transform_4(%arg0: i32) -> (i32, i32) {
    %c0_i32 = arith.constant 0 : i32
    %c0_i32_0 = arith.constant 0 : i32
    %c0_i32_1 = arith.constant 0 : i32
    return %c0_i32, %c0_i32_0 : i32, i32
  }
  func.func @transform_5(%arg0: i32) -> (i32, i32) {
    %c0_i32 = arith.constant 0 : i32
    %c0_i32_0 = arith.constant 0 : i32
    %c0_i32_1 = arith.constant 0 : i32
    return %c0_i32, %c0_i32_0 : i32, i32
  }
  func.func @transform_6(%arg0: i32) -> (i32, i32) {
    %c0_i32 = arith.constant 0 : i32
    %c0_i32_0 = arith.constant 0 : i32
    %c0_i32_1 = arith.constant 0 : i32
    return %c0_i32, %c0_i32_0 : i32, i32
  }
  func.func @transform_7(%arg0: i32) -> (i32, i32) {
    %c0_i32 = arith.constant 0 : i32
    %c0_i32_0 = arith.constant 0 : i32
    %c0_i32_1 = arith.constant 0 : i32
    return %c0_i32, %c0_i32_0 : i32, i32
  }
  func.func @transform_8(%arg0: i32) -> (i32, i32) {
    %c0_i32 = arith.constant 0 : i32
    %c0_i32_0 = arith.constant 0 : i32
    %c0_i32_1 = arith.constant 0 : i32
    return %c0_i32, %c0_i32_0 : i32, i32
  }
  func.func @transform_9(%arg0: i32) -> (i32, i32) {
    %c0_i32 = arith.constant 0 : i32
    %c0_i32_0 = arith.constant 0 : i32
    %c0_i32_1 = arith.constant 0 : i32
    return %c0_i32, %c0_i32_0 : i32, i32
  }
  func.func @transform_10(%arg0: i32) -> (i32, i32) {
    %c0_i32 = arith.constant 0 : i32
    %c0_i32_0 = arith.constant 0 : i32
    %c0_i32_1 = arith.constant 0 : i32
    return %c0_i32, %c0_i32_0 : i32, i32
  }
  func.func @transform_11(%arg0: i32) -> (i32, i32) {
    %c0_i32 = arith.constant 0 : i32
    %c0_i32_0 = arith.constant 0 : i32
    %c0_i32_1 = arith.constant 0 : i32
    return %c0_i32, %c0_i32_0 : i32, i32
  }
  func.func @transform_12(%arg0: i32) -> (i32, i32) {
    %c0_i32 = arith.constant 0 : i32
    %c0_i32_0 = arith.constant 0 : i32
    %c0_i32_1 = arith.constant 0 : i32
    return %c0_i32, %c0_i32_0 : i32, i32
  }
  func.func @transform_13(%arg0: i32) -> (i32, i32) {
    %c0_i32 = arith.constant 0 : i32
    %c0_i32_0 = arith.constant 0 : i32
    %c0_i32_1 = arith.constant 0 : i32
    return %c0_i32, %c0_i32_0 : i32, i32
  }
  func.func @transform_14(%arg0: i32) -> (i32, i32) {
    %c0_i32 = arith.constant 0 : i32
    %c0_i32_0 = arith.constant 0 : i32
    %c0_i32_1 = arith.constant 0 : i32
    return %c0_i32, %c0_i32_0 : i32, i32
  }
  func.func @transform_15(%arg0: i32) -> (i32, i32) {
    %c0_i32 = arith.constant 0 : i32
    %c0_i32_0 = arith.constant 0 : i32
    %c0_i32_1 = arith.constant 0 : i32
    return %c0_i32, %c0_i32_0 : i32, i32
  }
}

</mosaic_0001>

<llo_original>
// kernel: pilotnet_forward.3
$region0: #{pilotnet_forward.3}
  #allocation0 [shape = 'u32[]', space=smem, size = 0x4, offset = 0x4, fixed_abs, tag = 'smem constant byte address 0x4 - core index']
  #allocation1 [shape = 'u32[144,128]{1,0:T(1,128)}', space=vmem, size = 0x12000, scoped, tag = 'internal scratch']
  %s0 = inlined_call_operand.vmem [shape: bf16[6144,80], index: 0, kind: input, shape index: {}]
  %s1 = inlined_call_operand.vmem [shape: bf16[80,24], index: 1, kind: input, shape index: {}]
  %s2 = inlined_call_operand.vmem [shape: f32[1,24], index: 2, kind: input, shape index: {}]
  %s3 = inlined_call_operand.vmem [shape: bf16[6144,24], index: 3, kind: output, shape index: {}]
  %s4 = sld [smem:[#allocation0]]
  $region45: #{pilotnet_forward.3} parent=0
    _
  %s6 = ssub.s32 1, %s4
  %s7 = scalar_select 0, %s6, %s4
  loop: start=0, step=1, limit=8
  $region2: #{pilotnet_forward.3} parent=0 // loop_pre_header
    _
  $region3: #{pilotnet_forward.3} parent=0 // loop_header
    %s9 = sphi 0, %s13
    %p10 = scmp.ge.s32.totalorder %s9, 8
    %s19 = sphi 0, %s21
    %s22 = sphi 0, %s19
    %s23 = sphi 0, %s22
    %s39 = sphi 0, %s23
    %s43 = sphi 0, %s43
    %s45 = sphi 0, %s43
    %s46 = sphi 0, %s45
    %s60 = sphi 0, %s46
    %s64 = sphi 0, %s64
    %s66 = sphi 0, %s64
    %s67 = sphi 0, %s66
    %s81 = sphi 0, %s67
    %s87 = sphi 0, %s89
    %s90 = sphi 0, %s87
    %s91 = sphi 0, %s90
    %s107 = sphi 0, %s91
  $region4: #{pilotnet_forward.3} parent=0 // loop_header_branch
    %12 = sbr.rel (%p10) target = $region8
  $region5: #{pilotnet_forward.3} parent=0 // loop_body
    %s14 = ssub.s32 %s9, 1
    %s15 = ssub.s32 %s9, 2
    %s16 = sadd.s32 %s9, 1
    %s17 = ssub.s32 %s9, %s16
    %p18 = scmp.eq.s32.totalorder %s17, 0
    %s20 = sadd.s32 %s19, 1
    %s21 = scalar_select %p18, %s19, %s20
    %p24 = pneg %p18
    %p25 = scmp.eq.s32.totalorder %s9, 5
    %p26 = por %p24, %p25
    %p27 = scmp.ne.s32.totalorder %s19, %s22
    %p28 = scmp.eq.s32.totalorder %s9, 0
    %p29 = por %p27, %p28
    %p30 = scmp.ne.s32.totalorder %s19, %s22
    %p31 = scmp.eq.s32.totalorder %s14, 5
    %p32 = por %p30, %p31
    %p33 = scmp.ne.s32.totalorder %s22, %s23
    %p34 = scmp.eq.s32.totalorder %s14, 0
    %p35 = por %p33, %p34
    %p36 = scmp.ne.s32.totalorder %s22, %s23
    %p37 = scmp.eq.s32.totalorder %s15, 5
    %p38 = por %p36, %p37
    %p40 = scmp.ne.s32.totalorder %s23, %s39
    %p41 = scmp.eq.s32.totalorder %s15, 0
    %p42 = por %p40, %p41
    %s44 = sadd.s32 %s43, 1
    %p47 = scmp.eq.s32.totalorder %s9, 5
    %p48 = scmp.ne.s32.totalorder %s43, %s45
    %p49 = scmp.eq.s32.totalorder %s9, 0
    %p50 = por %p48, %p49
    %p51 = scmp.ne.s32.totalorder %s43, %s45
    %p52 = scmp.eq.s32.totalorder %s14, 5
    %p53 = por %p51, %p52
    %p54 = scmp.ne.s32.totalorder %s45, %s46
    %p55 = scmp.eq.s32.totalorder %s14, 0
    %p56 = por %p54, %p55
    %p57 = scmp.ne.s32.totalorder %s45, %s46
    %p58 = scmp.eq.s32.totalorder %s15, 5
    %p59 = por %p57, %p58
    %p61 = scmp.ne.s32.totalorder %s46, %s60
    %p62 = scmp.eq.s32.totalorder %s15, 0
    %p63 = por %p61, %p62
    %s65 = sadd.s32 %s64, 1
    %p68 = scmp.eq.s32.totalorder %s9, 5
    %p69 = scmp.ne.s32.totalorder %s64, %s66
    %p70 = scmp.eq.s32.totalorder %s9, 0
    %p71 = por %p69, %p70
    %p72 = scmp.ne.s32.totalorder %s64, %s66
    %p73 = scmp.eq.s32.totalorder %s14, 5
    %p74 = por %p72, %p73
    %p75 = scmp.ne.s32.totalorder %s66, %s67
    %p76 = scmp.eq.s32.totalorder %s14, 0
    %p77 = por %p75, %p76
    %p78 = scmp.ne.s32.totalorder %s66, %s67
    %p79 = scmp.eq.s32.totalorder %s15, 5
    %p80 = por %p78, %p79
    %p82 = scmp.ne.s32.totalorder %s67, %s81
    %p83 = scmp.eq.s32.totalorder %s15, 0
    %p84 = por %p82, %p83
    %s85 = ssub.s32 %s9, %s16
    %p86 = scmp.eq.s32.totalorder %s85, 0
    %s88 = sadd.s32 %s87, 1
    %s89 = scalar_select %p86, %s87, %s88
    %p92 = pneg %p86
    %p93 = scmp.eq.s32.totalorder %s9, 5
    %p94 = por %p92, %p93
    %p95 = scmp.ne.s32.totalorder %s87, %s90
    %p96 = scmp.eq.s32.totalorder %s9, 0
    %p97 = por %p95, %p96
    %p98 = scmp.ne.s32.totalorder %s87, %s90
    %p99 = scmp.eq.s32.totalorder %s14, 5
    %p100 = por %p98, %p99
    %p101 = scmp.ne.s32.totalorder %s90, %s91
    %p102 = scmp.eq.s32.totalorder %s14, 0
    %p103 = por %p101, %p102
    %p104 = scmp.ne.s32.totalorder %s90, %s91
    %p105 = scmp.eq.s32.totalorder %s15, 5
    %p106 = por %p104, %p105
    %p108 = scmp.ne.s32.totalorder %s91, %s107
    %p109 = scmp.eq.s32.totalorder %s15, 0
    %p110 = por %p108, %p109
    %p111 = scmp.le.s32.totalorder 1, %s9
    %p112 = scmp.lt.s32.totalorder %s9, 7
    %p113 = pnand %p111, %p112
    %p114 = pneg %p113
    // Predicated region
    $region9: #{pilotnet_forward.3} parent=5 // pred_check
      _
    $region10: #{pilotnet_forward.3} parent=5 // pred_check_branch
      %116 = sbr.rel (%p113) target = $region12
    $region11: #{pilotnet_forward.3} parent=5 // pred_region
      %s117 = ssub.s32 %s9, 1
      // Predicated region
      $region13: #{pilotnet_forward.3} parent=11 // pred_check
        %p118 = pneg %p56
      $region14: #{pilotnet_forward.3} parent=11 // pred_check_branch
        %120 = sbr.rel (%p118) target = $region16
      $region15: #{pilotnet_forward.3} parent=11 // pred_region
        _
      $region16: #{pilotnet_forward.3} parent=11 // pred_fallthru
        _
      // Predicated region
      $region17: #{pilotnet_forward.3} parent=11 // pred_check
        %p121 = pneg %p77
      $region18: #{pilotnet_forward.3} parent=11 // pred_check_branch
        %123 = sbr.rel (%p121) target = $region20
      $region19: #{pilotnet_forward.3} parent=11 // pred_region
        _
      $region20: #{pilotnet_forward.3} parent=11 // pred_fallthru
        _
    $region12: #{pilotnet_forward.3} parent=5 // pred_fallthru
      _
    %p124 = scmp.lt.s32.totalorder %s9, 6
    // Predicated region
    $region21: #{pilotnet_forward.3} parent=5 // pred_check
      %p125 = pneg %p124
    $region22: #{pilotnet_forward.3} parent=5 // pred_check_branch
      %127 = sbr.rel (%p125) target = $region24
    $region23: #{pilotnet_forward.3} parent=5 // pred_region
      // Predicated region
      $region25: #{pilotnet_forward.3} parent=23 // pred_check
        %p128 = pneg %p29
      $region26: #{pilotnet_forward.3} parent=23 // pred_check_branch
        %130 = sbr.rel (%p128) target = $region28
      $region27: #{pilotnet_forward.3} parent=23 // pred_region
        %s131 = smul.u32 128, %s9
        %p132 = scmp.lt.s32.totalorder %s131, 767
        %s133 = scalar_select %p132, %s131, 767
        %s134 = smul.addr %s133, 4
        %s135 = scalar_lea.vmem %s0, %s134
        %s136 = smul.u32 128, %s9
      $region28: #{pilotnet_forward.3} parent=23 // pred_fallthru
        _
    $region24: #{pilotnet_forward.3} parent=5 // pred_fallthru
      _
    %p137 = scmp.le.s32.totalorder 1, %s9
    %p138 = scmp.lt.s32.totalorder %s9, 7
    %p139 = pnand %p137, %p138
    %p140 = pneg %p139
    // Predicated region
    $region29: #{pilotnet_forward.3} parent=5 // pred_check
      _
    $region30: #{pilotnet_forward.3} parent=5 // pred_check_branch
      %142 = sbr.rel (%p139) target = $region32
    $region31: #{pilotnet_forward.3} parent=5 // pred_region
      %s143 = ssub.s32 %s9, 1
      %s144 = smul.u32 128, %s14
      %p145 = scmp.lt.s32.totalorder %s144, 767
      %s146 = scalar_select %p145, %s144, 767
      %s147 = smul.addr %s146, 4
      %s148 = scalar_lea.vmem %s0, %s147
      %p149 = pneg %p35
      %p150 = pneg %p32
      %p151 = pneg %p56
      %p152 = pneg %p53
      %p153 = pneg %p77
      %p154 = pneg %p74
      %p155 = pneg %p103
      %p156 = pneg %p100
      %s157 = smul.u32 128, %s14
      %p158 = scmp.lt.s32.totalorder %s157, 767
      %s159 = scalar_select %p158, %s157, 767
      %s160 = smul.addr %s159, 4
      %s161 = scalar_lea.vmem %s3, %s160
      %s162 = smul.u32 128, %s14
      %p163 = scmp.lt.s32.totalorder %s162, 767
      %s164 = scalar_select %p163, %s162, 767
      %s165 = smul.addr %s164, 4
      %s166 = scalar_lea.vmem %s0, %s165
      %s167 = smul.u32 128, %s14
      %s168 = smul.u32 128, %s14
      %p169 = scmp.lt.s32.totalorder %s168, 767
      %s170 = scalar_select %p169, %s168, 767
      %s171 = smul.addr %s170, 4
      %s172 = scalar_lea.vmem %s3, %s171
      %s173 = smul.u32 128, %s14
      %v175 = vld [vmem:[%s166] sm:$0xf]
      %v176 = vld [vmem:[%s166 + $0x4] sm:$0xf]
      %v177 = vld [vmem:[%s166 + $0x8] sm:$0xf]
      %v178 = vld [vmem:[%s166 + $0xc] sm:$0xf]
      %v179 = vld [vmem:[%s166 + $0x10] sm:$0xf]
      %v180 = vld [vmem:[%s166 + $0x14] sm:$0xf]
      %v181 = vld [vmem:[%s166 + $0x18] sm:$0xf]
      %v182 = vld [vmem:[%s166 + $0x1c] sm:$0xf]
      %v183 = vld [vmem:[%s166 + $0x20] sm:$0xf]
      %v184 = vld [vmem:[%s166 + $0x24] sm:$0xf]
      %v185 = vld [vmem:[%s166 + $0x28] sm:$0xf]
      %v186 = vld [vmem:[%s166 + $0x2c] sm:$0xf]
      %v187 = vld [vmem:[%s166 + $0x30] sm:$0xf]
      %v188 = vld [vmem:[%s166 + $0x34] sm:$0xf]
      %v189 = vld [vmem:[%s166 + $0x38] sm:$0xf]
      %v190 = vld [vmem:[%s166 + $0x3c] sm:$0xf]
      %v191 = vld [vmem:[%s166 + $0x40] sm:$0xf]
      %v192 = vld [vmem:[%s166 + $0x44] sm:$0xf]
      %v193 = vld [vmem:[%s166 + $0x48] sm:$0xf]
      %v194 = vld [vmem:[%s166 + $0x4c] sm:$0xf]
      %v195 = vld [vmem:[%s166 + $0x50] sm:$0xf]
      %v196 = vld [vmem:[%s166 + $0x54] sm:$0xf]
      %v197 = vld [vmem:[%s166 + $0x58] sm:$0xf]
      %v198 = vld [vmem:[%s166 + $0x5c] sm:$0xf]
      %v199 = vld [vmem:[%s166 + $0x60] sm:$0xf]
      %v200 = vld [vmem:[%s166 + $0x64] sm:$0xf]
      %v201 = vld [vmem:[%s166 + $0x68] sm:$0xf]
      %v202 = vld [vmem:[%s166 + $0x6c] sm:$0xf]
      %v203 = vld [vmem:[%s166 + $0x70] sm:$0xf]
      %v204 = vld [vmem:[%s166 + $0x74] sm:$0xf]
      %v205 = vld [vmem:[%s166 + $0x78] sm:$0xf]
      %v206 = vld [vmem:[%s166 + $0x7c] sm:$0xf]
      %v207 = vld [vmem:[%s166 + $0x80] sm:$0xf]
      %v208 = vld [vmem:[%s166 + $0x84] sm:$0xf]
      %v209 = vld [vmem:[%s166 + $0x88] sm:$0xf]
      %v210 = vld [vmem:[%s166 + $0x8c] sm:$0xf]
      %v211 = vld [vmem:[%s166 + $0x90] sm:$0xf]
      %v212 = vld [vmem:[%s166 + $0x94] sm:$0xf]
      %v213 = vld [vmem:[%s166 + $0x98] sm:$0xf]
      %v214 = vld [vmem:[%s166 + $0x9c] sm:$0xf]
      %v215 = vld [vmem:[%s166 + $0xa0] sm:$0xf]
      %v216 = vld [vmem:[%s166 + $0xa4] sm:$0xf]
      %v217 = vld [vmem:[%s166 + $0xa8] sm:$0xf]
      %v218 = vld [vmem:[%s166 + $0xac] sm:$0xf]
      %v219 = vld [vmem:[%s166 + $0xb0] sm:$0xf]
      %v220 = vld [vmem:[%s166 + $0xb4] sm:$0xf]
      %v221 = vld [vmem:[%s166 + $0xb8] sm:$0xf]
      %v222 = vld [vmem:[%s166 + $0xbc] sm:$0xf]
      %v223 = vld [vmem:[%s166 + $0xc0] sm:$0xf]
      %v224 = vld [vmem:[%s166 + $0xc4] sm:$0xf]
      %v225 = vld [vmem:[%s166 + $0xc8] sm:$0xf]
      %v226 = vld [vmem:[%s166 + $0xcc] sm:$0xf]
      %v227 = vld [vmem:[%s166 + $0xd0] sm:$0xf]
      %v228 = vld [vmem:[%s166 + $0xd4] sm:$0xf]
      %v229 = vld [vmem:[%s166 + $0xd8] sm:$0xf]
      %v230 = vld [vmem:[%s166 + $0xdc] sm:$0xf]
      %v231 = vld [vmem:[%s166 + $0xe0] sm:$0xf]
      %v232 = vld [vmem:[%s166 + $0xe4] sm:$0xf]
      %v233 = vld [vmem:[%s166 + $0xe8] sm:$0xf]
      %v234 = vld [vmem:[%s166 + $0xec] sm:$0xf]
      %v235 = vld [vmem:[%s166 + $0xf0] sm:$0xf]
      %v236 = vld [vmem:[%s166 + $0xf4] sm:$0xf]
      %v237 = vld [vmem:[%s166 + $0xf8] sm:$0xf]
      %v238 = vld [vmem:[%s166 + $0xfc] sm:$0xf]
      %v239 = vld [vmem:[%s166 + $0x100] sm:$0xf]
      %v240 = vld [vmem:[%s166 + $0x104] sm:$0xf]
      %v241 = vld [vmem:[%s166 + $0x108] sm:$0xf]
      %v242 = vld [vmem:[%s166 + $0x10c] sm:$0xf]
      %v243 = vld [vmem:[%s166 + $0x110] sm:$0xf]
      %v244 = vld [vmem:[%s166 + $0x114] sm:$0xf]
      %v245 = vld [vmem:[%s166 + $0x118] sm:$0xf]
      %v246 = vld [vmem:[%s166 + $0x11c] sm:$0xf]
      %v247 = vld [vmem:[%s166 + $0x120] sm:$0xf]
      %v248 = vld [vmem:[%s166 + $0x124] sm:$0xf]
      %v249 = vld [vmem:[%s166 + $0x128] sm:$0xf]
      %v250 = vld [vmem:[%s166 + $0x12c] sm:$0xf]
      %v251 = vld [vmem:[%s166 + $0x130] sm:$0xf]
      %v252 = vld [vmem:[%s166 + $0x134] sm:$0xf]
      %v253 = vld [vmem:[%s166 + $0x138] sm:$0xf]
      %v254 = vld [vmem:[%s166 + $0x13c] sm:$0xf]
      %v255 = vld [vmem:[%s166 + $0x140] sm:$0xf]
      %v256 = vld [vmem:[%s166 + $0x144] sm:$0xf]
      %v257 = vld [vmem:[%s166 + $0x148] sm:$0xf]
      %v258 = vld [vmem:[%s166 + $0x14c] sm:$0xf]
      %v259 = vld [vmem:[%s166 + $0x150] sm:$0xf]
      %v260 = vld [vmem:[%s166 + $0x154] sm:$0xf]
      %v261 = vld [vmem:[%s166 + $0x158] sm:$0xf]
      %v262 = vld [vmem:[%s166 + $0x15c] sm:$0xf]
      %v263 = vld [vmem:[%s166 + $0x160] sm:$0xf]
      %v264 = vld [vmem:[%s166 + $0x164] sm:$0xf]
      %v265 = vld [vmem:[%s166 + $0x168] sm:$0xf]
      %v266 = vld [vmem:[%s166 + $0x16c] sm:$0xf]
      %v267 = vld [vmem:[%s166 + $0x170] sm:$0xf]
      %v268 = vld [vmem:[%s166 + $0x174] sm:$0xf]
      %v269 = vld [vmem:[%s166 + $0x178] sm:$0xf]
      %v270 = vld [vmem:[%s166 + $0x17c] sm:$0xf]
      %v271 = vld [vmem:[%s166 + $0x180] sm:$0xf]
      %v272 = vld [vmem:[%s166 + $0x184] sm:$0xf]
      %v273 = vld [vmem:[%s166 + $0x188] sm:$0xf]
      %v274 = vld [vmem:[%s166 + $0x18c] sm:$0xf]
      %v275 = vld [vmem:[%s166 + $0x190] sm:$0xf]
      %v276 = vld [vmem:[%s166 + $0x194] sm:$0xf]
      %v277 = vld [vmem:[%s166 + $0x198] sm:$0xf]
      %v278 = vld [vmem:[%s166 + $0x19c] sm:$0xf]
      %v279 = vld [vmem:[%s166 + $0x1a0] sm:$0xf]
      %v280 = vld [vmem:[%s166 + $0x1a4] sm:$0xf]
      %v281 = vld [vmem:[%s166 + $0x1a8] sm:$0xf]
      %v282 = vld [vmem:[%s166 + $0x1ac] sm:$0xf]
      %v283 = vld [vmem:[%s166 + $0x1b0] sm:$0xf]
      %v284 = vld [vmem:[%s166 + $0x1b4] sm:$0xf]
      %v285 = vld [vmem:[%s166 + $0x1b8] sm:$0xf]
      %v286 = vld [vmem:[%s166 + $0x1bc] sm:$0xf]
      %v287 = vld [vmem:[%s166 + $0x1c0] sm:$0xf]
      %v288 = vld [vmem:[%s166 + $0x1c4] sm:$0xf]
      %v289 = vld [vmem:[%s166 + $0x1c8] sm:$0xf]
      %v290 = vld [vmem:[%s166 + $0x1cc] sm:$0xf]
      %v291 = vld [vmem:[%s166 + $0x1d0] sm:$0xf]
      %v292 = vld [vmem:[%s166 + $0x1d4] sm:$0xf]
      %v293 = vld [vmem:[%s166 + $0x1d8] sm:$0xf]
      %v294 = vld [vmem:[%s166 + $0x1dc] sm:$0xf]
      %v295 = vld [vmem:[%s166 + $0x1e0] sm:$0xf]
      %v296 = vld [vmem:[%s166 + $0x1e4] sm:$0xf]
      %v297 = vld [vmem:[%s166 + $0x1e8] sm:$0xf]
      %v298 = vld [vmem:[%s166 + $0x1ec] sm:$0xf]
      %v299 = vld [vmem:[%s166 + $0x1f0] sm:$0xf]
      %v300 = vld [vmem:[%s166 + $0x1f4] sm:$0xf]
      %v301 = vld [vmem:[%s166 + $0x1f8] sm:$0xf]
      %v302 = vld [vmem:[%s166 + $0x1fc] sm:$0xf]
      %v303 = vld [vmem:[%s1] sm:$0xf]
      %v304 = vld [vmem:[%s1 + $0x4] sm:$0xf]
      %v305 = vld [vmem:[%s1 + $0x8] sm:$0xf]
      %v306 = vld [vmem:[%s1 + $0xc] sm:$0xf]
      %v307 = vld [vmem:[%s1 + $0x10] sm:$0xf]
      %v308 = vld [vmem:[%s1 + $0x14] sm:$0xf]
      %v309 = vld [vmem:[%s1 + $0x18] sm:$0xf]
      %v310 = vld [vmem:[%s1 + $0x1c] sm:$0xf]
      %v311 = vld [vmem:[%s1 + $0x20] sm:$0xf]
      %v312 = vld [vmem:[%s1 + $0x24] sm:$0xf]
      %v313 = vld [vmem:[%s2] sm:$0x1]
      %v315 = vlaneseq
      %v316 = vshrl.u32 %v315, 7
      %v317 = vsub.s32 0, %v316
      %v318 = vrot.slane %v313, %v317
      %v448 = vunpack.c.l.b16 %v175
      %v449 = vunpack.c.l.b16 %v176
      %v450 = vunpack.c.l.b16 %v177
      %v451 = vunpack.c.l.b16 %v178
      %v452 = vunpack.c.l.b16 %v179
      %v453 = vunpack.c.l.b16 %v180
      %v454 = vunpack.c.l.b16 %v181
      %v455 = vunpack.c.l.b16 %v182
      %v456 = vunpack.c.l.b16 %v183
      %v457 = vunpack.c.l.b16 %v184
      %v458 = vunpack.c.l.b16 %v185
      %v459 = vunpack.c.l.b16 %v186
      %v460 = vunpack.c.l.b16 %v187
      %v461 = vunpack.c.l.b16 %v188
      %v462 = vunpack.c.l.b16 %v189
      %v463 = vunpack.c.l.b16 %v190
      %v464 = vunpack.c.l.b16 %v191
      %v465 = vunpack.c.l.b16 %v192
      %v466 = vunpack.c.l.b16 %v193
      %v467 = vunpack.c.l.b16 %v194
      %v468 = vunpack.c.l.b16 %v195
      %v469 = vunpack.c.l.b16 %v196
      %v470 = vunpack.c.l.b16 %v197
      %v471 = vunpack.c.l.b16 %v198
      %v472 = vunpack.c.l.b16 %v199
      %v473 = vunpack.c.l.b16 %v200
      %v474 = vunpack.c.l.b16 %v201
      %v475 = vunpack.c.l.b16 %v202
      %v476 = vunpack.c.l.b16 %v203
      %v477 = vunpack.c.l.b16 %v204
      %v478 = vunpack.c.l.b16 %v205
      %v479 = vunpack.c.l.b16 %v206
      %v480 = vunpack.c.l.b16 %v207
      %v481 = vunpack.c.l.b16 %v208
      %v482 = vunpack.c.l.b16 %v209
      %v483 = vunpack.c.l.b16 %v210
      %v484 = vunpack.c.l.b16 %v211
      %v485 = vunpack.c.l.b16 %v212
      %v486 = vunpack.c.l.b16 %v213
      %v487 = vunpack.c.l.b16 %v214
      %v488 = vunpack.c.l.b16 %v215
      %v489 = vunpack.c.l.b16 %v216
      %v490 = vunpack.c.l.b16 %v217
      %v491 = vunpack.c.l.b16 %v218
      %v492 = vunpack.c.l.b16 %v219
      %v493 = vunpack.c.l.b16 %v220
      %v494 = vunpack.c.l.b16 %v221
      %v495 = vunpack.c.l.b16 %v222
      %v496 = vunpack.c.l.b16 %v223
      %v497 = vunpack.c.l.b16 %v224
      %v498 = vunpack.c.l.b16 %v225
      %v499 = vunpack.c.l.b16 %v226
      %v500 = vunpack.c.l.b16 %v227
      %v501 = vunpack.c.l.b16 %v228
      %v502 = vunpack.c.l.b16 %v229
      %v503 = vunpack.c.l.b16 %v230
      %v504 = vunpack.c.l.b16 %v231
      %v505 = vunpack.c.l.b16 %v232
      %v506 = vunpack.c.l.b16 %v233
      %v507 = vunpack.c.l.b16 %v234
      %v508 = vunpack.c.l.b16 %v235
      %v509 = vunpack.c.l.b16 %v236
      %v510 = vunpack.c.l.b16 %v237
      %v511 = vunpack.c.l.b16 %v238
      %v512 = vunpack.c.l.b16 %v239
      %v513 = vunpack.c.l.b16 %v240
      %v514 = vunpack.c.l.b16 %v241
      %v515 = vunpack.c.l.b16 %v242
      %v516 = vunpack.c.l.b16 %v243
      %v517 = vunpack.c.l.b16 %v244
      %v518 = vunpack.c.l.b16 %v245
      %v519 = vunpack.c.l.b16 %v246
      %v520 = vunpack.c.l.b16 %v247
      %v521 = vunpack.c.l.b16 %v248
      %v522 = vunpack.c.l.b16 %v249
      %v523 = vunpack.c.l.b16 %v250
      %v524 = vunpack.c.l.b16 %v251
      %v525 = vunpack.c.l.b16 %v252
      %v526 = vunpack.c.l.b16 %v253
      %v527 = vunpack.c.l.b16 %v254
      %v528 = vunpack.c.l.b16 %v255
      %v529 = vunpack.c.l.b16 %v256
      %v530 = vunpack.c.l.b16 %v257
      %v531 = vunpack.c.l.b16 %v258
      %v532 = vunpack.c.l.b16 %v259
      %v533 = vunpack.c.l.b16 %v260
      %v534 = vunpack.c.l.b16 %v261
      %v535 = vunpack.c.l.b16 %v262
      %v536 = vunpack.c.l.b16 %v263
      %v537 = vunpack.c.l.b16 %v264
      %v538 = vunpack.c.l.b16 %v265
      %v539 = vunpack.c.l.b16 %v266
      %v540 = vunpack.c.l.b16 %v267
      %v541 = vunpack.c.l.b16 %v268
      %v542 = vunpack.c.l.b16 %v269
      %v543 = vunpack.c.l.b16 %v270
      %v544 = vunpack.c.l.b16 %v271
      %v545 = vunpack.c.l.b16 %v272
      %v546 = vunpack.c.l.b16 %v273
      %v547 = vunpack.c.l.b16 %v274
      %v548 = vunpack.c.l.b16 %v275
      %v549 = vunpack.c.l.b16 %v276
      %v550 = vunpack.c.l.b16 %v277
      %v551 = vunpack.c.l.b16 %v278
      %v552 = vunpack.c.l.b16 %v279
      %v553 = vunpack.c.l.b16 %v280
      %v554 = vunpack.c.l.b16 %v281
      %v555 = vunpack.c.l.b16 %v282
      %v556 = vunpack.c.l.b16 %v283
      %v557 = vunpack.c.l.b16 %v284
      %v558 = vunpack.c.l.b16 %v285
      %v559 = vunpack.c.l.b16 %v286
      %v560 = vunpack.c.l.b16 %v287
      %v561 = vunpack.c.l.b16 %v288
      %v562 = vunpack.c.l.b16 %v289
      %v563 = vunpack.c.l.b16 %v290
      %v564 = vunpack.c.l.b16 %v291
      %v565 = vunpack.c.l.b16 %v292
      %v566 = vunpack.c.l.b16 %v293
      %v567 = vunpack.c.l.b16 %v294
      %v568 = vunpack.c.l.b16 %v295
      %v569 = vunpack.c.l.b16 %v296
      %v570 = vunpack.c.l.b16 %v297
      %v571 = vunpack.c.l.b16 %v298
      %v572 = vunpack.c.l.b16 %v299
      %v573 = vunpack.c.l.b16 %v300
      %v574 = vunpack.c.l.b16 %v301
      %v575 = vunpack.c.l.b16 %v302
      %v576 = vpack.c.b16 %v449, %v448
      %v577 = vpack.c.b16 %v451, %v450
      %v578 = vpack.c.b16 %v453, %v452
      %v579 = vpack.c.b16 %v455, %v454
      %v580 = vpack.c.b16 %v457, %v456
      %v581 = vpack.c.b16 %v459, %v458
      %v582 = vpack.c.b16 %v461, %v460
      %v583 = vpack.c.b16 %v463, %v462
      %v584 = vpack.c.b16 %v465, %v464
      %v585 = vpack.c.b16 %v467, %v466
      %v586 = vpack.c.b16 %v469, %v468
      %v587 = vpack.c.b16 %v471, %v470
      %v588 = vpack.c.b16 %v473, %v472
      %v589 = vpack.c.b16 %v475, %v474
      %v590 = vpack.c.b16 %v477, %v476
      %v591 = vpack.c.b16 %v479, %v478
      %v592 = vpack.c.b16 %v481, %v480
      %v593 = vpack.c.b16 %v483, %v482
      %v594 = vpack.c.b16 %v485, %v484
      %v595 = vpack.c.b16 %v487, %v486
      %v596 = vpack.c.b16 %v489, %v488
      %v597 = vpack.c.b16 %v491, %v490
      %v598 = vpack.c.b16 %v493, %v492
      %v599 = vpack.c.b16 %v495, %v494
      %v600 = vpack.c.b16 %v497, %v496
      %v601 = vpack.c.b16 %v499, %v498
      %v602 = vpack.c.b16 %v501, %v500
      %v603 = vpack.c.b16 %v503, %v502
      %v604 = vpack.c.b16 %v505, %v504
      %v605 = vpack.c.b16 %v507, %v506
      %v606 = vpack.c.b16 %v509, %v508
      %v607 = vpack.c.b16 %v511, %v510
      %v608 = vpack.c.b16 %v513, %v512
      %v609 = vpack.c.b16 %v515, %v514
      %v610 = vpack.c.b16 %v517, %v516
      %v611 = vpack.c.b16 %v519, %v518
      %v612 = vpack.c.b16 %v521, %v520
      %v613 = vpack.c.b16 %v523, %v522
      %v614 = vpack.c.b16 %v525, %v524
      %v615 = vpack.c.b16 %v527, %v526
      %v616 = vpack.c.b16 %v529, %v528
      %v617 = vpack.c.b16 %v531, %v530
      %v618 = vpack.c.b16 %v533, %v532
      %v619 = vpack.c.b16 %v535, %v534
      %v620 = vpack.c.b16 %v537, %v536
      %v621 = vpack.c.b16 %v539, %v538
      %v622 = vpack.c.b16 %v541, %v540
      %v623 = vpack.c.b16 %v543, %v542
      %v624 = vpack.c.b16 %v545, %v544
      %v625 = vpack.c.b16 %v547, %v546
      %v626 = vpack.c.b16 %v549, %v548
      %v627 = vpack.c.b16 %v551, %v550
      %v628 = vpack.c.b16 %v553, %v552
      %v629 = vpack.c.b16 %v555, %v554
      %v630 = vpack.c.b16 %v557, %v556
      %v631 = vpack.c.b16 %v559, %v558
      %v632 = vpack.c.b16 %v561, %v560
      %v633 = vpack.c.b16 %v563, %v562
      %v634 = vpack.c.b16 %v565, %v564
      %v635 = vpack.c.b16 %v567, %v566
      %v636 = vpack.c.b16 %v569, %v568
      %v637 = vpack.c.b16 %v571, %v570
      %v638 = vpack.c.b16 %v573, %v572
      %v639 = vpack.c.b16 %v575, %v574
      %v650 = vunpack.c.l.b16 %v303
      %v651 = vunpack.c.l.b16 %v304
      %v652 = vunpack.c.l.b16 %v305
      %v653 = vunpack.c.l.b16 %v306
      %v654 = vunpack.c.l.b16 %v307
      %v655 = vunpack.c.l.b16 %v308
      %v656 = vunpack.c.l.b16 %v309
      %v657 = vunpack.c.l.b16 %v310
      %v658 = vunpack.c.l.b16 %v311
      %v659 = vunpack.c.l.b16 %v312
      %v660 = vpack.c.b16 %v651, %v650
      %v661 = vpack.c.b16 %v653, %v652
      %v662 = vpack.c.b16 %v655, %v654
      %v663 = vpack.c.b16 %v657, %v656
      %v664 = vpack.c.b16 %v659, %v658
      %vm670 = vcmask 654336
      %v672 = vsel %vm670, %v576, 0
      %v675 = vsel %vm670, %v577, 0
      %v678 = vsel %vm670, %v578, 0
      %v681 = vsel %vm670, %v579, 0
      %v684 = vsel %vm670, %v580, 0
      %v687 = vsel %vm670, %v581, 0
      %v690 = vsel %vm670, %v582, 0
      %v693 = vsel %vm670, %v583, 0
      %v696 = vsel %vm670, %v584, 0
      %v699 = vsel %vm670, %v585, 0
      %v702 = vsel %vm670, %v586, 0
      %v705 = vsel %vm670, %v587, 0
      %v708 = vsel %vm670, %v588, 0
      %v711 = vsel %vm670, %v589, 0
      %v714 = vsel %vm670, %v590, 0
      %v717 = vsel %vm670, %v591, 0
      %v720 = vsel %vm670, %v592, 0
      %v723 = vsel %vm670, %v593, 0
      %v726 = vsel %vm670, %v594, 0
      %v729 = vsel %vm670, %v595, 0
      %v732 = vsel %vm670, %v596, 0
      %v735 = vsel %vm670, %v597, 0
      %v738 = vsel %vm670, %v598, 0
      %v741 = vsel %vm670, %v599, 0
      %v744 = vsel %vm670, %v600, 0
      %v747 = vsel %vm670, %v601, 0
      %v750 = vsel %vm670, %v602, 0
      %v753 = vsel %vm670, %v603, 0
      %v756 = vsel %vm670, %v604, 0
      %v759 = vsel %vm670, %v605, 0
      %v762 = vsel %vm670, %v606, 0
      %v765 = vsel %vm670, %v607, 0
      %v768 = vsel %vm670, %v608, 0
      %v771 = vsel %vm670, %v609, 0
      %v774 = vsel %vm670, %v610, 0
      %v777 = vsel %vm670, %v611, 0
      %v780 = vsel %vm670, %v612, 0
      %v783 = vsel %vm670, %v613, 0
      %v786 = vsel %vm670, %v614, 0
      %v789 = vsel %vm670, %v615, 0
      %v792 = vsel %vm670, %v616, 0
      %v795 = vsel %vm670, %v617, 0
      %v798 = vsel %vm670, %v618, 0
      %v801 = vsel %vm670, %v619, 0
      %v804 = vsel %vm670, %v620, 0
      %v807 = vsel %vm670, %v621, 0
      %v810 = vsel %vm670, %v622, 0
      %v813 = vsel %vm670, %v623, 0
      %v816 = vsel %vm670, %v624, 0
      %v819 = vsel %vm670, %v625, 0
      %v822 = vsel %vm670, %v626, 0
      %v825 = vsel %vm670, %v627, 0
      %v828 = vsel %vm670, %v628, 0
      %v831 = vsel %vm670, %v629, 0
      %v834 = vsel %vm670, %v630, 0
      %v837 = vsel %vm670, %v631, 0
      %v840 = vsel %vm670, %v632, 0
      %v843 = vsel %vm670, %v633, 0
      %v846 = vsel %vm670, %v634, 0
      %v849 = vsel %vm670, %v635, 0
      %v852 = vsel %vm670, %v636, 0
      %v855 = vsel %vm670, %v637, 0
      %v858 = vsel %vm670, %v638, 0
      %v861 = vsel %vm670, %v639, 0
      %863 = vmatprep.subr.bf16.mxu0 0
      %864 = vmatpush1.bf16.msra.mxu0 %v660
      %865 = vmatprep.subr.bf16.mxu0 0
      %866 = vmatpush1.bf16.msra.mxu0 %v661
      %867 = vmatprep.subr.bf16.mxu0 0
      %868 = vmatpush1.bf16.msra.mxu0 %v662
      %869 = vmatprep.subr.bf16.mxu0 0
      %870 = vmatpush1.bf16.msra.mxu0 %v663
      %871 = vmatprep.subr.bf16.mxu0 0
      %872 = vmatpush1.bf16.msra.mxu0 %v664
      %873 = vmatprep.subr.bf16.mxu0 0
      %874 = vmatpush1.bf16.msra.mxu0 0
      %875 = vmatprep.subr.bf16.mxu0 0
      %876 = vmatpush1.bf16.msra.mxu0 0
      %877 = vmatprep.subr.bf16.mxu0 0
      %878 = vmatpush1.bf16.msra.mxu0 0
      %879 = vmatprep.subr.bf16.mxu0 0
      %880 = vmatpush1.bf16.msra.mxu0 0
      %881 = vmatprep.subr.bf16.mxu0 0
      %882 = vmatpush1.bf16.msra.mxu0 0
      %883 = vmatprep.subr.bf16.mxu0 0
      %884 = vmatpush1.bf16.msra.mxu0 0
      %885 = vmatprep.subr.bf16.mxu0 0
      %886 = vmatpush1.bf16.msra.mxu0 0
      %887 = vmatprep.subr.bf16.mxu0 0
      %888 = vmatpush1.bf16.msra.mxu0 0
      %889 = vmatprep.subr.bf16.mxu0 0
      %890 = vmatpush1.bf16.msra.mxu0 0
      %891 = vmatprep.subr.bf16.mxu0 0
      %892 = vmatpush1.bf16.msra.mxu0 0
      %893 = vmatprep.subr.bf16.mxu0 0
      %894 = vmatpush1.bf16.msra.mxu0 0
      %895 = vmatprep.mubr.bf16.mxu0 0
      %896 = vmatmul.mubr.bf16.gmra.mrb[0].mxu0 %v672
      %v897 = vpop.f32.mrb[0].mxu0
      %v898 = vadd.f32 %v318, %v897
      %v899 = vpop.f32.mrb[0].mxu0
      %v900 = vpop.f32.mrb[0].mxu0
      %v901 = vadd.f32 %v318, %v900
      %v902 = vpop.f32.mrb[0].mxu0
      %903 = vmatprep.mubr.bf16.mxu0 0
      %904 = vmatmul.mubr.bf16.gmra.mrb[0].mxu0 %v675
      %v905 = vpop.f32.mrb[0].mxu0
      %v906 = vadd.f32 %v318, %v905
      %v907 = vpop.f32.mrb[0].mxu0
      %v908 = vpop.f32.mrb[0].mxu0
      %v909 = vadd.f32 %v318, %v908
      %v910 = vpop.f32.mrb[0].mxu0
      %911 = vmatprep.mubr.bf16.mxu0 0
      %912 = vmatmul.mubr.bf16.gmra.mrb[0].mxu0 %v678
      %v913 = vpop.f32.mrb[0].mxu0
      %v914 = vadd.f32 %v318, %v913
      %v915 = vpop.f32.mrb[0].mxu0
      %v916 = vpop.f32.mrb[0].mxu0
      %v917 = vadd.f32 %v318, %v916
      %v918 = vpop.f32.mrb[0].mxu0
      %919 = vmatprep.mubr.bf16.mxu0 0
      %920 = vmatmul.mubr.bf16.gmra.mrb[0].mxu0 %v681
      %v921 = vpop.f32.mrb[0].mxu0
      %v922 = vadd.f32 %v318, %v921
      %v923 = vpop.f32.mrb[0].mxu0
      %v924 = vpop.f32.mrb[0].mxu0
      %v925 = vadd.f32 %v318, %v924
      %v926 = vpop.f32.mrb[0].mxu0
      %927 = vmatprep.mubr.bf16.mxu0 0
      %928 = vmatmul.mubr.bf16.gmra.mrb[0].mxu0 %v684
      %v929 = vpop.f32.mrb[0].mxu0
      %v930 = vadd.f32 %v318, %v929
      %v931 = vpop.f32.mrb[0].mxu0
      %v932 = vpop.f32.mrb[0].mxu0
      %v933 = vadd.f32 %v318, %v932
      %v934 = vpop.f32.mrb[0].mxu0
      %935 = vmatprep.mubr.bf16.mxu0 0
      %936 = vmatmul.mubr.bf16.gmra.mrb[0].mxu0 %v687
      %v937 = vpop.f32.mrb[0].mxu0
      %v938 = vadd.f32 %v318, %v937
      %v939 = vpop.f32.mrb[0].mxu0
      %v940 = vpop.f32.mrb[0].mxu0
      %v941 = vadd.f32 %v318, %v940
      %v942 = vpop.f32.mrb[0].mxu0
      %943 = vmatprep.mubr.bf16.mxu0 0
      %944 = vmatmul.mubr.bf16.gmra.mrb[0].mxu0 %v690
      %v945 = vpop.f32.mrb[0].mxu0
      %v946 = vadd.f32 %v318, %v945
      %v947 = vpop.f32.mrb[0].mxu0
      %v948 = vpop.f32.mrb[0].mxu0
      %v949 = vadd.f32 %v318, %v948
      %v950 = vpop.f32.mrb[0].mxu0
      %951 = vmatprep.mubr.bf16.mxu0 0
      %952 = vmatmul.mubr.bf16.gmra.mrb[0].mxu0 %v693
      %v953 = vpop.f32.mrb[0].mxu0
      %v954 = vadd.f32 %v318, %v953
      %v955 = vpop.f32.mrb[0].mxu0
      %v956 = vpop.f32.mrb[0].mxu0
      %v957 = vadd.f32 %v318, %v956
      %v958 = vpop.f32.mrb[0].mxu0
      %959 = vmatprep.mubr.bf16.mxu0 0
      %960 = vmatmul.mubr.bf16.gmra.mrb[0].mxu0 %v696
      %v961 = vpop.f32.mrb[0].mxu0
      %v962 = vadd.f32 %v318, %v961
      %v963 = vpop.f32.mrb[0].mxu0
      %v964 = vpop.f32.mrb[0].mxu0
      %v965 = vadd.f32 %v318, %v964
      %v966 = vpop.f32.mrb[0].mxu0
      %967 = vmatprep.mubr.bf16.mxu0 0
      %968 = vmatmul.mubr.bf16.gmra.mrb[0].mxu0 %v699
      %v969 = vpop.f32.mrb[0].mxu0
      %v970 = vadd.f32 %v318, %v969
      %v971 = vpop.f32.mrb[0].mxu0
      %v972 = vpop.f32.mrb[0].mxu0
      %v973 = vadd.f32 %v318, %v972
      %v974 = vpop.f32.mrb[0].mxu0
      %975 = vmatprep.mubr.bf16.mxu0 0
      %976 = vmatmul.mubr.bf16.gmra.mrb[0].mxu0 %v702
      %v977 = vpop.f32.mrb[0].mxu0
      %v978 = vadd.f32 %v318, %v977
      %v979 = vpop.f32.mrb[0].mxu0
      %v980 = vpop.f32.mrb[0].mxu0
      %v981 = vadd.f32 %v318, %v980
      %v982 = vpop.f32.mrb[0].mxu0
      %983 = vmatprep.mubr.bf16.mxu0 0
      %984 = vmatmul.mubr.bf16.gmra.mrb[0].mxu0 %v705
      %v985 = vpop.f32.mrb[0].mxu0
      %v986 = vadd.f32 %v318, %v985
      %v987 = vpop.f32.mrb[0].mxu0
      %v988 = vpop.f32.mrb[0].mxu0
      %v989 = vadd.f32 %v318, %v988
      %v990 = vpop.f32.mrb[0].mxu0
      %991 = vmatprep.mubr.bf16.mxu0 0
      %992 = vmatmul.mubr.bf16.gmra.mrb[0].mxu0 %v708
      %v993 = vpop.f32.mrb[0].mxu0
      %v994 = vadd.f32 %v318, %v993
      %v995 = vpop.f32.mrb[0].mxu0
      %v996 = vpop.f32.mrb[0].mxu0
      %v997 = vadd.f32 %v318, %v996
      %v998 = vpop.f32.mrb[0].mxu0
      %999 = vmatprep.mubr.bf16.mxu0 0
      %1000 = vmatmul.mubr.bf16.gmra.mrb[0].mxu0 %v711
      %v1001 = vpop.f32.mrb[0].mxu0
      %v1002 = vadd.f32 %v318, %v1001
      %v1003 = vpop.f32.mrb[0].mxu0
      %v1004 = vpop.f32.mrb[0].mxu0
      %v1005 = vadd.f32 %v318, %v1004
      %v1006 = vpop.f32.mrb[0].mxu0
      %1007 = vmatprep.mubr.bf16.mxu0 0
      %1008 = vmatmul.mubr.bf16.gmra.mrb[0].mxu0 %v714
      %v1009 = vpop.f32.mrb[0].mxu0
      %v1010 = vadd.f32 %v318, %v1009
      %v1011 = vpop.f32.mrb[0].mxu0
      %v1012 = vpop.f32.mrb[0].mxu0
      %v1013 = vadd.f32 %v318, %v1012
      %v1014 = vpop.f32.mrb[0].mxu0
      %1015 = vmatprep.mubr.bf16.mxu0 0
      %1016 = vmatmul.mubr.bf16.gmra.mrb[0].mxu0 %v717
      %v1017 = vpop.f32.mrb[0].mxu0
      %v1018 = vadd.f32 %v318, %v1017
      %v1019 = vpop.f32.mrb[0].mxu0
      %v1020 = vpop.f32.mrb[0].mxu0
      %v1021 = vadd.f32 %v318, %v1020
      %v1022 = vpop.f32.mrb[0].mxu0
      %1023 = vmatprep.mubr.bf16.mxu0 0
      %1024 = vmatmul.mubr.bf16.gmra.mrb[0].mxu0 %v720
      %v1025 = vpop.f32.mrb[0].mxu0
      %v1026 = vadd.f32 %v318, %v1025
      %v1027 = vpop.f32.mrb[0].mxu0
      %v1028 = vpop.f32.mrb[0].mxu0
      %v1029 = vadd.f32 %v318, %v1028
      %v1030 = vpop.f32.mrb[0].mxu0
      %1031 = vmatprep.mubr.bf16.mxu0 0
      %1032 = vmatmul.mubr.bf16.gmra.mrb[0].mxu0 %v723
      %v1033 = vpop.f32.mrb[0].mxu0
      %v1034 = vadd.f32 %v318, %v1033
      %v1035 = vpop.f32.mrb[0].mxu0
      %v1036 = vpop.f32.mrb[0].mxu0
      %v1037 = vadd.f32 %v318, %v1036
      %v1038 = vpop.f32.mrb[0].mxu0
      %1039 = vmatprep.mubr.bf16.mxu0 0
      %1040 = vmatmul.mubr.bf16.gmra.mrb[0].mxu0 %v726
      %v1041 = vpop.f32.mrb[0].mxu0
      %v1042 = vadd.f32 %v318, %v1041
      %v1043 = vpop.f32.mrb[0].mxu0
      %v1044 = vpop.f32.mrb[0].mxu0
      %v1045 = vadd.f32 %v318, %v1044
      %v1046 = vpop.f32.mrb[0].mxu0
      %1047 = vmatprep.mubr.bf16.mxu0 0
      %1048 = vmatmul.mubr.bf16.gmra.mrb[0].mxu0 %v729
      %v1049 = vpop.f32.mrb[0].mxu0
      %v1050 = vadd.f32 %v318, %v1049
      %v1051 = vpop.f32.mrb[0].mxu0
      %v1052 = vpop.f32.mrb[0].mxu0
      %v1053 = vadd.f32 %v318, %v1052
      %v1054 = vpop.f32.mrb[0].mxu0
      %1055 = vmatprep.mubr.bf16.mxu0 0
      %1056 = vmatmul.mubr.bf16.gmra.mrb[0].mxu0 %v732
      %v1057 = vpop.f32.mrb[0].mxu0
      %v1058 = vadd.f32 %v318, %v1057
      %v1059 = vpop.f32.mrb[0].mxu0
      %v1060 = vpop.f32.mrb[0].mxu0
      %v1061 = vadd.f32 %v318, %v1060
      %v1062 = vpop.f32.mrb[0].mxu0
      %1063 = vmatprep.mubr.bf16.mxu0 0
      %1064 = vmatmul.mubr.bf16.gmra.mrb[0].mxu0 %v735
      %v1065 = vpop.f32.mrb[0].mxu0
      %v1066 = vadd.f32 %v318, %v1065
      %v1067 = vpop.f32.mrb[0].mxu0
      %v1068 = vpop.f32.mrb[0].mxu0
      %v1069 = vadd.f32 %v318, %v1068
      %v1070 = vpop.f32.mrb[0].mxu0
      %1071 = vmatprep.mubr.bf16.mxu0 0
      %1072 = vmatmul.mubr.bf16.gmra.mrb[0].mxu0 %v738
      %v1073 = vpop.f32.mrb[0].mxu0
      %v1074 = vadd.f32 %v318, %v1073
      %v1075 = vpop.f32.mrb[0].mxu0
      %v1076 = vpop.f32.mrb[0].mxu0
      %v1077 = vadd.f32 %v318, %v1076
      %v1078 = vpop.f32.mrb[0].mxu0
      %1079 = vmatprep.mubr.bf16.mxu0 0
      %1080 = vmatmul.mubr.bf16.gmra.mrb[0].mxu0 %v741
      %v1081 = vpop.f32.mrb[0].mxu0
      %v1082 = vadd.f32 %v318, %v1081
      %v1083 = vpop.f32.mrb[0].mxu0
      %v1084 = vpop.f32.mrb[0].mxu0
      %v1085 = vadd.f32 %v318, %v1084
      %v1086 = vpop.f32.mrb[0].mxu0
      %1087 = vmatprep.mubr.bf16.mxu0 0
      %1088 = vmatmul.mubr.bf16.gmra.mrb[0].mxu0 %v744
      %v1089 = vpop.f32.mrb[0].mxu0
      %v1090 = vadd.f32 %v318, %v1089
      %v1091 = vpop.f32.mrb[0].mxu0
      %v1092 = vpop.f32.mrb[0].mxu0
      %v1093 = vadd.f32 %v318, %v1092
      %v1094 = vpop.f32.mrb[0].mxu0
      %1095 = vmatprep.mubr.bf16.mxu0 0
      %1096 = vmatmul.mubr.bf16.gmra.mrb[0].mxu0 %v747
      %v1097 = vpop.f32.mrb[0].mxu0
      %v1098 = vadd.f32 %v318, %v1097
      %v1099 = vpop.f32.mrb[0].mxu0
      %v1100 = vpop.f32.mrb[0].mxu0
      %v1101 = vadd.f32 %v318, %v1100
      %v1102 = vpop.f32.mrb[0].mxu0
      %1103 = vmatprep.mubr.bf16.mxu0 0
      %1104 = vmatmul.mubr.bf16.gmra.mrb[0].mxu0 %v750
      %v1105 = vpop.f32.mrb[0].mxu0
      %v1106 = vadd.f32 %v318, %v1105
      %v1107 = vpop.f32.mrb[0].mxu0
      %v1108 = vpop.f32.mrb[0].mxu0
      %v1109 = vadd.f32 %v318, %v1108
      %v1110 = vpop.f32.mrb[0].mxu0
      %1111 = vmatprep.mubr.bf16.mxu0 0
      %1112 = vmatmul.mubr.bf16.gmra.mrb[0].mxu0 %v753
      %v1113 = vpop.f32.mrb[0].mxu0
      %v1114 = vadd.f32 %v318, %v1113
      %v1115 = vpop.f32.mrb[0].mxu0
      %v1116 = vpop.f32.mrb[0].mxu0
      %v1117 = vadd.f32 %v318, %v1116
      %v1118 = vpop.f32.mrb[0].mxu0
      %1119 = vmatprep.mubr.bf16.mxu0 0
      %1120 = vmatmul.mubr.bf16.gmra.mrb[0].mxu0 %v756
      %v1121 = vpop.f32.mrb[0].mxu0
      %v1122 = vadd.f32 %v318, %v1121
      %v1123 = vpop.f32.mrb[0].mxu0
      %v1124 = vpop.f32.mrb[0].mxu0
      %v1125 = vadd.f32 %v318, %v1124
      %v1126 = vpop.f32.mrb[0].mxu0
      %1127 = vmatprep.mubr.bf16.mxu0 0
      %1128 = vmatmul.mubr.bf16.gmra.mrb[0].mxu0 %v759
      %v1129 = vpop.f32.mrb[0].mxu0
      %v1130 = vadd.f32 %v318, %v1129
      %v1131 = vpop.f32.mrb[0].mxu0
      %v1132 = vpop.f32.mrb[0].mxu0
      %v1133 = vadd.f32 %v318, %v1132
      %v1134 = vpop.f32.mrb[0].mxu0
      %1135 = vmatprep.mubr.bf16.mxu0 0
      %1136 = vmatmul.mubr.bf16.gmra.mrb[0].mxu0 %v762
      %v1137 = vpop.f32.mrb[0].mxu0
      %v1138 = vadd.f32 %v318, %v1137
      %v1139 = vpop.f32.mrb[0].mxu0
      %v1140 = vpop.f32.mrb[0].mxu0
      %v1141 = vadd.f32 %v318, %v1140
      %v1142 = vpop.f32.mrb[0].mxu0
      %1143 = vmatprep.mubr.bf16.mxu0 0
      %1144 = vmatmul.mubr.bf16.gmra.mrb[0].mxu0 %v765
      %v1145 = vpop.f32.mrb[0].mxu0
      %v1146 = vadd.f32 %v318, %v1145
      %v1147 = vpop.f32.mrb[0].mxu0
      %v1148 = vpop.f32.mrb[0].mxu0
      %v1149 = vadd.f32 %v318, %v1148
      %v1150 = vpop.f32.mrb[0].mxu0
      %1151 = vmatprep.mubr.bf16.mxu0 0
      %1152 = vmatmul.mubr.bf16.gmra.mrb[0].mxu0 %v768
      %v1153 = vpop.f32.mrb[0].mxu0
      %v1154 = vadd.f32 %v318, %v1153
      %v1155 = vpop.f32.mrb[0].mxu0
      %v1156 = vpop.f32.mrb[0].mxu0
      %v1157 = vadd.f32 %v318, %v1156
      %v1158 = vpop.f32.mrb[0].mxu0
      %1159 = vmatprep.mubr.bf16.mxu0 0
      %1160 = vmatmul.mubr.bf16.gmra.mrb[0].mxu0 %v771
      %v1161 = vpop.f32.mrb[0].mxu0
      %v1162 = vadd.f32 %v318, %v1161
      %v1163 = vpop.f32.mrb[0].mxu0
      %v1164 = vpop.f32.mrb[0].mxu0
      %v1165 = vadd.f32 %v318, %v1164
      %v1166 = vpop.f32.mrb[0].mxu0
      %1167 = vmatprep.mubr.bf16.mxu0 0
      %1168 = vmatmul.mubr.bf16.gmra.mrb[0].mxu0 %v774
      %v1169 = vpop.f32.mrb[0].mxu0
      %v1170 = vadd.f32 %v318, %v1169
      %v1171 = vpop.f32.mrb[0].mxu0
      %v1172 = vpop.f32.mrb[0].mxu0
      %v1173 = vadd.f32 %v318, %v1172
      %v1174 = vpop.f32.mrb[0].mxu0
      %1175 = vmatprep.mubr.bf16.mxu0 0
      %1176 = vmatmul.mubr.bf16.gmra.mrb[0].mxu0 %v777
      %v1177 = vpop.f32.mrb[0].mxu0
      %v1178 = vadd.f32 %v318, %v1177
      %v1179 = vpop.f32.mrb[0].mxu0
      %v1180 = vpop.f32.mrb[0].mxu0
      %v1181 = vadd.f32 %v318, %v1180
      %v1182 = vpop.f32.mrb[0].mxu0
      %1183 = vmatprep.mubr.bf16.mxu0 0
      %1184 = vmatmul.mubr.bf16.gmra.mrb[0].mxu0 %v780
      %v1185 = vpop.f32.mrb[0].mxu0
      %v1186 = vadd.f32 %v318, %v1185
      %v1187 = vpop.f32.mrb[0].mxu0
      %v1188 = vpop.f32.mrb[0].mxu0
      %v1189 = vadd.f32 %v318, %v1188
      %v1190 = vpop.f32.mrb[0].mxu0
      %1191 = vmatprep.mubr.bf16.mxu0 0
      %1192 = vmatmul.mubr.bf16.gmra.mrb[0].mxu0 %v783
      %v1193 = vpop.f32.mrb[0].mxu0
      %v1194 = vadd.f32 %v318, %v1193
      %v1195 = vpop.f32.mrb[0].mxu0
      %v1196 = vpop.f32.mrb[0].mxu0
      %v1197 = vadd.f32 %v318, %v1196
      %v1198 = vpop.f32.mrb[0].mxu0
      %1199 = vmatprep.mubr.bf16.mxu0 0
      %1200 = vmatmul.mubr.bf16.gmra.mrb[0].mxu0 %v786
      %v1201 = vpop.f32.mrb[0].mxu0
      %v1202 = vadd.f32 %v318, %v1201
      %v1203 = vpop.f32.mrb[0].mxu0
      %v1204 = vpop.f32.mrb[0].mxu0
      %v1205 = vadd.f32 %v318, %v1204
      %v1206 = vpop.f32.mrb[0].mxu0
      %1207 = vmatprep.mubr.bf16.mxu0 0
      %1208 = vmatmul.mubr.bf16.gmra.mrb[0].mxu0 %v789
      %v1209 = vpop.f32.mrb[0].mxu0
      %v1210 = vadd.f32 %v318, %v1209
      %v1211 = vpop.f32.mrb[0].mxu0
      %v1212 = vpop.f32.mrb[0].mxu0
      %v1213 = vadd.f32 %v318, %v1212
      %v1214 = vpop.f32.mrb[0].mxu0
      %1215 = vmatprep.mubr.bf16.mxu0 0
      %1216 = vmatmul.mubr.bf16.gmra.mrb[0].mxu0 %v792
      %v1217 = vpop.f32.mrb[0].mxu0
      %v1218 = vadd.f32 %v318, %v1217
      %v1219 = vpop.f32.mrb[0].mxu0
      %v1220 = vpop.f32.mrb[0].mxu0
      %v1221 = vadd.f32 %v318, %v1220
      %v1222 = vpop.f32.mrb[0].mxu0
      %1223 = vmatprep.mubr.bf16.mxu0 0
      %1224 = vmatmul.mubr.bf16.gmra.mrb[0].mxu0 %v795
      %v1225 = vpop.f32.mrb[0].mxu0
      %v1226 = vadd.f32 %v318, %v1225
      %v1227 = vpop.f32.mrb[0].mxu0
      %v1228 = vpop.f32.mrb[0].mxu0
      %v1229 = vadd.f32 %v318, %v1228
      %v1230 = vpop.f32.mrb[0].mxu0
      %1231 = vmatprep.mubr.bf16.mxu0 0
      %1232 = vmatmul.mubr.bf16.gmra.mrb[0].mxu0 %v798
      %v1233 = vpop.f32.mrb[0].mxu0
      %v1234 = vadd.f32 %v318, %v1233
      %v1235 = vpop.f32.mrb[0].mxu0
      %v1236 = vpop.f32.mrb[0].mxu0
      %v1237 = vadd.f32 %v318, %v1236
      %v1238 = vpop.f32.mrb[0].mxu0
      %1239 = vmatprep.mubr.bf16.mxu0 0
      %1240 = vmatmul.mubr.bf16.gmra.mrb[0].mxu0 %v801
      %v1241 = vpop.f32.mrb[0].mxu0
      %v1242 = vadd.f32 %v318, %v1241
      %v1243 = vpop.f32.mrb[0].mxu0
      %v1244 = vpop.f32.mrb[0].mxu0
      %v1245 = vadd.f32 %v318, %v1244
      %v1246 = vpop.f32.mrb[0].mxu0
      %1247 = vmatprep.mubr.bf16.mxu0 0
      %1248 = vmatmul.mubr.bf16.gmra.mrb[0].mxu0 %v804
      %v1249 = vpop.f32.mrb[0].mxu0
      %v1250 = vadd.f32 %v318, %v1249
      %v1251 = vpop.f32.mrb[0].mxu0
      %v1252 = vpop.f32.mrb[0].mxu0
      %v1253 = vadd.f32 %v318, %v1252
      %v1254 = vpop.f32.mrb[0].mxu0
      %1255 = vmatprep.mubr.bf16.mxu0 0
      %1256 = vmatmul.mubr.bf16.gmra.mrb[0].mxu0 %v807
      %v1257 = vpop.f32.mrb[0].mxu0
      %v1258 = vadd.f32 %v318, %v1257
      %v1259 = vpop.f32.mrb[0].mxu0
      %v1260 = vpop.f32.mrb[0].mxu0
      %v1261 = vadd.f32 %v318, %v1260
      %v1262 = vpop.f32.mrb[0].mxu0
      %1263 = vmatprep.mubr.bf16.mxu0 0
      %1264 = vmatmul.mubr.bf16.gmra.mrb[0].mxu0 %v810
      %v1265 = vpop.f32.mrb[0].mxu0
      %v1266 = vadd.f32 %v318, %v1265
      %v1267 = vpop.f32.mrb[0].mxu0
      %v1268 = vpop.f32.mrb[0].mxu0
      %v1269 = vadd.f32 %v318, %v1268
      %v1270 = vpop.f32.mrb[0].mxu0
      %1271 = vmatprep.mubr.bf16.mxu0 0
      %1272 = vmatmul.mubr.bf16.gmra.mrb[0].mxu0 %v813
      %v1273 = vpop.f32.mrb[0].mxu0
      %v1274 = vadd.f32 %v318, %v1273
      %v1275 = vpop.f32.mrb[0].mxu0
      %v1276 = vpop.f32.mrb[0].mxu0
      %v1277 = vadd.f32 %v318, %v1276
      %v1278 = vpop.f32.mrb[0].mxu0
      %1279 = vmatprep.mubr.bf16.mxu0 0
      %1280 = vmatmul.mubr.bf16.gmra.mrb[0].mxu0 %v816
      %v1281 = vpop.f32.mrb[0].mxu0
      %v1282 = vadd.f32 %v318, %v1281
      %v1283 = vpop.f32.mrb[0].mxu0
      %v1284 = vpop.f32.mrb[0].mxu0
      %v1285 = vadd.f32 %v318, %v1284
      %v1286 = vpop.f32.mrb[0].mxu0
      %1287 = vmatprep.mubr.bf16.mxu0 0
      %1288 = vmatmul.mubr.bf16.gmra.mrb[0].mxu0 %v819
      %v1289 = vpop.f32.mrb[0].mxu0
      %v1290 = vadd.f32 %v318, %v1289
      %v1291 = vpop.f32.mrb[0].mxu0
      %v1292 = vpop.f32.mrb[0].mxu0
      %v1293 = vadd.f32 %v318, %v1292
      %v1294 = vpop.f32.mrb[0].mxu0
      %1295 = vmatprep.mubr.bf16.mxu0 0
      %1296 = vmatmul.mubr.bf16.gmra.mrb[0].mxu0 %v822
      %v1297 = vpop.f32.mrb[0].mxu0
      %v1298 = vadd.f32 %v318, %v1297
      %v1299 = vpop.f32.mrb[0].mxu0
      %v1300 = vpop.f32.mrb[0].mxu0
      %v1301 = vadd.f32 %v318, %v1300
      %v1302 = vpop.f32.mrb[0].mxu0
      %1303 = vmatprep.mubr.bf16.mxu0 0
      %1304 = vmatmul.mubr.bf16.gmra.mrb[0].mxu0 %v825
      %v1305 = vpop.f32.mrb[0].mxu0
      %v1306 = vadd.f32 %v318, %v1305
      %v1307 = vpop.f32.mrb[0].mxu0
      %v1308 = vpop.f32.mrb[0].mxu0
      %v1309 = vadd.f32 %v318, %v1308
      %v1310 = vpop.f32.mrb[0].mxu0
      %1311 = vmatprep.mubr.bf16.mxu0 0
      %1312 = vmatmul.mubr.bf16.gmra.mrb[0].mxu0 %v828
      %v1313 = vpop.f32.mrb[0].mxu0
      %v1314 = vadd.f32 %v318, %v1313
      %v1315 = vpop.f32.mrb[0].mxu0
      %v1316 = vpop.f32.mrb[0].mxu0
      %v1317 = vadd.f32 %v318, %v1316
      %v1318 = vpop.f32.mrb[0].mxu0
      %1319 = vmatprep.mubr.bf16.mxu0 0
      %1320 = vmatmul.mubr.bf16.gmra.mrb[0].mxu0 %v831
      %v1321 = vpop.f32.mrb[0].mxu0
      %v1322 = vadd.f32 %v318, %v1321
      %v1323 = vpop.f32.mrb[0].mxu0
      %v1324 = vpop.f32.mrb[0].mxu0
      %v1325 = vadd.f32 %v318, %v1324
      %v1326 = vpop.f32.mrb[0].mxu0
      %1327 = vmatprep.mubr.bf16.mxu0 0
      %1328 = vmatmul.mubr.bf16.gmra.mrb[0].mxu0 %v834
      %v1329 = vpop.f32.mrb[0].mxu0
      %v1330 = vadd.f32 %v318, %v1329
      %v1331 = vpop.f32.mrb[0].mxu0
      %v1332 = vpop.f32.mrb[0].mxu0
      %v1333 = vadd.f32 %v318, %v1332
      %v1334 = vpop.f32.mrb[0].mxu0
      %1335 = vmatprep.mubr.bf16.mxu0 0
      %1336 = vmatmul.mubr.bf16.gmra.mrb[0].mxu0 %v837
      %v1337 = vpop.f32.mrb[0].mxu0
      %v1338 = vadd.f32 %v318, %v1337
      %v1339 = vpop.f32.mrb[0].mxu0
      %v1340 = vpop.f32.mrb[0].mxu0
      %v1341 = vadd.f32 %v318, %v1340
      %v1342 = vpop.f32.mrb[0].mxu0
      %1343 = vmatprep.mubr.bf16.mxu0 0
      %1344 = vmatmul.mubr.bf16.gmra.mrb[0].mxu0 %v840
      %v1345 = vpop.f32.mrb[0].mxu0
      %v1346 = vadd.f32 %v318, %v1345
      %v1347 = vpop.f32.mrb[0].mxu0
      %v1348 = vpop.f32.mrb[0].mxu0
      %v1349 = vadd.f32 %v318, %v1348
      %v1350 = vpop.f32.mrb[0].mxu0
      %1351 = vmatprep.mubr.bf16.mxu0 0
      %1352 = vmatmul.mubr.bf16.gmra.mrb[0].mxu0 %v843
      %v1353 = vpop.f32.mrb[0].mxu0
      %v1354 = vadd.f32 %v318, %v1353
      %v1355 = vpop.f32.mrb[0].mxu0
      %v1356 = vpop.f32.mrb[0].mxu0
      %v1357 = vadd.f32 %v318, %v1356
      %v1358 = vpop.f32.mrb[0].mxu0
      %1359 = vmatprep.mubr.bf16.mxu0 0
      %1360 = vmatmul.mubr.bf16.gmra.mrb[0].mxu0 %v846
      %v1361 = vpop.f32.mrb[0].mxu0
      %v1362 = vadd.f32 %v318, %v1361
      %v1363 = vpop.f32.mrb[0].mxu0
      %v1364 = vpop.f32.mrb[0].mxu0
      %v1365 = vadd.f32 %v318, %v1364
      %v1366 = vpop.f32.mrb[0].mxu0
      %1367 = vmatprep.mubr.bf16.mxu0 0
      %1368 = vmatmul.mubr.bf16.gmra.mrb[0].mxu0 %v849
      %v1369 = vpop.f32.mrb[0].mxu0
      %v1370 = vadd.f32 %v318, %v1369
      %v1371 = vpop.f32.mrb[0].mxu0
      %v1372 = vpop.f32.mrb[0].mxu0
      %v1373 = vadd.f32 %v318, %v1372
      %v1374 = vpop.f32.mrb[0].mxu0
      %1375 = vmatprep.mubr.bf16.mxu0 0
      %1376 = vmatmul.mubr.bf16.gmra.mrb[0].mxu0 %v852
      %v1377 = vpop.f32.mrb[0].mxu0
      %v1378 = vadd.f32 %v318, %v1377
      %v1379 = vpop.f32.mrb[0].mxu0
      %v1380 = vpop.f32.mrb[0].mxu0
      %v1381 = vadd.f32 %v318, %v1380
      %v1382 = vpop.f32.mrb[0].mxu0
      %1383 = vmatprep.mubr.bf16.mxu0 0
      %1384 = vmatmul.mubr.bf16.gmra.mrb[0].mxu0 %v855
      %v1385 = vpop.f32.mrb[0].mxu0
      %v1386 = vadd.f32 %v318, %v1385
      %v1387 = vpop.f32.mrb[0].mxu0
      %v1388 = vpop.f32.mrb[0].mxu0
      %v1389 = vadd.f32 %v318, %v1388
      %v1390 = vpop.f32.mrb[0].mxu0
      %1391 = vmatprep.mubr.bf16.mxu0 0
      %1392 = vmatmul.mubr.bf16.gmra.mrb[0].mxu0 %v858
      %v1393 = vpop.f32.mrb[0].mxu0
      %v1394 = vadd.f32 %v318, %v1393
      %v1395 = vpop.f32.mrb[0].mxu0
      %v1396 = vpop.f32.mrb[0].mxu0
      %v1397 = vadd.f32 %v318, %v1396
      %v1398 = vpop.f32.mrb[0].mxu0
      %1399 = vmatprep.mubr.bf16.mxu0 0
      %1400 = vmatmul.mubr.bf16.gmra.mrb[0].mxu0 %v861
      %v1401 = vpop.f32.mrb[0].mxu0
      %v1402 = vadd.f32 %v318, %v1401
      %v1403 = vpop.f32.mrb[0].mxu0
      %v1404 = vpop.f32.mrb[0].mxu0
      %v1405 = vadd.f32 %v318, %v1404
      %v1406 = vpop.f32.mrb[0].mxu0
      %1407 = vdwg.mxu0
      %v1408 = vpack.c.bf16 %v901, %v898
      %v1409 = vpack.c.bf16 %v909, %v906
      %v1410 = vpack.c.bf16 %v917, %v914
      %v1411 = vpack.c.bf16 %v925, %v922
      %v1412 = vpack.c.bf16 %v933, %v930
      %v1413 = vpack.c.bf16 %v941, %v938
      %v1414 = vpack.c.bf16 %v949, %v946
      %v1415 = vpack.c.bf16 %v957, %v954
      %v1416 = vpack.c.bf16 %v965, %v962
      %v1417 = vpack.c.bf16 %v973, %v970
      %v1418 = vpack.c.bf16 %v981, %v978
      %v1419 = vpack.c.bf16 %v989, %v986
      %v1420 = vpack.c.bf16 %v997, %v994
      %v1421 = vpack.c.bf16 %v1005, %v1002
      %v1422 = vpack.c.bf16 %v1013, %v1010
      %v1423 = vpack.c.bf16 %v1021, %v1018
      %v1424 = vpack.c.bf16 %v1029, %v1026
      %v1425 = vpack.c.bf16 %v1037, %v1034
      %v1426 = vpack.c.bf16 %v1045, %v1042
      %v1427 = vpack.c.bf16 %v1053, %v1050
      %v1428 = vpack.c.bf16 %v1061, %v1058
      %v1429 = vpack.c.bf16 %v1069, %v1066
      %v1430 = vpack.c.bf16 %v1077, %v1074
      %v1431 = vpack.c.bf16 %v1085, %v1082
      %v1432 = vpack.c.bf16 %v1093, %v1090
      %v1433 = vpack.c.bf16 %v1101, %v1098
      %v1434 = vpack.c.bf16 %v1109, %v1106
      %v1435 = vpack.c.bf16 %v1117, %v1114
      %v1436 = vpack.c.bf16 %v1125, %v1122
      %v1437 = vpack.c.bf16 %v1133, %v1130
      %v1438 = vpack.c.bf16 %v1141, %v1138
      %v1439 = vpack.c.bf16 %v1149, %v1146
      %v1440 = vpack.c.bf16 %v1157, %v1154
      %v1441 = vpack.c.bf16 %v1165, %v1162
      %v1442 = vpack.c.bf16 %v1173, %v1170
      %v1443 = vpack.c.bf16 %v1181, %v1178
      %v1444 = vpack.c.bf16 %v1189, %v1186
      %v1445 = vpack.c.bf16 %v1197, %v1194
      %v1446 = vpack.c.bf16 %v1205, %v1202
      %v1447 = vpack.c.bf16 %v1213, %v1210
      %v1448 = vpack.c.bf16 %v1221, %v1218
      %v1449 = vpack.c.bf16 %v1229, %v1226
      %v1450 = vpack.c.bf16 %v1237, %v1234
      %v1451 = vpack.c.bf16 %v1245, %v1242
      %v1452 = vpack.c.bf16 %v1253, %v1250
      %v1453 = vpack.c.bf16 %v1261, %v1258
      %v1454 = vpack.c.bf16 %v1269, %v1266
      %v1455 = vpack.c.bf16 %v1277, %v1274
      %v1456 = vpack.c.bf16 %v1285, %v1282
      %v1457 = vpack.c.bf16 %v1293, %v1290
      %v1458 = vpack.c.bf16 %v1301, %v1298
      %v1459 = vpack.c.bf16 %v1309, %v1306
      %v1460 = vpack.c.bf16 %v1317, %v1314
      %v1461 = vpack.c.bf16 %v1325, %v1322
      %v1462 = vpack.c.bf16 %v1333, %v1330
      %v1463 = vpack.c.bf16 %v1341, %v1338
      %v1464 = vpack.c.bf16 %v1349, %v1346
      %v1465 = vpack.c.bf16 %v1357, %v1354
      %v1466 = vpack.c.bf16 %v1365, %v1362
      %v1467 = vpack.c.bf16 %v1373, %v1370
      %v1468 = vpack.c.bf16 %v1381, %v1378
      %v1469 = vpack.c.bf16 %v1389, %v1386
      %v1470 = vpack.c.bf16 %v1397, %v1394
      %v1471 = vpack.c.bf16 %v1405, %v1402
      %v1536 = vunpack.c.l.b16 %v1408
      %v1537 = vunpack.c.h.b16 %v1408
      %v1538 = vunpack.c.l.b16 %v1409
      %v1539 = vunpack.c.h.b16 %v1409
      %v1540 = vunpack.c.l.b16 %v1410
      %v1541 = vunpack.c.h.b16 %v1410
      %v1542 = vunpack.c.l.b16 %v1411
      %v1543 = vunpack.c.h.b16 %v1411
      %v1544 = vunpack.c.l.b16 %v1412
      %v1545 = vunpack.c.h.b16 %v1412
      %v1546 = vunpack.c.l.b16 %v1413
      %v1547 = vunpack.c.h.b16 %v1413
      %v1548 = vunpack.c.l.b16 %v1414
      %v1549 = vunpack.c.h.b16 %v1414
      %v1550 = vunpack.c.l.b16 %v1415
      %v1551 = vunpack.c.h.b16 %v1415
      %v1552 = vunpack.c.l.b16 %v1416
      %v1553 = vunpack.c.h.b16 %v1416
      %v1554 = vunpack.c.l.b16 %v1417
      %v1555 = vunpack.c.h.b16 %v1417
      %v1556 = vunpack.c.l.b16 %v1418
      %v1557 = vunpack.c.h.b16 %v1418
      %v1558 = vunpack.c.l.b16 %v1419
      %v1559 = vunpack.c.h.b16 %v1419
      %v1560 = vunpack.c.l.b16 %v1420
      %v1561 = vunpack.c.h.b16 %v1420
      %v1562 = vunpack.c.l.b16 %v1421
      %v1563 = vunpack.c.h.b16 %v1421
      %v1564 = vunpack.c.l.b16 %v1422
      %v1565 = vunpack.c.h.b16 %v1422
      %v1566 = vunpack.c.l.b16 %v1423
      %v1567 = vunpack.c.h.b16 %v1423
      %v1568 = vunpack.c.l.b16 %v1424
      %v1569 = vunpack.c.h.b16 %v1424
      %v1570 = vunpack.c.l.b16 %v1425
      %v1571 = vunpack.c.h.b16 %v1425
      %v1572 = vunpack.c.l.b16 %v1426
      %v1573 = vunpack.c.h.b16 %v1426
      %v1574 = vunpack.c.l.b16 %v1427
      %v1575 = vunpack.c.h.b16 %v1427
      %v1576 = vunpack.c.l.b16 %v1428
      %v1577 = vunpack.c.h.b16 %v1428
      %v1578 = vunpack.c.l.b16 %v1429
      %v1579 = vunpack.c.h.b16 %v1429
      %v1580 = vunpack.c.l.b16 %v1430
      %v1581 = vunpack.c.h.b16 %v1430
      %v1582 = vunpack.c.l.b16 %v1431
      %v1583 = vunpack.c.h.b16 %v1431
      %v1584 = vunpack.c.l.b16 %v1432
      %v1585 = vunpack.c.h.b16 %v1432
      %v1586 = vunpack.c.l.b16 %v1433
      %v1587 = vunpack.c.h.b16 %v1433
      %v1588 = vunpack.c.l.b16 %v1434
      %v1589 = vunpack.c.h.b16 %v1434
      %v1590 = vunpack.c.l.b16 %v1435
      %v1591 = vunpack.c.h.b16 %v1435
      %v1592 = vunpack.c.l.b16 %v1436
      %v1593 = vunpack.c.h.b16 %v1436
      %v1594 = vunpack.c.l.b16 %v1437
      %v1595 = vunpack.c.h.b16 %v1437
      %v1596 = vunpack.c.l.b16 %v1438
      %v1597 = vunpack.c.h.b16 %v1438
      %v1598 = vunpack.c.l.b16 %v1439
      %v1599 = vunpack.c.h.b16 %v1439
      %v1600 = vunpack.c.l.b16 %v1440
      %v1601 = vunpack.c.h.b16 %v1440
      %v1602 = vunpack.c.l.b16 %v1441
      %v1603 = vunpack.c.h.b16 %v1441
      %v1604 = vunpack.c.l.b16 %v1442
      %v1605 = vunpack.c.h.b16 %v1442
      %v1606 = vunpack.c.l.b16 %v1443
      %v1607 = vunpack.c.h.b16 %v1443
      %v1608 = vunpack.c.l.b16 %v1444
      %v1609 = vunpack.c.h.b16 %v1444
      %v1610 = vunpack.c.l.b16 %v1445
      %v1611 = vunpack.c.h.b16 %v1445
      %v1612 = vunpack.c.l.b16 %v1446
      %v1613 = vunpack.c.h.b16 %v1446
      %v1614 = vunpack.c.l.b16 %v1447
      %v1615 = vunpack.c.h.b16 %v1447
      %v1616 = vunpack.c.l.b16 %v1448
      %v1617 = vunpack.c.h.b16 %v1448
      %v1618 = vunpack.c.l.b16 %v1449
      %v1619 = vunpack.c.h.b16 %v1449
      %v1620 = vunpack.c.l.b16 %v1450
      %v1621 = vunpack.c.h.b16 %v1450
      %v1622 = vunpack.c.l.b16 %v1451
      %v1623 = vunpack.c.h.b16 %v1451
      %v1624 = vunpack.c.l.b16 %v1452
      %v1625 = vunpack.c.h.b16 %v1452
      %v1626 = vunpack.c.l.b16 %v1453
      %v1627 = vunpack.c.h.b16 %v1453
      %v1628 = vunpack.c.l.b16 %v1454
      %v1629 = vunpack.c.h.b16 %v1454
      %v1630 = vunpack.c.l.b16 %v1455
      %v1631 = vunpack.c.h.b16 %v1455
      %v1632 = vunpack.c.l.b16 %v1456
      %v1633 = vunpack.c.h.b16 %v1456
      %v1634 = vunpack.c.l.b16 %v1457
      %v1635 = vunpack.c.h.b16 %v1457
      %v1636 = vunpack.c.l.b16 %v1458
      %v1637 = vunpack.c.h.b16 %v1458
      %v1638 = vunpack.c.l.b16 %v1459
      %v1639 = vunpack.c.h.b16 %v1459
      %v1640 = vunpack.c.l.b16 %v1460
      %v1641 = vunpack.c.h.b16 %v1460
      %v1642 = vunpack.c.l.b16 %v1461
      %v1643 = vunpack.c.h.b16 %v1461
      %v1644 = vunpack.c.l.b16 %v1462
      %v1645 = vunpack.c.h.b16 %v1462
      %v1646 = vunpack.c.l.b16 %v1463
      %v1647 = vunpack.c.h.b16 %v1463
      %v1648 = vunpack.c.l.b16 %v1464
      %v1649 = vunpack.c.h.b16 %v1464
      %v1650 = vunpack.c.l.b16 %v1465
      %v1651 = vunpack.c.h.b16 %v1465
      %v1652 = vunpack.c.l.b16 %v1466
      %v1653 = vunpack.c.h.b16 %v1466
      %v1654 = vunpack.c.l.b16 %v1467
      %v1655 = vunpack.c.h.b16 %v1467
      %v1656 = vunpack.c.l.b16 %v1468
      %v1657 = vunpack.c.h.b16 %v1468
      %v1658 = vunpack.c.l.b16 %v1469
      %v1659 = vunpack.c.h.b16 %v1469
      %v1660 = vunpack.c.l.b16 %v1470
      %v1661 = vunpack.c.h.b16 %v1470
      %v1662 = vunpack.c.l.b16 %v1471
      %v1663 = vunpack.c.h.b16 %v1471
      %v1664 = vpack.c.b16 %v1536, %v1536
      %v1665 = vpack.c.b16 %v1537, %v1537
      %v1666 = vpack.c.b16 %v1538, %v1538
      %v1667 = vpack.c.b16 %v1539, %v1539
      %v1668 = vpack.c.b16 %v1540, %v1540
      %v1669 = vpack.c.b16 %v1541, %v1541
      %v1670 = vpack.c.b16 %v1542, %v1542
      %v1671 = vpack.c.b16 %v1543, %v1543
      %v1672 = vpack.c.b16 %v1544, %v1544
      %v1673 = vpack.c.b16 %v1545, %v1545
      %v1674 = vpack.c.b16 %v1546, %v1546
      %v1675 = vpack.c.b16 %v1547, %v1547
      %v1676 = vpack.c.b16 %v1548, %v1548
      %v1677 = vpack.c.b16 %v1549, %v1549
      %v1678 = vpack.c.b16 %v1550, %v1550
      %v1679 = vpack.c.b16 %v1551, %v1551
      %v1680 = vpack.c.b16 %v1552, %v1552
      %v1681 = vpack.c.b16 %v1553, %v1553
      %v1682 = vpack.c.b16 %v1554, %v1554
      %v1683 = vpack.c.b16 %v1555, %v1555
      %v1684 = vpack.c.b16 %v1556, %v1556
      %v1685 = vpack.c.b16 %v1557, %v1557
      %v1686 = vpack.c.b16 %v1558, %v1558
      %v1687 = vpack.c.b16 %v1559, %v1559
      %v1688 = vpack.c.b16 %v1560, %v1560
      %v1689 = vpack.c.b16 %v1561, %v1561
      %v1690 = vpack.c.b16 %v1562, %v1562
      %v1691 = vpack.c.b16 %v1563, %v1563
      %v1692 = vpack.c.b16 %v1564, %v1564
      %v1693 = vpack.c.b16 %v1565, %v1565
      %v1694 = vpack.c.b16 %v1566, %v1566
      %v1695 = vpack.c.b16 %v1567, %v1567
      %v1696 = vpack.c.b16 %v1568, %v1568
      %v1697 = vpack.c.b16 %v1569, %v1569
      %v1698 = vpack.c.b16 %v1570, %v1570
      %v1699 = vpack.c.b16 %v1571, %v1571
      %v1700 = vpack.c.b16 %v1572, %v1572
      %v1701 = vpack.c.b16 %v1573, %v1573
      %v1702 = vpack.c.b16 %v1574, %v1574
      %v1703 = vpack.c.b16 %v1575, %v1575
      %v1704 = vpack.c.b16 %v1576, %v1576
      %v1705 = vpack.c.b16 %v1577, %v1577
      %v1706 = vpack.c.b16 %v1578, %v1578
      %v1707 = vpack.c.b16 %v1579, %v1579
      %v1708 = vpack.c.b16 %v1580, %v1580
      %v1709 = vpack.c.b16 %v1581, %v1581
      %v1710 = vpack.c.b16 %v1582, %v1582
      %v1711 = vpack.c.b16 %v1583, %v1583
      %v1712 = vpack.c.b16 %v1584, %v1584
      %v1713 = vpack.c.b16 %v1585, %v1585
      %v1714 = vpack.c.b16 %v1586, %v1586
      %v1715 = vpack.c.b16 %v1587, %v1587
      %v1716 = vpack.c.b16 %v1588, %v1588
      %v1717 = vpack.c.b16 %v1589, %v1589
      %v1718 = vpack.c.b16 %v1590, %v1590
      %v1719 = vpack.c.b16 %v1591, %v1591
      %v1720 = vpack.c.b16 %v1592, %v1592
      %v1721 = vpack.c.b16 %v1593, %v1593
      %v1722 = vpack.c.b16 %v1594, %v1594
      %v1723 = vpack.c.b16 %v1595, %v1595
      %v1724 = vpack.c.b16 %v1596, %v1596
      %v1725 = vpack.c.b16 %v1597, %v1597
      %v1726 = vpack.c.b16 %v1598, %v1598
      %v1727 = vpack.c.b16 %v1599, %v1599
      %v1728 = vpack.c.b16 %v1600, %v1600
      %v1729 = vpack.c.b16 %v1601, %v1601
      %v1730 = vpack.c.b16 %v1602, %v1602
      %v1731 = vpack.c.b16 %v1603, %v1603
      %v1732 = vpack.c.b16 %v1604, %v1604
      %v1733 = vpack.c.b16 %v1605, %v1605
      %v1734 = vpack.c.b16 %v1606, %v1606
      %v1735 = vpack.c.b16 %v1607, %v1607
      %v1736 = vpack.c.b16 %v1608, %v1608
      %v1737 = vpack.c.b16 %v1609, %v1609
      %v1738 = vpack.c.b16 %v1610, %v1610
      %v1739 = vpack.c.b16 %v1611, %v1611
      %v1740 = vpack.c.b16 %v1612, %v1612
      %v1741 = vpack.c.b16 %v1613, %v1613
      %v1742 = vpack.c.b16 %v1614, %v1614
      %v1743 = vpack.c.b16 %v1615, %v1615
      %v1744 = vpack.c.b16 %v1616, %v1616
      %v1745 = vpack.c.b16 %v1617, %v1617
      %v1746 = vpack.c.b16 %v1618, %v1618
      %v1747 = vpack.c.b16 %v1619, %v1619
      %v1748 = vpack.c.b16 %v1620, %v1620
      %v1749 = vpack.c.b16 %v1621, %v1621
      %v1750 = vpack.c.b16 %v1622, %v1622
      %v1751 = vpack.c.b16 %v1623, %v1623
      %v1752 = vpack.c.b16 %v1624, %v1624
      %v1753 = vpack.c.b16 %v1625, %v1625
      %v1754 = vpack.c.b16 %v1626, %v1626
      %v1755 = vpack.c.b16 %v1627, %v1627
      %v1756 = vpack.c.b16 %v1628, %v1628
      %v1757 = vpack.c.b16 %v1629, %v1629
      %v1758 = vpack.c.b16 %v1630, %v1630
      %v1759 = vpack.c.b16 %v1631, %v1631
      %v1760 = vpack.c.b16 %v1632, %v1632
      %v1761 = vpack.c.b16 %v1633, %v1633
      %v1762 = vpack.c.b16 %v1634, %v1634
      %v1763 = vpack.c.b16 %v1635, %v1635
      %v1764 = vpack.c.b16 %v1636, %v1636
      %v1765 = vpack.c.b16 %v1637, %v1637
      %v1766 = vpack.c.b16 %v1638, %v1638
      %v1767 = vpack.c.b16 %v1639, %v1639
      %v1768 = vpack.c.b16 %v1640, %v1640
      %v1769 = vpack.c.b16 %v1641, %v1641
      %v1770 = vpack.c.b16 %v1642, %v1642
      %v1771 = vpack.c.b16 %v1643, %v1643
      %v1772 = vpack.c.b16 %v1644, %v1644
      %v1773 = vpack.c.b16 %v1645, %v1645
      %v1774 = vpack.c.b16 %v1646, %v1646
      %v1775 = vpack.c.b16 %v1647, %v1647
      %v1776 = vpack.c.b16 %v1648, %v1648
      %v1777 = vpack.c.b16 %v1649, %v1649
      %v1778 = vpack.c.b16 %v1650, %v1650
      %v1779 = vpack.c.b16 %v1651, %v1651
      %v1780 = vpack.c.b16 %v1652, %v1652
      %v1781 = vpack.c.b16 %v1653, %v1653
      %v1782 = vpack.c.b16 %v1654, %v1654
      %v1783 = vpack.c.b16 %v1655, %v1655
      %v1784 = vpack.c.b16 %v1656, %v1656
      %v1785 = vpack.c.b16 %v1657, %v1657
      %v1786 = vpack.c.b16 %v1658, %v1658
      %v1787 = vpack.c.b16 %v1659, %v1659
      %v1788 = vpack.c.b16 %v1660, %v1660
      %v1789 = vpack.c.b16 %v1661, %v1661
      %v1790 = vpack.c.b16 %v1662, %v1662
      %v1791 = vpack.c.b16 %v1663, %v1663
      %vm1920 = vcmask 191488
      %1921 = vst.msk [vmem:[%s172] sm:$0xf] %vm1920, %v1664
      %1922 = vst.msk [vmem:[%s172 + $0x4] sm:$0xf] %vm1920, %v1665
      %1923 = vst.msk [vmem:[%s172 + $0x8] sm:$0xf] %vm1920, %v1666
      %1924 = vst.msk [vmem:[%s172 + $0xc] sm:$0xf] %vm1920, %v1667
      %1925 = vst.msk [vmem:[%s172 + $0x10] sm:$0xf] %vm1920, %v1668
      %1926 = vst.msk [vmem:[%s172 + $0x14] sm:$0xf] %vm1920, %v1669
      %1927 = vst.msk [vmem:[%s172 + $0x18] sm:$0xf] %vm1920, %v1670
      %1928 = vst.msk [vmem:[%s172 + $0x1c] sm:$0xf] %vm1920, %v1671
      %1929 = vst.msk [vmem:[%s172 + $0x20] sm:$0xf] %vm1920, %v1672
      %1930 = vst.msk [vmem:[%s172 + $0x24] sm:$0xf] %vm1920, %v1673
      %1931 = vst.msk [vmem:[%s172 + $0x28] sm:$0xf] %vm1920, %v1674
      %1932 = vst.msk [vmem:[%s172 + $0x2c] sm:$0xf] %vm1920, %v1675
      %1933 = vst.msk [vmem:[%s172 + $0x30] sm:$0xf] %vm1920, %v1676
      %1934 = vst.msk [vmem:[%s172 + $0x34] sm:$0xf] %vm1920, %v1677
      %1935 = vst.msk [vmem:[%s172 + $0x38] sm:$0xf] %vm1920, %v1678
      %1936 = vst.msk [vmem:[%s172 + $0x3c] sm:$0xf] %vm1920, %v1679
      %1937 = vst.msk [vmem:[%s172 + $0x40] sm:$0xf] %vm1920, %v1680
      %1938 = vst.msk [vmem:[%s172 + $0x44] sm:$0xf] %vm1920, %v1681
      %1939 = vst.msk [vmem:[%s172 + $0x48] sm:$0xf] %vm1920, %v1682
      %1940 = vst.msk [vmem:[%s172 + $0x4c] sm:$0xf] %vm1920, %v1683
      %1941 = vst.msk [vmem:[%s172 + $0x50] sm:$0xf] %vm1920, %v1684
      %1942 = vst.msk [vmem:[%s172 + $0x54] sm:$0xf] %vm1920, %v1685
      %1943 = vst.msk [vmem:[%s172 + $0x58] sm:$0xf] %vm1920, %v1686
      %1944 = vst.msk [vmem:[%s172 + $0x5c] sm:$0xf] %vm1920, %v1687
      %1945 = vst.msk [vmem:[%s172 + $0x60] sm:$0xf] %vm1920, %v1688
      %1946 = vst.msk [vmem:[%s172 + $0x64] sm:$0xf] %vm1920, %v1689
      %1947 = vst.msk [vmem:[%s172 + $0x68] sm:$0xf] %vm1920, %v1690
      %1948 = vst.msk [vmem:[%s172 + $0x6c] sm:$0xf] %vm1920, %v1691
      %1949 = vst.msk [vmem:[%s172 + $0x70] sm:$0xf] %vm1920, %v1692
      %1950 = vst.msk [vmem:[%s172 + $0x74] sm:$0xf] %vm1920, %v1693
      %1951 = vst.msk [vmem:[%s172 + $0x78] sm:$0xf] %vm1920, %v1694
      %1952 = vst.msk [vmem:[%s172 + $0x7c] sm:$0xf] %vm1920, %v1695
      %1953 = vst.msk [vmem:[%s172 + $0x80] sm:$0xf] %vm1920, %v1696
      %1954 = vst.msk [vmem:[%s172 + $0x84] sm:$0xf] %vm1920, %v1697
      %1955 = vst.msk [vmem:[%s172 + $0x88] sm:$0xf] %vm1920, %v1698
      %1956 = vst.msk [vmem:[%s172 + $0x8c] sm:$0xf] %vm1920, %v1699
      %1957 = vst.msk [vmem:[%s172 + $0x90] sm:$0xf] %vm1920, %v1700
      %1958 = vst.msk [vmem:[%s172 + $0x94] sm:$0xf] %vm1920, %v1701
      %1959 = vst.msk [vmem:[%s172 + $0x98] sm:$0xf] %vm1920, %v1702
      %1960 = vst.msk [vmem:[%s172 + $0x9c] sm:$0xf] %vm1920, %v1703
      %1961 = vst.msk [vmem:[%s172 + $0xa0] sm:$0xf] %vm1920, %v1704
      %1962 = vst.msk [vmem:[%s172 + $0xa4] sm:$0xf] %vm1920, %v1705
      %1963 = vst.msk [vmem:[%s172 + $0xa8] sm:$0xf] %vm1920, %v1706
      %1964 = vst.msk [vmem:[%s172 + $0xac] sm:$0xf] %vm1920, %v1707
      %1965 = vst.msk [vmem:[%s172 + $0xb0] sm:$0xf] %vm1920, %v1708
      %1966 = vst.msk [vmem:[%s172 + $0xb4] sm:$0xf] %vm1920, %v1709
      %1967 = vst.msk [vmem:[%s172 + $0xb8] sm:$0xf] %vm1920, %v1710
      %1968 = vst.msk [vmem:[%s172 + $0xbc] sm:$0xf] %vm1920, %v1711
      %1969 = vst.msk [vmem:[%s172 + $0xc0] sm:$0xf] %vm1920, %v1712
      %1970 = vst.msk [vmem:[%s172 + $0xc4] sm:$0xf] %vm1920, %v1713
      %1971 = vst.msk [vmem:[%s172 + $0xc8] sm:$0xf] %vm1920, %v1714
      %1972 = vst.msk [vmem:[%s172 + $0xcc] sm:$0xf] %vm1920, %v1715
      %1973 = vst.msk [vmem:[%s172 + $0xd0] sm:$0xf] %vm1920, %v1716
      %1974 = vst.msk [vmem:[%s172 + $0xd4] sm:$0xf] %vm1920, %v1717
      %1975 = vst.msk [vmem:[%s172 + $0xd8] sm:$0xf] %vm1920, %v1718
      %1976 = vst.msk [vmem:[%s172 + $0xdc] sm:$0xf] %vm1920, %v1719
      %1977 = vst.msk [vmem:[%s172 + $0xe0] sm:$0xf] %vm1920, %v1720
      %1978 = vst.msk [vmem:[%s172 + $0xe4] sm:$0xf] %vm1920, %v1721
      %1979 = vst.msk [vmem:[%s172 + $0xe8] sm:$0xf] %vm1920, %v1722
      %1980 = vst.msk [vmem:[%s172 + $0xec] sm:$0xf] %vm1920, %v1723
      %1981 = vst.msk [vmem:[%s172 + $0xf0] sm:$0xf] %vm1920, %v1724
      %1982 = vst.msk [vmem:[%s172 + $0xf4] sm:$0xf] %vm1920, %v1725
      %1983 = vst.msk [vmem:[%s172 + $0xf8] sm:$0xf] %vm1920, %v1726
      %1984 = vst.msk [vmem:[%s172 + $0xfc] sm:$0xf] %vm1920, %v1727
      %1985 = vst.msk [vmem:[%s172 + $0x100] sm:$0xf] %vm1920, %v1728
      %1986 = vst.msk [vmem:[%s172 + $0x104] sm:$0xf] %vm1920, %v1729
      %1987 = vst.msk [vmem:[%s172 + $0x108] sm:$0xf] %vm1920, %v1730
      %1988 = vst.msk [vmem:[%s172 + $0x10c] sm:$0xf] %vm1920, %v1731
      %1989 = vst.msk [vmem:[%s172 + $0x110] sm:$0xf] %vm1920, %v1732
      %1990 = vst.msk [vmem:[%s172 + $0x114] sm:$0xf] %vm1920, %v1733
      %1991 = vst.msk [vmem:[%s172 + $0x118] sm:$0xf] %vm1920, %v1734
      %1992 = vst.msk [vmem:[%s172 + $0x11c] sm:$0xf] %vm1920, %v1735
      %1993 = vst.msk [vmem:[%s172 + $0x120] sm:$0xf] %vm1920, %v1736
      %1994 = vst.msk [vmem:[%s172 + $0x124] sm:$0xf] %vm1920, %v1737
      %1995 = vst.msk [vmem:[%s172 + $0x128] sm:$0xf] %vm1920, %v1738
      %1996 = vst.msk [vmem:[%s172 + $0x12c] sm:$0xf] %vm1920, %v1739
      %1997 = vst.msk [vmem:[%s172 + $0x130] sm:$0xf] %vm1920, %v1740
      %1998 = vst.msk [vmem:[%s172 + $0x134] sm:$0xf] %vm1920, %v1741
      %1999 = vst.msk [vmem:[%s172 + $0x138] sm:$0xf] %vm1920, %v1742
      %2000 = vst.msk [vmem:[%s172 + $0x13c] sm:$0xf] %vm1920, %v1743
      %2001 = vst.msk [vmem:[%s172 + $0x140] sm:$0xf] %vm1920, %v1744
      %2002 = vst.msk [vmem:[%s172 + $0x144] sm:$0xf] %vm1920, %v1745
      %2003 = vst.msk [vmem:[%s172 + $0x148] sm:$0xf] %vm1920, %v1746
      %2004 = vst.msk [vmem:[%s172 + $0x14c] sm:$0xf] %vm1920, %v1747
      %2005 = vst.msk [vmem:[%s172 + $0x150] sm:$0xf] %vm1920, %v1748
      %2006 = vst.msk [vmem:[%s172 + $0x154] sm:$0xf] %vm1920, %v1749
      %2007 = vst.msk [vmem:[%s172 + $0x158] sm:$0xf] %vm1920, %v1750
      %2008 = vst.msk [vmem:[%s172 + $0x15c] sm:$0xf] %vm1920, %v1751
      %2009 = vst.msk [vmem:[%s172 + $0x160] sm:$0xf] %vm1920, %v1752
      %2010 = vst.msk [vmem:[%s172 + $0x164] sm:$0xf] %vm1920, %v1753
      %2011 = vst.msk [vmem:[%s172 + $0x168] sm:$0xf] %vm1920, %v1754
      %2012 = vst.msk [vmem:[%s172 + $0x16c] sm:$0xf] %vm1920, %v1755
      %2013 = vst.msk [vmem:[%s172 + $0x170] sm:$0xf] %vm1920, %v1756
      %2014 = vst.msk [vmem:[%s172 + $0x174] sm:$0xf] %vm1920, %v1757
      %2015 = vst.msk [vmem:[%s172 + $0x178] sm:$0xf] %vm1920, %v1758
      %2016 = vst.msk [vmem:[%s172 + $0x17c] sm:$0xf] %vm1920, %v1759
      %2017 = vst.msk [vmem:[%s172 + $0x180] sm:$0xf] %vm1920, %v1760
      %2018 = vst.msk [vmem:[%s172 + $0x184] sm:$0xf] %vm1920, %v1761
      %2019 = vst.msk [vmem:[%s172 + $0x188] sm:$0xf] %vm1920, %v1762
      %2020 = vst.msk [vmem:[%s172 + $0x18c] sm:$0xf] %vm1920, %v1763
      %2021 = vst.msk [vmem:[%s172 + $0x190] sm:$0xf] %vm1920, %v1764
      %2022 = vst.msk [vmem:[%s172 + $0x194] sm:$0xf] %vm1920, %v1765
      %2023 = vst.msk [vmem:[%s172 + $0x198] sm:$0xf] %vm1920, %v1766
      %2024 = vst.msk [vmem:[%s172 + $0x19c] sm:$0xf] %vm1920, %v1767
      %2025 = vst.msk [vmem:[%s172 + $0x1a0] sm:$0xf] %vm1920, %v1768
      %2026 = vst.msk [vmem:[%s172 + $0x1a4] sm:$0xf] %vm1920, %v1769
      %2027 = vst.msk [vmem:[%s172 + $0x1a8] sm:$0xf] %vm1920, %v1770
      %2028 = vst.msk [vmem:[%s172 + $0x1ac] sm:$0xf] %vm1920, %v1771
      %2029 = vst.msk [vmem:[%s172 + $0x1b0] sm:$0xf] %vm1920, %v1772
      %2030 = vst.msk [vmem:[%s172 + $0x1b4] sm:$0xf] %vm1920, %v1773
      %2031 = vst.msk [vmem:[%s172 + $0x1b8] sm:$0xf] %vm1920, %v1774
      %2032 = vst.msk [vmem:[%s172 + $0x1bc] sm:$0xf] %vm1920, %v1775
      %2033 = vst.msk [vmem:[%s172 + $0x1c0] sm:$0xf] %vm1920, %v1776
      %2034 = vst.msk [vmem:[%s172 + $0x1c4] sm:$0xf] %vm1920, %v1777
      %2035 = vst.msk [vmem:[%s172 + $0x1c8] sm:$0xf] %vm1920, %v1778
      %2036 = vst.msk [vmem:[%s172 + $0x1cc] sm:$0xf] %vm1920, %v1779
      %2037 = vst.msk [vmem:[%s172 + $0x1d0] sm:$0xf] %vm1920, %v1780
      %2038 = vst.msk [vmem:[%s172 + $0x1d4] sm:$0xf] %vm1920, %v1781
      %2039 = vst.msk [vmem:[%s172 + $0x1d8] sm:$0xf] %vm1920, %v1782
      %2040 = vst.msk [vmem:[%s172 + $0x1dc] sm:$0xf] %vm1920, %v1783
      %2041 = vst.msk [vmem:[%s172 + $0x1e0] sm:$0xf] %vm1920, %v1784
      %2042 = vst.msk [vmem:[%s172 + $0x1e4] sm:$0xf] %vm1920, %v1785
      %2043 = vst.msk [vmem:[%s172 + $0x1e8] sm:$0xf] %vm1920, %v1786
      %2044 = vst.msk [vmem:[%s172 + $0x1ec] sm:$0xf] %vm1920, %v1787
      %2045 = vst.msk [vmem:[%s172 + $0x1f0] sm:$0xf] %vm1920, %v1788
      %2046 = vst.msk [vmem:[%s172 + $0x1f4] sm:$0xf] %vm1920, %v1789
      %2047 = vst.msk [vmem:[%s172 + $0x1f8] sm:$0xf] %vm1920, %v1790
      %2048 = vst.msk [vmem:[%s172 + $0x1fc] sm:$0xf] %vm1920, %v1791
      %s2049 = smul.u32 128, %s14
      %p2050 = scmp.lt.s32.totalorder %s2049, 767
      %s2051 = scalar_select %p2050, %s2049, 767
      %s2052 = smul.addr %s2051, 4
      %s2053 = scalar_lea.vmem %s3, %s2052
      // Predicated region
      $region33: #{pilotnet_forward.3} parent=31 // pred_check
        %p2054 = pneg %p100
      $region34: #{pilotnet_forward.3} parent=31 // pred_check_branch
        %2056 = sbr.rel (%p2054) target = $region36
      $region35: #{pilotnet_forward.3} parent=31 // pred_region
        %s2057 = smul.u32 128, %s14
      $region36: #{pilotnet_forward.3} parent=31 // pred_fallthru
        _
    $region32: #{pilotnet_forward.3} parent=5 // pred_fallthru
      _
    %p2058 = scmp.le.s32.totalorder 2, %s9
    // Predicated region
    $region37: #{pilotnet_forward.3} parent=5 // pred_check
      %p2059 = pneg %p2058
    $region38: #{pilotnet_forward.3} parent=5 // pred_check_branch
      %2061 = sbr.rel (%p2059) target = $region40
    $region39: #{pilotnet_forward.3} parent=5 // pred_region
      %s2062 = ssub.s32 %s9, 2
      // Predicated region
      $region41: #{pilotnet_forward.3} parent=39 // pred_check
        %p2063 = pneg %p106
      $region42: #{pilotnet_forward.3} parent=39 // pred_check_branch
        %2065 = sbr.rel (%p2063) target = $region44
      $region43: #{pilotnet_forward.3} parent=39 // pred_region
        %s2066 = smul.u32 128, %s15
        %p2067 = scmp.lt.s32.totalorder %s2066, 767
        %s2068 = scalar_select %p2067, %s2066, 767
        %s2069 = smul.addr %s2068, 4
        %s2070 = scalar_lea.vmem %s3, %s2069
      $region44: #{pilotnet_forward.3} parent=39 // pred_fallthru
        _
    $region40: #{pilotnet_forward.3} parent=5 // pred_fallthru
      _
  $region6: #{pilotnet_forward.3} parent=0 // loop_footer
    %s13 = sadd.s32 1, %s9
  $region7: #{pilotnet_forward.3} parent=0 // loop_footer_branch
    %8 = sbr.rel target = $region3
  $region8: #{pilotnet_forward.3} parent=0 // loop_exit
    _

// kernel: pilotnet_forward.4
$region0: #{pilotnet_forward.4}
  #allocation0 [shape = 'u32[]', space=smem, size = 0x4, offset = 0x4, fixed_abs, tag = 'smem constant byte address 0x4 - core index']
  #allocation1 [shape = 'u32[144,128]{1,0:T(1,128)}', space=vmem, size = 0x12000, scoped, tag = 'internal scratch']
  %s0 = inlined_call_operand.vmem [shape: bf16[1344,608], index: 0, kind: input, shape index: {}]
  %s1 = inlined_call_operand.vmem [shape: bf16[608,36], index: 1, kind: input, shape index: {}]
  %s2 = inlined_call_operand.vmem [shape: f32[1,36], index: 2, kind: input, shape index: {}]
  %s3 = inlined_call_operand.vmem [shape: bf16[1344,36], index: 3, kind: output, shape index: {}]
  %s4 = sld [smem:[#allocation0]]
  $region45: #{pilotnet_forward.4} parent=0
    _
  %s6 = ssub.s32 1, %s4
  %s7 = scalar_select 0, %s6, %s4
  loop: start=0, step=1, limit=4
  $region2: #{pilotnet_forward.4} parent=0 // loop_pre_header
    _
  $region3: #{pilotnet_forward.4} parent=0 // loop_header
    %s9 = sphi 0, %s13
    %p10 = scmp.ge.s32.totalorder %s9, 4
    %s19 = sphi 0, %s21
    %s22 = sphi 0, %s19
    %s23 = sphi 0, %s22
    %s39 = sphi 0, %s23
    %s43 = sphi 0, %s43
    %s45 = sphi 0, %s43
    %s46 = sphi 0, %s45
    %s60 = sphi 0, %s46
    %s64 = sphi 0, %s64
    %s66 = sphi 0, %s64
    %s67 = sphi 0, %s66
    %s81 = sphi 0, %s67
    %s87 = sphi 0, %s89
    %s90 = sphi 0, %s87
    %s91 = sphi 0, %s90
    %s107 = sphi 0, %s91
  $region4: #{pilotnet_forward.4} parent=0 // loop_header_branch
    %12 = sbr.rel (%p10) target = $region8
  $region5: #{pilotnet_forward.4} parent=0 // loop_body
    %s14 = ssub.s32 %s9, 1
    %s15 = ssub.s32 %s9, 2
    %s16 = sadd.s32 %s9, 1
    %s17 = ssub.s32 %s9, %s16
    %p18 = scmp.eq.s32.totalorder %s17, 0
    %s20 = sadd.s32 %s19, 1
    %s21 = scalar_select %p18, %s19, %s20
    %p24 = pneg %p18
    %p25 = scmp.eq.s32.totalorder %s9, 1
    %p26 = por %p24, %p25
    %p27 = scmp.ne.s32.totalorder %s19, %s22
    %p28 = scmp.eq.s32.totalorder %s9, 0
    %p29 = por %p27, %p28
    %p30 = scmp.ne.s32.totalorder %s19, %s22
    %p31 = scmp.eq.s32.totalorder %s14, 1
    %p32 = por %p30, %p31
    %p33 = scmp.ne.s32.totalorder %s22, %s23
    %p34 = scmp.eq.s32.totalorder %s14, 0
    %p35 = por %p33, %p34
    %p36 = scmp.ne.s32.totalorder %s22, %s23
    %p37 = scmp.eq.s32.totalorder %s15, 1
    %p38 = por %p36, %p37
    %p40 = scmp.ne.s32.totalorder %s23, %s39
    %p41 = scmp.eq.s32.totalorder %s15, 0
    %p42 = por %p40, %p41
    %s44 = sadd.s32 %s43, 1
    %p47 = scmp.eq.s32.totalorder %s9, 1
    %p48 = scmp.ne.s32.totalorder %s43, %s45
    %p49 = scmp.eq.s32.totalorder %s9, 0
    %p50 = por %p48, %p49
    %p51 = scmp.ne.s32.totalorder %s43, %s45
    %p52 = scmp.eq.s32.totalorder %s14, 1
    %p53 = por %p51, %p52
    %p54 = scmp.ne.s32.totalorder %s45, %s46
    %p55 = scmp.eq.s32.totalorder %s14, 0
    %p56 = por %p54, %p55
    %p57 = scmp.ne.s32.totalorder %s45, %s46
    %p58 = scmp.eq.s32.totalorder %s15, 1
    %p59 = por %p57, %p58
    %p61 = scmp.ne.s32.totalorder %s46, %s60
    %p62 = scmp.eq.s32.totalorder %s15, 0
    %p63 = por %p61, %p62
    %s65 = sadd.s32 %s64, 1
    %p68 = scmp.eq.s32.totalorder %s9, 1
    %p69 = scmp.ne.s32.totalorder %s64, %s66
    %p70 = scmp.eq.s32.totalorder %s9, 0
    %p71 = por %p69, %p70
    %p72 = scmp.ne.s32.totalorder %s64, %s66
    %p73 = scmp.eq.s32.totalorder %s14, 1
    %p74 = por %p72, %p73
    %p75 = scmp.ne.s32.totalorder %s66, %s67
    %p76 = scmp.eq.s32.totalorder %s14, 0
    %p77 = por %p75, %p76
    %p78 = scmp.ne.s32.totalorder %s66, %s67
    %p79 = scmp.eq.s32.totalorder %s15, 1
    %p80 = por %p78, %p79
    %p82 = scmp.ne.s32.totalorder %s67, %s81
    %p83 = scmp.eq.s32.totalorder %s15, 0
    %p84 = por %p82, %p83
    %s85 = ssub.s32 %s9, %s16
    %p86 = scmp.eq.s32.totalorder %s85, 0
    %s88 = sadd.s32 %s87, 1
    %s89 = scalar_select %p86, %s87, %s88
    %p92 = pneg %p86
    %p93 = scmp.eq.s32.totalorder %s9, 1
    %p94 = por %p92, %p93
    %p95 = scmp.ne.s32.totalorder %s87, %s90
    %p96 = scmp.eq.s32.totalorder %s9, 0
    %p97 = por %p95, %p96
    %p98 = scmp.ne.s32.totalorder %s87, %s90
    %p99 = scmp.eq.s32.totalorder %s14, 1
    %p100 = por %p98, %p99
    %p101 = scmp.ne.s32.totalorder %s90, %s91
    %p102 = scmp.eq.s32.totalorder %s14, 0
    %p103 = por %p101, %p102
    %p104 = scmp.ne.s32.totalorder %s90, %s91
    %p105 = scmp.eq.s32.totalorder %s15, 1
    %p106 = por %p104, %p105
    %p108 = scmp.ne.s32.totalorder %s91, %s107
    %p109 = scmp.eq.s32.totalorder %s15, 0
    %p110 = por %p108, %p109
    %p111 = scmp.le.s32.totalorder 1, %s9
    %p112 = scmp.lt.s32.totalorder %s9, 3
    %p113 = pnand %p111, %p112
    %p114 = pneg %p113
    // Predicated region
    $region9: #{pilotnet_forward.4} parent=5 // pred_check
      _
    $region10: #{pilotnet_forward.4} parent=5 // pred_check_branch
      %116 = sbr.rel (%p113) target = $region12
    $region11: #{pilotnet_forward.4} parent=5 // pred_region
      %s117 = ssub.s32 %s9, 1
      // Predicated region
      $region13: #{pilotnet_forward.4} parent=11 // pred_check
        %p118 = pneg %p56
      $region14: #{pilotnet_forward.4} parent=11 // pred_check_branch
        %120 = sbr.rel (%p118) target = $region16
      $region15: #{pilotnet_forward.4} parent=11 // pred_region
        _
      $region16: #{pilotnet_forward.4} parent=11 // pred_fallthru
        _
      // Predicated region
      $region17: #{pilotnet_forward.4} parent=11 // pred_check
        %p121 = pneg %p77
      $region18: #{pilotnet_forward.4} parent=11 // pred_check_branch
        %123 = sbr.rel (%p121) target = $region20
      $region19: #{pilotnet_forward.4} parent=11 // pred_region
        _
      $region20: #{pilotnet_forward.4} parent=11 // pred_fallthru
        _
    $region12: #{pilotnet_forward.4} parent=5 // pred_fallthru
      _
    %p124 = scmp.lt.s32.totalorder %s9, 2
    // Predicated region
    $region21: #{pilotnet_forward.4} parent=5 // pred_check
      %p125 = pneg %p124
    $region22: #{pilotnet_forward.4} parent=5 // pred_check_branch
      %127 = sbr.rel (%p125) target = $region24
    $region23: #{pilotnet_forward.4} parent=5 // pred_region
      // Predicated region
      $region25: #{pilotnet_forward.4} parent=23 // pred_check
        %p128 = pneg %p29
      $region26: #{pilotnet_forward.4} parent=23 // pred_check_branch
        %130 = sbr.rel (%p128) target = $region28
      $region27: #{pilotnet_forward.4} parent=23 // pred_region
        %s131 = smul.u32 84, %s9
        %p132 = scmp.lt.s32.totalorder %s131, 167
        %s133 = scalar_select %p132, %s131, 167
        %s134 = smul.addr %s133, 5
        %s135 = smul.addr %s134, 4
        %s136 = scalar_lea.vmem %s0, %s135
        %s137 = smul.u32 84, %s9
      $region28: #{pilotnet_forward.4} parent=23 // pred_fallthru
        _
    $region24: #{pilotnet_forward.4} parent=5 // pred_fallthru
      _
    %p138 = scmp.le.s32.totalorder 1, %s9
    %p139 = scmp.lt.s32.totalorder %s9, 3
    %p140 = pnand %p138, %p139
    %p141 = pneg %p140
    // Predicated region
    $region29: #{pilotnet_forward.4} parent=5 // pred_check
      _
    $region30: #{pilotnet_forward.4} parent=5 // pred_check_branch
      %143 = sbr.rel (%p140) target = $region32
    $region31: #{pilotnet_forward.4} parent=5 // pred_region
      %s144 = ssub.s32 %s9, 1
      %s145 = smul.u32 84, %s14
      %p146 = scmp.lt.s32.totalorder %s145, 167
      %s147 = scalar_select %p146, %s145, 167
      %s148 = smul.addr %s147, 5
      %s149 = smul.addr %s148, 4
      %s150 = scalar_lea.vmem %s0, %s149
      %p151 = pneg %p35
      %p152 = pneg %p32
      %p153 = pneg %p56
      %p154 = pneg %p53
      %p155 = pneg %p77
      %p156 = pneg %p74
      %p157 = pneg %p103
      %p158 = pneg %p100
      %s159 = smul.u32 84, %s14
      %p160 = scmp.lt.s32.totalorder %s159, 167
      %s161 = scalar_select %p160, %s159, 167
      %s162 = smul.addr %s161, 4
      %s163 = scalar_lea.vmem %s3, %s162
      %s164 = smul.u32 84, %s14
      %p165 = scmp.lt.s32.totalorder %s164, 167
      %s166 = scalar_select %p165, %s164, 167
      %s167 = smul.addr %s166, 5
      %s168 = smul.addr %s167, 4
      %s169 = scalar_lea.vmem %s0, %s168
      %s170 = smul.u32 84, %s14
      %s171 = smul.u32 84, %s14
      %p172 = scmp.lt.s32.totalorder %s171, 167
      %s173 = scalar_select %p172, %s171, 167
      %s174 = smul.addr %s173, 4
      %s175 = scalar_lea.vmem %s3, %s174
      %s176 = smul.u32 84, %s14
      %v178 = vld [vmem:[%s169] sm:$0xff]
      %v179 = vld [vmem:[%s169 + $0x8] sm:$0xff]
      %v180 = vld [vmem:[%s169 + $0x10] sm:$0xf]
      %v181 = vld [vmem:[%s169 + $0x14] sm:$0xff]
      %v182 = vld [vmem:[%s169 + $0x1c] sm:$0xff]
      %v183 = vld [vmem:[%s169 + $0x24] sm:$0xf]
      %v184 = vld [vmem:[%s169 + $0x28] sm:$0xff]
      %v185 = vld [vmem:[%s169 + $0x30] sm:$0xff]
      %v186 = vld [vmem:[%s169 + $0x38] sm:$0xf]
      %v187 = vld [vmem:[%s169 + $0x3c] sm:$0xff]
      %v188 = vld [vmem:[%s169 + $0x44] sm:$0xff]
      %v189 = vld [vmem:[%s169 + $0x4c] sm:$0xf]
      %v190 = vld [vmem:[%s169 + $0x50] sm:$0xff]
      %v191 = vld [vmem:[%s169 + $0x58] sm:$0xff]
      %v192 = vld [vmem:[%s169 + $0x60] sm:$0xf]
      %v193 = vld [vmem:[%s169 + $0x64] sm:$0xff]
      %v194 = vld [vmem:[%s169 + $0x6c] sm:$0xff]
      %v195 = vld [vmem:[%s169 + $0x74] sm:$0xf]
      %v196 = vld [vmem:[%s169 + $0x78] sm:$0xff]
      %v197 = vld [vmem:[%s169 + $0x80] sm:$0xff]
      %v198 = vld [vmem:[%s169 + $0x88] sm:$0xf]
      %v199 = vld [vmem:[%s169 + $0x8c] sm:$0xff]
      %v200 = vld [vmem:[%s169 + $0x94] sm:$0xff]
      %v201 = vld [vmem:[%s169 + $0x9c] sm:$0xf]
      %v202 = vld [vmem:[%s169 + $0xa0] sm:$0xff]
      %v203 = vld [vmem:[%s169 + $0xa8] sm:$0xff]
      %v204 = vld [vmem:[%s169 + $0xb0] sm:$0xf]
      %v205 = vld [vmem:[%s169 + $0xb4] sm:$0xff]
      %v206 = vld [vmem:[%s169 + $0xbc] sm:$0xff]
      %v207 = vld [vmem:[%s169 + $0xc4] sm:$0xf]
      %v208 = vld [vmem:[%s169 + $0xc8] sm:$0xff]
      %v209 = vld [vmem:[%s169 + $0xd0] sm:$0xff]
      %v210 = vld [vmem:[%s169 + $0xd8] sm:$0xf]
      %v211 = vld [vmem:[%s169 + $0xdc] sm:$0xff]
      %v212 = vld [vmem:[%s169 + $0xe4] sm:$0xff]
      %v213 = vld [vmem:[%s169 + $0xec] sm:$0xf]
      %v214 = vld [vmem:[%s169 + $0xf0] sm:$0xff]
      %v215 = vld [vmem:[%s169 + $0xf8] sm:$0xff]
      %v216 = vld [vmem:[%s169 + $0x100] sm:$0xf]
      %v217 = vld [vmem:[%s169 + $0x104] sm:$0xff]
      %v218 = vld [vmem:[%s169 + $0x10c] sm:$0xff]
      %v219 = vld [vmem:[%s169 + $0x114] sm:$0xf]
      %v220 = vld [vmem:[%s169 + $0x118] sm:$0xff]
      %v221 = vld [vmem:[%s169 + $0x120] sm:$0xff]
      %v222 = vld [vmem:[%s169 + $0x128] sm:$0xf]
      %v223 = vld [vmem:[%s169 + $0x12c] sm:$0xff]
      %v224 = vld [vmem:[%s169 + $0x134] sm:$0xff]
      %v225 = vld [vmem:[%s169 + $0x13c] sm:$0xf]
      %v226 = vld [vmem:[%s169 + $0x140] sm:$0xff]
      %v227 = vld [vmem:[%s169 + $0x148] sm:$0xff]
      %v228 = vld [vmem:[%s169 + $0x150] sm:$0xf]
      %v229 = vld [vmem:[%s169 + $0x154] sm:$0xff]
      %v230 = vld [vmem:[%s169 + $0x15c] sm:$0xff]
      %v231 = vld [vmem:[%s169 + $0x164] sm:$0xf]
      %v232 = vld [vmem:[%s169 + $0x168] sm:$0xff]
      %v233 = vld [vmem:[%s169 + $0x170] sm:$0xff]
      %v234 = vld [vmem:[%s169 + $0x178] sm:$0xf]
      %v235 = vld [vmem:[%s169 + $0x17c] sm:$0xff]
      %v236 = vld [vmem:[%s169 + $0x184] sm:$0xff]
      %v237 = vld [vmem:[%s169 + $0x18c] sm:$0xf]
      %v238 = vld [vmem:[%s169 + $0x190] sm:$0xff]
      %v239 = vld [vmem:[%s169 + $0x198] sm:$0xff]
      %v240 = vld [vmem:[%s169 + $0x1a0] sm:$0xf]
      %v241 = vld [vmem:[%s169 + $0x1a4] sm:$0xff]
      %v242 = vld [vmem:[%s169 + $0x1ac] sm:$0xff]
      %v243 = vld [vmem:[%s169 + $0x1b4] sm:$0xf]
      %v244 = vld [vmem:[%s169 + $0x1b8] sm:$0xff]
      %v245 = vld [vmem:[%s169 + $0x1c0] sm:$0xff]
      %v246 = vld [vmem:[%s169 + $0x1c8] sm:$0xf]
      %v247 = vld [vmem:[%s169 + $0x1cc] sm:$0xff]
      %v248 = vld [vmem:[%s169 + $0x1d4] sm:$0xff]
      %v249 = vld [vmem:[%s169 + $0x1dc] sm:$0xf]
      %v250 = vld [vmem:[%s169 + $0x1e0] sm:$0xff]
      %v251 = vld [vmem:[%s169 + $0x1e8] sm:$0xff]
      %v252 = vld [vmem:[%s169 + $0x1f0] sm:$0xf]
      %v253 = vld [vmem:[%s169 + $0x1f4] sm:$0xff]
      %v254 = vld [vmem:[%s169 + $0x1fc] sm:$0xff]
      %v255 = vld [vmem:[%s169 + $0x204] sm:$0xf]
      %v256 = vld [vmem:[%s169 + $0x208] sm:$0xff]
      %v257 = vld [vmem:[%s169 + $0x210] sm:$0xff]
      %v258 = vld [vmem:[%s169 + $0x218] sm:$0xf]
      %v259 = vld [vmem:[%s169 + $0x21c] sm:$0xff]
      %v260 = vld [vmem:[%s169 + $0x224] sm:$0xff]
      %v261 = vld [vmem:[%s169 + $0x22c] sm:$0xf]
      %v262 = vld [vmem:[%s169 + $0x230] sm:$0xff]
      %v263 = vld [vmem:[%s169 + $0x238] sm:$0xff]
      %v264 = vld [vmem:[%s169 + $0x240] sm:$0xf]
      %v265 = vld [vmem:[%s169 + $0x244] sm:$0xff]
      %v266 = vld [vmem:[%s169 + $0x24c] sm:$0xff]
      %v267 = vld [vmem:[%s169 + $0x254] sm:$0xf]
      %v268 = vld [vmem:[%s169 + $0x258] sm:$0xff]
      %v269 = vld [vmem:[%s169 + $0x260] sm:$0xff]
      %v270 = vld [vmem:[%s169 + $0x268] sm:$0xf]
      %v271 = vld [vmem:[%s169 + $0x26c] sm:$0xff]
      %v272 = vld [vmem:[%s169 + $0x274] sm:$0xff]
      %v273 = vld [vmem:[%s169 + $0x27c] sm:$0xf]
      %v274 = vld [vmem:[%s169 + $0x280] sm:$0xff]
      %v275 = vld [vmem:[%s169 + $0x288] sm:$0xff]
      %v276 = vld [vmem:[%s169 + $0x290] sm:$0xf]
      %v277 = vld [vmem:[%s169 + $0x294] sm:$0xff]
      %v278 = vld [vmem:[%s169 + $0x29c] sm:$0xff]
      %v279 = vld [vmem:[%s169 + $0x2a4] sm:$0xf]
      %v280 = vld [vmem:[%s169 + $0x2a8] sm:$0xff]
      %v281 = vld [vmem:[%s169 + $0x2b0] sm:$0xff]
      %v282 = vld [vmem:[%s169 + $0x2b8] sm:$0xf]
      %v283 = vld [vmem:[%s169 + $0x2bc] sm:$0xff]
      %v284 = vld [vmem:[%s169 + $0x2c4] sm:$0xff]
      %v285 = vld [vmem:[%s169 + $0x2cc] sm:$0xf]
      %v286 = vld [vmem:[%s169 + $0x2d0] sm:$0xff]
      %v287 = vld [vmem:[%s169 + $0x2d8] sm:$0xff]
      %v288 = vld [vmem:[%s169 + $0x2e0] sm:$0xf]
      %v289 = vld [vmem:[%s169 + $0x2e4] sm:$0xff]
      %v290 = vld [vmem:[%s169 + $0x2ec] sm:$0xff]
      %v291 = vld [vmem:[%s169 + $0x2f4] sm:$0xf]
      %v292 = vld [vmem:[%s169 + $0x2f8] sm:$0xff]
      %v293 = vld [vmem:[%s169 + $0x300] sm:$0xff]
      %v294 = vld [vmem:[%s169 + $0x308] sm:$0xf]
      %v295 = vld [vmem:[%s169 + $0x30c] sm:$0xff]
      %v296 = vld [vmem:[%s169 + $0x314] sm:$0xff]
      %v297 = vld [vmem:[%s169 + $0x31c] sm:$0xf]
      %v298 = vld [vmem:[%s169 + $0x320] sm:$0xff]
      %v299 = vld [vmem:[%s169 + $0x328] sm:$0xff]
      %v300 = vld [vmem:[%s169 + $0x330] sm:$0xf]
      %v301 = vld [vmem:[%s169 + $0x334] sm:$0xff]
      %v302 = vld [vmem:[%s169 + $0x33c] sm:$0xff]
      %v303 = vld [vmem:[%s169 + $0x344] sm:$0xf]
      %v304 = vld [vmem:[%s169 + $0x348] sm:$0xff]
      %v305 = vld [vmem:[%s169 + $0x350] sm:$0xff]
      %v306 = vld [vmem:[%s169 + $0x358] sm:$0xf]
      %v307 = vld [vmem:[%s169 + $0x35c] sm:$0xff]
      %v308 = vld [vmem:[%s169 + $0x364] sm:$0xff]
      %v309 = vld [vmem:[%s169 + $0x36c] sm:$0xf]
      %v310 = vld [vmem:[%s169 + $0x370] sm:$0xff]
      %v311 = vld [vmem:[%s169 + $0x378] sm:$0xff]
      %v312 = vld [vmem:[%s169 + $0x380] sm:$0xf]
      %v313 = vld [vmem:[%s169 + $0x384] sm:$0xff]
      %v314 = vld [vmem:[%s169 + $0x38c] sm:$0xff]
      %v315 = vld [vmem:[%s169 + $0x394] sm:$0xf]
      %v316 = vld [vmem:[%s169 + $0x398] sm:$0xff]
      %v317 = vld [vmem:[%s169 + $0x3a0] sm:$0xff]
      %v318 = vld [vmem:[%s169 + $0x3a8] sm:$0xf]
      %v319 = vld [vmem:[%s169 + $0x3ac] sm:$0xff]
      %v320 = vld [vmem:[%s169 + $0x3b4] sm:$0xff]
      %v321 = vld [vmem:[%s169 + $0x3bc] sm:$0xf]
      %v322 = vld [vmem:[%s169 + $0x3c0] sm:$0xff]
      %v323 = vld [vmem:[%s169 + $0x3c8] sm:$0xff]
      %v324 = vld [vmem:[%s169 + $0x3d0] sm:$0xf]
      %v325 = vld [vmem:[%s169 + $0x3d4] sm:$0xff]
      %v326 = vld [vmem:[%s169 + $0x3dc] sm:$0xff]
      %v327 = vld [vmem:[%s169 + $0x3e4] sm:$0xf]
      %v328 = vld [vmem:[%s169 + $0x3e8] sm:$0xff]
      %v329 = vld [vmem:[%s169 + $0x3f0] sm:$0xff]
      %v330 = vld [vmem:[%s169 + $0x3f8] sm:$0xf]
      %v331 = vld [vmem:[%s169 + $0x3fc] sm:$0xff]
      %v332 = vld [vmem:[%s169 + $0x404] sm:$0xff]
      %v333 = vld [vmem:[%s169 + $0x40c] sm:$0xf]
      %v334 = vld [vmem:[%s169 + $0x410] sm:$0xff]
      %v335 = vld [vmem:[%s169 + $0x418] sm:$0xff]
      %v336 = vld [vmem:[%s169 + $0x420] sm:$0xf]
      %v337 = vld [vmem:[%s169 + $0x424] sm:$0xff]
      %v338 = vld [vmem:[%s169 + $0x42c] sm:$0xff]
      %v339 = vld [vmem:[%s169 + $0x434] sm:$0xf]
      %v340 = vld [vmem:[%s169 + $0x438] sm:$0xff]
      %v341 = vld [vmem:[%s169 + $0x440] sm:$0xff]
      %v342 = vld [vmem:[%s169 + $0x448] sm:$0xf]
      %v343 = vld [vmem:[%s169 + $0x44c] sm:$0xff]
      %v344 = vld [vmem:[%s169 + $0x454] sm:$0xff]
      %v345 = vld [vmem:[%s169 + $0x45c] sm:$0xf]
      %v346 = vld [vmem:[%s169 + $0x460] sm:$0xff]
      %v347 = vld [vmem:[%s169 + $0x468] sm:$0xff]
      %v348 = vld [vmem:[%s169 + $0x470] sm:$0xf]
      %v349 = vld [vmem:[%s169 + $0x474] sm:$0xff]
      %v350 = vld [vmem:[%s169 + $0x47c] sm:$0xff]
      %v351 = vld [vmem:[%s169 + $0x484] sm:$0xf]
      %v352 = vld [vmem:[%s169 + $0x488] sm:$0xff]
      %v353 = vld [vmem:[%s169 + $0x490] sm:$0xff]
      %v354 = vld [vmem:[%s169 + $0x498] sm:$0xf]
      %v355 = vld [vmem:[%s169 + $0x49c] sm:$0xff]
      %v356 = vld [vmem:[%s169 + $0x4a4] sm:$0xff]
      %v357 = vld [vmem:[%s169 + $0x4ac] sm:$0xf]
      %v358 = vld [vmem:[%s169 + $0x4b0] sm:$0xff]
      %v359 = vld [vmem:[%s169 + $0x4b8] sm:$0xff]
      %v360 = vld [vmem:[%s169 + $0x4c0] sm:$0xf]
      %v361 = vld [vmem:[%s169 + $0x4c4] sm:$0xff]
      %v362 = vld [vmem:[%s169 + $0x4cc] sm:$0xff]
      %v363 = vld [vmem:[%s169 + $0x4d4] sm:$0xf]
      %v364 = vld [vmem:[%s169 + $0x4d8] sm:$0xff]
      %v365 = vld [vmem:[%s169 + $0x4e0] sm:$0xff]
      %v366 = vld [vmem:[%s169 + $0x4e8] sm:$0xf]
      %v367 = vld [vmem:[%s169 + $0x4ec] sm:$0xff]
      %v368 = vld [vmem:[%s169 + $0x4f4] sm:$0xff]
      %v369 = vld [vmem:[%s169 + $0x4fc] sm:$0xf]
      %v370 = vld [vmem:[%s169 + $0x500] sm:$0xff]
      %v371 = vld [vmem:[%s169 + $0x508] sm:$0xff]
      %v372 = vld [vmem:[%s169 + $0x510] sm:$0xf]
      %v373 = vld [vmem:[%s169 + $0x514] sm:$0xff]
      %v374 = vld [vmem:[%s169 + $0x51c] sm:$0xff]
      %v375 = vld [vmem:[%s169 + $0x524] sm:$0xf]
      %v376 = vld [vmem:[%s169 + $0x528] sm:$0xff]
      %v377 = vld [vmem:[%s169 + $0x530] sm:$0xff]
      %v378 = vld [vmem:[%s169 + $0x538] sm:$0xf]
      %v379 = vld [vmem:[%s169 + $0x53c] sm:$0xff]
      %v380 = vld [vmem:[%s169 + $0x544] sm:$0xff]
      %v381 = vld [vmem:[%s169 + $0x54c] sm:$0xf]
      %v382 = vld [vmem:[%s169 + $0x550] sm:$0xff]
      %v383 = vld [vmem:[%s169 + $0x558] sm:$0xff]
      %v384 = vld [vmem:[%s169 + $0x560] sm:$0xf]
      %v385 = vld [vmem:[%s169 + $0x564] sm:$0xff]
      %v386 = vld [vmem:[%s169 + $0x56c] sm:$0xff]
      %v387 = vld [vmem:[%s169 + $0x574] sm:$0xf]
      %v388 = vld [vmem:[%s169 + $0x578] sm:$0xff]
      %v389 = vld [vmem:[%s169 + $0x580] sm:$0xff]
      %v390 = vld [vmem:[%s169 + $0x588] sm:$0xf]
      %v391 = vld [vmem:[%s169 + $0x58c] sm:$0xff]
      %v392 = vld [vmem:[%s169 + $0x594] sm:$0xff]
      %v393 = vld [vmem:[%s169 + $0x59c] sm:$0xf]
      %v394 = vld [vmem:[%s169 + $0x5a0] sm:$0xff]
      %v395 = vld [vmem:[%s169 + $0x5a8] sm:$0xff]
      %v396 = vld [vmem:[%s169 + $0x5b0] sm:$0xf]
      %v397 = vld [vmem:[%s169 + $0x5b4] sm:$0xff]
      %v398 = vld [vmem:[%s169 + $0x5bc] sm:$0xff]
      %v399 = vld [vmem:[%s169 + $0x5c4] sm:$0xf]
      %v400 = vld [vmem:[%s169 + $0x5c8] sm:$0xff]
      %v401 = vld [vmem:[%s169 + $0x5d0] sm:$0xff]
      %v402 = vld [vmem:[%s169 + $0x5d8] sm:$0xf]
      %v403 = vld [vmem:[%s169 + $0x5dc] sm:$0xff]
      %v404 = vld [vmem:[%s169 + $0x5e4] sm:$0xff]
      %v405 = vld [vmem:[%s169 + $0x5ec] sm:$0xf]
      %v406 = vld [vmem:[%s169 + $0x5f0] sm:$0xff]
      %v407 = vld [vmem:[%s169 + $0x5f8] sm:$0xff]
      %v408 = vld [vmem:[%s169 + $0x600] sm:$0xf]
      %v409 = vld [vmem:[%s169 + $0x604] sm:$0xff]
      %v410 = vld [vmem:[%s169 + $0x60c] sm:$0xff]
      %v411 = vld [vmem:[%s169 + $0x614] sm:$0xf]
      %v412 = vld [vmem:[%s169 + $0x618] sm:$0xff]
      %v413 = vld [vmem:[%s169 + $0x620] sm:$0xff]
      %v414 = vld [vmem:[%s169 + $0x628] sm:$0xf]
      %v415 = vld [vmem:[%s169 + $0x62c] sm:$0xff]
      %v416 = vld [vmem:[%s169 + $0x634] sm:$0xff]
      %v417 = vld [vmem:[%s169 + $0x63c] sm:$0xf]
      %v418 = vld [vmem:[%s169 + $0x640] sm:$0xff]
      %v419 = vld [vmem:[%s169 + $0x648] sm:$0xff]
      %v420 = vld [vmem:[%s169 + $0x650] sm:$0xf]
      %v421 = vld [vmem:[%s169 + $0x654] sm:$0xff]
      %v422 = vld [vmem:[%s169 + $0x65c] sm:$0xff]
      %v423 = vld [vmem:[%s169 + $0x664] sm:$0xf]
      %v424 = vld [vmem:[%s169 + $0x668] sm:$0xff]
      %v425 = vld [vmem:[%s169 + $0x670] sm:$0xff]
      %v426 = vld [vmem:[%s169 + $0x678] sm:$0xf]
      %v427 = vld [vmem:[%s169 + $0x67c] sm:$0xff]
      %v428 = vld [vmem:[%s169 + $0x684] sm:$0xff]
      %v429 = vld [vmem:[%s169 + $0x68c] sm:$0xf]
      %v430 = vld [vmem:[%s1] sm:$0xf]
      %v431 = vld [vmem:[%s1 + $0x4] sm:$0xf]
      %v432 = vld [vmem:[%s1 + $0x8] sm:$0xf]
      %v433 = vld [vmem:[%s1 + $0xc] sm:$0xf]
      %v434 = vld [vmem:[%s1 + $0x10] sm:$0xf]
      %v435 = vld [vmem:[%s1 + $0x14] sm:$0xf]
      %v436 = vld [vmem:[%s1 + $0x18] sm:$0xf]
      %v437 = vld [vmem:[%s1 + $0x1c] sm:$0xf]
      %v438 = vld [vmem:[%s1 + $0x20] sm:$0xf]
      %v439 = vld [vmem:[%s1 + $0x24] sm:$0xf]
      %v440 = vld [vmem:[%s1 + $0x28] sm:$0xf]
      %v441 = vld [vmem:[%s1 + $0x2c] sm:$0xf]
      %v442 = vld [vmem:[%s1 + $0x30] sm:$0xf]
      %v443 = vld [vmem:[%s1 + $0x34] sm:$0xf]
      %v444 = vld [vmem:[%s1 + $0x38] sm:$0xf]
      %v445 = vld [vmem:[%s1 + $0x3c] sm:$0xf]
      %v446 = vld [vmem:[%s1 + $0x40] sm:$0xf]
      %v447 = vld [vmem:[%s1 + $0x44] sm:$0xf]
      %v448 = vld [vmem:[%s1 + $0x48] sm:$0xf]
      %v449 = vld [vmem:[%s1 + $0x4c] sm:$0xf]
      %v450 = vld [vmem:[%s1 + $0x50] sm:$0xf]
      %v451 = vld [vmem:[%s1 + $0x54] sm:$0xf]
      %v452 = vld [vmem:[%s1 + $0x58] sm:$0xf]
      %v453 = vld [vmem:[%s1 + $0x5c] sm:$0xf]
      %v454 = vld [vmem:[%s1 + $0x60] sm:$0xf]
      %v455 = vld [vmem:[%s1 + $0x64] sm:$0xf]
      %v456 = vld [vmem:[%s1 + $0x68] sm:$0xf]
      %v457 = vld [vmem:[%s1 + $0x6c] sm:$0xf]
      %v458 = vld [vmem:[%s1 + $0x70] sm:$0xf]
      %v459 = vld [vmem:[%s1 + $0x74] sm:$0xf]
      %v460 = vld [vmem:[%s1 + $0x78] sm:$0xf]
      %v461 = vld [vmem:[%s1 + $0x7c] sm:$0xf]
      %v462 = vld [vmem:[%s1 + $0x80] sm:$0xf]
      %v463 = vld [vmem:[%s1 + $0x84] sm:$0xf]
      %v464 = vld [vmem:[%s1 + $0x88] sm:$0xf]
      %v465 = vld [vmem:[%s1 + $0x8c] sm:$0xf]
      %v466 = vld [vmem:[%s1 + $0x90] sm:$0xf]
      %v467 = vld [vmem:[%s1 + $0x94] sm:$0xf]
      %v468 = vld [vmem:[%s1 + $0x98] sm:$0xf]
      %v469 = vld [vmem:[%s1 + $0x9c] sm:$0xf]
      %v470 = vld [vmem:[%s1 + $0xa0] sm:$0xf]
      %v471 = vld [vmem:[%s1 + $0xa4] sm:$0xf]
      %v472 = vld [vmem:[%s1 + $0xa8] sm:$0xf]
      %v473 = vld [vmem:[%s1 + $0xac] sm:$0xf]
      %v474 = vld [vmem:[%s1 + $0xb0] sm:$0xf]
      %v475 = vld [vmem:[%s1 + $0xb4] sm:$0xf]
      %v476 = vld [vmem:[%s1 + $0xb8] sm:$0xf]
      %v477 = vld [vmem:[%s1 + $0xbc] sm:$0xf]
      %v478 = vld [vmem:[%s1 + $0xc0] sm:$0xf]
      %v479 = vld [vmem:[%s1 + $0xc4] sm:$0xf]
      %v480 = vld [vmem:[%s1 + $0xc8] sm:$0xf]
      %v481 = vld [vmem:[%s1 + $0xcc] sm:$0xf]
      %v482 = vld [vmem:[%s1 + $0xd0] sm:$0xf]
      %v483 = vld [vmem:[%s1 + $0xd4] sm:$0xf]
      %v484 = vld [vmem:[%s1 + $0xd8] sm:$0xf]
      %v485 = vld [vmem:[%s1 + $0xdc] sm:$0xf]
      %v486 = vld [vmem:[%s1 + $0xe0] sm:$0xf]
      %v487 = vld [vmem:[%s1 + $0xe4] sm:$0xf]
      %v488 = vld [vmem:[%s1 + $0xe8] sm:$0xf]
      %v489 = vld [vmem:[%s1 + $0xec] sm:$0xf]
      %v490 = vld [vmem:[%s1 + $0xf0] sm:$0xf]
      %v491 = vld [vmem:[%s1 + $0xf4] sm:$0xf]
      %v492 = vld [vmem:[%s1 + $0xf8] sm:$0xf]
      %v493 = vld [vmem:[%s1 + $0xfc] sm:$0xf]
      %v494 = vld [vmem:[%s1 + $0x100] sm:$0xf]
      %v495 = vld [vmem:[%s1 + $0x104] sm:$0xf]
      %v496 = vld [vmem:[%s1 + $0x108] sm:$0xf]
      %v497 = vld [vmem:[%s1 + $0x10c] sm:$0xf]
      %v498 = vld [vmem:[%s1 + $0x110] sm:$0xf]
      %v499 = vld [vmem:[%s1 + $0x114] sm:$0xf]
      %v500 = vld [vmem:[%s1 + $0x118] sm:$0xf]
      %v501 = vld [vmem:[%s1 + $0x11c] sm:$0xf]
      %v502 = vld [vmem:[%s1 + $0x120] sm:$0xf]
      %v503 = vld [vmem:[%s1 + $0x124] sm:$0xf]
      %v504 = vld [vmem:[%s1 + $0x128] sm:$0xf]
      %v505 = vld [vmem:[%s1 + $0x12c] sm:$0xf]
      %v506 = vld [vmem:[%s2] sm:$0x1]
      %v508 = vlaneseq
      %v509 = vshrl.u32 %v508, 7
      %v510 = vsub.s32 0, %v509
      %v511 = vrot.slane %v506, %v510
      %v765 = vunpack.c.l.b16 %v178
      %v766 = vunpack.c.h.b16 %v178
      %v767 = vunpack.c.l.b16 %v179
      %v768 = vunpack.c.h.b16 %v179
      %v769 = vunpack.c.l.b16 %v180
      %v770 = vunpack.c.l.b16 %v181
      %v771 = vunpack.c.h.b16 %v181
      %v772 = vunpack.c.l.b16 %v182
      %v773 = vunpack.c.h.b16 %v182
      %v774 = vunpack.c.l.b16 %v183
      %v775 = vunpack.c.l.b16 %v184
      %v776 = vunpack.c.h.b16 %v184
      %v777 = vunpack.c.l.b16 %v185
      %v778 = vunpack.c.h.b16 %v185
      %v779 = vunpack.c.l.b16 %v186
      %v780 = vunpack.c.l.b16 %v187
      %v781 = vunpack.c.h.b16 %v187
      %v782 = vunpack.c.l.b16 %v188
      %v783 = vunpack.c.h.b16 %v188
      %v784 = vunpack.c.l.b16 %v189
      %v785 = vunpack.c.l.b16 %v190
      %v786 = vunpack.c.h.b16 %v190
      %v787 = vunpack.c.l.b16 %v191
      %v788 = vunpack.c.h.b16 %v191
      %v789 = vunpack.c.l.b16 %v192
      %v790 = vunpack.c.l.b16 %v193
      %v791 = vunpack.c.h.b16 %v193
      %v792 = vunpack.c.l.b16 %v194
      %v793 = vunpack.c.h.b16 %v194
      %v794 = vunpack.c.l.b16 %v195
      %v795 = vunpack.c.l.b16 %v196
      %v796 = vunpack.c.h.b16 %v196
      %v797 = vunpack.c.l.b16 %v197
      %v798 = vunpack.c.h.b16 %v197
      %v799 = vunpack.c.l.b16 %v198
      %v800 = vunpack.c.l.b16 %v199
      %v801 = vunpack.c.h.b16 %v199
      %v802 = vunpack.c.l.b16 %v200
      %v803 = vunpack.c.h.b16 %v200
      %v804 = vunpack.c.l.b16 %v201
      %v805 = vunpack.c.l.b16 %v202
      %v806 = vunpack.c.h.b16 %v202
      %v807 = vunpack.c.l.b16 %v203
      %v808 = vunpack.c.h.b16 %v203
      %v809 = vunpack.c.l.b16 %v204
      %v810 = vunpack.c.l.b16 %v205
      %v811 = vunpack.c.h.b16 %v205
      %v812 = vunpack.c.l.b16 %v206
      %v813 = vunpack.c.h.b16 %v206
      %v814 = vunpack.c.l.b16 %v207
      %v815 = vunpack.c.l.b16 %v208
      %v816 = vunpack.c.h.b16 %v208
      %v817 = vunpack.c.l.b16 %v209
      %v818 = vunpack.c.h.b16 %v209
      %v819 = vunpack.c.l.b16 %v210
      %v820 = vunpack.c.l.b16 %v211
      %v821 = vunpack.c.h.b16 %v211
      %v822 = vunpack.c.l.b16 %v212
      %v823 = vunpack.c.h.b16 %v212
      %v824 = vunpack.c.l.b16 %v213
      %v825 = vunpack.c.l.b16 %v214
      %v826 = vunpack.c.h.b16 %v214
      %v827 = vunpack.c.l.b16 %v215
      %v828 = vunpack.c.h.b16 %v215
      %v829 = vunpack.c.l.b16 %v216
      %v830 = vunpack.c.l.b16 %v217
      %v831 = vunpack.c.h.b16 %v217
      %v832 = vunpack.c.l.b16 %v218
      %v833 = vunpack.c.h.b16 %v218
      %v834 = vunpack.c.l.b16 %v219
      %v835 = vunpack.c.l.b16 %v220
      %v836 = vunpack.c.h.b16 %v220
      %v837 = vunpack.c.l.b16 %v221
      %v838 = vunpack.c.h.b16 %v221
      %v839 = vunpack.c.l.b16 %v222
      %v840 = vunpack.c.l.b16 %v223
      %v841 = vunpack.c.h.b16 %v223
      %v842 = vunpack.c.l.b16 %v224
      %v843 = vunpack.c.h.b16 %v224
      %v844 = vunpack.c.l.b16 %v225
      %v845 = vunpack.c.l.b16 %v226
      %v846 = vunpack.c.h.b16 %v226
      %v847 = vunpack.c.l.b16 %v227
      %v848 = vunpack.c.h.b16 %v227
      %v849 = vunpack.c.l.b16 %v228
      %v850 = vunpack.c.l.b16 %v229
      %v851 = vunpack.c.h.b16 %v229
      %v852 = vunpack.c.l.b16 %v230
      %v853 = vunpack.c.h.b16 %v230
      %v854 = vunpack.c.l.b16 %v231
      %v855 = vunpack.c.l.b16 %v232
      %v856 = vunpack.c.h.b16 %v232
      %v857 = vunpack.c.l.b16 %v233
      %v858 = vunpack.c.h.b16 %v233
      %v859 = vunpack.c.l.b16 %v234
      %v860 = vunpack.c.l.b16 %v235
      %v861 = vunpack.c.h.b16 %v235
      %v862 = vunpack.c.l.b16 %v236
      %v863 = vunpack.c.h.b16 %v236
      %v864 = vunpack.c.l.b16 %v237
      %v865 = vunpack.c.l.b16 %v238
      %v866 = vunpack.c.h.b16 %v238
      %v867 = vunpack.c.l.b16 %v239
      %v868 = vunpack.c.h.b16 %v239
      %v869 = vunpack.c.l.b16 %v240
      %v870 = vunpack.c.l.b16 %v241
      %v871 = vunpack.c.h.b16 %v241
      %v872 = vunpack.c.l.b16 %v242
      %v873 = vunpack.c.h.b16 %v242
      %v874 = vunpack.c.l.b16 %v243
      %v875 = vunpack.c.l.b16 %v244
      %v876 = vunpack.c.h.b16 %v244
      %v877 = vunpack.c.l.b16 %v245
      %v878 = vunpack.c.h.b16 %v245
      %v879 = vunpack.c.l.b16 %v246
      %v880 = vunpack.c.l.b16 %v247
      %v881 = vunpack.c.h.b16 %v247
      %v882 = vunpack.c.l.b16 %v248
      %v883 = vunpack.c.h.b16 %v248
      %v884 = vunpack.c.l.b16 %v249
      %v885 = vunpack.c.l.b16 %v250
      %v886 = vunpack.c.h.b16 %v250
      %v887 = vunpack.c.l.b16 %v251
      %v888 = vunpack.c.h.b16 %v251
      %v889 = vunpack.c.l.b16 %v252
      %v890 = vunpack.c.l.b16 %v253
      %v891 = vunpack.c.h.b16 %v253
      %v892 = vunpack.c.l.b16 %v254
      %v893 = vunpack.c.h.b16 %v254
      %v894 = vunpack.c.l.b16 %v255
      %v895 = vunpack.c.l.b16 %v256
      %v896 = vunpack.c.h.b16 %v256
      %v897 = vunpack.c.l.b16 %v257
      %v898 = vunpack.c.h.b16 %v257
      %v899 = vunpack.c.l.b16 %v258
      %v900 = vunpack.c.l.b16 %v259
      %v901 = vunpack.c.h.b16 %v259
      %v902 = vunpack.c.l.b16 %v260
      %v903 = vunpack.c.h.b16 %v260
      %v904 = vunpack.c.l.b16 %v261
      %v905 = vunpack.c.l.b16 %v262
      %v906 = vunpack.c.h.b16 %v262
      %v907 = vunpack.c.l.b16 %v263
      %v908 = vunpack.c.h.b16 %v263
      %v909 = vunpack.c.l.b16 %v264
      %v910 = vunpack.c.l.b16 %v265
      %v911 = vunpack.c.h.b16 %v265
      %v912 = vunpack.c.l.b16 %v266
      %v913 = vunpack.c.h.b16 %v266
      %v914 = vunpack.c.l.b16 %v267
      %v915 = vunpack.c.l.b16 %v268
      %v916 = vunpack.c.h.b16 %v268
      %v917 = vunpack.c.l.b16 %v269
      %v918 = vunpack.c.h.b16 %v269
      %v919 = vunpack.c.l.b16 %v270
      %v920 = vunpack.c.l.b16 %v271
      %v921 = vunpack.c.h.b16 %v271
      %v922 = vunpack.c.l.b16 %v272
      %v923 = vunpack.c.h.b16 %v272
      %v924 = vunpack.c.l.b16 %v273
      %v925 = vunpack.c.l.b16 %v274
      %v926 = vunpack.c.h.b16 %v274
      %v927 = vunpack.c.l.b16 %v275
      %v928 = vunpack.c.h.b16 %v275
      %v929 = vunpack.c.l.b16 %v276
      %v930 = vunpack.c.l.b16 %v277
      %v931 = vunpack.c.h.b16 %v277
      %v932 = vunpack.c.l.b16 %v278
      %v933 = vunpack.c.h.b16 %v278
      %v934 = vunpack.c.l.b16 %v279
      %v935 = vunpack.c.l.b16 %v280
      %v936 = vunpack.c.h.b16 %v280
      %v937 = vunpack.c.l.b16 %v281
      %v938 = vunpack.c.h.b16 %v281
      %v939 = vunpack.c.l.b16 %v282
      %v940 = vunpack.c.l.b16 %v283
      %v941 = vunpack.c.h.b16 %v283
      %v942 = vunpack.c.l.b16 %v284
      %v943 = vunpack.c.h.b16 %v284
      %v944 = vunpack.c.l.b16 %v285
      %v945 = vunpack.c.l.b16 %v286
      %v946 = vunpack.c.h.b16 %v286
      %v947 = vunpack.c.l.b16 %v287
      %v948 = vunpack.c.h.b16 %v287
      %v949 = vunpack.c.l.b16 %v288
      %v950 = vunpack.c.l.b16 %v289
      %v951 = vunpack.c.h.b16 %v289
      %v952 = vunpack.c.l.b16 %v290
      %v953 = vunpack.c.h.b16 %v290
      %v954 = vunpack.c.l.b16 %v291
      %v955 = vunpack.c.l.b16 %v292
      %v956 = vunpack.c.h.b16 %v292
      %v957 = vunpack.c.l.b16 %v293
      %v958 = vunpack.c.h.b16 %v293
      %v959 = vunpack.c.l.b16 %v294
      %v960 = vunpack.c.l.b16 %v295
      %v961 = vunpack.c.h.b16 %v295
      %v962 = vunpack.c.l.b16 %v296
      %v963 = vunpack.c.h.b16 %v296
      %v964 = vunpack.c.l.b16 %v297
      %v965 = vunpack.c.l.b16 %v298
      %v966 = vunpack.c.h.b16 %v298
      %v967 = vunpack.c.l.b16 %v299
      %v968 = vunpack.c.h.b16 %v299
      %v969 = vunpack.c.l.b16 %v300
      %v970 = vunpack.c.l.b16 %v301
      %v971 = vunpack.c.h.b16 %v301
      %v972 = vunpack.c.l.b16 %v302
      %v973 = vunpack.c.h.b16 %v302
      %v974 = vunpack.c.l.b16 %v303
      %v975 = vunpack.c.l.b16 %v304
      %v976 = vunpack.c.h.b16 %v304
      %v977 = vunpack.c.l.b16 %v305
      %v978 = vunpack.c.h.b16 %v305
      %v979 = vunpack.c.l.b16 %v306
      %v980 = vunpack.c.l.b16 %v307
      %v981 = vunpack.c.h.b16 %v307
      %v982 = vunpack.c.l.b16 %v308
      %v983 = vunpack.c.h.b16 %v308
      %v984 = vunpack.c.l.b16 %v309
      %v985 = vunpack.c.l.b16 %v310
      %v986 = vunpack.c.h.b16 %v310
      %v987 = vunpack.c.l.b16 %v311
      %v988 = vunpack.c.h.b16 %v311
      %v989 = vunpack.c.l.b16 %v312
      %v990 = vunpack.c.l.b16 %v313
      %v991 = vunpack.c.h.b16 %v313
      %v992 = vunpack.c.l.b16 %v314
      %v993 = vunpack.c.h.b16 %v314
      %v994 = vunpack.c.l.b16 %v315
      %v995 = vunpack.c.l.b16 %v316
      %v996 = vunpack.c.h.b16 %v316
      %v997 = vunpack.c.l.b16 %v317
      %v998 = vunpack.c.h.b16 %v317
      %v999 = vunpack.c.l.b16 %v318
      %v1000 = vunpack.c.l.b16 %v319
      %v1001 = vunpack.c.h.b16 %v319
      %v1002 = vunpack.c.l.b16 %v320
      %v1003 = vunpack.c.h.b16 %v320
      %v1004 = vunpack.c.l.b16 %v321
      %v1005 = vunpack.c.l.b16 %v322
      %v1006 = vunpack.c.h.b16 %v322
      %v1007 = vunpack.c.l.b16 %v323
      %v1008 = vunpack.c.h.b16 %v323
      %v1009 = vunpack.c.l.b16 %v324
      %v1010 = vunpack.c.l.b16 %v325
      %v1011 = vunpack.c.h.b16 %v325
      %v1012 = vunpack.c.l.b16 %v326
      %v1013 = vunpack.c.h.b16 %v326
      %v1014 = vunpack.c.l.b16 %v327
      %v1015 = vunpack.c.l.b16 %v328
      %v1016 = vunpack.c.h.b16 %v328
      %v1017 = vunpack.c.l.b16 %v329
      %v1018 = vunpack.c.h.b16 %v329
      %v1019 = vunpack.c.l.b16 %v330
      %v1020 = vunpack.c.l.b16 %v331
      %v1021 = vunpack.c.h.b16 %v331
      %v1022 = vunpack.c.l.b16 %v332
      %v1023 = vunpack.c.h.b16 %v332
      %v1024 = vunpack.c.l.b16 %v333
      %v1025 = vunpack.c.l.b16 %v334
      %v1026 = vunpack.c.h.b16 %v334
      %v1027 = vunpack.c.l.b16 %v335
      %v1028 = vunpack.c.h.b16 %v335
      %v1029 = vunpack.c.l.b16 %v336
      %v1030 = vunpack.c.l.b16 %v337
      %v1031 = vunpack.c.h.b16 %v337
      %v1032 = vunpack.c.l.b16 %v338
      %v1033 = vunpack.c.h.b16 %v338
      %v1034 = vunpack.c.l.b16 %v339
      %v1035 = vunpack.c.l.b16 %v340
      %v1036 = vunpack.c.h.b16 %v340
      %v1037 = vunpack.c.l.b16 %v341
      %v1038 = vunpack.c.h.b16 %v341
      %v1039 = vunpack.c.l.b16 %v342
      %v1040 = vunpack.c.l.b16 %v343
      %v1041 = vunpack.c.h.b16 %v343
      %v1042 = vunpack.c.l.b16 %v344
      %v1043 = vunpack.c.h.b16 %v344
      %v1044 = vunpack.c.l.b16 %v345
      %v1045 = vunpack.c.l.b16 %v346
      %v1046 = vunpack.c.h.b16 %v346
      %v1047 = vunpack.c.l.b16 %v347
      %v1048 = vunpack.c.h.b16 %v347
      %v1049 = vunpack.c.l.b16 %v348
      %v1050 = vunpack.c.l.b16 %v349
      %v1051 = vunpack.c.h.b16 %v349
      %v1052 = vunpack.c.l.b16 %v350
      %v1053 = vunpack.c.h.b16 %v350
      %v1054 = vunpack.c.l.b16 %v351
      %v1055 = vunpack.c.l.b16 %v352
      %v1056 = vunpack.c.h.b16 %v352
      %v1057 = vunpack.c.l.b16 %v353
      %v1058 = vunpack.c.h.b16 %v353
      %v1059 = vunpack.c.l.b16 %v354
      %v1060 = vunpack.c.l.b16 %v355
      %v1061 = vunpack.c.h.b16 %v355
      %v1062 = vunpack.c.l.b16 %v356
      %v1063 = vunpack.c.h.b16 %v356
      %v1064 = vunpack.c.l.b16 %v357
      %v1065 = vunpack.c.l.b16 %v358
      %v1066 = vunpack.c.h.b16 %v358
      %v1067 = vunpack.c.l.b16 %v359
      %v1068 = vunpack.c.h.b16 %v359
      %v1069 = vunpack.c.l.b16 %v360
      %v1070 = vunpack.c.l.b16 %v361
      %v1071 = vunpack.c.h.b16 %v361
      %v1072 = vunpack.c.l.b16 %v362
      %v1073 = vunpack.c.h.b16 %v362
      %v1074 = vunpack.c.l.b16 %v363
      %v1075 = vunpack.c.l.b16 %v364
      %v1076 = vunpack.c.h.b16 %v364
      %v1077 = vunpack.c.l.b16 %v365
      %v1078 = vunpack.c.h.b16 %v365
      %v1079 = vunpack.c.l.b16 %v366
      %v1080 = vunpack.c.l.b16 %v367
      %v1081 = vunpack.c.h.b16 %v367
      %v1082 = vunpack.c.l.b16 %v368
      %v1083 = vunpack.c.h.b16 %v368
      %v1084 = vunpack.c.l.b16 %v369
      %v1085 = vunpack.c.l.b16 %v370
      %v1086 = vunpack.c.h.b16 %v370
      %v1087 = vunpack.c.l.b16 %v371
      %v1088 = vunpack.c.h.b16 %v371
      %v1089 = vunpack.c.l.b16 %v372
      %v1090 = vunpack.c.l.b16 %v373
      %v1091 = vunpack.c.h.b16 %v373
      %v1092 = vunpack.c.l.b16 %v374
      %v1093 = vunpack.c.h.b16 %v374
      %v1094 = vunpack.c.l.b16 %v375
      %v1095 = vunpack.c.l.b16 %v376
      %v1096 = vunpack.c.h.b16 %v376
      %v1097 = vunpack.c.l.b16 %v377
      %v1098 = vunpack.c.h.b16 %v377
      %v1099 = vunpack.c.l.b16 %v378
      %v1100 = vunpack.c.l.b16 %v379
      %v1101 = vunpack.c.h.b16 %v379
      %v1102 = vunpack.c.l.b16 %v380
      %v1103 = vunpack.c.h.b16 %v380
      %v1104 = vunpack.c.l.b16 %v381
      %v1105 = vunpack.c.l.b16 %v382
      %v1106 = vunpack.c.h.b16 %v382
      %v1107 = vunpack.c.l.b16 %v383
      %v1108 = vunpack.c.h.b16 %v383
      %v1109 = vunpack.c.l.b16 %v384
      %v1110 = vunpack.c.l.b16 %v385
      %v1111 = vunpack.c.h.b16 %v385
      %v1112 = vunpack.c.l.b16 %v386
      %v1113 = vunpack.c.h.b16 %v386
      %v1114 = vunpack.c.l.b16 %v387
      %v1115 = vunpack.c.l.b16 %v388
      %v1116 = vunpack.c.h.b16 %v388
      %v1117 = vunpack.c.l.b16 %v389
      %v1118 = vunpack.c.h.b16 %v389
      %v1119 = vunpack.c.l.b16 %v390
      %v1120 = vunpack.c.l.b16 %v391
      %v1121 = vunpack.c.h.b16 %v391
      %v1122 = vunpack.c.l.b16 %v392
      %v1123 = vunpack.c.h.b16 %v392
      %v1124 = vunpack.c.l.b16 %v393
      %v1125 = vunpack.c.l.b16 %v394
      %v1126 = vunpack.c.h.b16 %v394
      %v1127 = vunpack.c.l.b16 %v395
      %v1128 = vunpack.c.h.b16 %v395
      %v1129 = vunpack.c.l.b16 %v396
      %v1130 = vunpack.c.l.b16 %v397
      %v1131 = vunpack.c.h.b16 %v397
      %v1132 = vunpack.c.l.b16 %v398
      %v1133 = vunpack.c.h.b16 %v398
      %v1134 = vunpack.c.l.b16 %v399
      %v1135 = vunpack.c.l.b16 %v400
      %v1136 = vunpack.c.h.b16 %v400
      %v1137 = vunpack.c.l.b16 %v401
      %v1138 = vunpack.c.h.b16 %v401
      %v1139 = vunpack.c.l.b16 %v402
      %v1140 = vunpack.c.l.b16 %v403
      %v1141 = vunpack.c.h.b16 %v403
      %v1142 = vunpack.c.l.b16 %v404
      %v1143 = vunpack.c.h.b16 %v404
      %v1144 = vunpack.c.l.b16 %v405
      %v1145 = vunpack.c.l.b16 %v406
      %v1146 = vunpack.c.h.b16 %v406
      %v1147 = vunpack.c.l.b16 %v407
      %v1148 = vunpack.c.h.b16 %v407
      %v1149 = vunpack.c.l.b16 %v408
      %v1150 = vunpack.c.l.b16 %v409
      %v1151 = vunpack.c.h.b16 %v409
      %v1152 = vunpack.c.l.b16 %v410
      %v1153 = vunpack.c.h.b16 %v410
      %v1154 = vunpack.c.l.b16 %v411
      %v1155 = vunpack.c.l.b16 %v412
      %v1156 = vunpack.c.h.b16 %v412
      %v1157 = vunpack.c.l.b16 %v413
      %v1158 = vunpack.c.h.b16 %v413
      %v1159 = vunpack.c.l.b16 %v414
      %v1160 = vunpack.c.l.b16 %v415
      %v1161 = vunpack.c.h.b16 %v415
      %v1162 = vunpack.c.l.b16 %v416
      %v1163 = vunpack.c.h.b16 %v416
      %v1164 = vunpack.c.l.b16 %v417
      %v1165 = vunpack.c.l.b16 %v418
      %v1166 = vunpack.c.h.b16 %v418
      %v1167 = vunpack.c.l.b16 %v419
      %v1168 = vunpack.c.h.b16 %v419
      %v1169 = vunpack.c.l.b16 %v420
      %v1170 = vunpack.c.l.b16 %v421
      %v1171 = vunpack.c.h.b16 %v421
      %v1172 = vunpack.c.l.b16 %v422
      %v1173 = vunpack.c.h.b16 %v422
      %v1174 = vunpack.c.l.b16 %v423
      %v1175 = vunpack.c.l.b16 %v424
      %v1176 = vunpack.c.h.b16 %v424
      %v1177 = vunpack.c.l.b16 %v425
      %v1178 = vunpack.c.h.b16 %v425
      %v1179 = vunpack.c.l.b16 %v426
      %v1180 = vunpack.c.l.b16 %v427
      %v1181 = vunpack.c.h.b16 %v427
      %v1182 = vunpack.c.l.b16 %v428
      %v1183 = vunpack.c.h.b16 %v428
      %v1184 = vunpack.c.l.b16 %v429
      %v1185 = vpack.c.b16 %v770, %v765
      %v1186 = vpack.c.b16 %v771, %v766
      %v1187 = vpack.c.b16 %v772, %v767
      %v1188 = vpack.c.b16 %v773, %v768
      %v1189 = vpack.c.b16 %v774, %v769
      %v1190 = vpack.c.b16 %v780, %v775
      %v1191 = vpack.c.b16 %v781, %v776
      %v1192 = vpack.c.b16 %v782, %v777
      %v1193 = vpack.c.b16 %v783, %v778
      %v1194 = vpack.c.b16 %v784, %v779
      %v1195 = vpack.c.b16 %v790, %v785
      %v1196 = vpack.c.b16 %v791, %v786
      %v1197 = vpack.c.b16 %v792, %v787
      %v1198 = vpack.c.b16 %v793, %v788
      %v1199 = vpack.c.b16 %v794, %v789
      %v1200 = vpack.c.b16 %v800, %v795
      %v1201 = vpack.c.b16 %v801, %v796
      %v1202 = vpack.c.b16 %v802, %v797
      %v1203 = vpack.c.b16 %v803, %v798
      %v1204 = vpack.c.b16 %v804, %v799
      %v1205 = vpack.c.b16 %v810, %v805
      %v1206 = vpack.c.b16 %v811, %v806
      %v1207 = vpack.c.b16 %v812, %v807
      %v1208 = vpack.c.b16 %v813, %v808
      %v1209 = vpack.c.b16 %v814, %v809
      %v1210 = vpack.c.b16 %v820, %v815
      %v1211 = vpack.c.b16 %v821, %v816
      %v1212 = vpack.c.b16 %v822, %v817
      %v1213 = vpack.c.b16 %v823, %v818
      %v1214 = vpack.c.b16 %v824, %v819
      %v1215 = vpack.c.b16 %v830, %v825
      %v1216 = vpack.c.b16 %v831, %v826
      %v1217 = vpack.c.b16 %v832, %v827
      %v1218 = vpack.c.b16 %v833, %v828
      %v1219 = vpack.c.b16 %v834, %v829
      %v1220 = vpack.c.b16 %v840, %v835
      %v1221 = vpack.c.b16 %v841, %v836
      %v1222 = vpack.c.b16 %v842, %v837
      %v1223 = vpack.c.b16 %v843, %v838
      %v1224 = vpack.c.b16 %v844, %v839
      %v1225 = vpack.c.b16 %v850, %v845
      %v1226 = vpack.c.b16 %v851, %v846
      %v1227 = vpack.c.b16 %v852, %v847
      %v1228 = vpack.c.b16 %v853, %v848
      %v1229 = vpack.c.b16 %v854, %v849
      %v1230 = vpack.c.b16 %v860, %v855
      %v1231 = vpack.c.b16 %v861, %v856
      %v1232 = vpack.c.b16 %v862, %v857
      %v1233 = vpack.c.b16 %v863, %v858
      %v1234 = vpack.c.b16 %v864, %v859
      %v1235 = vpack.c.b16 %v870, %v865
      %v1236 = vpack.c.b16 %v871, %v866
      %v1237 = vpack.c.b16 %v872, %v867
      %v1238 = vpack.c.b16 %v873, %v868
      %v1239 = vpack.c.b16 %v874, %v869
      %v1240 = vpack.c.b16 %v880, %v875
      %v1241 = vpack.c.b16 %v881, %v876
      %v1242 = vpack.c.b16 %v882, %v877
      %v1243 = vpack.c.b16 %v883, %v878
      %v1244 = vpack.c.b16 %v884, %v879
      %v1245 = vpack.c.b16 %v890, %v885
      %v1246 = vpack.c.b16 %v891, %v886
      %v1247 = vpack.c.b16 %v892, %v887
      %v1248 = vpack.c.b16 %v893, %v888
      %v1249 = vpack.c.b16 %v894, %v889
      %v1250 = vpack.c.b16 %v900, %v895
      %v1251 = vpack.c.b16 %v901, %v896
      %v1252 = vpack.c.b16 %v902, %v897
      %v1253 = vpack.c.b16 %v903, %v898
      %v1254 = vpack.c.b16 %v904, %v899
      %v1255 = vpack.c.b16 %v910, %v905
      %v1256 = vpack.c.b16 %v911, %v906
      %v1257 = vpack.c.b16 %v912, %v907
      %v1258 = vpack.c.b16 %v913, %v908
      %v1259 = vpack.c.b16 %v914, %v909
      %v1260 = vpack.c.b16 %v920, %v915
      %v1261 = vpack.c.b16 %v921, %v916
      %v1262 = vpack.c.b16 %v922, %v917
      %v1263 = vpack.c.b16 %v923, %v918
      %v1264 = vpack.c.b16 %v924, %v919
      %v1265 = vpack.c.b16 %v930, %v925
      %v1266 = vpack.c.b16 %v931, %v926
      %v1267 = vpack.c.b16 %v932, %v927
      %v1268 = vpack.c.b16 %v933, %v928
      %v1269 = vpack.c.b16 %v934, %v929
      %v1270 = vpack.c.b16 %v940, %v935
      %v1271 = vpack.c.b16 %v941, %v936
      %v1272 = vpack.c.b16 %v942, %v937
      %v1273 = vpack.c.b16 %v943, %v938
      %v1274 = vpack.c.b16 %v944, %v939
      %v1275 = vpack.c.b16 %v950, %v945
      %v1276 = vpack.c.b16 %v951, %v946
      %v1277 = vpack.c.b16 %v952, %v947
      %v1278 = vpack.c.b16 %v953, %v948
      %v1279 = vpack.c.b16 %v954, %v949
      %v1280 = vpack.c.b16 %v960, %v955
      %v1281 = vpack.c.b16 %v961, %v956
      %v1282 = vpack.c.b16 %v962, %v957
      %v1283 = vpack.c.b16 %v963, %v958
      %v1284 = vpack.c.b16 %v964, %v959
      %v1285 = vpack.c.b16 %v970, %v965
      %v1286 = vpack.c.b16 %v971, %v966
      %v1287 = vpack.c.b16 %v972, %v967
      %v1288 = vpack.c.b16 %v973, %v968
      %v1289 = vpack.c.b16 %v974, %v969
      %v1290 = vpack.c.b16 %v980, %v975
      %v1291 = vpack.c.b16 %v981, %v976
      %v1292 = vpack.c.b16 %v982, %v977
      %v1293 = vpack.c.b16 %v983, %v978
      %v1294 = vpack.c.b16 %v984, %v979
      %v1295 = vpack.c.b16 %v990, %v985
      %v1296 = vpack.c.b16 %v991, %v986
      %v1297 = vpack.c.b16 %v992, %v987
      %v1298 = vpack.c.b16 %v993, %v988
      %v1299 = vpack.c.b16 %v994, %v989
      %v1300 = vpack.c.b16 %v1000, %v995
      %v1301 = vpack.c.b16 %v1001, %v996
      %v1302 = vpack.c.b16 %v1002, %v997
      %v1303 = vpack.c.b16 %v1003, %v998
      %v1304 = vpack.c.b16 %v1004, %v999
      %v1305 = vpack.c.b16 %v1010, %v1005
      %v1306 = vpack.c.b16 %v1011, %v1006
      %v1307 = vpack.c.b16 %v1012, %v1007
      %v1308 = vpack.c.b16 %v1013, %v1008
      %v1309 = vpack.c.b16 %v1014, %v1009
      %v1310 = vpack.c.b16 %v1020, %v1015
      %v1311 = vpack.c.b16 %v1021, %v1016
      %v1312 = vpack.c.b16 %v1022, %v1017
      %v1313 = vpack.c.b16 %v1023, %v1018
      %v1314 = vpack.c.b16 %v1024, %v1019
      %v1315 = vpack.c.b16 %v1030, %v1025
      %v1316 = vpack.c.b16 %v1031, %v1026
      %v1317 = vpack.c.b16 %v1032, %v1027
      %v1318 = vpack.c.b16 %v1033, %v1028
      %v1319 = vpack.c.b16 %v1034, %v1029
      %v1320 = vpack.c.b16 %v1040, %v1035
      %v1321 = vpack.c.b16 %v1041, %v1036
      %v1322 = vpack.c.b16 %v1042, %v1037
      %v1323 = vpack.c.b16 %v1043, %v1038
      %v1324 = vpack.c.b16 %v1044, %v1039
      %v1325 = vpack.c.b16 %v1050, %v1045
      %v1326 = vpack.c.b16 %v1051, %v1046
      %v1327 = vpack.c.b16 %v1052, %v1047
      %v1328 = vpack.c.b16 %v1053, %v1048
      %v1329 = vpack.c.b16 %v1054, %v1049
      %v1330 = vpack.c.b16 %v1060, %v1055
      %v1331 = vpack.c.b16 %v1061, %v1056
      %v1332 = vpack.c.b16 %v1062, %v1057
      %v1333 = vpack.c.b16 %v1063, %v1058
      %v1334 = vpack.c.b16 %v1064, %v1059
      %v1335 = vpack.c.b16 %v1070, %v1065
      %v1336 = vpack.c.b16 %v1071, %v1066
      %v1337 = vpack.c.b16 %v1072, %v1067
      %v1338 = vpack.c.b16 %v1073, %v1068
      %v1339 = vpack.c.b16 %v1074, %v1069
      %v1340 = vpack.c.b16 %v1080, %v1075
      %v1341 = vpack.c.b16 %v1081, %v1076
      %v1342 = vpack.c.b16 %v1082, %v1077
      %v1343 = vpack.c.b16 %v1083, %v1078
      %v1344 = vpack.c.b16 %v1084, %v1079
      %v1345 = vpack.c.b16 %v1090, %v1085
      %v1346 = vpack.c.b16 %v1091, %v1086
      %v1347 = vpack.c.b16 %v1092, %v1087
      %v1348 = vpack.c.b16 %v1093, %v1088
      %v1349 = vpack.c.b16 %v1094, %v1089
      %v1350 = vpack.c.b16 %v1100, %v1095
      %v1351 = vpack.c.b16 %v1101, %v1096
      %v1352 = vpack.c.b16 %v1102, %v1097
      %v1353 = vpack.c.b16 %v1103, %v1098
      %v1354 = vpack.c.b16 %v1104, %v1099
      %v1355 = vpack.c.b16 %v1110, %v1105
      %v1356 = vpack.c.b16 %v1111, %v1106
      %v1357 = vpack.c.b16 %v1112, %v1107
      %v1358 = vpack.c.b16 %v1113, %v1108
      %v1359 = vpack.c.b16 %v1114, %v1109
      %v1360 = vpack.c.b16 %v1120, %v1115
      %v1361 = vpack.c.b16 %v1121, %v1116
      %v1362 = vpack.c.b16 %v1122, %v1117
      %v1363 = vpack.c.b16 %v1123, %v1118
      %v1364 = vpack.c.b16 %v1124, %v1119
      %v1365 = vpack.c.b16 %v1130, %v1125
      %v1366 = vpack.c.b16 %v1131, %v1126
      %v1367 = vpack.c.b16 %v1132, %v1127
      %v1368 = vpack.c.b16 %v1133, %v1128
      %v1369 = vpack.c.b16 %v1134, %v1129
      %v1370 = vpack.c.b16 %v1140, %v1135
      %v1371 = vpack.c.b16 %v1141, %v1136
      %v1372 = vpack.c.b16 %v1142, %v1137
      %v1373 = vpack.c.b16 %v1143, %v1138
      %v1374 = vpack.c.b16 %v1144, %v1139
      %v1375 = vpack.c.b16 %v1150, %v1145
      %v1376 = vpack.c.b16 %v1151, %v1146
      %v1377 = vpack.c.b16 %v1152, %v1147
      %v1378 = vpack.c.b16 %v1153, %v1148
      %v1379 = vpack.c.b16 %v1154, %v1149
      %v1380 = vpack.c.b16 %v1160, %v1155
      %v1381 = vpack.c.b16 %v1161, %v1156
      %v1382 = vpack.c.b16 %v1162, %v1157
      %v1383 = vpack.c.b16 %v1163, %v1158
      %v1384 = vpack.c.b16 %v1164, %v1159
      %v1385 = vpack.c.b16 %v1170, %v1165
      %v1386 = vpack.c.b16 %v1171, %v1166
      %v1387 = vpack.c.b16 %v1172, %v1167
      %v1388 = vpack.c.b16 %v1173, %v1168
      %v1389 = vpack.c.b16 %v1174, %v1169
      %v1390 = vpack.c.b16 %v1180, %v1175
      %v1391 = vpack.c.b16 %v1181, %v1176
      %v1392 = vpack.c.b16 %v1182, %v1177
      %v1393 = vpack.c.b16 %v1183, %v1178
      %v1394 = vpack.c.b16 %v1184, %v1179
      %v1639 = vunpack.c.l.b16 %v430
      %v1640 = vunpack.c.l.b16 %v431
      %v1641 = vunpack.c.l.b16 %v432
      %v1642 = vunpack.c.l.b16 %v433
      %v1643 = vunpack.c.l.b16 %v434
      %v1644 = vunpack.c.l.b16 %v435
      %v1645 = vunpack.c.l.b16 %v436
      %v1646 = vunpack.c.l.b16 %v437
      %v1647 = vunpack.c.l.b16 %v438
      %v1648 = vunpack.c.l.b16 %v439
      %v1649 = vunpack.c.l.b16 %v440
      %v1650 = vunpack.c.l.b16 %v441
      %v1651 = vunpack.c.l.b16 %v442
      %v1652 = vunpack.c.l.b16 %v443
      %v1653 = vunpack.c.l.b16 %v444
      %v1654 = vunpack.c.l.b16 %v445
      %v1655 = vunpack.c.l.b16 %v446
      %v1656 = vunpack.c.l.b16 %v447
      %v1657 = vunpack.c.l.b16 %v448
      %v1658 = vunpack.c.l.b16 %v449
      %v1659 = vunpack.c.l.b16 %v450
      %v1660 = vunpack.c.l.b16 %v451
      %v1661 = vunpack.c.l.b16 %v452
      %v1662 = vunpack.c.l.b16 %v453
      %v1663 = vunpack.c.l.b16 %v454
      %v1664 = vunpack.c.l.b16 %v455
      %v1665 = vunpack.c.l.b16 %v456
      %v1666 = vunpack.c.l.b16 %v457
      %v1667 = vunpack.c.l.b16 %v458
      %v1668 = vunpack.c.l.b16 %v459
      %v1669 = vunpack.c.l.b16 %v460
      %v1670 = vunpack.c.l.b16 %v461
      %v1671 = vunpack.c.l.b16 %v462
      %v1672 = vunpack.c.l.b16 %v463
      %v1673 = vunpack.c.l.b16 %v464
      %v1674 = vunpack.c.l.b16 %v465
      %v1675 = vunpack.c.l.b16 %v466
      %v1676 = vunpack.c.l.b16 %v467
      %v1677 = vunpack.c.l.b16 %v468
      %v1678 = vunpack.c.l.b16 %v469
      %v1679 = vunpack.c.l.b16 %v470
      %v1680 = vunpack.c.l.b16 %v471
      %v1681 = vunpack.c.l.b16 %v472
      %v1682 = vunpack.c.l.b16 %v473
      %v1683 = vunpack.c.l.b16 %v474
      %v1684 = vunpack.c.l.b16 %v475
      %v1685 = vunpack.c.l.b16 %v476
      %v1686 = vunpack.c.l.b16 %v477
      %v1687 = vunpack.c.l.b16 %v478
      %v1688 = vunpack.c.l.b16 %v479
      %v1689 = vunpack.c.l.b16 %v480
      %v1690 = vunpack.c.l.b16 %v481
      %v1691 = vunpack.c.l.b16 %v482
      %v1692 = vunpack.c.l.b16 %v483
      %v1693 = vunpack.c.l.b16 %v484
      %v1694 = vunpack.c.l.b16 %v485
      %v1695 = vunpack.c.l.b16 %v486
      %v1696 = vunpack.c.l.b16 %v487
      %v1697 = vunpack.c.l.b16 %v488
      %v1698 = vunpack.c.l.b16 %v489
      %v1699 = vunpack.c.l.b16 %v490
      %v1700 = vunpack.c.l.b16 %v491
      %v1701 = vunpack.c.l.b16 %v492
      %v1702 = vunpack.c.l.b16 %v493
      %v1703 = vunpack.c.l.b16 %v494
      %v1704 = vunpack.c.l.b16 %v495
      %v1705 = vunpack.c.l.b16 %v496
      %v1706 = vunpack.c.l.b16 %v497
      %v1707 = vunpack.c.l.b16 %v498
      %v1708 = vunpack.c.l.b16 %v499
      %v1709 = vunpack.c.l.b16 %v500
      %v1710 = vunpack.c.l.b16 %v501
      %v1711 = vunpack.c.l.b16 %v502
      %v1712 = vunpack.c.l.b16 %v503
      %v1713 = vunpack.c.l.b16 %v504
      %v1714 = vunpack.c.l.b16 %v505
      %v1715 = vpack.c.b16 %v1640, %v1639
      %v1716 = vpack.c.b16 %v1642, %v1641
      %v1717 = vpack.c.b16 %v1644, %v1643
      %v1718 = vpack.c.b16 %v1646, %v1645
      %v1719 = vpack.c.b16 %v1648, %v1647
      %v1720 = vpack.c.b16 %v1650, %v1649
      %v1721 = vpack.c.b16 %v1652, %v1651
      %v1722 = vpack.c.b16 %v1654, %v1653
      %v1723 = vpack.c.b16 %v1656, %v1655
      %v1724 = vpack.c.b16 %v1658, %v1657
      %v1725 = vpack.c.b16 %v1660, %v1659
      %v1726 = vpack.c.b16 %v1662, %v1661
      %v1727 = vpack.c.b16 %v1664, %v1663
      %v1728 = vpack.c.b16 %v1666, %v1665
      %v1729 = vpack.c.b16 %v1668, %v1667
      %v1730 = vpack.c.b16 %v1670, %v1669
      %v1731 = vpack.c.b16 %v1672, %v1671
      %v1732 = vpack.c.b16 %v1674, %v1673
      %v1733 = vpack.c.b16 %v1676, %v1675
      %v1734 = vpack.c.b16 %v1678, %v1677
      %v1735 = vpack.c.b16 %v1680, %v1679
      %v1736 = vpack.c.b16 %v1682, %v1681
      %v1737 = vpack.c.b16 %v1684, %v1683
      %v1738 = vpack.c.b16 %v1686, %v1685
      %v1739 = vpack.c.b16 %v1688, %v1687
      %v1740 = vpack.c.b16 %v1690, %v1689
      %v1741 = vpack.c.b16 %v1692, %v1691
      %v1742 = vpack.c.b16 %v1694, %v1693
      %v1743 = vpack.c.b16 %v1696, %v1695
      %v1744 = vpack.c.b16 %v1698, %v1697
      %v1745 = vpack.c.b16 %v1700, %v1699
      %v1746 = vpack.c.b16 %v1702, %v1701
      %v1747 = vpack.c.b16 %v1704, %v1703
      %v1748 = vpack.c.b16 %v1706, %v1705
      %v1749 = vpack.c.b16 %v1708, %v1707
      %v1750 = vpack.c.b16 %v1710, %v1709
      %v1751 = vpack.c.b16 %v1712, %v1711
      %v1752 = vpack.c.b16 %v1714, %v1713
      %vm1791 = vcmask 785408
      %v1793 = vsel %vm1791, %v1189, 0
      %v1796 = vsel %vm1791, %v1194, 0
      %v1799 = vsel %vm1791, %v1199, 0
      %v1802 = vsel %vm1791, %v1204, 0
      %v1805 = vsel %vm1791, %v1209, 0
      %v1808 = vsel %vm1791, %v1214, 0
      %v1811 = vsel %vm1791, %v1219, 0
      %v1814 = vsel %vm1791, %v1224, 0
      %v1817 = vsel %vm1791, %v1229, 0
      %v1820 = vsel %vm1791, %v1234, 0
      %v1823 = vsel %vm1791, %v1239, 0
      %v1826 = vsel %vm1791, %v1244, 0
      %v1829 = vsel %vm1791, %v1249, 0
      %v1832 = vsel %vm1791, %v1254, 0
      %v1835 = vsel %vm1791, %v1259, 0
      %v1838 = vsel %vm1791, %v1264, 0
      %v1841 = vsel %vm1791, %v1269, 0
      %v1844 = vsel %vm1791, %v1274, 0
      %v1847 = vsel %vm1791, %v1279, 0
      %v1850 = vsel %vm1791, %v1284, 0
      %v1853 = vsel %vm1791, %v1289, 0
      %v1856 = vsel %vm1791, %v1294, 0
      %v1859 = vsel %vm1791, %v1299, 0
      %v1862 = vsel %vm1791, %v1304, 0
      %v1865 = vsel %vm1791, %v1309, 0
      %v1868 = vsel %vm1791, %v1314, 0
      %v1871 = vsel %vm1791, %v1319, 0
      %v1874 = vsel %vm1791, %v1324, 0
      %v1877 = vsel %vm1791, %v1329, 0
      %v1880 = vsel %vm1791, %v1334, 0
      %v1883 = vsel %vm1791, %v1339, 0
      %v1886 = vsel %vm1791, %v1344, 0
      %v1889 = vsel %vm1791, %v1349, 0
      %v1892 = vsel %vm1791, %v1354, 0
      %v1895 = vsel %vm1791, %v1359, 0
      %v1898 = vsel %vm1791, %v1364, 0
      %v1901 = vsel %vm1791, %v1369, 0
      %v1904 = vsel %vm1791, %v1374, 0
      %v1907 = vsel %vm1791, %v1379, 0
      %v1910 = vsel %vm1791, %v1384, 0
      %v1913 = vsel %vm1791, %v1389, 0
      %v1916 = vsel %vm1791, %v1394, 0
      %1918 = vmatprep.subr.bf16.mxu0 0
      %1919 = vmatpush1.bf16.msra.mxu0 %v1715
      %1920 = vmatprep.subr.bf16.mxu0 0
      %1921 = vmatpush1.bf16.msra.mxu0 %v1716
      %1922 = vmatprep.subr.bf16.mxu0 0
      %1923 = vmatpush1.bf16.msra.mxu0 %v1717
      %1924 = vmatprep.subr.bf16.mxu0 0
      %1925 = vmatpush1.bf16.msra.mxu0 %v1718
      %1926 = vmatprep.subr.bf16.mxu0 0
      %1927 = vmatpush1.bf16.msra.mxu0 %v1719
      %1928 = vmatprep.subr.bf16.mxu0 0
      %1929 = vmatpush1.bf16.msra.mxu0 %v1720
      %1930 = vmatprep.subr.bf16.mxu0 0
      %1931 = vmatpush1.bf16.msra.mxu0 %v1721
      %1932 = vmatprep.subr.bf16.mxu0 0
      %1933 = vmatpush1.bf16.msra.mxu0 %v1722
      %1934 = vmatprep.subr.bf16.mxu0 0
      %1935 = vmatpush1.bf16.msra.mxu0 %v1723
      %1936 = vmatprep.subr.bf16.mxu0 0
      %1937 = vmatpush1.bf16.msra.mxu0 %v1724
      %1938 = vmatprep.subr.bf16.mxu0 0
      %1939 = vmatpush1.bf16.msra.mxu0 %v1725
      %1940 = vmatprep.subr.bf16.mxu0 0
      %1941 = vmatpush1.bf16.msra.mxu0 %v1726
      %1942 = vmatprep.subr.bf16.mxu0 0
      %1943 = vmatpush1.bf16.msra.mxu0 %v1727
      %1944 = vmatprep.subr.bf16.mxu0 0
      %1945 = vmatpush1.bf16.msra.mxu0 %v1728
      %1946 = vmatprep.subr.bf16.mxu0 0
      %1947 = vmatpush1.bf16.msra.mxu0 %v1729
      %1948 = vmatprep.subr.bf16.mxu0 0
      %1949 = vmatpush1.bf16.msra.mxu0 %v1730
      %1950 = vmatprep.mubr.bf16.mxu0 %v1186
      %1951 = vmatmul.mubr.bf16.gmra.mrb[0].mxu0 %v1185
      %v1952 = vpop.f32.mrb[0].mxu0
      %v1953 = vadd.f32 %v511, %v1952
      %v1954 = vpop.f32.mrb[0].mxu0
      %v1955 = vpop.f32.mrb[0].mxu0
      %v1956 = vadd.f32 %v511, %v1955
      %v1957 = vpop.f32.mrb[0].mxu0
      %1958 = vmatprep.mubr.bf16.mxu0 %v1191
      %1959 = vmatmul.mubr.bf16.gmra.mrb[0].mxu0 %v1190
      %v1960 = vpop.f32.mrb[0].mxu0
      %v1961 = vadd.f32 %v511, %v1960
      %v1962 = vpop.f32.mrb[0].mxu0
      %v1963 = vpop.f32.mrb[0].mxu0
      %v1964 = vadd.f32 %v511, %v1963
      %v1965 = vpop.f32.mrb[0].mxu0
      %1966 = vmatprep.mubr.bf16.mxu0 %v1196
      %1967 = vmatmul.mubr.bf16.gmra.mrb[0].mxu0 %v1195
      %v1968 = vpop.f32.mrb[0].mxu0
      %v1969 = vadd.f32 %v511, %v1968
      %v1970 = vpop.f32.mrb[0].mxu0
      %v1971 = vpop.f32.mrb[0].mxu0
      %v1972 = vadd.f32 %v511, %v1971
      %v1973 = vpop.f32.mrb[0].mxu0
      %1974 = vmatprep.mubr.bf16.mxu0 %v1201
      %1975 = vmatmul.mubr.bf16.gmra.mrb[0].mxu0 %v1200
      %v1976 = vpop.f32.mrb[0].mxu0
      %v1977 = vadd.f32 %v511, %v1976
      %v1978 = vpop.f32.mrb[0].mxu0
      %v1979 = vpop.f32.mrb[0].mxu0
      %v1980 = vadd.f32 %v511, %v1979
      %v1981 = vpop.f32.mrb[0].mxu0
      %1982 = vmatprep.mubr.bf16.mxu0 %v1206
      %1983 = vmatmul.mubr.bf16.gmra.mrb[0].mxu0 %v1205
      %v1984 = vpop.f32.mrb[0].mxu0
      %v1985 = vadd.f32 %v511, %v1984
      %v1986 = vpop.f32.mrb[0].mxu0
      %v1987 = vpop.f32.mrb[0].mxu0
      %v1988 = vadd.f32 %v511, %v1987
      %v1989 = vpop.f32.mrb[0].mxu0
      %1990 = vmatprep.mubr.bf16.mxu0 %v1211
      %1991 = vmatmul.mubr.bf16.gmra.mrb[0].mxu0 %v1210
      %v1992 = vpop.f32.mrb[0].mxu0
      %v1993 = vadd.f32 %v511, %v1992
      %v1994 = vpop.f32.mrb[0].mxu0
      %v1995 = vpop.f32.mrb[0].mxu0
      %v1996 = vadd.f32 %v511, %v1995
      %v1997 = vpop.f32.mrb[0].mxu0
      %1998 = vmatprep.mubr.bf16.mxu0 %v1216
      %1999 = vmatmul.mubr.bf16.gmra.mrb[0].mxu0 %v1215
      %v2000 = vpop.f32.mrb[0].mxu0
      %v2001 = vadd.f32 %v511, %v2000
      %v2002 = vpop.f32.mrb[0].mxu0
      %v2003 = vpop.f32.mrb[0].mxu0
      %v2004 = vadd.f32 %v511, %v2003
      %v2005 = vpop.f32.mrb[0].mxu0
      %2006 = vmatprep.mubr.bf16.mxu0 %v1221
      %2007 = vmatmul.mubr.bf16.gmra.mrb[0].mxu0 %v1220
      %v2008 = vpop.f32.mrb[0].mxu0
      %v2009 = vadd.f32 %v511, %v2008
      %v2010 = vpop.f32.mrb[0].mxu0
      %v2011 = vpop.f32.mrb[0].mxu0
      %v2012 = vadd.f32 %v511, %v2011
      %v2013 = vpop.f32.mrb[0].mxu0
      %2014 = vmatprep.mubr.bf16.mxu0 %v1226
      %2015 = vmatmul.mubr.bf16.gmra.mrb[0].mxu0 %v1225
      %v2016 = vpop.f32.mrb[0].mxu0
      %v2017 = vadd.f32 %v511, %v2016
      %v2018 = vpop.f32.mrb[0].mxu0
      %v2019 = vpop.f32.mrb[0].mxu0
      %v2020 = vadd.f32 %v511, %v2019
      %v2021 = vpop.f32.mrb[0].mxu0
      %2022 = vmatprep.mubr.bf16.mxu0 %v1231
      %2023 = vmatmul.mubr.bf16.gmra.mrb[0].mxu0 %v1230
      %v2024 = vpop.f32.mrb[0].mxu0
      %v2025 = vadd.f32 %v511, %v2024
      %v2026 = vpop.f32.mrb[0].mxu0
      %v2027 = vpop.f32.mrb[0].mxu0
      %v2028 = vadd.f32 %v511, %v2027
      %v2029 = vpop.f32.mrb[0].mxu0
      %2030 = vmatprep.mubr.bf16.mxu0 %v1236
      %2031 = vmatmul.mubr.bf16.gmra.mrb[0].mxu0 %v1235
      %v2032 = vpop.f32.mrb[0].mxu0
      %v2033 = vadd.f32 %v511, %v2032
      %v2034 = vpop.f32.mrb[0].mxu0
      %v2035 = vpop.f32.mrb[0].mxu0
      %v2036 = vadd.f32 %v511, %v2035
      %v2037 = vpop.f32.mrb[0].mxu0
      %2038 = vmatprep.mubr.bf16.mxu0 %v1241
      %2039 = vmatmul.mubr.bf16.gmra.mrb[0].mxu0 %v1240
      %v2040 = vpop.f32.mrb[0].mxu0
      %v2041 = vadd.f32 %v511, %v2040
      %v2042 = vpop.f32.mrb[0].mxu0
      %v2043 = vpop.f32.mrb[0].mxu0
      %v2044 = vadd.f32 %v511, %v2043
      %v2045 = vpop.f32.mrb[0].mxu0
      %2046 = vmatprep.mubr.bf16.mxu0 %v1246
      %2047 = vmatmul.mubr.bf16.gmra.mrb[0].mxu0 %v1245
      %v2048 = vpop.f32.mrb[0].mxu0
      %v2049 = vadd.f32 %v511, %v2048
      %v2050 = vpop.f32.mrb[0].mxu0
      %v2051 = vpop.f32.mrb[0].mxu0
      %v2052 = vadd.f32 %v511, %v2051
      %v2053 = vpop.f32.mrb[0].mxu0
      %2054 = vmatprep.mubr.bf16.mxu0 %v1251
      %2055 = vmatmul.mubr.bf16.gmra.mrb[0].mxu0 %v1250
      %v2056 = vpop.f32.mrb[0].mxu0
      %v2057 = vadd.f32 %v511, %v2056
      %v2058 = vpop.f32.mrb[0].mxu0
      %v2059 = vpop.f32.mrb[0].mxu0
      %v2060 = vadd.f32 %v511, %v2059
      %v2061 = vpop.f32.mrb[0].mxu0
      %2062 = vmatprep.mubr.bf16.mxu0 %v1256
      %2063 = vmatmul.mubr.bf16.gmra.mrb[0].mxu0 %v1255
      %v2064 = vpop.f32.mrb[0].mxu0
      %v2065 = vadd.f32 %v511, %v2064
      %v2066 = vpop.f32.mrb[0].mxu0
      %v2067 = vpop.f32.mrb[0].mxu0
      %v2068 = vadd.f32 %v511, %v2067
      %v2069 = vpop.f32.mrb[0].mxu0
      %2070 = vmatprep.mubr.bf16.mxu0 %v1261
      %2071 = vmatmul.mubr.bf16.gmra.mrb[0].mxu0 %v1260
      %v2072 = vpop.f32.mrb[0].mxu0
      %v2073 = vadd.f32 %v511, %v2072
      %v2074 = vpop.f32.mrb[0].mxu0
      %v2075 = vpop.f32.mrb[0].mxu0
      %v2076 = vadd.f32 %v511, %v2075
      %v2077 = vpop.f32.mrb[0].mxu0
      %2078 = vmatprep.mubr.bf16.mxu0 %v1266
      %2079 = vmatmul.mubr.bf16.gmra.mrb[0].mxu0 %v1265
      %v2080 = vpop.f32.mrb[0].mxu0
      %v2081 = vadd.f32 %v511, %v2080
      %v2082 = vpop.f32.mrb[0].mxu0
      %v2083 = vpop.f32.mrb[0].mxu0
      %v2084 = vadd.f32 %v511, %v2083
      %v2085 = vpop.f32.mrb[0].mxu0
      %2086 = vmatprep.mubr.bf16.mxu0 %v1271
      %2087 = vmatmul.mubr.bf16.gmra.mrb[0].mxu0 %v1270
      %v2088 = vpop.f32.mrb[0].mxu0
      %v2089 = vadd.f32 %v511, %v2088
      %v2090 = vpop.f32.mrb[0].mxu0
      %v2091 = vpop.f32.mrb[0].mxu0
      %v2092 = vadd.f32 %v511, %v2091
      %v2093 = vpop.f32.mrb[0].mxu0
      %2094 = vmatprep.mubr.bf16.mxu0 %v1276
      %2095 = vmatmul.mubr.bf16.gmra.mrb[0].mxu0 %v1275
      %v2096 = vpop.f32.mrb[0].mxu0
      %v2097 = vadd.f32 %v511, %v2096
      %v2098 = vpop.f32.mrb[0].mxu0
      %v2099 = vpop.f32.mrb[0].mxu0
      %v2100 = vadd.f32 %v511, %v2099
      %v2101 = vpop.f32.mrb[0].mxu0
      %2102 = vmatprep.mubr.bf16.mxu0 %v1281
      %2103 = vmatmul.mubr.bf16.gmra.mrb[0].mxu0 %v1280
      %v2104 = vpop.f32.mrb[0].mxu0
      %v2105 = vadd.f32 %v511, %v2104
      %v2106 = vpop.f32.mrb[0].mxu0
      %v2107 = vpop.f32.mrb[0].mxu0
      %v2108 = vadd.f32 %v511, %v2107
      %v2109 = vpop.f32.mrb[0].mxu0
      %2110 = vmatprep.mubr.bf16.mxu0 %v1286
      %2111 = vmatmul.mubr.bf16.gmra.mrb[0].mxu0 %v1285
      %v2112 = vpop.f32.mrb[0].mxu0
      %v2113 = vadd.f32 %v511, %v2112
      %v2114 = vpop.f32.mrb[0].mxu0
      %v2115 = vpop.f32.mrb[0].mxu0
      %v2116 = vadd.f32 %v511, %v2115
      %v2117 = vpop.f32.mrb[0].mxu0
      %2118 = vmatprep.mubr.bf16.mxu0 %v1291
      %2119 = vmatmul.mubr.bf16.gmra.mrb[0].mxu0 %v1290
      %v2120 = vpop.f32.mrb[0].mxu0
      %v2121 = vadd.f32 %v511, %v2120
      %v2122 = vpop.f32.mrb[0].mxu0
      %v2123 = vpop.f32.mrb[0].mxu0
      %v2124 = vadd.f32 %v511, %v2123
      %v2125 = vpop.f32.mrb[0].mxu0
      %2126 = vmatprep.mubr.bf16.mxu0 %v1296
      %2127 = vmatmul.mubr.bf16.gmra.mrb[0].mxu0 %v1295
      %v2128 = vpop.f32.mrb[0].mxu0
      %v2129 = vadd.f32 %v511, %v2128
      %v2130 = vpop.f32.mrb[0].mxu0
      %v2131 = vpop.f32.mrb[0].mxu0
      %v2132 = vadd.f32 %v511, %v2131
      %v2133 = vpop.f32.mrb[0].mxu0
      %2134 = vmatprep.mubr.bf16.mxu0 %v1301
      %2135 = vmatmul.mubr.bf16.gmra.mrb[0].mxu0 %v1300
      %v2136 = vpop.f32.mrb[0].mxu0
      %v2137 = vadd.f32 %v511, %v2136
      %v2138 = vpop.f32.mrb[0].mxu0
      %v2139 = vpop.f32.mrb[0].mxu0
      %v2140 = vadd.f32 %v511, %v2139
      %v2141 = vpop.f32.mrb[0].mxu0
      %2142 = vmatprep.mubr.bf16.mxu0 %v1306
      %2143 = vmatmul.mubr.bf16.gmra.mrb[0].mxu0 %v1305
      %v2144 = vpop.f32.mrb[0].mxu0
      %v2145 = vadd.f32 %v511, %v2144
      %v2146 = vpop.f32.mrb[0].mxu0
      %v2147 = vpop.f32.mrb[0].mxu0
      %v2148 = vadd.f32 %v511, %v2147
      %v2149 = vpop.f32.mrb[0].mxu0
      %2150 = vmatprep.mubr.bf16.mxu0 %v1311
      %2151 = vmatmul.mubr.bf16.gmra.mrb[0].mxu0 %v1310
      %v2152 = vpop.f32.mrb[0].mxu0
      %v2153 = vadd.f32 %v511, %v2152
      %v2154 = vpop.f32.mrb[0].mxu0
      %v2155 = vpop.f32.mrb[0].mxu0
      %v2156 = vadd.f32 %v511, %v2155
      %v2157 = vpop.f32.mrb[0].mxu0
      %2158 = vmatprep.mubr.bf16.mxu0 %v1316
      %2159 = vmatmul.mubr.bf16.gmra.mrb[0].mxu0 %v1315
      %v2160 = vpop.f32.mrb[0].mxu0
      %v2161 = vadd.f32 %v511, %v2160
      %v2162 = vpop.f32.mrb[0].mxu0
      %v2163 = vpop.f32.mrb[0].mxu0
      %v2164 = vadd.f32 %v511, %v2163
      %v2165 = vpop.f32.mrb[0].mxu0
      %2166 = vmatprep.mubr.bf16.mxu0 %v1321
      %2167 = vmatmul.mubr.bf16.gmra.mrb[0].mxu0 %v1320
      %v2168 = vpop.f32.mrb[0].mxu0
      %v2169 = vadd.f32 %v511, %v2168
      %v2170 = vpop.f32.mrb[0].mxu0
      %v2171 = vpop.f32.mrb[0].mxu0
      %v2172 = vadd.f32 %v511, %v2171
      %v2173 = vpop.f32.mrb[0].mxu0
      %2174 = vmatprep.mubr.bf16.mxu0 %v1326
      %2175 = vmatmul.mubr.bf16.gmra.mrb[0].mxu0 %v1325
      %v2176 = vpop.f32.mrb[0].mxu0
      %v2177 = vadd.f32 %v511, %v2176
      %v2178 = vpop.f32.mrb[0].mxu0
      %v2179 = vpop.f32.mrb[0].mxu0
      %v2180 = vadd.f32 %v511, %v2179
      %v2181 = vpop.f32.mrb[0].mxu0
      %2182 = vmatprep.mubr.bf16.mxu0 %v1331
      %2183 = vmatmul.mubr.bf16.gmra.mrb[0].mxu0 %v1330
      %v2184 = vpop.f32.mrb[0].mxu0
      %v2185 = vadd.f32 %v511, %v2184
      %v2186 = vpop.f32.mrb[0].mxu0
      %v2187 = vpop.f32.mrb[0].mxu0
      %v2188 = vadd.f32 %v511, %v2187
      %v2189 = vpop.f32.mrb[0].mxu0
      %2190 = vmatprep.mubr.bf16.mxu0 %v1336
      %2191 = vmatmul.mubr.bf16.gmra.mrb[0].mxu0 %v1335
      %v2192 = vpop.f32.mrb[0].mxu0
      %v2193 = vadd.f32 %v511, %v2192
      %v2194 = vpop.f32.mrb[0].mxu0
      %v2195 = vpop.f32.mrb[0].mxu0
      %v2196 = vadd.f32 %v511, %v2195
      %v2197 = vpop.f32.mrb[0].mxu0
      %2198 = vmatprep.mubr.bf16.mxu0 %v1341
      %2199 = vmatmul.mubr.bf16.gmra.mrb[0].mxu0 %v1340
      %v2200 = vpop.f32.mrb[0].mxu0
      %v2201 = vadd.f32 %v511, %v2200
      %v2202 = vpop.f32.mrb[0].mxu0
      %v2203 = vpop.f32.mrb[0].mxu0
      %v2204 = vadd.f32 %v511, %v2203
      %v2205 = vpop.f32.mrb[0].mxu0
      %2206 = vmatprep.mubr.bf16.mxu0 %v1346
      %2207 = vmatmul.mubr.bf16.gmra.mrb[0].mxu0 %v1345
      %v2208 = vpop.f32.mrb[0].mxu0
      %v2209 = vadd.f32 %v511, %v2208
      %v2210 = vpop.f32.mrb[0].mxu0
      %v2211 = vpop.f32.mrb[0].mxu0
      %v2212 = vadd.f32 %v511, %v2211
      %v2213 = vpop.f32.mrb[0].mxu0
      %2214 = vmatprep.mubr.bf16.mxu0 %v1351
      %2215 = vmatmul.mubr.bf16.gmra.mrb[0].mxu0 %v1350
      %v2216 = vpop.f32.mrb[0].mxu0
      %v2217 = vadd.f32 %v511, %v2216
      %v2218 = vpop.f32.mrb[0].mxu0
      %v2219 = vpop.f32.mrb[0].mxu0
      %v2220 = vadd.f32 %v511, %v2219
      %v2221 = vpop.f32.mrb[0].mxu0
      %2222 = vmatprep.mubr.bf16.mxu0 %v1356
      %2223 = vmatmul.mubr.bf16.gmra.mrb[0].mxu0 %v1355
      %v2224 = vpop.f32.mrb[0].mxu0
      %v2225 = vadd.f32 %v511, %v2224
      %v2226 = vpop.f32.mrb[0].mxu0
      %v2227 = vpop.f32.mrb[0].mxu0
      %v2228 = vadd.f32 %v511, %v2227
      %v2229 = vpop.f32.mrb[0].mxu0
      %2230 = vmatprep.mubr.bf16.mxu0 %v1361
      %2231 = vmatmul.mubr.bf16.gmra.mrb[0].mxu0 %v1360
      %v2232 = vpop.f32.mrb[0].mxu0
      %v2233 = vadd.f32 %v511, %v2232
      %v2234 = vpop.f32.mrb[0].mxu0
      %v2235 = vpop.f32.mrb[0].mxu0
      %v2236 = vadd.f32 %v511, %v2235
      %v2237 = vpop.f32.mrb[0].mxu0
      %2238 = vmatprep.mubr.bf16.mxu0 %v1366
      %2239 = vmatmul.mubr.bf16.gmra.mrb[0].mxu0 %v1365
      %v2240 = vpop.f32.mrb[0].mxu0
      %v2241 = vadd.f32 %v511, %v2240
      %v2242 = vpop.f32.mrb[0].mxu0
      %v2243 = vpop.f32.mrb[0].mxu0
      %v2244 = vadd.f32 %v511, %v2243
      %v2245 = vpop.f32.mrb[0].mxu0
      %2246 = vmatprep.mubr.bf16.mxu0 %v1371
      %2247 = vmatmul.mubr.bf16.gmra.mrb[0].mxu0 %v1370
      %v2248 = vpop.f32.mrb[0].mxu0
      %v2249 = vadd.f32 %v511, %v2248
      %v2250 = vpop.f32.mrb[0].mxu0
      %v2251 = vpop.f32.mrb[0].mxu0
      %v2252 = vadd.f32 %v511, %v2251
      %v2253 = vpop.f32.mrb[0].mxu0
      %2254 = vmatprep.mubr.bf16.mxu0 %v1376
      %2255 = vmatmul.mubr.bf16.gmra.mrb[0].mxu0 %v1375
      %v2256 = vpop.f32.mrb[0].mxu0
      %v2257 = vadd.f32 %v511, %v2256
      %v2258 = vpop.f32.mrb[0].mxu0
      %v2259 = vpop.f32.mrb[0].mxu0
      %v2260 = vadd.f32 %v511, %v2259
      %v2261 = vpop.f32.mrb[0].mxu0
      %2262 = vmatprep.mubr.bf16.mxu0 %v1381
      %2263 = vmatmul.mubr.bf16.gmra.mrb[0].mxu0 %v1380
      %v2264 = vpop.f32.mrb[0].mxu0
      %v2265 = vadd.f32 %v511, %v2264
      %v2266 = vpop.f32.mrb[0].mxu0
      %v2267 = vpop.f32.mrb[0].mxu0
      %v2268 = vadd.f32 %v511, %v2267
      %v2269 = vpop.f32.mrb[0].mxu0
      %2270 = vmatprep.mubr.bf16.mxu0 %v1386
      %2271 = vmatmul.mubr.bf16.gmra.mrb[0].mxu0 %v1385
      %v2272 = vpop.f32.mrb[0].mxu0
      %v2273 = vadd.f32 %v511, %v2272
      %v2274 = vpop.f32.mrb[0].mxu0
      %v2275 = vpop.f32.mrb[0].mxu0
      %v2276 = vadd.f32 %v511, %v2275
      %v2277 = vpop.f32.mrb[0].mxu0
      %2278 = vmatprep.mubr.bf16.mxu0 %v1391
      %2279 = vmatmul.mubr.bf16.gmra.mrb[0].mxu0 %v1390
      %v2280 = vpop.f32.mrb[0].mxu0
      %v2281 = vadd.f32 %v511, %v2280
      %v2282 = vpop.f32.mrb[0].mxu0
      %v2283 = vpop.f32.mrb[0].mxu0
      %v2284 = vadd.f32 %v511, %v2283
      %v2285 = vpop.f32.mrb[0].mxu0
      %2286 = vdwg.mxu0
      %2287 = vmatprep.subr.bf16.mxu0 0
      %2288 = vmatpush1.bf16.msra.mxu0 %v1731
      %2289 = vmatprep.subr.bf16.mxu0 0
      %2290 = vmatpush1.bf16.msra.mxu0 %v1732
      %2291 = vmatprep.subr.bf16.mxu0 0
      %2292 = vmatpush1.bf16.msra.mxu0 %v1733
      %2293 = vmatprep.subr.bf16.mxu0 0
      %2294 = vmatpush1.bf16.msra.mxu0 %v1734
      %2295 = vmatprep.subr.bf16.mxu0 0
      %2296 = vmatpush1.bf16.msra.mxu0 %v1735
      %2297 = vmatprep.subr.bf16.mxu0 0
      %2298 = vmatpush1.bf16.msra.mxu0 %v1736
      %2299 = vmatprep.subr.bf16.mxu0 0
      %2300 = vmatpush1.bf16.msra.mxu0 %v1737
      %2301 = vmatprep.subr.bf16.mxu0 0
      %2302 = vmatpush1.bf16.msra.mxu0 %v1738
      %2303 = vmatprep.subr.bf16.mxu0 0
      %2304 = vmatpush1.bf16.msra.mxu0 %v1739
      %2305 = vmatprep.subr.bf16.mxu0 0
      %2306 = vmatpush1.bf16.msra.mxu0 %v1740
      %2307 = vmatprep.subr.bf16.mxu0 0
      %2308 = vmatpush1.bf16.msra.mxu0 %v1741
      %2309 = vmatprep.subr.bf16.mxu0 0
      %2310 = vmatpush1.bf16.msra.mxu0 %v1742
      %2311 = vmatprep.subr.bf16.mxu0 0
      %2312 = vmatpush1.bf16.msra.mxu0 %v1743
      %2313 = vmatprep.subr.bf16.mxu0 0
      %2314 = vmatpush1.bf16.msra.mxu0 %v1744
      %2315 = vmatprep.subr.bf16.mxu0 0
      %2316 = vmatpush1.bf16.msra.mxu0 %v1745
      %2317 = vmatprep.subr.bf16.mxu0 0
      %2318 = vmatpush1.bf16.msra.mxu0 %v1746
      %2319 = vmatprep.mubr.bf16.mxu0 %v1188
      %2320 = vmatmul.mubr.bf16.gmra.mrb[0].mxu0 %v1187
      %v2321 = vpop.f32.mrb[0].mxu0
      %v2322 = vadd.f32 %v1953, %v2321
      %v2323 = vpop.f32.mrb[0].mxu0
      %v2324 = vpop.f32.mrb[0].mxu0
      %v2325 = vadd.f32 %v1956, %v2324
      %v2326 = vpop.f32.mrb[0].mxu0
      %2327 = vmatprep.mubr.bf16.mxu0 %v1193
      %2328 = vmatmul.mubr.bf16.gmra.mrb[0].mxu0 %v1192
      %v2329 = vpop.f32.mrb[0].mxu0
      %v2330 = vadd.f32 %v1961, %v2329
      %v2331 = vpop.f32.mrb[0].mxu0
      %v2332 = vpop.f32.mrb[0].mxu0
      %v2333 = vadd.f32 %v1964, %v2332
      %v2334 = vpop.f32.mrb[0].mxu0
      %2335 = vmatprep.mubr.bf16.mxu0 %v1198
      %2336 = vmatmul.mubr.bf16.gmra.mrb[0].mxu0 %v1197
      %v2337 = vpop.f32.mrb[0].mxu0
      %v2338 = vadd.f32 %v1969, %v2337
      %v2339 = vpop.f32.mrb[0].mxu0
      %v2340 = vpop.f32.mrb[0].mxu0
      %v2341 = vadd.f32 %v1972, %v2340
      %v2342 = vpop.f32.mrb[0].mxu0
      %2343 = vmatprep.mubr.bf16.mxu0 %v1203
      %2344 = vmatmul.mubr.bf16.gmra.mrb[0].mxu0 %v1202
      %v2345 = vpop.f32.mrb[0].mxu0
      %v2346 = vadd.f32 %v1977, %v2345
      %v2347 = vpop.f32.mrb[0].mxu0
      %v2348 = vpop.f32.mrb[0].mxu0
      %v2349 = vadd.f32 %v1980, %v2348
      %v2350 = vpop.f32.mrb[0].mxu0
      %2351 = vmatprep.mubr.bf16.mxu0 %v1208
      %2352 = vmatmul.mubr.bf16.gmra.mrb[0].mxu0 %v1207
      %v2353 = vpop.f32.mrb[0].mxu0
      %v2354 = vadd.f32 %v1985, %v2353
      %v2355 = vpop.f32.mrb[0].mxu0
      %v2356 = vpop.f32.mrb[0].mxu0
      %v2357 = vadd.f32 %v1988, %v2356
      %v2358 = vpop.f32.mrb[0].mxu0
      %2359 = vmatprep.mubr.bf16.mxu0 %v1213
      %2360 = vmatmul.mubr.bf16.gmra.mrb[0].mxu0 %v1212
      %v2361 = vpop.f32.mrb[0].mxu0
      %v2362 = vadd.f32 %v1993, %v2361
      %v2363 = vpop.f32.mrb[0].mxu0
      %v2364 = vpop.f32.mrb[0].mxu0
      %v2365 = vadd.f32 %v1996, %v2364
      %v2366 = vpop.f32.mrb[0].mxu0
      %2367 = vmatprep.mubr.bf16.mxu0 %v1218
      %2368 = vmatmul.mubr.bf16.gmra.mrb[0].mxu0 %v1217
      %v2369 = vpop.f32.mrb[0].mxu0
      %v2370 = vadd.f32 %v2001, %v2369
      %v2371 = vpop.f32.mrb[0].mxu0
      %v2372 = vpop.f32.mrb[0].mxu0
      %v2373 = vadd.f32 %v2004, %v2372
      %v2374 = vpop.f32.mrb[0].mxu0
      %2375 = vmatprep.mubr.bf16.mxu0 %v1223
      %2376 = vmatmul.mubr.bf16.gmra.mrb[0].mxu0 %v1222
      %v2377 = vpop.f32.mrb[0].mxu0
      %v2378 = vadd.f32 %v2009, %v2377
      %v2379 = vpop.f32.mrb[0].mxu0
      %v2380 = vpop.f32.mrb[0].mxu0
      %v2381 = vadd.f32 %v2012, %v2380
      %v2382 = vpop.f32.mrb[0].mxu0
      %2383 = vmatprep.mubr.bf16.mxu0 %v1228
      %2384 = vmatmul.mubr.bf16.gmra.mrb[0].mxu0 %v1227
      %v2385 = vpop.f32.mrb[0].mxu0
      %v2386 = vadd.f32 %v2017, %v2385
      %v2387 = vpop.f32.mrb[0].mxu0
      %v2388 = vpop.f32.mrb[0].mxu0
      %v2389 = vadd.f32 %v2020, %v2388
      %v2390 = vpop.f32.mrb[0].mxu0
      %2391 = vmatprep.mubr.bf16.mxu0 %v1233
      %2392 = vmatmul.mubr.bf16.gmra.mrb[0].mxu0 %v1232
      %v2393 = vpop.f32.mrb[0].mxu0
      %v2394 = vadd.f32 %v2025, %v2393
      %v2395 = vpop.f32.mrb[0].mxu0
      %v2396 = vpop.f32.mrb[0].mxu0
      %v2397 = vadd.f32 %v2028, %v2396
      %v2398 = vpop.f32.mrb[0].mxu0
      %2399 = vmatprep.mubr.bf16.mxu0 %v1238
      %2400 = vmatmul.mubr.bf16.gmra.mrb[0].mxu0 %v1237
      %v2401 = vpop.f32.mrb[0].mxu0
      %v2402 = vadd.f32 %v2033, %v2401
      %v2403 = vpop.f32.mrb[0].mxu0
      %v2404 = vpop.f32.mrb[0].mxu0
      %v2405 = vadd.f32 %v2036, %v2404
      %v2406 = vpop.f32.mrb[0].mxu0
      %2407 = vmatprep.mubr.bf16.mxu0 %v1243
      %2408 = vmatmul.mubr.bf16.gmra.mrb[0].mxu0 %v1242
      %v2409 = vpop.f32.mrb[0].mxu0
      %v2410 = vadd.f32 %v2041, %v2409
      %v2411 = vpop.f32.mrb[0].mxu0
      %v2412 = vpop.f32.mrb[0].mxu0
      %v2413 = vadd.f32 %v2044, %v2412
      %v2414 = vpop.f32.mrb[0].mxu0
      %2415 = vmatprep.mubr.bf16.mxu0 %v1248
      %2416 = vmatmul.mubr.bf16.gmra.mrb[0].mxu0 %v1247
      %v2417 = vpop.f32.mrb[0].mxu0
      %v2418 = vadd.f32 %v2049, %v2417
      %v2419 = vpop.f32.mrb[0].mxu0
      %v2420 = vpop.f32.mrb[0].mxu0
      %v2421 = vadd.f32 %v2052, %v2420
      %v2422 = vpop.f32.mrb[0].mxu0
      %2423 = vmatprep.mubr.bf16.mxu0 %v1253
      %2424 = vmatmul.mubr.bf16.gmra.mrb[0].mxu0 %v1252
      %v2425 = vpop.f32.mrb[0].mxu0
      %v2426 = vadd.f32 %v2057, %v2425
      %v2427 = vpop.f32.mrb[0].mxu0
      %v2428 = vpop.f32.mrb[0].mxu0
      %v2429 = vadd.f32 %v2060, %v2428
      %v2430 = vpop.f32.mrb[0].mxu0
      %2431 = vmatprep.mubr.bf16.mxu0 %v1258
      %2432 = vmatmul.mubr.bf16.gmra.mrb[0].mxu0 %v1257
      %v2433 = vpop.f32.mrb[0].mxu0
      %v2434 = vadd.f32 %v2065, %v2433
      %v2435 = vpop.f32.mrb[0].mxu0
      %v2436 = vpop.f32.mrb[0].mxu0
      %v2437 = vadd.f32 %v2068, %v2436
      %v2438 = vpop.f32.mrb[0].mxu0
      %2439 = vmatprep.mubr.bf16.mxu0 %v1263
      %2440 = vmatmul.mubr.bf16.gmra.mrb[0].mxu0 %v1262
      %v2441 = vpop.f32.mrb[0].mxu0
      %v2442 = vadd.f32 %v2073, %v2441
      %v2443 = vpop.f32.mrb[0].mxu0
      %v2444 = vpop.f32.mrb[0].mxu0
      %v2445 = vadd.f32 %v2076, %v2444
      %v2446 = vpop.f32.mrb[0].mxu0
      %2447 = vmatprep.mubr.bf16.mxu0 %v1268
      %2448 = vmatmul.mubr.bf16.gmra.mrb[0].mxu0 %v1267
      %v2449 = vpop.f32.mrb[0].mxu0
      %v2450 = vadd.f32 %v2081, %v2449
      %v2451 = vpop.f32.mrb[0].mxu0
      %v2452 = vpop.f32.mrb[0].mxu0
      %v2453 = vadd.f32 %v2084, %v2452
      %v2454 = vpop.f32.mrb[0].mxu0
      %2455 = vmatprep.mubr.bf16.mxu0 %v1273
      %2456 = vmatmul.mubr.bf16.gmra.mrb[0].mxu0 %v1272
      %v2457 = vpop.f32.mrb[0].mxu0
      %v2458 = vadd.f32 %v2089, %v2457
      %v2459 = vpop.f32.mrb[0].mxu0
      %v2460 = vpop.f32.mrb[0].mxu0
      %v2461 = vadd.f32 %v2092, %v2460
      %v2462 = vpop.f32.mrb[0].mxu0
      %2463 = vmatprep.mubr.bf16.mxu0 %v1278
      %2464 = vmatmul.mubr.bf16.gmra.mrb[0].mxu0 %v1277
      %v2465 = vpop.f32.mrb[0].mxu0
      %v2466 = vadd.f32 %v2097, %v2465
      %v2467 = vpop.f32.mrb[0].mxu0
      %v2468 = vpop.f32.mrb[0].mxu0
      %v2469 = vadd.f32 %v2100, %v2468
      %v2470 = vpop.f32.mrb[0].mxu0
      %2471 = vmatprep.mubr.bf16.mxu0 %v1283
      %2472 = vmatmul.mubr.bf16.gmra.mrb[0].mxu0 %v1282
      %v2473 = vpop.f32.mrb[0].mxu0
      %v2474 = vadd.f32 %v2105, %v2473
      %v2475 = vpop.f32.mrb[0].mxu0
      %v2476 = vpop.f32.mrb[0].mxu0
      %v2477 = vadd.f32 %v2108, %v2476
      %v2478 = vpop.f32.mrb[0].mxu0
      %2479 = vmatprep.mubr.bf16.mxu0 %v1288
      %2480 = vmatmul.mubr.bf16.gmra.mrb[0].mxu0 %v1287
      %v2481 = vpop.f32.mrb[0].mxu0
      %v2482 = vadd.f32 %v2113, %v2481
      %v2483 = vpop.f32.mrb[0].mxu0
      %v2484 = vpop.f32.mrb[0].mxu0
      %v2485 = vadd.f32 %v2116, %v2484
      %v2486 = vpop.f32.mrb[0].mxu0
      %2487 = vmatprep.mubr.bf16.mxu0 %v1293
      %2488 = vmatmul.mubr.bf16.gmra.mrb[0].mxu0 %v1292
      %v2489 = vpop.f32.mrb[0].mxu0
      %v2490 = vadd.f32 %v2121, %v2489
      %v2491 = vpop.f32.mrb[0].mxu0
      %v2492 = vpop.f32.mrb[0].mxu0
      %v2493 = vadd.f32 %v2124, %v2492
      %v2494 = vpop.f32.mrb[0].mxu0
      %2495 = vmatprep.mubr.bf16.mxu0 %v1298
      %2496 = vmatmul.mubr.bf16.gmra.mrb[0].mxu0 %v1297
      %v2497 = vpop.f32.mrb[0].mxu0
      %v2498 = vadd.f32 %v2129, %v2497
      %v2499 = vpop.f32.mrb[0].mxu0
      %v2500 = vpop.f32.mrb[0].mxu0
      %v2501 = vadd.f32 %v2132, %v2500
      %v2502 = vpop.f32.mrb[0].mxu0
      %2503 = vmatprep.mubr.bf16.mxu0 %v1303
      %2504 = vmatmul.mubr.bf16.gmra.mrb[0].mxu0 %v1302
      %v2505 = vpop.f32.mrb[0].mxu0
      %v2506 = vadd.f32 %v2137, %v2505
      %v2507 = vpop.f32.mrb[0].mxu0
      %v2508 = vpop.f32.mrb[0].mxu0
      %v2509 = vadd.f32 %v2140, %v2508
      %v2510 = vpop.f32.mrb[0].mxu0
      %2511 = vmatprep.mubr.bf16.mxu0 %v1308
      %2512 = vmatmul.mubr.bf16.gmra.mrb[0].mxu0 %v1307
      %v2513 = vpop.f32.mrb[0].mxu0
      %v2514 = vadd.f32 %v2145, %v2513
      %v2515 = vpop.f32.mrb[0].mxu0
      %v2516 = vpop.f32.mrb[0].mxu0
      %v2517 = vadd.f32 %v2148, %v2516
      %v2518 = vpop.f32.mrb[0].mxu0
      %2519 = vmatprep.mubr.bf16.mxu0 %v1313
      %2520 = vmatmul.mubr.bf16.gmra.mrb[0].mxu0 %v1312
      %v2521 = vpop.f32.mrb[0].mxu0
      %v2522 = vadd.f32 %v2153, %v2521
      %v2523 = vpop.f32.mrb[0].mxu0
      %v2524 = vpop.f32.mrb[0].mxu0
      %v2525 = vadd.f32 %v2156, %v2524
      %v2526 = vpop.f32.mrb[0].mxu0
      %2527 = vmatprep.mubr.bf16.mxu0 %v1318
      %2528 = vmatmul.mubr.bf16.gmra.mrb[0].mxu0 %v1317
      %v2529 = vpop.f32.mrb[0].mxu0
      %v2530 = vadd.f32 %v2161, %v2529
      %v2531 = vpop.f32.mrb[0].mxu0
      %v2532 = vpop.f32.mrb[0].mxu0
      %v2533 = vadd.f32 %v2164, %v2532
      %v2534 = vpop.f32.mrb[0].mxu0
      %2535 = vmatprep.mubr.bf16.mxu0 %v1323
      %2536 = vmatmul.mubr.bf16.gmra.mrb[0].mxu0 %v1322
      %v2537 = vpop.f32.mrb[0].mxu0
      %v2538 = vadd.f32 %v2169, %v2537
      %v2539 = vpop.f32.mrb[0].mxu0
      %v2540 = vpop.f32.mrb[0].mxu0
      %v2541 = vadd.f32 %v2172, %v2540
      %v2542 = vpop.f32.mrb[0].mxu0
      %2543 = vmatprep.mubr.bf16.mxu0 %v1328
      %2544 = vmatmul.mubr.bf16.gmra.mrb[0].mxu0 %v1327
      %v2545 = vpop.f32.mrb[0].mxu0
      %v2546 = vadd.f32 %v2177, %v2545
      %v2547 = vpop.f32.mrb[0].mxu0
      %v2548 = vpop.f32.mrb[0].mxu0
      %v2549 = vadd.f32 %v2180, %v2548
      %v2550 = vpop.f32.mrb[0].mxu0
      %2551 = vmatprep.mubr.bf16.mxu0 %v1333
      %2552 = vmatmul.mubr.bf16.gmra.mrb[0].mxu0 %v1332
      %v2553 = vpop.f32.mrb[0].mxu0
      %v2554 = vadd.f32 %v2185, %v2553
      %v2555 = vpop.f32.mrb[0].mxu0
      %v2556 = vpop.f32.mrb[0].mxu0
      %v2557 = vadd.f32 %v2188, %v2556
      %v2558 = vpop.f32.mrb[0].mxu0
      %2559 = vmatprep.mubr.bf16.mxu0 %v1338
      %2560 = vmatmul.mubr.bf16.gmra.mrb[0].mxu0 %v1337
      %v2561 = vpop.f32.mrb[0].mxu0
      %v2562 = vadd.f32 %v2193, %v2561
      %v2563 = vpop.f32.mrb[0].mxu0
      %v2564 = vpop.f32.mrb[0].mxu0
      %v2565 = vadd.f32 %v2196, %v2564
      %v2566 = vpop.f32.mrb[0].mxu0
      %2567 = vmatprep.mubr.bf16.mxu0 %v1343
      %2568 = vmatmul.mubr.bf16.gmra.mrb[0].mxu0 %v1342
      %v2569 = vpop.f32.mrb[0].mxu0
      %v2570 = vadd.f32 %v2201, %v2569
      %v2571 = vpop.f32.mrb[0].mxu0
      %v2572 = vpop.f32.mrb[0].mxu0
      %v2573 = vadd.f32 %v2204, %v2572
      %v2574 = vpop.f32.mrb[0].mxu0
      %2575 = vmatprep.mubr.bf16.mxu0 %v1348
      %2576 = vmatmul.mubr.bf16.gmra.mrb[0].mxu0 %v1347
      %v2577 = vpop.f32.mrb[0].mxu0
      %v2578 = vadd.f32 %v2209, %v2577
      %v2579 = vpop.f32.mrb[0].mxu0
      %v2580 = vpop.f32.mrb[0].mxu0
      %v2581 = vadd.f32 %v2212, %v2580
      %v2582 = vpop.f32.mrb[0].mxu0
      %2583 = vmatprep.mubr.bf16.mxu0 %v1353
      %2584 = vmatmul.mubr.bf16.gmra.mrb[0].mxu0 %v1352
      %v2585 = vpop.f32.mrb[0].mxu0
      %v2586 = vadd.f32 %v2217, %v2585
      %v2587 = vpop.f32.mrb[0].mxu0
      %v2588 = vpop.f32.mrb[0].mxu0
      %v2589 = vadd.f32 %v2220, %v2588
      %v2590 = vpop.f32.mrb[0].mxu0
      %2591 = vmatprep.mubr.bf16.mxu0 %v1358
      %2592 = vmatmul.mubr.bf16.gmra.mrb[0].mxu0 %v1357
      %v2593 = vpop.f32.mrb[0].mxu0
      %v2594 = vadd.f32 %v2225, %v2593
      %v2595 = vpop.f32.mrb[0].mxu0
      %v2596 = vpop.f32.mrb[0].mxu0
      %v2597 = vadd.f32 %v2228, %v2596
      %v2598 = vpop.f32.mrb[0].mxu0
      %2599 = vmatprep.mubr.bf16.mxu0 %v1363
      %2600 = vmatmul.mubr.bf16.gmra.mrb[0].mxu0 %v1362
      %v2601 = vpop.f32.mrb[0].mxu0
      %v2602 = vadd.f32 %v2233, %v2601
      %v2603 = vpop.f32.mrb[0].mxu0
      %v2604 = vpop.f32.mrb[0].mxu0
      %v2605 = vadd.f32 %v2236, %v2604
      %v2606 = vpop.f32.mrb[0].mxu0
      %2607 = vmatprep.mubr.bf16.mxu0 %v1368
      %2608 = vmatmul.mubr.bf16.gmra.mrb[0].mxu0 %v1367
      %v2609 = vpop.f32.mrb[0].mxu0
      %v2610 = vadd.f32 %v2241, %v2609
      %v2611 = vpop.f32.mrb[0].mxu0
      %v2612 = vpop.f32.mrb[0].mxu0
      %v2613 = vadd.f32 %v2244, %v2612
      %v2614 = vpop.f32.mrb[0].mxu0
      %2615 = vmatprep.mubr.bf16.mxu0 %v1373
      %2616 = vmatmul.mubr.bf16.gmra.mrb[0].mxu0 %v1372
      %v2617 = vpop.f32.mrb[0].mxu0
      %v2618 = vadd.f32 %v2249, %v2617
      %v2619 = vpop.f32.mrb[0].mxu0
      %v2620 = vpop.f32.mrb[0].mxu0
      %v2621 = vadd.f32 %v2252, %v2620
      %v2622 = vpop.f32.mrb[0].mxu0
      %2623 = vmatprep.mubr.bf16.mxu0 %v1378
      %2624 = vmatmul.mubr.bf16.gmra.mrb[0].mxu0 %v1377
      %v2625 = vpop.f32.mrb[0].mxu0
      %v2626 = vadd.f32 %v2257, %v2625
      %v2627 = vpop.f32.mrb[0].mxu0
      %v2628 = vpop.f32.mrb[0].mxu0
      %v2629 = vadd.f32 %v2260, %v2628
      %v2630 = vpop.f32.mrb[0].mxu0
      %2631 = vmatprep.mubr.bf16.mxu0 %v1383
      %2632 = vmatmul.mubr.bf16.gmra.mrb[0].mxu0 %v1382
      %v2633 = vpop.f32.mrb[0].mxu0
      %v2634 = vadd.f32 %v2265, %v2633
      %v2635 = vpop.f32.mrb[0].mxu0
      %v2636 = vpop.f32.mrb[0].mxu0
      %v2637 = vadd.f32 %v2268, %v2636
      %v2638 = vpop.f32.mrb[0].mxu0
      %2639 = vmatprep.mubr.bf16.mxu0 %v1388
      %2640 = vmatmul.mubr.bf16.gmra.mrb[0].mxu0 %v1387
      %v2641 = vpop.f32.mrb[0].mxu0
      %v2642 = vadd.f32 %v2273, %v2641
      %v2643 = vpop.f32.mrb[0].mxu0
      %v2644 = vpop.f32.mrb[0].mxu0
      %v2645 = vadd.f32 %v2276, %v2644
      %v2646 = vpop.f32.mrb[0].mxu0
      %2647 = vmatprep.mubr.bf16.mxu0 %v1393
      %2648 = vmatmul.mubr.bf16.gmra.mrb[0].mxu0 %v1392
      %v2649 = vpop.f32.mrb[0].mxu0
      %v2650 = vadd.f32 %v2281, %v2649
      %v2651 = vpop.f32.mrb[0].mxu0
      %v2652 = vpop.f32.mrb[0].mxu0
      %v2653 = vadd.f32 %v2284, %v2652
      %v2654 = vpop.f32.mrb[0].mxu0
      %2655 = vdwg.mxu0
      %2656 = vmatprep.subr.bf16.mxu0 0
      %2657 = vmatpush1.bf16.msra.mxu0 %v1747
      %2658 = vmatprep.subr.bf16.mxu0 0
      %2659 = vmatpush1.bf16.msra.mxu0 %v1748
      %2660 = vmatprep.subr.bf16.mxu0 0
      %2661 = vmatpush1.bf16.msra.mxu0 %v1749
      %2662 = vmatprep.subr.bf16.mxu0 0
      %2663 = vmatpush1.bf16.msra.mxu0 %v1750
      %2664 = vmatprep.subr.bf16.mxu0 0
      %2665 = vmatpush1.bf16.msra.mxu0 %v1751
      %2666 = vmatprep.subr.bf16.mxu0 0
      %2667 = vmatpush1.bf16.msra.mxu0 %v1752
      %2668 = vmatprep.subr.bf16.mxu0 0
      %2669 = vmatpush1.bf16.msra.mxu0 0
      %2670 = vmatprep.subr.bf16.mxu0 0
      %2671 = vmatpush1.bf16.msra.mxu0 0
      %2672 = vmatprep.subr.bf16.mxu0 0
      %2673 = vmatpush1.bf16.msra.mxu0 0
      %2674 = vmatprep.subr.bf16.mxu0 0
      %2675 = vmatpush1.bf16.msra.mxu0 0
      %2676 = vmatprep.subr.bf16.mxu0 0
      %2677 = vmatpush1.bf16.msra.mxu0 0
      %2678 = vmatprep.subr.bf16.mxu0 0
      %2679 = vmatpush1.bf16.msra.mxu0 0
      %2680 = vmatprep.subr.bf16.mxu0 0
      %2681 = vmatpush1.bf16.msra.mxu0 0
      %2682 = vmatprep.subr.bf16.mxu0 0
      %2683 = vmatpush1.bf16.msra.mxu0 0
      %2684 = vmatprep.subr.bf16.mxu0 0
      %2685 = vmatpush1.bf16.msra.mxu0 0
      %2686 = vmatprep.subr.bf16.mxu0 0
      %2687 = vmatpush1.bf16.msra.mxu0 0
      %2688 = vmatprep.mubr.bf16.mxu0 0
      %2689 = vmatmul.mubr.bf16.gmra.mrb[0].mxu0 %v1793
      %v2690 = vpop.f32.mrb[0].mxu0
      %v2691 = vadd.f32 %v2322, %v2690
      %v2692 = vpop.f32.mrb[0].mxu0
      %v2693 = vpop.f32.mrb[0].mxu0
      %v2694 = vadd.f32 %v2325, %v2693
      %v2695 = vpop.f32.mrb[0].mxu0
      %2696 = vmatprep.mubr.bf16.mxu0 0
      %2697 = vmatmul.mubr.bf16.gmra.mrb[0].mxu0 %v1796
      %v2698 = vpop.f32.mrb[0].mxu0
      %v2699 = vadd.f32 %v2330, %v2698
      %v2700 = vpop.f32.mrb[0].mxu0
      %v2701 = vpop.f32.mrb[0].mxu0
      %v2702 = vadd.f32 %v2333, %v2701
      %v2703 = vpop.f32.mrb[0].mxu0
      %2704 = vmatprep.mubr.bf16.mxu0 0
      %2705 = vmatmul.mubr.bf16.gmra.mrb[0].mxu0 %v1799
      %v2706 = vpop.f32.mrb[0].mxu0
      %v2707 = vadd.f32 %v2338, %v2706
      %v2708 = vpop.f32.mrb[0].mxu0
      %v2709 = vpop.f32.mrb[0].mxu0
      %v2710 = vadd.f32 %v2341, %v2709
      %v2711 = vpop.f32.mrb[0].mxu0
      %2712 = vmatprep.mubr.bf16.mxu0 0
      %2713 = vmatmul.mubr.bf16.gmra.mrb[0].mxu0 %v1802
      %v2714 = vpop.f32.mrb[0].mxu0
      %v2715 = vadd.f32 %v2346, %v2714
      %v2716 = vpop.f32.mrb[0].mxu0
      %v2717 = vpop.f32.mrb[0].mxu0
      %v2718 = vadd.f32 %v2349, %v2717
      %v2719 = vpop.f32.mrb[0].mxu0
      %2720 = vmatprep.mubr.bf16.mxu0 0
      %2721 = vmatmul.mubr.bf16.gmra.mrb[0].mxu0 %v1805
      %v2722 = vpop.f32.mrb[0].mxu0
      %v2723 = vadd.f32 %v2354, %v2722
      %v2724 = vpop.f32.mrb[0].mxu0
      %v2725 = vpop.f32.mrb[0].mxu0
      %v2726 = vadd.f32 %v2357, %v2725
      %v2727 = vpop.f32.mrb[0].mxu0
      %2728 = vmatprep.mubr.bf16.mxu0 0
      %2729 = vmatmul.mubr.bf16.gmra.mrb[0].mxu0 %v1808
      %v2730 = vpop.f32.mrb[0].mxu0
      %v2731 = vadd.f32 %v2362, %v2730
      %v2732 = vpop.f32.mrb[0].mxu0
      %v2733 = vpop.f32.mrb[0].mxu0
      %v2734 = vadd.f32 %v2365, %v2733
      %v2735 = vpop.f32.mrb[0].mxu0
      %2736 = vmatprep.mubr.bf16.mxu0 0
      %2737 = vmatmul.mubr.bf16.gmra.mrb[0].mxu0 %v1811
      %v2738 = vpop.f32.mrb[0].mxu0
      %v2739 = vadd.f32 %v2370, %v2738
      %v2740 = vpop.f32.mrb[0].mxu0
      %v2741 = vpop.f32.mrb[0].mxu0
      %v2742 = vadd.f32 %v2373, %v2741
      %v2743 = vpop.f32.mrb[0].mxu0
      %2744 = vmatprep.mubr.bf16.mxu0 0
      %2745 = vmatmul.mubr.bf16.gmra.mrb[0].mxu0 %v1814
      %v2746 = vpop.f32.mrb[0].mxu0
      %v2747 = vadd.f32 %v2378, %v2746
      %v2748 = vpop.f32.mrb[0].mxu0
      %v2749 = vpop.f32.mrb[0].mxu0
      %v2750 = vadd.f32 %v2381, %v2749
      %v2751 = vpop.f32.mrb[0].mxu0
      %2752 = vmatprep.mubr.bf16.mxu0 0
      %2753 = vmatmul.mubr.bf16.gmra.mrb[0].mxu0 %v1817
      %v2754 = vpop.f32.mrb[0].mxu0
      %v2755 = vadd.f32 %v2386, %v2754
      %v2756 = vpop.f32.mrb[0].mxu0
      %v2757 = vpop.f32.mrb[0].mxu0
      %v2758 = vadd.f32 %v2389, %v2757
      %v2759 = vpop.f32.mrb[0].mxu0
      %2760 = vmatprep.mubr.bf16.mxu0 0
      %2761 = vmatmul.mubr.bf16.gmra.mrb[0].mxu0 %v1820
      %v2762 = vpop.f32.mrb[0].mxu0
      %v2763 = vadd.f32 %v2394, %v2762
      %v2764 = vpop.f32.mrb[0].mxu0
      %v2765 = vpop.f32.mrb[0].mxu0
      %v2766 = vadd.f32 %v2397, %v2765
      %v2767 = vpop.f32.mrb[0].mxu0
      %2768 = vmatprep.mubr.bf16.mxu0 0
      %2769 = vmatmul.mubr.bf16.gmra.mrb[0].mxu0 %v1823
      %v2770 = vpop.f32.mrb[0].mxu0
      %v2771 = vadd.f32 %v2402, %v2770
      %v2772 = vpop.f32.mrb[0].mxu0
      %v2773 = vpop.f32.mrb[0].mxu0
      %v2774 = vadd.f32 %v2405, %v2773
      %v2775 = vpop.f32.mrb[0].mxu0
      %2776 = vmatprep.mubr.bf16.mxu0 0
      %2777 = vmatmul.mubr.bf16.gmra.mrb[0].mxu0 %v1826
      %v2778 = vpop.f32.mrb[0].mxu0
      %v2779 = vadd.f32 %v2410, %v2778
      %v2780 = vpop.f32.mrb[0].mxu0
      %v2781 = vpop.f32.mrb[0].mxu0
      %v2782 = vadd.f32 %v2413, %v2781
      %v2783 = vpop.f32.mrb[0].mxu0
      %2784 = vmatprep.mubr.bf16.mxu0 0
      %2785 = vmatmul.mubr.bf16.gmra.mrb[0].mxu0 %v1829
      %v2786 = vpop.f32.mrb[0].mxu0
      %v2787 = vadd.f32 %v2418, %v2786
      %v2788 = vpop.f32.mrb[0].mxu0
      %v2789 = vpop.f32.mrb[0].mxu0
      %v2790 = vadd.f32 %v2421, %v2789
      %v2791 = vpop.f32.mrb[0].mxu0
      %2792 = vmatprep.mubr.bf16.mxu0 0
      %2793 = vmatmul.mubr.bf16.gmra.mrb[0].mxu0 %v1832
      %v2794 = vpop.f32.mrb[0].mxu0
      %v2795 = vadd.f32 %v2426, %v2794
      %v2796 = vpop.f32.mrb[0].mxu0
      %v2797 = vpop.f32.mrb[0].mxu0
      %v2798 = vadd.f32 %v2429, %v2797
      %v2799 = vpop.f32.mrb[0].mxu0
      %2800 = vmatprep.mubr.bf16.mxu0 0
      %2801 = vmatmul.mubr.bf16.gmra.mrb[0].mxu0 %v1835
      %v2802 = vpop.f32.mrb[0].mxu0
      %v2803 = vadd.f32 %v2434, %v2802
      %v2804 = vpop.f32.mrb[0].mxu0
      %v2805 = vpop.f32.mrb[0].mxu0
      %v2806 = vadd.f32 %v2437, %v2805
      %v2807 = vpop.f32.mrb[0].mxu0
      %2808 = vmatprep.mubr.bf16.mxu0 0
      %2809 = vmatmul.mubr.bf16.gmra.mrb[0].mxu0 %v1838
      %v2810 = vpop.f32.mrb[0].mxu0
      %v2811 = vadd.f32 %v2442, %v2810
      %v2812 = vpop.f32.mrb[0].mxu0
      %v2813 = vpop.f32.mrb[0].mxu0
      %v2814 = vadd.f32 %v2445, %v2813
      %v2815 = vpop.f32.mrb[0].mxu0
      %2816 = vmatprep.mubr.bf16.mxu0 0
      %2817 = vmatmul.mubr.bf16.gmra.mrb[0].mxu0 %v1841
      %v2818 = vpop.f32.mrb[0].mxu0
      %v2819 = vadd.f32 %v2450, %v2818
      %v2820 = vpop.f32.mrb[0].mxu0
      %v2821 = vpop.f32.mrb[0].mxu0
      %v2822 = vadd.f32 %v2453, %v2821
      %v2823 = vpop.f32.mrb[0].mxu0
      %2824 = vmatprep.mubr.bf16.mxu0 0
      %2825 = vmatmul.mubr.bf16.gmra.mrb[0].mxu0 %v1844
      %v2826 = vpop.f32.mrb[0].mxu0
      %v2827 = vadd.f32 %v2458, %v2826
      %v2828 = vpop.f32.mrb[0].mxu0
      %v2829 = vpop.f32.mrb[0].mxu0
      %v2830 = vadd.f32 %v2461, %v2829
      %v2831 = vpop.f32.mrb[0].mxu0
      %2832 = vmatprep.mubr.bf16.mxu0 0
      %2833 = vmatmul.mubr.bf16.gmra.mrb[0].mxu0 %v1847
      %v2834 = vpop.f32.mrb[0].mxu0
      %v2835 = vadd.f32 %v2466, %v2834
      %v2836 = vpop.f32.mrb[0].mxu0
      %v2837 = vpop.f32.mrb[0].mxu0
      %v2838 = vadd.f32 %v2469, %v2837
      %v2839 = vpop.f32.mrb[0].mxu0
      %2840 = vmatprep.mubr.bf16.mxu0 0
      %2841 = vmatmul.mubr.bf16.gmra.mrb[0].mxu0 %v1850
      %v2842 = vpop.f32.mrb[0].mxu0
      %v2843 = vadd.f32 %v2474, %v2842
      %v2844 = vpop.f32.mrb[0].mxu0
      %v2845 = vpop.f32.mrb[0].mxu0
      %v2846 = vadd.f32 %v2477, %v2845
      %v2847 = vpop.f32.mrb[0].mxu0
      %2848 = vmatprep.mubr.bf16.mxu0 0
      %2849 = vmatmul.mubr.bf16.gmra.mrb[0].mxu0 %v1853
      %v2850 = vpop.f32.mrb[0].mxu0
      %v2851 = vadd.f32 %v2482, %v2850
      %v2852 = vpop.f32.mrb[0].mxu0
      %v2853 = vpop.f32.mrb[0].mxu0
      %v2854 = vadd.f32 %v2485, %v2853
      %v2855 = vpop.f32.mrb[0].mxu0
      %2856 = vmatprep.mubr.bf16.mxu0 0
      %2857 = vmatmul.mubr.bf16.gmra.mrb[0].mxu0 %v1856
      %v2858 = vpop.f32.mrb[0].mxu0
      %v2859 = vadd.f32 %v2490, %v2858
      %v2860 = vpop.f32.mrb[0].mxu0
      %v2861 = vpop.f32.mrb[0].mxu0
      %v2862 = vadd.f32 %v2493, %v2861
      %v2863 = vpop.f32.mrb[0].mxu0
      %2864 = vmatprep.mubr.bf16.mxu0 0
      %2865 = vmatmul.mubr.bf16.gmra.mrb[0].mxu0 %v1859
      %v2866 = vpop.f32.mrb[0].mxu0
      %v2867 = vadd.f32 %v2498, %v2866
      %v2868 = vpop.f32.mrb[0].mxu0
      %v2869 = vpop.f32.mrb[0].mxu0
      %v2870 = vadd.f32 %v2501, %v2869
      %v2871 = vpop.f32.mrb[0].mxu0
      %2872 = vmatprep.mubr.bf16.mxu0 0
      %2873 = vmatmul.mubr.bf16.gmra.mrb[0].mxu0 %v1862
      %v2874 = vpop.f32.mrb[0].mxu0
      %v2875 = vadd.f32 %v2506, %v2874
      %v2876 = vpop.f32.mrb[0].mxu0
      %v2877 = vpop.f32.mrb[0].mxu0
      %v2878 = vadd.f32 %v2509, %v2877
      %v2879 = vpop.f32.mrb[0].mxu0
      %2880 = vmatprep.mubr.bf16.mxu0 0
      %2881 = vmatmul.mubr.bf16.gmra.mrb[0].mxu0 %v1865
      %v2882 = vpop.f32.mrb[0].mxu0
      %v2883 = vadd.f32 %v2514, %v2882
      %v2884 = vpop.f32.mrb[0].mxu0
      %v2885 = vpop.f32.mrb[0].mxu0
      %v2886 = vadd.f32 %v2517, %v2885
      %v2887 = vpop.f32.mrb[0].mxu0
      %2888 = vmatprep.mubr.bf16.mxu0 0
      %2889 = vmatmul.mubr.bf16.gmra.mrb[0].mxu0 %v1868
      %v2890 = vpop.f32.mrb[0].mxu0
      %v2891 = vadd.f32 %v2522, %v2890
      %v2892 = vpop.f32.mrb[0].mxu0
      %v2893 = vpop.f32.mrb[0].mxu0
      %v2894 = vadd.f32 %v2525, %v2893
      %v2895 = vpop.f32.mrb[0].mxu0
      %2896 = vmatprep.mubr.bf16.mxu0 0
      %2897 = vmatmul.mubr.bf16.gmra.mrb[0].mxu0 %v1871
      %v2898 = vpop.f32.mrb[0].mxu0
      %v2899 = vadd.f32 %v2530, %v2898
      %v2900 = vpop.f32.mrb[0].mxu0
      %v2901 = vpop.f32.mrb[0].mxu0
      %v2902 = vadd.f32 %v2533, %v2901
      %v2903 = vpop.f32.mrb[0].mxu0
      %2904 = vmatprep.mubr.bf16.mxu0 0
      %2905 = vmatmul.mubr.bf16.gmra.mrb[0].mxu0 %v1874
      %v2906 = vpop.f32.mrb[0].mxu0
      %v2907 = vadd.f32 %v2538, %v2906
      %v2908 = vpop.f32.mrb[0].mxu0
      %v2909 = vpop.f32.mrb[0].mxu0
      %v2910 = vadd.f32 %v2541, %v2909
      %v2911 = vpop.f32.mrb[0].mxu0
      %2912 = vmatprep.mubr.bf16.mxu0 0
      %2913 = vmatmul.mubr.bf16.gmra.mrb[0].mxu0 %v1877
      %v2914 = vpop.f32.mrb[0].mxu0
      %v2915 = vadd.f32 %v2546, %v2914
      %v2916 = vpop.f32.mrb[0].mxu0
      %v2917 = vpop.f32.mrb[0].mxu0
      %v2918 = vadd.f32 %v2549, %v2917
      %v2919 = vpop.f32.mrb[0].mxu0
      %2920 = vmatprep.mubr.bf16.mxu0 0
      %2921 = vmatmul.mubr.bf16.gmra.mrb[0].mxu0 %v1880
      %v2922 = vpop.f32.mrb[0].mxu0
      %v2923 = vadd.f32 %v2554, %v2922
      %v2924 = vpop.f32.mrb[0].mxu0
      %v2925 = vpop.f32.mrb[0].mxu0
      %v2926 = vadd.f32 %v2557, %v2925
      %v2927 = vpop.f32.mrb[0].mxu0
      %2928 = vmatprep.mubr.bf16.mxu0 0
      %2929 = vmatmul.mubr.bf16.gmra.mrb[0].mxu0 %v1883
      %v2930 = vpop.f32.mrb[0].mxu0
      %v2931 = vadd.f32 %v2562, %v2930
      %v2932 = vpop.f32.mrb[0].mxu0
      %v2933 = vpop.f32.mrb[0].mxu0
      %v2934 = vadd.f32 %v2565, %v2933
      %v2935 = vpop.f32.mrb[0].mxu0
      %2936 = vmatprep.mubr.bf16.mxu0 0
      %2937 = vmatmul.mubr.bf16.gmra.mrb[0].mxu0 %v1886
      %v2938 = vpop.f32.mrb[0].mxu0
      %v2939 = vadd.f32 %v2570, %v2938
      %v2940 = vpop.f32.mrb[0].mxu0
      %v2941 = vpop.f32.mrb[0].mxu0
      %v2942 = vadd.f32 %v2573, %v2941
      %v2943 = vpop.f32.mrb[0].mxu0
      %2944 = vmatprep.mubr.bf16.mxu0 0
      %2945 = vmatmul.mubr.bf16.gmra.mrb[0].mxu0 %v1889
      %v2946 = vpop.f32.mrb[0].mxu0
      %v2947 = vadd.f32 %v2578, %v2946
      %v2948 = vpop.f32.mrb[0].mxu0
      %v2949 = vpop.f32.mrb[0].mxu0
      %v2950 = vadd.f32 %v2581, %v2949
      %v2951 = vpop.f32.mrb[0].mxu0
      %2952 = vmatprep.mubr.bf16.mxu0 0
      %2953 = vmatmul.mubr.bf16.gmra.mrb[0].mxu0 %v1892
      %v2954 = vpop.f32.mrb[0].mxu0
      %v2955 = vadd.f32 %v2586, %v2954
      %v2956 = vpop.f32.mrb[0].mxu0
      %v2957 = vpop.f32.mrb[0].mxu0
      %v2958 = vadd.f32 %v2589, %v2957
      %v2959 = vpop.f32.mrb[0].mxu0
      %2960 = vmatprep.mubr.bf16.mxu0 0
      %2961 = vmatmul.mubr.bf16.gmra.mrb[0].mxu0 %v1895
      %v2962 = vpop.f32.mrb[0].mxu0
      %v2963 = vadd.f32 %v2594, %v2962
      %v2964 = vpop.f32.mrb[0].mxu0
      %v2965 = vpop.f32.mrb[0].mxu0
      %v2966 = vadd.f32 %v2597, %v2965
      %v2967 = vpop.f32.mrb[0].mxu0
      %2968 = vmatprep.mubr.bf16.mxu0 0
      %2969 = vmatmul.mubr.bf16.gmra.mrb[0].mxu0 %v1898
      %v2970 = vpop.f32.mrb[0].mxu0
      %v2971 = vadd.f32 %v2602, %v2970
      %v2972 = vpop.f32.mrb[0].mxu0
      %v2973 = vpop.f32.mrb[0].mxu0
      %v2974 = vadd.f32 %v2605, %v2973
      %v2975 = vpop.f32.mrb[0].mxu0
      %2976 = vmatprep.mubr.bf16.mxu0 0
      %2977 = vmatmul.mubr.bf16.gmra.mrb[0].mxu0 %v1901
      %v2978 = vpop.f32.mrb[0].mxu0
      %v2979 = vadd.f32 %v2610, %v2978
      %v2980 = vpop.f32.mrb[0].mxu0
      %v2981 = vpop.f32.mrb[0].mxu0
      %v2982 = vadd.f32 %v2613, %v2981
      %v2983 = vpop.f32.mrb[0].mxu0
      %2984 = vmatprep.mubr.bf16.mxu0 0
      %2985 = vmatmul.mubr.bf16.gmra.mrb[0].mxu0 %v1904
      %v2986 = vpop.f32.mrb[0].mxu0
      %v2987 = vadd.f32 %v2618, %v2986
      %v2988 = vpop.f32.mrb[0].mxu0
      %v2989 = vpop.f32.mrb[0].mxu0
      %v2990 = vadd.f32 %v2621, %v2989
      %v2991 = vpop.f32.mrb[0].mxu0
      %2992 = vmatprep.mubr.bf16.mxu0 0
      %2993 = vmatmul.mubr.bf16.gmra.mrb[0].mxu0 %v1907
      %v2994 = vpop.f32.mrb[0].mxu0
      %v2995 = vadd.f32 %v2626, %v2994
      %v2996 = vpop.f32.mrb[0].mxu0
      %v2997 = vpop.f32.mrb[0].mxu0
      %v2998 = vadd.f32 %v2629, %v2997
      %v2999 = vpop.f32.mrb[0].mxu0
      %3000 = vmatprep.mubr.bf16.mxu0 0
      %3001 = vmatmul.mubr.bf16.gmra.mrb[0].mxu0 %v1910
      %v3002 = vpop.f32.mrb[0].mxu0
      %v3003 = vadd.f32 %v2634, %v3002
      %v3004 = vpop.f32.mrb[0].mxu0
      %v3005 = vpop.f32.mrb[0].mxu0
      %v3006 = vadd.f32 %v2637, %v3005
      %v3007 = vpop.f32.mrb[0].mxu0
      %3008 = vmatprep.mubr.bf16.mxu0 0
      %3009 = vmatmul.mubr.bf16.gmra.mrb[0].mxu0 %v1913
      %v3010 = vpop.f32.mrb[0].mxu0
      %v3011 = vadd.f32 %v2642, %v3010
      %v3012 = vpop.f32.mrb[0].mxu0
      %v3013 = vpop.f32.mrb[0].mxu0
      %v3014 = vadd.f32 %v2645, %v3013
      %v3015 = vpop.f32.mrb[0].mxu0
      %3016 = vmatprep.mubr.bf16.mxu0 0
      %3017 = vmatmul.mubr.bf16.gmra.mrb[0].mxu0 %v1916
      %v3018 = vpop.f32.mrb[0].mxu0
      %v3019 = vadd.f32 %v2650, %v3018
      %v3020 = vpop.f32.mrb[0].mxu0
      %v3021 = vpop.f32.mrb[0].mxu0
      %v3022 = vadd.f32 %v2653, %v3021
      %v3023 = vpop.f32.mrb[0].mxu0
      %3024 = vdwg.mxu0
      %v3025 = vpack.c.bf16 %v2694, %v2691
      %v3026 = vpack.c.bf16 %v2702, %v2699
      %v3027 = vpack.c.bf16 %v2710, %v2707
      %v3028 = vpack.c.bf16 %v2718, %v2715
      %v3029 = vpack.c.bf16 %v2726, %v2723
      %v3030 = vpack.c.bf16 %v2734, %v2731
      %v3031 = vpack.c.bf16 %v2742, %v2739
      %v3032 = vpack.c.bf16 %v2750, %v2747
      %v3033 = vpack.c.bf16 %v2758, %v2755
      %v3034 = vpack.c.bf16 %v2766, %v2763
      %v3035 = vpack.c.bf16 %v2774, %v2771
      %v3036 = vpack.c.bf16 %v2782, %v2779
      %v3037 = vpack.c.bf16 %v2790, %v2787
      %v3038 = vpack.c.bf16 %v2798, %v2795
      %v3039 = vpack.c.bf16 %v2806, %v2803
      %v3040 = vpack.c.bf16 %v2814, %v2811
      %v3041 = vpack.c.bf16 %v2822, %v2819
      %v3042 = vpack.c.bf16 %v2830, %v2827
      %v3043 = vpack.c.bf16 %v2838, %v2835
      %v3044 = vpack.c.bf16 %v2846, %v2843
      %v3045 = vpack.c.bf16 %v2854, %v2851
      %v3046 = vpack.c.bf16 %v2862, %v2859
      %v3047 = vpack.c.bf16 %v2870, %v2867
      %v3048 = vpack.c.bf16 %v2878, %v2875
      %v3049 = vpack.c.bf16 %v2886, %v2883
      %v3050 = vpack.c.bf16 %v2894, %v2891
      %v3051 = vpack.c.bf16 %v2902, %v2899
      %v3052 = vpack.c.bf16 %v2910, %v2907
      %v3053 = vpack.c.bf16 %v2918, %v2915
      %v3054 = vpack.c.bf16 %v2926, %v2923
      %v3055 = vpack.c.bf16 %v2934, %v2931
      %v3056 = vpack.c.bf16 %v2942, %v2939
      %v3057 = vpack.c.bf16 %v2950, %v2947
      %v3058 = vpack.c.bf16 %v2958, %v2955
      %v3059 = vpack.c.bf16 %v2966, %v2963
      %v3060 = vpack.c.bf16 %v2974, %v2971
      %v3061 = vpack.c.bf16 %v2982, %v2979
      %v3062 = vpack.c.bf16 %v2990, %v2987
      %v3063 = vpack.c.bf16 %v2998, %v2995
      %v3064 = vpack.c.bf16 %v3006, %v3003
      %v3065 = vpack.c.bf16 %v3014, %v3011
      %v3066 = vpack.c.bf16 %v3022, %v3019
      %v3109 = vunpack.c.l.b16 %v3025
      %v3110 = vunpack.c.h.b16 %v3025
      %v3111 = vunpack.c.l.b16 %v3026
      %v3112 = vunpack.c.h.b16 %v3026
      %v3113 = vunpack.c.l.b16 %v3027
      %v3114 = vunpack.c.h.b16 %v3027
      %v3115 = vunpack.c.l.b16 %v3028
      %v3116 = vunpack.c.h.b16 %v3028
      %v3117 = vunpack.c.l.b16 %v3029
      %v3118 = vunpack.c.h.b16 %v3029
      %v3119 = vunpack.c.l.b16 %v3030
      %v3120 = vunpack.c.h.b16 %v3030
      %v3121 = vunpack.c.l.b16 %v3031
      %v3122 = vunpack.c.h.b16 %v3031
      %v3123 = vunpack.c.l.b16 %v3032
      %v3124 = vunpack.c.h.b16 %v3032
      %v3125 = vunpack.c.l.b16 %v3033
      %v3126 = vunpack.c.h.b16 %v3033
      %v3127 = vunpack.c.l.b16 %v3034
      %v3128 = vunpack.c.h.b16 %v3034
      %v3129 = vunpack.c.l.b16 %v3035
      %v3130 = vunpack.c.h.b16 %v3035
      %v3131 = vunpack.c.l.b16 %v3036
      %v3132 = vunpack.c.h.b16 %v3036
      %v3133 = vunpack.c.l.b16 %v3037
      %v3134 = vunpack.c.h.b16 %v3037
      %v3135 = vunpack.c.l.b16 %v3038
      %v3136 = vunpack.c.h.b16 %v3038
      %v3137 = vunpack.c.l.b16 %v3039
      %v3138 = vunpack.c.h.b16 %v3039
      %v3139 = vunpack.c.l.b16 %v3040
      %v3140 = vunpack.c.h.b16 %v3040
      %v3141 = vunpack.c.l.b16 %v3041
      %v3142 = vunpack.c.h.b16 %v3041
      %v3143 = vunpack.c.l.b16 %v3042
      %v3144 = vunpack.c.h.b16 %v3042
      %v3145 = vunpack.c.l.b16 %v3043
      %v3146 = vunpack.c.h.b16 %v3043
      %v3147 = vunpack.c.l.b16 %v3044
      %v3148 = vunpack.c.h.b16 %v3044
      %v3149 = vunpack.c.l.b16 %v3045
      %v3150 = vunpack.c.h.b16 %v3045
      %v3151 = vunpack.c.l.b16 %v3046
      %v3152 = vunpack.c.h.b16 %v3046
      %v3153 = vunpack.c.l.b16 %v3047
      %v3154 = vunpack.c.h.b16 %v3047
      %v3155 = vunpack.c.l.b16 %v3048
      %v3156 = vunpack.c.h.b16 %v3048
      %v3157 = vunpack.c.l.b16 %v3049
      %v3158 = vunpack.c.h.b16 %v3049
      %v3159 = vunpack.c.l.b16 %v3050
      %v3160 = vunpack.c.h.b16 %v3050
      %v3161 = vunpack.c.l.b16 %v3051
      %v3162 = vunpack.c.h.b16 %v3051
      %v3163 = vunpack.c.l.b16 %v3052
      %v3164 = vunpack.c.h.b16 %v3052
      %v3165 = vunpack.c.l.b16 %v3053
      %v3166 = vunpack.c.h.b16 %v3053
      %v3167 = vunpack.c.l.b16 %v3054
      %v3168 = vunpack.c.h.b16 %v3054
      %v3169 = vunpack.c.l.b16 %v3055
      %v3170 = vunpack.c.h.b16 %v3055
      %v3171 = vunpack.c.l.b16 %v3056
      %v3172 = vunpack.c.h.b16 %v3056
      %v3173 = vunpack.c.l.b16 %v3057
      %v3174 = vunpack.c.h.b16 %v3057
      %v3175 = vunpack.c.l.b16 %v3058
      %v3176 = vunpack.c.h.b16 %v3058
      %v3177 = vunpack.c.l.b16 %v3059
      %v3178 = vunpack.c.h.b16 %v3059
      %v3179 = vunpack.c.l.b16 %v3060
      %v3180 = vunpack.c.h.b16 %v3060
      %v3181 = vunpack.c.l.b16 %v3061
      %v3182 = vunpack.c.h.b16 %v3061
      %v3183 = vunpack.c.l.b16 %v3062
      %v3184 = vunpack.c.h.b16 %v3062
      %v3185 = vunpack.c.l.b16 %v3063
      %v3186 = vunpack.c.h.b16 %v3063
      %v3187 = vunpack.c.l.b16 %v3064
      %v3188 = vunpack.c.h.b16 %v3064
      %v3189 = vunpack.c.l.b16 %v3065
      %v3190 = vunpack.c.h.b16 %v3065
      %v3191 = vunpack.c.l.b16 %v3066
      %v3192 = vunpack.c.h.b16 %v3066
      %v3193 = vpack.c.b16 %v3109, %v3109
      %v3194 = vpack.c.b16 %v3110, %v3110
      %v3195 = vpack.c.b16 %v3111, %v3111
      %v3196 = vpack.c.b16 %v3112, %v3112
      %v3197 = vpack.c.b16 %v3113, %v3113
      %v3198 = vpack.c.b16 %v3114, %v3114
      %v3199 = vpack.c.b16 %v3115, %v3115
      %v3200 = vpack.c.b16 %v3116, %v3116
      %v3201 = vpack.c.b16 %v3117, %v3117
      %v3202 = vpack.c.b16 %v3118, %v3118
      %v3203 = vpack.c.b16 %v3119, %v3119
      %v3204 = vpack.c.b16 %v3120, %v3120
      %v3205 = vpack.c.b16 %v3121, %v3121
      %v3206 = vpack.c.b16 %v3122, %v3122
      %v3207 = vpack.c.b16 %v3123, %v3123
      %v3208 = vpack.c.b16 %v3124, %v3124
      %v3209 = vpack.c.b16 %v3125, %v3125
      %v3210 = vpack.c.b16 %v3126, %v3126
      %v3211 = vpack.c.b16 %v3127, %v3127
      %v3212 = vpack.c.b16 %v3128, %v3128
      %v3213 = vpack.c.b16 %v3129, %v3129
      %v3214 = vpack.c.b16 %v3130, %v3130
      %v3215 = vpack.c.b16 %v3131, %v3131
      %v3216 = vpack.c.b16 %v3132, %v3132
      %v3217 = vpack.c.b16 %v3133, %v3133
      %v3218 = vpack.c.b16 %v3134, %v3134
      %v3219 = vpack.c.b16 %v3135, %v3135
      %v3220 = vpack.c.b16 %v3136, %v3136
      %v3221 = vpack.c.b16 %v3137, %v3137
      %v3222 = vpack.c.b16 %v3138, %v3138
      %v3223 = vpack.c.b16 %v3139, %v3139
      %v3224 = vpack.c.b16 %v3140, %v3140
      %v3225 = vpack.c.b16 %v3141, %v3141
      %v3226 = vpack.c.b16 %v3142, %v3142
      %v3227 = vpack.c.b16 %v3143, %v3143
      %v3228 = vpack.c.b16 %v3144, %v3144
      %v3229 = vpack.c.b16 %v3145, %v3145
      %v3230 = vpack.c.b16 %v3146, %v3146
      %v3231 = vpack.c.b16 %v3147, %v3147
      %v3232 = vpack.c.b16 %v3148, %v3148
      %v3233 = vpack.c.b16 %v3149, %v3149
      %v3234 = vpack.c.b16 %v3150, %v3150
      %v3235 = vpack.c.b16 %v3151, %v3151
      %v3236 = vpack.c.b16 %v3152, %v3152
      %v3237 = vpack.c.b16 %v3153, %v3153
      %v3238 = vpack.c.b16 %v3154, %v3154
      %v3239 = vpack.c.b16 %v3155, %v3155
      %v3240 = vpack.c.b16 %v3156, %v3156
      %v3241 = vpack.c.b16 %v3157, %v3157
      %v3242 = vpack.c.b16 %v3158, %v3158
      %v3243 = vpack.c.b16 %v3159, %v3159
      %v3244 = vpack.c.b16 %v3160, %v3160
      %v3245 = vpack.c.b16 %v3161, %v3161
      %v3246 = vpack.c.b16 %v3162, %v3162
      %v3247 = vpack.c.b16 %v3163, %v3163
      %v3248 = vpack.c.b16 %v3164, %v3164
      %v3249 = vpack.c.b16 %v3165, %v3165
      %v3250 = vpack.c.b16 %v3166, %v3166
      %v3251 = vpack.c.b16 %v3167, %v3167
      %v3252 = vpack.c.b16 %v3168, %v3168
      %v3253 = vpack.c.b16 %v3169, %v3169
      %v3254 = vpack.c.b16 %v3170, %v3170
      %v3255 = vpack.c.b16 %v3171, %v3171
      %v3256 = vpack.c.b16 %v3172, %v3172
      %v3257 = vpack.c.b16 %v3173, %v3173
      %v3258 = vpack.c.b16 %v3174, %v3174
      %v3259 = vpack.c.b16 %v3175, %v3175
      %v3260 = vpack.c.b16 %v3176, %v3176
      %v3261 = vpack.c.b16 %v3177, %v3177
      %v3262 = vpack.c.b16 %v3178, %v3178
      %v3263 = vpack.c.b16 %v3179, %v3179
      %v3264 = vpack.c.b16 %v3180, %v3180
      %v3265 = vpack.c.b16 %v3181, %v3181
      %v3266 = vpack.c.b16 %v3182, %v3182
      %v3267 = vpack.c.b16 %v3183, %v3183
      %v3268 = vpack.c.b16 %v3184, %v3184
      %v3269 = vpack.c.b16 %v3185, %v3185
      %v3270 = vpack.c.b16 %v3186, %v3186
      %v3271 = vpack.c.b16 %v3187, %v3187
      %v3272 = vpack.c.b16 %v3188, %v3188
      %v3273 = vpack.c.b16 %v3189, %v3189
      %v3274 = vpack.c.b16 %v3190, %v3190
      %v3275 = vpack.c.b16 %v3191, %v3191
      %v3276 = vpack.c.b16 %v3192, %v3192
      %vm3361 = vcmask 289792
      %3362 = vst.msk [vmem:[%s175] sm:$0xf] %vm3361, %v3193
      %3363 = vst.msk [vmem:[%s175 + $0x4] sm:$0xf] %vm3361, %v3194
      %3364 = vst.msk [vmem:[%s175 + $0x8] sm:$0xf] %vm3361, %v3195
      %3365 = vst.msk [vmem:[%s175 + $0xc] sm:$0xf] %vm3361, %v3196
      %3366 = vst.msk [vmem:[%s175 + $0x10] sm:$0xf] %vm3361, %v3197
      %3367 = vst.msk [vmem:[%s175 + $0x14] sm:$0xf] %vm3361, %v3198
      %3368 = vst.msk [vmem:[%s175 + $0x18] sm:$0xf] %vm3361, %v3199
      %3369 = vst.msk [vmem:[%s175 + $0x1c] sm:$0xf] %vm3361, %v3200
      %3370 = vst.msk [vmem:[%s175 + $0x20] sm:$0xf] %vm3361, %v3201
      %3371 = vst.msk [vmem:[%s175 + $0x24] sm:$0xf] %vm3361, %v3202
      %3372 = vst.msk [vmem:[%s175 + $0x28] sm:$0xf] %vm3361, %v3203
      %3373 = vst.msk [vmem:[%s175 + $0x2c] sm:$0xf] %vm3361, %v3204
      %3374 = vst.msk [vmem:[%s175 + $0x30] sm:$0xf] %vm3361, %v3205
      %3375 = vst.msk [vmem:[%s175 + $0x34] sm:$0xf] %vm3361, %v3206
      %3376 = vst.msk [vmem:[%s175 + $0x38] sm:$0xf] %vm3361, %v3207
      %3377 = vst.msk [vmem:[%s175 + $0x3c] sm:$0xf] %vm3361, %v3208
      %3378 = vst.msk [vmem:[%s175 + $0x40] sm:$0xf] %vm3361, %v3209
      %3379 = vst.msk [vmem:[%s175 + $0x44] sm:$0xf] %vm3361, %v3210
      %3380 = vst.msk [vmem:[%s175 + $0x48] sm:$0xf] %vm3361, %v3211
      %3381 = vst.msk [vmem:[%s175 + $0x4c] sm:$0xf] %vm3361, %v3212
      %3382 = vst.msk [vmem:[%s175 + $0x50] sm:$0xf] %vm3361, %v3213
      %3383 = vst.msk [vmem:[%s175 + $0x54] sm:$0xf] %vm3361, %v3214
      %3384 = vst.msk [vmem:[%s175 + $0x58] sm:$0xf] %vm3361, %v3215
      %3385 = vst.msk [vmem:[%s175 + $0x5c] sm:$0xf] %vm3361, %v3216
      %3386 = vst.msk [vmem:[%s175 + $0x60] sm:$0xf] %vm3361, %v3217
      %3387 = vst.msk [vmem:[%s175 + $0x64] sm:$0xf] %vm3361, %v3218
      %3388 = vst.msk [vmem:[%s175 + $0x68] sm:$0xf] %vm3361, %v3219
      %3389 = vst.msk [vmem:[%s175 + $0x6c] sm:$0xf] %vm3361, %v3220
      %3390 = vst.msk [vmem:[%s175 + $0x70] sm:$0xf] %vm3361, %v3221
      %3391 = vst.msk [vmem:[%s175 + $0x74] sm:$0xf] %vm3361, %v3222
      %3392 = vst.msk [vmem:[%s175 + $0x78] sm:$0xf] %vm3361, %v3223
      %3393 = vst.msk [vmem:[%s175 + $0x7c] sm:$0xf] %vm3361, %v3224
      %3394 = vst.msk [vmem:[%s175 + $0x80] sm:$0xf] %vm3361, %v3225
      %3395 = vst.msk [vmem:[%s175 + $0x84] sm:$0xf] %vm3361, %v3226
      %3396 = vst.msk [vmem:[%s175 + $0x88] sm:$0xf] %vm3361, %v3227
      %3397 = vst.msk [vmem:[%s175 + $0x8c] sm:$0xf] %vm3361, %v3228
      %3398 = vst.msk [vmem:[%s175 + $0x90] sm:$0xf] %vm3361, %v3229
      %3399 = vst.msk [vmem:[%s175 + $0x94] sm:$0xf] %vm3361, %v3230
      %3400 = vst.msk [vmem:[%s175 + $0x98] sm:$0xf] %vm3361, %v3231
      %3401 = vst.msk [vmem:[%s175 + $0x9c] sm:$0xf] %vm3361, %v3232
      %3402 = vst.msk [vmem:[%s175 + $0xa0] sm:$0xf] %vm3361, %v3233
      %3403 = vst.msk [vmem:[%s175 + $0xa4] sm:$0xf] %vm3361, %v3234
      %3404 = vst.msk [vmem:[%s175 + $0xa8] sm:$0xf] %vm3361, %v3235
      %3405 = vst.msk [vmem:[%s175 + $0xac] sm:$0xf] %vm3361, %v3236
      %3406 = vst.msk [vmem:[%s175 + $0xb0] sm:$0xf] %vm3361, %v3237
      %3407 = vst.msk [vmem:[%s175 + $0xb4] sm:$0xf] %vm3361, %v3238
      %3408 = vst.msk [vmem:[%s175 + $0xb8] sm:$0xf] %vm3361, %v3239
      %3409 = vst.msk [vmem:[%s175 + $0xbc] sm:$0xf] %vm3361, %v3240
      %3410 = vst.msk [vmem:[%s175 + $0xc0] sm:$0xf] %vm3361, %v3241
      %3411 = vst.msk [vmem:[%s175 + $0xc4] sm:$0xf] %vm3361, %v3242
      %3412 = vst.msk [vmem:[%s175 + $0xc8] sm:$0xf] %vm3361, %v3243
      %3413 = vst.msk [vmem:[%s175 + $0xcc] sm:$0xf] %vm3361, %v3244
      %3414 = vst.msk [vmem:[%s175 + $0xd0] sm:$0xf] %vm3361, %v3245
      %3415 = vst.msk [vmem:[%s175 + $0xd4] sm:$0xf] %vm3361, %v3246
      %3416 = vst.msk [vmem:[%s175 + $0xd8] sm:$0xf] %vm3361, %v3247
      %3417 = vst.msk [vmem:[%s175 + $0xdc] sm:$0xf] %vm3361, %v3248
      %3418 = vst.msk [vmem:[%s175 + $0xe0] sm:$0xf] %vm3361, %v3249
      %3419 = vst.msk [vmem:[%s175 + $0xe4] sm:$0xf] %vm3361, %v3250
      %3420 = vst.msk [vmem:[%s175 + $0xe8] sm:$0xf] %vm3361, %v3251
      %3421 = vst.msk [vmem:[%s175 + $0xec] sm:$0xf] %vm3361, %v3252
      %3422 = vst.msk [vmem:[%s175 + $0xf0] sm:$0xf] %vm3361, %v3253
      %3423 = vst.msk [vmem:[%s175 + $0xf4] sm:$0xf] %vm3361, %v3254
      %3424 = vst.msk [vmem:[%s175 + $0xf8] sm:$0xf] %vm3361, %v3255
      %3425 = vst.msk [vmem:[%s175 + $0xfc] sm:$0xf] %vm3361, %v3256
      %3426 = vst.msk [vmem:[%s175 + $0x100] sm:$0xf] %vm3361, %v3257
      %3427 = vst.msk [vmem:[%s175 + $0x104] sm:$0xf] %vm3361, %v3258
      %3428 = vst.msk [vmem:[%s175 + $0x108] sm:$0xf] %vm3361, %v3259
      %3429 = vst.msk [vmem:[%s175 + $0x10c] sm:$0xf] %vm3361, %v3260
      %3430 = vst.msk [vmem:[%s175 + $0x110] sm:$0xf] %vm3361, %v3261
      %3431 = vst.msk [vmem:[%s175 + $0x114] sm:$0xf] %vm3361, %v3262
      %3432 = vst.msk [vmem:[%s175 + $0x118] sm:$0xf] %vm3361, %v3263
      %3433 = vst.msk [vmem:[%s175 + $0x11c] sm:$0xf] %vm3361, %v3264
      %3434 = vst.msk [vmem:[%s175 + $0x120] sm:$0xf] %vm3361, %v3265
      %3435 = vst.msk [vmem:[%s175 + $0x124] sm:$0xf] %vm3361, %v3266
      %3436 = vst.msk [vmem:[%s175 + $0x128] sm:$0xf] %vm3361, %v3267
      %3437 = vst.msk [vmem:[%s175 + $0x12c] sm:$0xf] %vm3361, %v3268
      %3438 = vst.msk [vmem:[%s175 + $0x130] sm:$0xf] %vm3361, %v3269
      %3439 = vst.msk [vmem:[%s175 + $0x134] sm:$0xf] %vm3361, %v3270
      %3440 = vst.msk [vmem:[%s175 + $0x138] sm:$0xf] %vm3361, %v3271
      %3441 = vst.msk [vmem:[%s175 + $0x13c] sm:$0xf] %vm3361, %v3272
      %3442 = vst.msk [vmem:[%s175 + $0x140] sm:$0xf] %vm3361, %v3273
      %3443 = vst.msk [vmem:[%s175 + $0x144] sm:$0xf] %vm3361, %v3274
      %3444 = vst.msk [vmem:[%s175 + $0x148] sm:$0xf] %vm3361, %v3275
      %3445 = vst.msk [vmem:[%s175 + $0x14c] sm:$0xf] %vm3361, %v3276
      %s3446 = smul.u32 84, %s14
      %p3447 = scmp.lt.s32.totalorder %s3446, 167
      %s3448 = scalar_select %p3447, %s3446, 167
      %s3449 = smul.addr %s3448, 4
      %s3450 = scalar_lea.vmem %s3, %s3449
      // Predicated region
      $region33: #{pilotnet_forward.4} parent=31 // pred_check
        %p3451 = pneg %p100
      $region34: #{pilotnet_forward.4} parent=31 // pred_check_branch
        %3453 = sbr.rel (%p3451) target = $region36
      $region35: #{pilotnet_forward.4} parent=31 // pred_region
        %s3454 = smul.u32 84, %s14
      $region36: #{pilotnet_forward.4} parent=31 // pred_fallthru
        _
    $region32: #{pilotnet_forward.4} parent=5 // pred_fallthru
      _
    %p3455 = scmp.le.s32.totalorder 2, %s9
    // Predicated region
    $region37: #{pilotnet_forward.4} parent=5 // pred_check
      %p3456 = pneg %p3455
    $region38: #{pilotnet_forward.4} parent=5 // pred_check_branch
      %3458 = sbr.rel (%p3456) target = $region40
    $region39: #{pilotnet_forward.4} parent=5 // pred_region
      %s3459 = ssub.s32 %s9, 2
      // Predicated region
      $region41: #{pilotnet_forward.4} parent=39 // pred_check
        %p3460 = pneg %p106
      $region42: #{pilotnet_forward.4} parent=39 // pred_check_branch
        %3462 = sbr.rel (%p3460) target = $region44
      $region43: #{pilotnet_forward.4} parent=39 // pred_region
        %s3463 = smul.u32 84, %s15
        %p3464 = scmp.lt.s32.totalorder %s3463, 167
        %s3465 = scalar_select %p3464, %s3463, 167
        %s3466 = smul.addr %s3465, 4
        %s3467 = scalar_lea.vmem %s3, %s3466
      $region44: #{pilotnet_forward.4} parent=39 // pred_fallthru
        _
    $region40: #{pilotnet_forward.4} parent=5 // pred_fallthru
      _
  $region6: #{pilotnet_forward.4} parent=0 // loop_footer
    %s13 = sadd.s32 1, %s9
  $region7: #{pilotnet_forward.4} parent=0 // loop_footer_branch
    %8 = sbr.rel target = $region3
  $region8: #{pilotnet_forward.4} parent=0 // loop_exit
    _

// kernel: pilotnet_forward.5
$region0: #{pilotnet_forward.5}
  #allocation0 [shape = 'u32[]', space=smem, size = 0x4, offset = 0x4, fixed_abs, tag = 'smem constant byte address 0x4 - core index']
  #allocation1 [shape = 'u32[144,128]{1,0:T(1,128)}', space=vmem, size = 0x12000, scoped, tag = 'internal scratch']
  #allocation2 [shape = 'f32[220,48]{1,0:T(8,128)}', space=vmem, size = 0x1c000, scoped, tag = 'scratch operand']
  #allocation3 [shape = 'f32[120,432]{1,0:T(8,128)}', space=vmem, size = 0x3c000, scoped, tag = 'scratch operand']
  #allocation4 [shape = 'f32[120,64]{1,0:T(8,128)}', space=vmem, size = 0xf000, scoped, tag = 'scratch operand']
  #allocation5 [shape = 'f32[36,576]{1,0:T(8,128)}', space=vmem, size = 0x19000, scoped, tag = 'scratch operand']
  #allocation6 [shape = 'f32[36,64]{1,0:T(8,128)}', space=vmem, size = 0x5000, scoped, tag = 'scratch operand']
  #allocation7 [shape = 'f32[2,1152]{1,0:T(2,128)}', space=vmem, size = 0x2400, scoped, tag = 'scratch operand']
  %s0 = inlined_call_operand.vmem [shape: bf16[220,912], index: 0, kind: input, shape index: {}]
  %s1 = inlined_call_operand.vmem [shape: bf16[912,48], index: 1, kind: input, shape index: {}]
  %s2 = inlined_call_operand.vmem [shape: f32[1,48], index: 2, kind: input, shape index: {}]
  %s3 = inlined_call_operand.vmem [shape: bf16[432,64], index: 3, kind: input, shape index: {}]
  %s4 = inlined_call_operand.vmem [shape: f32[1,64], index: 4, kind: input, shape index: {}]
  %s5 = inlined_call_operand.vmem [shape: bf16[576,64], index: 5, kind: input, shape index: {}]
  %s6 = inlined_call_operand.vmem [shape: f32[1,64], index: 6, kind: input, shape index: {}]
  %s7 = inlined_call_operand.vmem [shape: bf16[1152,100], index: 7, kind: input, shape index: {}]
  %s8 = inlined_call_operand.vmem [shape: f32[1,100], index: 8, kind: input, shape index: {}]
  %s9 = inlined_call_operand.vmem [shape: bf16[100,50], index: 9, kind: input, shape index: {}]
  %s10 = inlined_call_operand.vmem [shape: f32[1,50], index: 10, kind: input, shape index: {}]
  %s11 = inlined_call_operand.vmem [shape: bf16[50,10], index: 11, kind: input, shape index: {}]
  %s12 = inlined_call_operand.vmem [shape: f32[1,10], index: 12, kind: input, shape index: {}]
  %s13 = inlined_call_operand.vmem [shape: bf16[10,128], index: 13, kind: input, shape index: {}]
  %s14 = inlined_call_operand.vmem [shape: f32[1,128], index: 14, kind: input, shape index: {}]
  %s15 = inlined_call_operand.vmem [shape: f32[2,128], index: 15, kind: output, shape index: {}]
  %s16 = sld [smem:[#allocation0]]
  $region70: #{pilotnet_forward.5} parent=0
    _
  %s18 = ssub.s32 1, %s16
  %s19 = scalar_select 0, %s18, %s16
  // Predicated region
  $region2: #{pilotnet_forward.5} parent=0 // pred_check
    _
  $region3: #{pilotnet_forward.5} parent=0 // pred_check_branch
    %21 = sbr.rel (0) target = $region5
  $region4: #{pilotnet_forward.5} parent=0 // pred_region
    _
  $region5: #{pilotnet_forward.5} parent=0 // pred_fallthru
    _
  // Predicated region
  $region6: #{pilotnet_forward.5} parent=0 // pred_check
    _
  $region7: #{pilotnet_forward.5} parent=0 // pred_check_branch
    %23 = sbr.rel (0) target = $region9
  $region8: #{pilotnet_forward.5} parent=0 // pred_region
    _
  $region9: #{pilotnet_forward.5} parent=0 // pred_fallthru
    _
  // Predicated region
  $region10: #{pilotnet_forward.5} parent=0 // pred_check
    _
  $region11: #{pilotnet_forward.5} parent=0 // pred_check_branch
    %25 = sbr.rel (0) target = $region13
  $region12: #{pilotnet_forward.5} parent=0 // pred_region
    _
  $region13: #{pilotnet_forward.5} parent=0 // pred_fallthru
    _
  // Predicated region
  $region14: #{pilotnet_forward.5} parent=0 // pred_check
    _
  $region15: #{pilotnet_forward.5} parent=0 // pred_check_branch
    %27 = sbr.rel (0) target = $region17
  $region16: #{pilotnet_forward.5} parent=0 // pred_region
    _
  $region17: #{pilotnet_forward.5} parent=0 // pred_fallthru
    _
  // Predicated region
  $region18: #{pilotnet_forward.5} parent=0 // pred_check
    _
  $region19: #{pilotnet_forward.5} parent=0 // pred_check_branch
    %29 = sbr.rel (0) target = $region21
  $region20: #{pilotnet_forward.5} parent=0 // pred_region
    _
  $region21: #{pilotnet_forward.5} parent=0 // pred_fallthru
    _
  // Predicated region
  $region22: #{pilotnet_forward.5} parent=0 // pred_check
    _
  $region23: #{pilotnet_forward.5} parent=0 // pred_check_branch
    %31 = sbr.rel (0) target = $region25
  $region24: #{pilotnet_forward.5} parent=0 // pred_region
    _
  $region25: #{pilotnet_forward.5} parent=0 // pred_fallthru
    _
  // Predicated region
  $region26: #{pilotnet_forward.5} parent=0 // pred_check
    _
  $region27: #{pilotnet_forward.5} parent=0 // pred_check_branch
    %33 = sbr.rel (0) target = $region29
  $region28: #{pilotnet_forward.5} parent=0 // pred_region
    _
  $region29: #{pilotnet_forward.5} parent=0 // pred_fallthru
    _
  // Predicated region
  $region30: #{pilotnet_forward.5} parent=0 // pred_check
    _
  $region31: #{pilotnet_forward.5} parent=0 // pred_check_branch
    %35 = sbr.rel (0) target = $region33
  $region32: #{pilotnet_forward.5} parent=0 // pred_region
    _
  $region33: #{pilotnet_forward.5} parent=0 // pred_fallthru
    _
  // Predicated region
  $region34: #{pilotnet_forward.5} parent=0 // pred_check
    _
  $region35: #{pilotnet_forward.5} parent=0 // pred_check_branch
    %37 = sbr.rel (0) target = $region37
  $region36: #{pilotnet_forward.5} parent=0 // pred_region
    _
  $region37: #{pilotnet_forward.5} parent=0 // pred_fallthru
    _
  // Predicated region
  $region38: #{pilotnet_forward.5} parent=0 // pred_check
    _
  $region39: #{pilotnet_forward.5} parent=0 // pred_check_branch
    %39 = sbr.rel (0) target = $region41
  $region40: #{pilotnet_forward.5} parent=0 // pred_region
    _
  $region41: #{pilotnet_forward.5} parent=0 // pred_fallthru
    _
  // Predicated region
  $region42: #{pilotnet_forward.5} parent=0 // pred_check
    _
  $region43: #{pilotnet_forward.5} parent=0 // pred_check_branch
    %41 = sbr.rel (0) target = $region45
  $region44: #{pilotnet_forward.5} parent=0 // pred_region
    _
  $region45: #{pilotnet_forward.5} parent=0 // pred_fallthru
    _
  // Predicated region
  $region46: #{pilotnet_forward.5} parent=0 // pred_check
    _
  $region47: #{pilotnet_forward.5} parent=0 // pred_check_branch
    %43 = sbr.rel (0) target = $region49
  $region48: #{pilotnet_forward.5} parent=0 // pred_region
    _
  $region49: #{pilotnet_forward.5} parent=0 // pred_fallthru
    _
  // Predicated region
  $region50: #{pilotnet_forward.5} parent=0 // pred_check
    _
  $region51: #{pilotnet_forward.5} parent=0 // pred_check_branch
    %45 = sbr.rel (0) target = $region53
  $region52: #{pilotnet_forward.5} parent=0 // pred_region
    _
  $region53: #{pilotnet_forward.5} parent=0 // pred_fallthru
    _
  // Predicated region
  $region54: #{pilotnet_forward.5} parent=0 // pred_check
    _
  $region55: #{pilotnet_forward.5} parent=0 // pred_check_branch
    %47 = sbr.rel (0) target = $region57
  $region56: #{pilotnet_forward.5} parent=0 // pred_region
    _
  $region57: #{pilotnet_forward.5} parent=0 // pred_fallthru
    _
  // Predicated region
  $region58: #{pilotnet_forward.5} parent=0 // pred_check
    _
  $region59: #{pilotnet_forward.5} parent=0 // pred_check_branch
    %49 = sbr.rel (0) target = $region61
  $region60: #{pilotnet_forward.5} parent=0 // pred_region
    _
  $region61: #{pilotnet_forward.5} parent=0 // pred_fallthru
    _
  %v51 = vld [vmem:[%s0] sm:$0xff]
  %v52 = vld [vmem:[%s0 + $0x8] sm:$0xff]
  %v53 = vld [vmem:[%s0 + $0x10] sm:$0xff]
  %v54 = vld [vmem:[%s0 + $0x18] sm:$0xff]
  %v55 = vld [vmem:[%s0 + $0x20] sm:$0xff]
  %v56 = vld [vmem:[%s0 + $0x28] sm:$0xff]
  %v57 = vld [vmem:[%s0 + $0x30] sm:$0xff]
  %v58 = vld [vmem:[%s0 + $0x38] sm:$0xff]
  %v59 = vld [vmem:[%s0 + $0x40] sm:$0xff]
  %v60 = vld [vmem:[%s0 + $0x48] sm:$0xff]
  %v61 = vld [vmem:[%s0 + $0x50] sm:$0xff]
  %v62 = vld [vmem:[%s0 + $0x58] sm:$0xff]
  %v63 = vld [vmem:[%s0 + $0x60] sm:$0xff]
  %v64 = vld [vmem:[%s0 + $0x68] sm:$0xff]
  %v65 = vld [vmem:[%s0 + $0x70] sm:$0xff]
  %v66 = vld [vmem:[%s0 + $0x78] sm:$0xff]
  %v67 = vld [vmem:[%s0 + $0x80] sm:$0xff]
  %v68 = vld [vmem:[%s0 + $0x88] sm:$0xff]
  %v69 = vld [vmem:[%s0 + $0x90] sm:$0xff]
  %v70 = vld [vmem:[%s0 + $0x98] sm:$0xff]
  %v71 = vld [vmem:[%s0 + $0xa0] sm:$0xff]
  %v72 = vld [vmem:[%s0 + $0xa8] sm:$0xff]
  %v73 = vld [vmem:[%s0 + $0xb0] sm:$0xff]
  %v74 = vld [vmem:[%s0 + $0xb8] sm:$0xff]
  %v75 = vld [vmem:[%s0 + $0xc0] sm:$0xff]
  %v76 = vld [vmem:[%s0 + $0xc8] sm:$0xff]
  %v77 = vld [vmem:[%s0 + $0xd0] sm:$0xff]
  %v78 = vld [vmem:[%s0 + $0xd8] sm:$0xff]
  %v79 = vld [vmem:[%s0 + $0xe0] sm:$0xff]
  %v80 = vld [vmem:[%s0 + $0xe8] sm:$0xff]
  %v81 = vld [vmem:[%s0 + $0xf0] sm:$0xff]
  %v82 = vld [vmem:[%s0 + $0xf8] sm:$0xff]
  %v83 = vld [vmem:[%s0 + $0x100] sm:$0xff]
  %v84 = vld [vmem:[%s0 + $0x108] sm:$0xff]
  %v85 = vld [vmem:[%s0 + $0x110] sm:$0xff]
  %v86 = vld [vmem:[%s0 + $0x118] sm:$0xff]
  %v87 = vld [vmem:[%s0 + $0x120] sm:$0xff]
  %v88 = vld [vmem:[%s0 + $0x128] sm:$0xff]
  %v89 = vld [vmem:[%s0 + $0x130] sm:$0xff]
  %v90 = vld [vmem:[%s0 + $0x138] sm:$0xff]
  %v91 = vld [vmem:[%s0 + $0x140] sm:$0xff]
  %v92 = vld [vmem:[%s0 + $0x148] sm:$0xff]
  %v93 = vld [vmem:[%s0 + $0x150] sm:$0xff]
  %v94 = vld [vmem:[%s0 + $0x158] sm:$0xff]
  %v95 = vld [vmem:[%s0 + $0x160] sm:$0xff]
  %v96 = vld [vmem:[%s0 + $0x168] sm:$0xff]
  %v97 = vld [vmem:[%s0 + $0x170] sm:$0xff]
  %v98 = vld [vmem:[%s0 + $0x178] sm:$0xff]
  %v99 = vld [vmem:[%s0 + $0x180] sm:$0xff]
  %v100 = vld [vmem:[%s0 + $0x188] sm:$0xff]
  %v101 = vld [vmem:[%s0 + $0x190] sm:$0xff]
  %v102 = vld [vmem:[%s0 + $0x198] sm:$0xff]
  %v103 = vld [vmem:[%s0 + $0x1a0] sm:$0xff]
  %v104 = vld [vmem:[%s0 + $0x1a8] sm:$0xff]
  %v105 = vld [vmem:[%s0 + $0x1b0] sm:$0xff]
  %v106 = vld [vmem:[%s0 + $0x1b8] sm:$0xff]
  %v107 = vld [vmem:[%s0 + $0x1c0] sm:$0xff]
  %v108 = vld [vmem:[%s0 + $0x1c8] sm:$0xff]
  %v109 = vld [vmem:[%s0 + $0x1d0] sm:$0xff]
  %v110 = vld [vmem:[%s0 + $0x1d8] sm:$0xff]
  %v111 = vld [vmem:[%s0 + $0x1e0] sm:$0xff]
  %v112 = vld [vmem:[%s0 + $0x1e8] sm:$0xff]
  %v113 = vld [vmem:[%s0 + $0x1f0] sm:$0xff]
  %v114 = vld [vmem:[%s0 + $0x1f8] sm:$0xff]
  %v115 = vld [vmem:[%s0 + $0x200] sm:$0xff]
  %v116 = vld [vmem:[%s0 + $0x208] sm:$0xff]
  %v117 = vld [vmem:[%s0 + $0x210] sm:$0xff]
  %v118 = vld [vmem:[%s0 + $0x218] sm:$0xff]
  %v119 = vld [vmem:[%s0 + $0x220] sm:$0xff]
  %v120 = vld [vmem:[%s0 + $0x228] sm:$0xff]
  %v121 = vld [vmem:[%s0 + $0x230] sm:$0xff]
  %v122 = vld [vmem:[%s0 + $0x238] sm:$0xff]
  %v123 = vld [vmem:[%s0 + $0x240] sm:$0xff]
  %v124 = vld [vmem:[%s0 + $0x248] sm:$0xff]
  %v125 = vld [vmem:[%s0 + $0x250] sm:$0xff]
  %v126 = vld [vmem:[%s0 + $0x258] sm:$0xff]
  %v127 = vld [vmem:[%s0 + $0x260] sm:$0xff]
  %v128 = vld [vmem:[%s0 + $0x268] sm:$0xff]
  %v129 = vld [vmem:[%s0 + $0x270] sm:$0xff]
  %v130 = vld [vmem:[%s0 + $0x278] sm:$0xff]
  %v131 = vld [vmem:[%s0 + $0x280] sm:$0xff]
  %v132 = vld [vmem:[%s0 + $0x288] sm:$0xff]
  %v133 = vld [vmem:[%s0 + $0x290] sm:$0xff]
  %v134 = vld [vmem:[%s0 + $0x298] sm:$0xff]
  %v135 = vld [vmem:[%s0 + $0x2a0] sm:$0xff]
  %v136 = vld [vmem:[%s0 + $0x2a8] sm:$0xff]
  %v137 = vld [vmem:[%s0 + $0x2b0] sm:$0xff]
  %v138 = vld [vmem:[%s0 + $0x2b8] sm:$0xff]
  %v139 = vld [vmem:[%s0 + $0x2c0] sm:$0xff]
  %v140 = vld [vmem:[%s0 + $0x2c8] sm:$0xff]
  %v141 = vld [vmem:[%s0 + $0x2d0] sm:$0xff]
  %v142 = vld [vmem:[%s0 + $0x2d8] sm:$0xff]
  %v143 = vld [vmem:[%s0 + $0x2e0] sm:$0xff]
  %v144 = vld [vmem:[%s0 + $0x2e8] sm:$0xff]
  %v145 = vld [vmem:[%s0 + $0x2f0] sm:$0xff]
  %v146 = vld [vmem:[%s0 + $0x2f8] sm:$0xff]
  %v147 = vld [vmem:[%s0 + $0x300] sm:$0xff]
  %v148 = vld [vmem:[%s0 + $0x308] sm:$0xff]
  %v149 = vld [vmem:[%s0 + $0x310] sm:$0xff]
  %v150 = vld [vmem:[%s0 + $0x318] sm:$0xff]
  %v151 = vld [vmem:[%s0 + $0x320] sm:$0xff]
  %v152 = vld [vmem:[%s0 + $0x328] sm:$0xff]
  %v153 = vld [vmem:[%s0 + $0x330] sm:$0xff]
  %v154 = vld [vmem:[%s0 + $0x338] sm:$0xff]
  %v155 = vld [vmem:[%s0 + $0x340] sm:$0xff]
  %v156 = vld [vmem:[%s0 + $0x348] sm:$0xff]
  %v157 = vld [vmem:[%s0 + $0x350] sm:$0xff]
  %v158 = vld [vmem:[%s0 + $0x358] sm:$0xff]
  %v159 = vld [vmem:[%s0 + $0x360] sm:$0x33]
  %v160 = vld [vmem:[%s0 + $0x368] sm:$0x33]
  %v161 = vld [vmem:[%s0 + $0x370] sm:$0x33]
  %v162 = vld [vmem:[%s0 + $0x378] sm:$0x33]
  %v163 = vld [vmem:[%s1] sm:$0xf]
  %v164 = vld [vmem:[%s1 + $0x4] sm:$0xf]
  %v165 = vld [vmem:[%s1 + $0x8] sm:$0xf]
  %v166 = vld [vmem:[%s1 + $0xc] sm:$0xf]
  %v167 = vld [vmem:[%s1 + $0x10] sm:$0xf]
  %v168 = vld [vmem:[%s1 + $0x14] sm:$0xf]
  %v169 = vld [vmem:[%s1 + $0x18] sm:$0xf]
  %v170 = vld [vmem:[%s1 + $0x1c] sm:$0xf]
  %v171 = vld [vmem:[%s1 + $0x20] sm:$0xf]
  %v172 = vld [vmem:[%s1 + $0x24] sm:$0xf]
  %v173 = vld [vmem:[%s1 + $0x28] sm:$0xf]
  %v174 = vld [vmem:[%s1 + $0x2c] sm:$0xf]
  %v175 = vld [vmem:[%s1 + $0x30] sm:$0xf]
  %v176 = vld [vmem:[%s1 + $0x34] sm:$0xf]
  %v177 = vld [vmem:[%s1 + $0x38] sm:$0xf]
  %v178 = vld [vmem:[%s1 + $0x3c] sm:$0xf]
  %v179 = vld [vmem:[%s1 + $0x40] sm:$0xf]
  %v180 = vld [vmem:[%s1 + $0x44] sm:$0xf]
  %v181 = vld [vmem:[%s1 + $0x48] sm:$0xf]
  %v182 = vld [vmem:[%s1 + $0x4c] sm:$0xf]
  %v183 = vld [vmem:[%s1 + $0x50] sm:$0xf]
  %v184 = vld [vmem:[%s1 + $0x54] sm:$0xf]
  %v185 = vld [vmem:[%s1 + $0x58] sm:$0xf]
  %v186 = vld [vmem:[%s1 + $0x5c] sm:$0xf]
  %v187 = vld [vmem:[%s1 + $0x60] sm:$0xf]
  %v188 = vld [vmem:[%s1 + $0x64] sm:$0xf]
  %v189 = vld [vmem:[%s1 + $0x68] sm:$0xf]
  %v190 = vld [vmem:[%s1 + $0x6c] sm:$0xf]
  %v191 = vld [vmem:[%s1 + $0x70] sm:$0xf]
  %v192 = vld [vmem:[%s1 + $0x74] sm:$0xf]
  %v193 = vld [vmem:[%s1 + $0x78] sm:$0xf]
  %v194 = vld [vmem:[%s1 + $0x7c] sm:$0xf]
  %v195 = vld [vmem:[%s1 + $0x80] sm:$0xf]
  %v196 = vld [vmem:[%s1 + $0x84] sm:$0xf]
  %v197 = vld [vmem:[%s1 + $0x88] sm:$0xf]
  %v198 = vld [vmem:[%s1 + $0x8c] sm:$0xf]
  %v199 = vld [vmem:[%s1 + $0x90] sm:$0xf]
  %v200 = vld [vmem:[%s1 + $0x94] sm:$0xf]
  %v201 = vld [vmem:[%s1 + $0x98] sm:$0xf]
  %v202 = vld [vmem:[%s1 + $0x9c] sm:$0xf]
  %v203 = vld [vmem:[%s1 + $0xa0] sm:$0xf]
  %v204 = vld [vmem:[%s1 + $0xa4] sm:$0xf]
  %v205 = vld [vmem:[%s1 + $0xa8] sm:$0xf]
  %v206 = vld [vmem:[%s1 + $0xac] sm:$0xf]
  %v207 = vld [vmem:[%s1 + $0xb0] sm:$0xf]
  %v208 = vld [vmem:[%s1 + $0xb4] sm:$0xf]
  %v209 = vld [vmem:[%s1 + $0xb8] sm:$0xf]
  %v210 = vld [vmem:[%s1 + $0xbc] sm:$0xf]
  %v211 = vld [vmem:[%s1 + $0xc0] sm:$0xf]
  %v212 = vld [vmem:[%s1 + $0xc4] sm:$0xf]
  %v213 = vld [vmem:[%s1 + $0xc8] sm:$0xf]
  %v214 = vld [vmem:[%s1 + $0xcc] sm:$0xf]
  %v215 = vld [vmem:[%s1 + $0xd0] sm:$0xf]
  %v216 = vld [vmem:[%s1 + $0xd4] sm:$0xf]
  %v217 = vld [vmem:[%s1 + $0xd8] sm:$0xf]
  %v218 = vld [vmem:[%s1 + $0xdc] sm:$0xf]
  %v219 = vld [vmem:[%s1 + $0xe0] sm:$0xf]
  %v220 = vld [vmem:[%s1 + $0xe4] sm:$0xf]
  %v221 = vld [vmem:[%s1 + $0xe8] sm:$0xf]
  %v222 = vld [vmem:[%s1 + $0xec] sm:$0xf]
  %v223 = vld [vmem:[%s1 + $0xf0] sm:$0xf]
  %v224 = vld [vmem:[%s1 + $0xf4] sm:$0xf]
  %v225 = vld [vmem:[%s1 + $0xf8] sm:$0xf]
  %v226 = vld [vmem:[%s1 + $0xfc] sm:$0xf]
  %v227 = vld [vmem:[%s1 + $0x100] sm:$0xf]
  %v228 = vld [vmem:[%s1 + $0x104] sm:$0xf]
  %v229 = vld [vmem:[%s1 + $0x108] sm:$0xf]
  %v230 = vld [vmem:[%s1 + $0x10c] sm:$0xf]
  %v231 = vld [vmem:[%s1 + $0x110] sm:$0xf]
  %v232 = vld [vmem:[%s1 + $0x114] sm:$0xf]
  %v233 = vld [vmem:[%s1 + $0x118] sm:$0xf]
  %v234 = vld [vmem:[%s1 + $0x11c] sm:$0xf]
  %v235 = vld [vmem:[%s1 + $0x120] sm:$0xf]
  %v236 = vld [vmem:[%s1 + $0x124] sm:$0xf]
  %v237 = vld [vmem:[%s1 + $0x128] sm:$0xf]
  %v238 = vld [vmem:[%s1 + $0x12c] sm:$0xf]
  %v239 = vld [vmem:[%s1 + $0x130] sm:$0xf]
  %v240 = vld [vmem:[%s1 + $0x134] sm:$0xf]
  %v241 = vld [vmem:[%s1 + $0x138] sm:$0xf]
  %v242 = vld [vmem:[%s1 + $0x13c] sm:$0xf]
  %v243 = vld [vmem:[%s1 + $0x140] sm:$0xf]
  %v244 = vld [vmem:[%s1 + $0x144] sm:$0xf]
  %v245 = vld [vmem:[%s1 + $0x148] sm:$0xf]
  %v246 = vld [vmem:[%s1 + $0x14c] sm:$0xf]
  %v247 = vld [vmem:[%s1 + $0x150] sm:$0xf]
  %v248 = vld [vmem:[%s1 + $0x154] sm:$0xf]
  %v249 = vld [vmem:[%s1 + $0x158] sm:$0xf]
  %v250 = vld [vmem:[%s1 + $0x15c] sm:$0xf]
  %v251 = vld [vmem:[%s1 + $0x160] sm:$0xf]
  %v252 = vld [vmem:[%s1 + $0x164] sm:$0xf]
  %v253 = vld [vmem:[%s1 + $0x168] sm:$0xf]
  %v254 = vld [vmem:[%s1 + $0x16c] sm:$0xf]
  %v255 = vld [vmem:[%s1 + $0x170] sm:$0xf]
  %v256 = vld [vmem:[%s1 + $0x174] sm:$0xf]
  %v257 = vld [vmem:[%s1 + $0x178] sm:$0xf]
  %v258 = vld [vmem:[%s1 + $0x17c] sm:$0xf]
  %v259 = vld [vmem:[%s1 + $0x180] sm:$0xf]
  %v260 = vld [vmem:[%s1 + $0x184] sm:$0xf]
  %v261 = vld [vmem:[%s1 + $0x188] sm:$0xf]
  %v262 = vld [vmem:[%s1 + $0x18c] sm:$0xf]
  %v263 = vld [vmem:[%s1 + $0x190] sm:$0xf]
  %v264 = vld [vmem:[%s1 + $0x194] sm:$0xf]
  %v265 = vld [vmem:[%s1 + $0x198] sm:$0xf]
  %v266 = vld [vmem:[%s1 + $0x19c] sm:$0xf]
  %v267 = vld [vmem:[%s1 + $0x1a0] sm:$0xf]
  %v268 = vld [vmem:[%s1 + $0x1a4] sm:$0xf]
  %v269 = vld [vmem:[%s1 + $0x1a8] sm:$0xf]
  %v270 = vld [vmem:[%s1 + $0x1ac] sm:$0xf]
  %v271 = vld [vmem:[%s1 + $0x1b0] sm:$0xf]
  %v272 = vld [vmem:[%s1 + $0x1b4] sm:$0xf]
  %v273 = vld [vmem:[%s1 + $0x1b8] sm:$0xf]
  %v274 = vld [vmem:[%s1 + $0x1bc] sm:$0xf]
  %v275 = vld [vmem:[%s1 + $0x1c0] sm:$0xf]
  %v276 = vld [vmem:[%s1 + $0x1c4] sm:$0xf]
  %v277 = vld [vmem:[%s2] sm:$0x1]
  %v279 = vlaneseq
  %v280 = vshrl.u32 %v279, 7
  %v281 = vsub.s32 0, %v280
  %v282 = vrot.slane %v277, %v281
  %v396 = vunpack.c.l.b16 %v51
  %v397 = vunpack.c.h.b16 %v51
  %v398 = vunpack.c.l.b16 %v52
  %v399 = vunpack.c.h.b16 %v52
  %v400 = vunpack.c.l.b16 %v53
  %v401 = vunpack.c.h.b16 %v53
  %v402 = vunpack.c.l.b16 %v54
  %v403 = vunpack.c.h.b16 %v54
  %v404 = vunpack.c.l.b16 %v55
  %v405 = vunpack.c.h.b16 %v55
  %v406 = vunpack.c.l.b16 %v56
  %v407 = vunpack.c.h.b16 %v56
  %v408 = vunpack.c.l.b16 %v57
  %v409 = vunpack.c.h.b16 %v57
  %v410 = vunpack.c.l.b16 %v58
  %v411 = vunpack.c.h.b16 %v58
  %v412 = vunpack.c.l.b16 %v59
  %v413 = vunpack.c.h.b16 %v59
  %v414 = vunpack.c.l.b16 %v60
  %v415 = vunpack.c.h.b16 %v60
  %v416 = vunpack.c.l.b16 %v61
  %v417 = vunpack.c.h.b16 %v61
  %v418 = vunpack.c.l.b16 %v62
  %v419 = vunpack.c.h.b16 %v62
  %v420 = vunpack.c.l.b16 %v63
  %v421 = vunpack.c.h.b16 %v63
  %v422 = vunpack.c.l.b16 %v64
  %v423 = vunpack.c.h.b16 %v64
  %v424 = vunpack.c.l.b16 %v65
  %v425 = vunpack.c.h.b16 %v65
  %v426 = vunpack.c.l.b16 %v66
  %v427 = vunpack.c.h.b16 %v66
  %v428 = vunpack.c.l.b16 %v67
  %v429 = vunpack.c.h.b16 %v67
  %v430 = vunpack.c.l.b16 %v68
  %v431 = vunpack.c.h.b16 %v68
  %v432 = vunpack.c.l.b16 %v69
  %v433 = vunpack.c.h.b16 %v69
  %v434 = vunpack.c.l.b16 %v70
  %v435 = vunpack.c.h.b16 %v70
  %v436 = vunpack.c.l.b16 %v71
  %v437 = vunpack.c.h.b16 %v71
  %v438 = vunpack.c.l.b16 %v72
  %v439 = vunpack.c.h.b16 %v72
  %v440 = vunpack.c.l.b16 %v73
  %v441 = vunpack.c.h.b16 %v73
  %v442 = vunpack.c.l.b16 %v74
  %v443 = vunpack.c.h.b16 %v74
  %v444 = vunpack.c.l.b16 %v75
  %v445 = vunpack.c.h.b16 %v75
  %v446 = vunpack.c.l.b16 %v76
  %v447 = vunpack.c.h.b16 %v76
  %v448 = vunpack.c.l.b16 %v77
  %v449 = vunpack.c.h.b16 %v77
  %v450 = vunpack.c.l.b16 %v78
  %v451 = vunpack.c.h.b16 %v78
  %v452 = vunpack.c.l.b16 %v79
  %v453 = vunpack.c.h.b16 %v79
  %v454 = vunpack.c.l.b16 %v80
  %v455 = vunpack.c.h.b16 %v80
  %v456 = vunpack.c.l.b16 %v81
  %v457 = vunpack.c.h.b16 %v81
  %v458 = vunpack.c.l.b16 %v82
  %v459 = vunpack.c.h.b16 %v82
  %v460 = vunpack.c.l.b16 %v83
  %v461 = vunpack.c.h.b16 %v83
  %v462 = vunpack.c.l.b16 %v84
  %v463 = vunpack.c.h.b16 %v84
  %v464 = vunpack.c.l.b16 %v85
  %v465 = vunpack.c.h.b16 %v85
  %v466 = vunpack.c.l.b16 %v86
  %v467 = vunpack.c.h.b16 %v86
  %v468 = vunpack.c.l.b16 %v87
  %v469 = vunpack.c.h.b16 %v87
  %v470 = vunpack.c.l.b16 %v88
  %v471 = vunpack.c.h.b16 %v88
  %v472 = vunpack.c.l.b16 %v89
  %v473 = vunpack.c.h.b16 %v89
  %v474 = vunpack.c.l.b16 %v90
  %v475 = vunpack.c.h.b16 %v90
  %v476 = vunpack.c.l.b16 %v91
  %v477 = vunpack.c.h.b16 %v91
  %v478 = vunpack.c.l.b16 %v92
  %v479 = vunpack.c.h.b16 %v92
  %v480 = vunpack.c.l.b16 %v93
  %v481 = vunpack.c.h.b16 %v93
  %v482 = vunpack.c.l.b16 %v94
  %v483 = vunpack.c.h.b16 %v94
  %v484 = vunpack.c.l.b16 %v95
  %v485 = vunpack.c.h.b16 %v95
  %v486 = vunpack.c.l.b16 %v96
  %v487 = vunpack.c.h.b16 %v96
  %v488 = vunpack.c.l.b16 %v97
  %v489 = vunpack.c.h.b16 %v97
  %v490 = vunpack.c.l.b16 %v98
  %v491 = vunpack.c.h.b16 %v98
  %v492 = vunpack.c.l.b16 %v99
  %v493 = vunpack.c.h.b16 %v99
  %v494 = vunpack.c.l.b16 %v100
  %v495 = vunpack.c.h.b16 %v100
  %v496 = vunpack.c.l.b16 %v101
  %v497 = vunpack.c.h.b16 %v101
  %v498 = vunpack.c.l.b16 %v102
  %v499 = vunpack.c.h.b16 %v102
  %v500 = vunpack.c.l.b16 %v103
  %v501 = vunpack.c.h.b16 %v103
  %v502 = vunpack.c.l.b16 %v104
  %v503 = vunpack.c.h.b16 %v104
  %v504 = vunpack.c.l.b16 %v105
  %v505 = vunpack.c.h.b16 %v105
  %v506 = vunpack.c.l.b16 %v106
  %v507 = vunpack.c.h.b16 %v106
  %v508 = vunpack.c.l.b16 %v107
  %v509 = vunpack.c.h.b16 %v107
  %v510 = vunpack.c.l.b16 %v108
  %v511 = vunpack.c.h.b16 %v108
  %v512 = vunpack.c.l.b16 %v109
  %v513 = vunpack.c.h.b16 %v109
  %v514 = vunpack.c.l.b16 %v110
  %v515 = vunpack.c.h.b16 %v110
  %v516 = vunpack.c.l.b16 %v111
  %v517 = vunpack.c.h.b16 %v111
  %v518 = vunpack.c.l.b16 %v112
  %v519 = vunpack.c.h.b16 %v112
  %v520 = vunpack.c.l.b16 %v113
  %v521 = vunpack.c.h.b16 %v113
  %v522 = vunpack.c.l.b16 %v114
  %v523 = vunpack.c.h.b16 %v114
  %v524 = vunpack.c.l.b16 %v115
  %v525 = vunpack.c.h.b16 %v115
  %v526 = vunpack.c.l.b16 %v116
  %v527 = vunpack.c.h.b16 %v116
  %v528 = vunpack.c.l.b16 %v117
  %v529 = vunpack.c.h.b16 %v117
  %v530 = vunpack.c.l.b16 %v118
  %v531 = vunpack.c.h.b16 %v118
  %v532 = vunpack.c.l.b16 %v119
  %v533 = vunpack.c.h.b16 %v119
  %v534 = vunpack.c.l.b16 %v120
  %v535 = vunpack.c.h.b16 %v120
  %v536 = vunpack.c.l.b16 %v121
  %v537 = vunpack.c.h.b16 %v121
  %v538 = vunpack.c.l.b16 %v122
  %v539 = vunpack.c.h.b16 %v122
  %v540 = vunpack.c.l.b16 %v123
  %v541 = vunpack.c.h.b16 %v123
  %v542 = vunpack.c.l.b16 %v124
  %v543 = vunpack.c.h.b16 %v124
  %v544 = vunpack.c.l.b16 %v125
  %v545 = vunpack.c.h.b16 %v125
  %v546 = vunpack.c.l.b16 %v126
  %v547 = vunpack.c.h.b16 %v126
  %v548 = vunpack.c.l.b16 %v127
  %v549 = vunpack.c.h.b16 %v127
  %v550 = vunpack.c.l.b16 %v128
  %v551 = vunpack.c.h.b16 %v128
  %v552 = vunpack.c.l.b16 %v129
  %v553 = vunpack.c.h.b16 %v129
  %v554 = vunpack.c.l.b16 %v130
  %v555 = vunpack.c.h.b16 %v130
  %v556 = vunpack.c.l.b16 %v131
  %v557 = vunpack.c.h.b16 %v131
  %v558 = vunpack.c.l.b16 %v132
  %v559 = vunpack.c.h.b16 %v132
  %v560 = vunpack.c.l.b16 %v133
  %v561 = vunpack.c.h.b16 %v133
  %v562 = vunpack.c.l.b16 %v134
  %v563 = vunpack.c.h.b16 %v134
  %v564 = vunpack.c.l.b16 %v135
  %v565 = vunpack.c.h.b16 %v135
  %v566 = vunpack.c.l.b16 %v136
  %v567 = vunpack.c.h.b16 %v136
  %v568 = vunpack.c.l.b16 %v137
  %v569 = vunpack.c.h.b16 %v137
  %v570 = vunpack.c.l.b16 %v138
  %v571 = vunpack.c.h.b16 %v138
  %v572 = vunpack.c.l.b16 %v139
  %v573 = vunpack.c.h.b16 %v139
  %v574 = vunpack.c.l.b16 %v140
  %v575 = vunpack.c.h.b16 %v140
  %v576 = vunpack.c.l.b16 %v141
  %v577 = vunpack.c.h.b16 %v141
  %v578 = vunpack.c.l.b16 %v142
  %v579 = vunpack.c.h.b16 %v142
  %v580 = vunpack.c.l.b16 %v143
  %v581 = vunpack.c.h.b16 %v143
  %v582 = vunpack.c.l.b16 %v144
  %v583 = vunpack.c.h.b16 %v144
  %v584 = vunpack.c.l.b16 %v145
  %v585 = vunpack.c.h.b16 %v145
  %v586 = vunpack.c.l.b16 %v146
  %v587 = vunpack.c.h.b16 %v146
  %v588 = vunpack.c.l.b16 %v147
  %v589 = vunpack.c.h.b16 %v147
  %v590 = vunpack.c.l.b16 %v148
  %v591 = vunpack.c.h.b16 %v148
  %v592 = vunpack.c.l.b16 %v149
  %v593 = vunpack.c.h.b16 %v149
  %v594 = vunpack.c.l.b16 %v150
  %v595 = vunpack.c.h.b16 %v150
  %v596 = vunpack.c.l.b16 %v151
  %v597 = vunpack.c.h.b16 %v151
  %v598 = vunpack.c.l.b16 %v152
  %v599 = vunpack.c.h.b16 %v152
  %v600 = vunpack.c.l.b16 %v153
  %v601 = vunpack.c.h.b16 %v153
  %v602 = vunpack.c.l.b16 %v154
  %v603 = vunpack.c.h.b16 %v154
  %v604 = vunpack.c.l.b16 %v155
  %v605 = vunpack.c.h.b16 %v155
  %v606 = vunpack.c.l.b16 %v156
  %v607 = vunpack.c.h.b16 %v156
  %v608 = vunpack.c.l.b16 %v157
  %v609 = vunpack.c.h.b16 %v157
  %v610 = vunpack.c.l.b16 %v158
  %v611 = vunpack.c.h.b16 %v158
  %v612 = vunpack.c.l.b16 %v159
  %v613 = vunpack.c.h.b16 %v159
  %v614 = vunpack.c.l.b16 %v160
  %v615 = vunpack.c.h.b16 %v160
  %v616 = vunpack.c.l.b16 %v161
  %v617 = vunpack.c.h.b16 %v161
  %v618 = vunpack.c.l.b16 %v162
  %v619 = vunpack.c.h.b16 %v162
  %v620 = vpack.c.b16 %v404, %v396
  %v621 = vpack.c.b16 %v405, %v397
  %v622 = vpack.c.b16 %v406, %v398
  %v623 = vpack.c.b16 %v407, %v399
  %v624 = vpack.c.b16 %v408, %v400
  %v625 = vpack.c.b16 %v409, %v401
  %v626 = vpack.c.b16 %v410, %v402
  %v627 = vpack.c.b16 %v411, %v403
  %v628 = vpack.c.b16 %v420, %v412
  %v629 = vpack.c.b16 %v421, %v413
  %v630 = vpack.c.b16 %v422, %v414
  %v631 = vpack.c.b16 %v423, %v415
  %v632 = vpack.c.b16 %v424, %v416
  %v633 = vpack.c.b16 %v425, %v417
  %v634 = vpack.c.b16 %v426, %v418
  %v635 = vpack.c.b16 %v427, %v419
  %v636 = vpack.c.b16 %v436, %v428
  %v637 = vpack.c.b16 %v437, %v429
  %v638 = vpack.c.b16 %v438, %v430
  %v639 = vpack.c.b16 %v439, %v431
  %v640 = vpack.c.b16 %v440, %v432
  %v641 = vpack.c.b16 %v441, %v433
  %v642 = vpack.c.b16 %v442, %v434
  %v643 = vpack.c.b16 %v443, %v435
  %v644 = vpack.c.b16 %v452, %v444
  %v645 = vpack.c.b16 %v453, %v445
  %v646 = vpack.c.b16 %v454, %v446
  %v647 = vpack.c.b16 %v455, %v447
  %v648 = vpack.c.b16 %v456, %v448
  %v649 = vpack.c.b16 %v457, %v449
  %v650 = vpack.c.b16 %v458, %v450
  %v651 = vpack.c.b16 %v459, %v451
  %v652 = vpack.c.b16 %v468, %v460
  %v653 = vpack.c.b16 %v469, %v461
  %v654 = vpack.c.b16 %v470, %v462
  %v655 = vpack.c.b16 %v471, %v463
  %v656 = vpack.c.b16 %v472, %v464
  %v657 = vpack.c.b16 %v473, %v465
  %v658 = vpack.c.b16 %v474, %v466
  %v659 = vpack.c.b16 %v475, %v467
  %v660 = vpack.c.b16 %v484, %v476
  %v661 = vpack.c.b16 %v485, %v477
  %v662 = vpack.c.b16 %v486, %v478
  %v663 = vpack.c.b16 %v487, %v479
  %v664 = vpack.c.b16 %v488, %v480
  %v665 = vpack.c.b16 %v489, %v481
  %v666 = vpack.c.b16 %v490, %v482
  %v667 = vpack.c.b16 %v491, %v483
  %v668 = vpack.c.b16 %v500, %v492
  %v669 = vpack.c.b16 %v501, %v493
  %v670 = vpack.c.b16 %v502, %v494
  %v671 = vpack.c.b16 %v503, %v495
  %v672 = vpack.c.b16 %v504, %v496
  %v673 = vpack.c.b16 %v505, %v497
  %v674 = vpack.c.b16 %v506, %v498
  %v675 = vpack.c.b16 %v507, %v499
  %v676 = vpack.c.b16 %v516, %v508
  %v677 = vpack.c.b16 %v517, %v509
  %v678 = vpack.c.b16 %v518, %v510
  %v679 = vpack.c.b16 %v519, %v511
  %v680 = vpack.c.b16 %v520, %v512
  %v681 = vpack.c.b16 %v521, %v513
  %v682 = vpack.c.b16 %v522, %v514
  %v683 = vpack.c.b16 %v523, %v515
  %v684 = vpack.c.b16 %v532, %v524
  %v685 = vpack.c.b16 %v533, %v525
  %v686 = vpack.c.b16 %v534, %v526
  %v687 = vpack.c.b16 %v535, %v527
  %v688 = vpack.c.b16 %v536, %v528
  %v689 = vpack.c.b16 %v537, %v529
  %v690 = vpack.c.b16 %v538, %v530
  %v691 = vpack.c.b16 %v539, %v531
  %v692 = vpack.c.b16 %v548, %v540
  %v693 = vpack.c.b16 %v549, %v541
  %v694 = vpack.c.b16 %v550, %v542
  %v695 = vpack.c.b16 %v551, %v543
  %v696 = vpack.c.b16 %v552, %v544
  %v697 = vpack.c.b16 %v553, %v545
  %v698 = vpack.c.b16 %v554, %v546
  %v699 = vpack.c.b16 %v555, %v547
  %v700 = vpack.c.b16 %v564, %v556
  %v701 = vpack.c.b16 %v565, %v557
  %v702 = vpack.c.b16 %v566, %v558
  %v703 = vpack.c.b16 %v567, %v559
  %v704 = vpack.c.b16 %v568, %v560
  %v705 = vpack.c.b16 %v569, %v561
  %v706 = vpack.c.b16 %v570, %v562
  %v707 = vpack.c.b16 %v571, %v563
  %v708 = vpack.c.b16 %v580, %v572
  %v709 = vpack.c.b16 %v581, %v573
  %v710 = vpack.c.b16 %v582, %v574
  %v711 = vpack.c.b16 %v583, %v575
  %v712 = vpack.c.b16 %v584, %v576
  %v713 = vpack.c.b16 %v585, %v577
  %v714 = vpack.c.b16 %v586, %v578
  %v715 = vpack.c.b16 %v587, %v579
  %v716 = vpack.c.b16 %v596, %v588
  %v717 = vpack.c.b16 %v597, %v589
  %v718 = vpack.c.b16 %v598, %v590
  %v719 = vpack.c.b16 %v599, %v591
  %v720 = vpack.c.b16 %v600, %v592
  %v721 = vpack.c.b16 %v601, %v593
  %v722 = vpack.c.b16 %v602, %v594
  %v723 = vpack.c.b16 %v603, %v595
  %v724 = vpack.c.b16 %v612, %v604
  %v725 = vpack.c.b16 %v613, %v605
  %v726 = vpack.c.b16 %v614, %v606
  %v727 = vpack.c.b16 %v615, %v607
  %v728 = vpack.c.b16 %v616, %v608
  %v729 = vpack.c.b16 %v617, %v609
  %v730 = vpack.c.b16 %v618, %v610
  %v731 = vpack.c.b16 %v619, %v611
  %v944 = vunpack.c.l.b16 %v163
  %v945 = vunpack.c.l.b16 %v164
  %v946 = vunpack.c.l.b16 %v165
  %v947 = vunpack.c.l.b16 %v166
  %v948 = vunpack.c.l.b16 %v167
  %v949 = vunpack.c.l.b16 %v168
  %v950 = vunpack.c.l.b16 %v169
  %v951 = vunpack.c.l.b16 %v170
  %v952 = vunpack.c.l.b16 %v171
  %v953 = vunpack.c.l.b16 %v172
  %v954 = vunpack.c.l.b16 %v173
  %v955 = vunpack.c.l.b16 %v174
  %v956 = vunpack.c.l.b16 %v175
  %v957 = vunpack.c.l.b16 %v176
  %v958 = vunpack.c.l.b16 %v177
  %v959 = vunpack.c.l.b16 %v178
  %v960 = vunpack.c.l.b16 %v179
  %v961 = vunpack.c.l.b16 %v180
  %v962 = vunpack.c.l.b16 %v181
  %v963 = vunpack.c.l.b16 %v182
  %v964 = vunpack.c.l.b16 %v183
  %v965 = vunpack.c.l.b16 %v184
  %v966 = vunpack.c.l.b16 %v185
  %v967 = vunpack.c.l.b16 %v186
  %v968 = vunpack.c.l.b16 %v187
  %v969 = vunpack.c.l.b16 %v188
  %v970 = vunpack.c.l.b16 %v189
  %v971 = vunpack.c.l.b16 %v190
  %v972 = vunpack.c.l.b16 %v191
  %v973 = vunpack.c.l.b16 %v192
  %v974 = vunpack.c.l.b16 %v193
  %v975 = vunpack.c.l.b16 %v194
  %v976 = vunpack.c.l.b16 %v195
  %v977 = vunpack.c.l.b16 %v196
  %v978 = vunpack.c.l.b16 %v197
  %v979 = vunpack.c.l.b16 %v198
  %v980 = vunpack.c.l.b16 %v199
  %v981 = vunpack.c.l.b16 %v200
  %v982 = vunpack.c.l.b16 %v201
  %v983 = vunpack.c.l.b16 %v202
  %v984 = vunpack.c.l.b16 %v203
  %v985 = vunpack.c.l.b16 %v204
  %v986 = vunpack.c.l.b16 %v205
  %v987 = vunpack.c.l.b16 %v206
  %v988 = vunpack.c.l.b16 %v207
  %v989 = vunpack.c.l.b16 %v208
  %v990 = vunpack.c.l.b16 %v209
  %v991 = vunpack.c.l.b16 %v210
  %v992 = vunpack.c.l.b16 %v211
  %v993 = vunpack.c.l.b16 %v212
  %v994 = vunpack.c.l.b16 %v213
  %v995 = vunpack.c.l.b16 %v214
  %v996 = vunpack.c.l.b16 %v215
  %v997 = vunpack.c.l.b16 %v216
  %v998 = vunpack.c.l.b16 %v217
  %v999 = vunpack.c.l.b16 %v218
  %v1000 = vunpack.c.l.b16 %v219
  %v1001 = vunpack.c.l.b16 %v220
  %v1002 = vunpack.c.l.b16 %v221
  %v1003 = vunpack.c.l.b16 %v222
  %v1004 = vunpack.c.l.b16 %v223
  %v1005 = vunpack.c.l.b16 %v224
  %v1006 = vunpack.c.l.b16 %v225
  %v1007 = vunpack.c.l.b16 %v226
  %v1008 = vunpack.c.l.b16 %v227
  %v1009 = vunpack.c.l.b16 %v228
  %v1010 = vunpack.c.l.b16 %v229
  %v1011 = vunpack.c.l.b16 %v230
  %v1012 = vunpack.c.l.b16 %v231
  %v1013 = vunpack.c.l.b16 %v232
  %v1014 = vunpack.c.l.b16 %v233
  %v1015 = vunpack.c.l.b16 %v234
  %v1016 = vunpack.c.l.b16 %v235
  %v1017 = vunpack.c.l.b16 %v236
  %v1018 = vunpack.c.l.b16 %v237
  %v1019 = vunpack.c.l.b16 %v238
  %v1020 = vunpack.c.l.b16 %v239
  %v1021 = vunpack.c.l.b16 %v240
  %v1022 = vunpack.c.l.b16 %v241
  %v1023 = vunpack.c.l.b16 %v242
  %v1024 = vunpack.c.l.b16 %v243
  %v1025 = vunpack.c.l.b16 %v244
  %v1026 = vunpack.c.l.b16 %v245
  %v1027 = vunpack.c.l.b16 %v246
  %v1028 = vunpack.c.l.b16 %v247
  %v1029 = vunpack.c.l.b16 %v248
  %v1030 = vunpack.c.l.b16 %v249
  %v1031 = vunpack.c.l.b16 %v250
  %v1032 = vunpack.c.l.b16 %v251
  %v1033 = vunpack.c.l.b16 %v252
  %v1034 = vunpack.c.l.b16 %v253
  %v1035 = vunpack.c.l.b16 %v254
  %v1036 = vunpack.c.l.b16 %v255
  %v1037 = vunpack.c.l.b16 %v256
  %v1038 = vunpack.c.l.b16 %v257
  %v1039 = vunpack.c.l.b16 %v258
  %v1040 = vunpack.c.l.b16 %v259
  %v1041 = vunpack.c.l.b16 %v260
  %v1042 = vunpack.c.l.b16 %v261
  %v1043 = vunpack.c.l.b16 %v262
  %v1044 = vunpack.c.l.b16 %v263
  %v1045 = vunpack.c.l.b16 %v264
  %v1046 = vunpack.c.l.b16 %v265
  %v1047 = vunpack.c.l.b16 %v266
  %v1048 = vunpack.c.l.b16 %v267
  %v1049 = vunpack.c.l.b16 %v268
  %v1050 = vunpack.c.l.b16 %v269
  %v1051 = vunpack.c.l.b16 %v270
  %v1052 = vunpack.c.l.b16 %v271
  %v1053 = vunpack.c.l.b16 %v272
  %v1054 = vunpack.c.l.b16 %v273
  %v1055 = vunpack.c.l.b16 %v274
  %v1056 = vunpack.c.l.b16 %v275
  %v1057 = vunpack.c.l.b16 %v276
  %v1058 = vpack.c.b16 %v945, %v944
  %v1059 = vpack.c.b16 %v947, %v946
  %v1060 = vpack.c.b16 %v949, %v948
  %v1061 = vpack.c.b16 %v951, %v950
  %v1062 = vpack.c.b16 %v953, %v952
  %v1063 = vpack.c.b16 %v955, %v954
  %v1064 = vpack.c.b16 %v957, %v956
  %v1065 = vpack.c.b16 %v959, %v958
  %v1066 = vpack.c.b16 %v961, %v960
  %v1067 = vpack.c.b16 %v963, %v962
  %v1068 = vpack.c.b16 %v965, %v964
  %v1069 = vpack.c.b16 %v967, %v966
  %v1070 = vpack.c.b16 %v969, %v968
  %v1071 = vpack.c.b16 %v971, %v970
  %v1072 = vpack.c.b16 %v973, %v972
  %v1073 = vpack.c.b16 %v975, %v974
  %v1074 = vpack.c.b16 %v977, %v976
  %v1075 = vpack.c.b16 %v979, %v978
  %v1076 = vpack.c.b16 %v981, %v980
  %v1077 = vpack.c.b16 %v983, %v982
  %v1078 = vpack.c.b16 %v985, %v984
  %v1079 = vpack.c.b16 %v987, %v986
  %v1080 = vpack.c.b16 %v989, %v988
  %v1081 = vpack.c.b16 %v991, %v990
  %v1082 = vpack.c.b16 %v993, %v992
  %v1083 = vpack.c.b16 %v995, %v994
  %v1084 = vpack.c.b16 %v997, %v996
  %v1085 = vpack.c.b16 %v999, %v998
  %v1086 = vpack.c.b16 %v1001, %v1000
  %v1087 = vpack.c.b16 %v1003, %v1002
  %v1088 = vpack.c.b16 %v1005, %v1004
  %v1089 = vpack.c.b16 %v1007, %v1006
  %v1090 = vpack.c.b16 %v1009, %v1008
  %v1091 = vpack.c.b16 %v1011, %v1010
  %v1092 = vpack.c.b16 %v1013, %v1012
  %v1093 = vpack.c.b16 %v1015, %v1014
  %v1094 = vpack.c.b16 %v1017, %v1016
  %v1095 = vpack.c.b16 %v1019, %v1018
  %v1096 = vpack.c.b16 %v1021, %v1020
  %v1097 = vpack.c.b16 %v1023, %v1022
  %v1098 = vpack.c.b16 %v1025, %v1024
  %v1099 = vpack.c.b16 %v1027, %v1026
  %v1100 = vpack.c.b16 %v1029, %v1028
  %v1101 = vpack.c.b16 %v1031, %v1030
  %v1102 = vpack.c.b16 %v1033, %v1032
  %v1103 = vpack.c.b16 %v1035, %v1034
  %v1104 = vpack.c.b16 %v1037, %v1036
  %v1105 = vpack.c.b16 %v1039, %v1038
  %v1106 = vpack.c.b16 %v1041, %v1040
  %v1107 = vpack.c.b16 %v1043, %v1042
  %v1108 = vpack.c.b16 %v1045, %v1044
  %v1109 = vpack.c.b16 %v1047, %v1046
  %v1110 = vpack.c.b16 %v1049, %v1048
  %v1111 = vpack.c.b16 %v1051, %v1050
  %v1112 = vpack.c.b16 %v1053, %v1052
  %v1113 = vpack.c.b16 %v1055, %v1054
  %v1114 = vpack.c.b16 %v1057, %v1056
  %vm1172 = vcmask 130048
  %v1174 = vsel %vm1172, %v627, 0
  %v1177 = vsel %vm1172, %v635, 0
  %v1180 = vsel %vm1172, %v643, 0
  %v1183 = vsel %vm1172, %v651, 0
  %v1186 = vsel %vm1172, %v659, 0
  %v1189 = vsel %vm1172, %v667, 0
  %v1192 = vsel %vm1172, %v675, 0
  %v1195 = vsel %vm1172, %v683, 0
  %v1198 = vsel %vm1172, %v691, 0
  %v1201 = vsel %vm1172, %v699, 0
  %v1204 = vsel %vm1172, %v707, 0
  %v1207 = vsel %vm1172, %v715, 0
  %v1210 = vsel %vm1172, %v723, 0
  %v1213 = vsel %vm1172, %v731, 0
  %1215 = vmatprep.subr.bf16.mxu0 0
  %1216 = vmatpush1.bf16.msra.mxu0 %v1058
  %1217 = vmatprep.subr.bf16.mxu0 0
  %1218 = vmatpush1.bf16.msra.mxu0 %v1059
  %1219 = vmatprep.subr.bf16.mxu0 0
  %1220 = vmatpush1.bf16.msra.mxu0 %v1060
  %1221 = vmatprep.subr.bf16.mxu0 0
  %1222 = vmatpush1.bf16.msra.mxu0 %v1061
  %1223 = vmatprep.subr.bf16.mxu0 0
  %1224 = vmatpush1.bf16.msra.mxu0 %v1062
  %1225 = vmatprep.subr.bf16.mxu0 0
  %1226 = vmatpush1.bf16.msra.mxu0 %v1063
  %1227 = vmatprep.subr.bf16.mxu0 0
  %1228 = vmatpush1.bf16.msra.mxu0 %v1064
  %1229 = vmatprep.subr.bf16.mxu0 0
  %1230 = vmatpush1.bf16.msra.mxu0 %v1065
  %1231 = vmatprep.subr.bf16.mxu0 0
  %1232 = vmatpush1.bf16.msra.mxu0 %v1066
  %1233 = vmatprep.subr.bf16.mxu0 0
  %1234 = vmatpush1.bf16.msra.mxu0 %v1067
  %1235 = vmatprep.subr.bf16.mxu0 0
  %1236 = vmatpush1.bf16.msra.mxu0 %v1068
  %1237 = vmatprep.subr.bf16.mxu0 0
  %1238 = vmatpush1.bf16.msra.mxu0 %v1069
  %1239 = vmatprep.subr.bf16.mxu0 0
  %1240 = vmatpush1.bf16.msra.mxu0 %v1070
  %1241 = vmatprep.subr.bf16.mxu0 0
  %1242 = vmatpush1.bf16.msra.mxu0 %v1071
  %1243 = vmatprep.subr.bf16.mxu0 0
  %1244 = vmatpush1.bf16.msra.mxu0 %v1072
  %1245 = vmatprep.subr.bf16.mxu0 0
  %1246 = vmatpush1.bf16.msra.mxu0 %v1073
  %1247 = vmatprep.mubr.bf16.mxu0 %v621
  %1248 = vmatmul.mubr.bf16.gmra.mrb[0].mxu0 %v620
  %v1249 = vpop.f32.mrb[0].mxu0
  %v1250 = vadd.f32 %v282, %v1249
  %v1251 = vpop.f32.mrb[0].mxu0
  %v1252 = vpop.f32.mrb[0].mxu0
  %v1253 = vadd.f32 %v282, %v1252
  %v1254 = vpop.f32.mrb[0].mxu0
  %1255 = vmatprep.mubr.bf16.mxu0 %v629
  %1256 = vmatmul.mubr.bf16.gmra.mrb[0].mxu0 %v628
  %v1257 = vpop.f32.mrb[0].mxu0
  %v1258 = vadd.f32 %v282, %v1257
  %v1259 = vpop.f32.mrb[0].mxu0
  %v1260 = vpop.f32.mrb[0].mxu0
  %v1261 = vadd.f32 %v282, %v1260
  %v1262 = vpop.f32.mrb[0].mxu0
  %1263 = vmatprep.mubr.bf16.mxu0 %v637
  %1264 = vmatmul.mubr.bf16.gmra.mrb[0].mxu0 %v636
  %v1265 = vpop.f32.mrb[0].mxu0
  %v1266 = vadd.f32 %v282, %v1265
  %v1267 = vpop.f32.mrb[0].mxu0
  %v1268 = vpop.f32.mrb[0].mxu0
  %v1269 = vadd.f32 %v282, %v1268
  %v1270 = vpop.f32.mrb[0].mxu0
  %1271 = vmatprep.mubr.bf16.mxu0 %v645
  %1272 = vmatmul.mubr.bf16.gmra.mrb[0].mxu0 %v644
  %v1273 = vpop.f32.mrb[0].mxu0
  %v1274 = vadd.f32 %v282, %v1273
  %v1275 = vpop.f32.mrb[0].mxu0
  %v1276 = vpop.f32.mrb[0].mxu0
  %v1277 = vadd.f32 %v282, %v1276
  %v1278 = vpop.f32.mrb[0].mxu0
  %1279 = vmatprep.mubr.bf16.mxu0 %v653
  %1280 = vmatmul.mubr.bf16.gmra.mrb[0].mxu0 %v652
  %v1281 = vpop.f32.mrb[0].mxu0
  %v1282 = vadd.f32 %v282, %v1281
  %v1283 = vpop.f32.mrb[0].mxu0
  %v1284 = vpop.f32.mrb[0].mxu0
  %v1285 = vadd.f32 %v282, %v1284
  %v1286 = vpop.f32.mrb[0].mxu0
  %1287 = vmatprep.mubr.bf16.mxu0 %v661
  %1288 = vmatmul.mubr.bf16.gmra.mrb[0].mxu0 %v660
  %v1289 = vpop.f32.mrb[0].mxu0
  %v1290 = vadd.f32 %v282, %v1289
  %v1291 = vpop.f32.mrb[0].mxu0
  %v1292 = vpop.f32.mrb[0].mxu0
  %v1293 = vadd.f32 %v282, %v1292
  %v1294 = vpop.f32.mrb[0].mxu0
  %1295 = vmatprep.mubr.bf16.mxu0 %v669
  %1296 = vmatmul.mubr.bf16.gmra.mrb[0].mxu0 %v668
  %v1297 = vpop.f32.mrb[0].mxu0
  %v1298 = vadd.f32 %v282, %v1297
  %v1299 = vpop.f32.mrb[0].mxu0
  %v1300 = vpop.f32.mrb[0].mxu0
  %v1301 = vadd.f32 %v282, %v1300
  %v1302 = vpop.f32.mrb[0].mxu0
  %1303 = vmatprep.mubr.bf16.mxu0 %v677
  %1304 = vmatmul.mubr.bf16.gmra.mrb[0].mxu0 %v676
  %v1305 = vpop.f32.mrb[0].mxu0
  %v1306 = vadd.f32 %v282, %v1305
  %v1307 = vpop.f32.mrb[0].mxu0
  %v1308 = vpop.f32.mrb[0].mxu0
  %v1309 = vadd.f32 %v282, %v1308
  %v1310 = vpop.f32.mrb[0].mxu0
  %1311 = vmatprep.mubr.bf16.mxu0 %v685
  %1312 = vmatmul.mubr.bf16.gmra.mrb[0].mxu0 %v684
  %v1313 = vpop.f32.mrb[0].mxu0
  %v1314 = vadd.f32 %v282, %v1313
  %v1315 = vpop.f32.mrb[0].mxu0
  %v1316 = vpop.f32.mrb[0].mxu0
  %v1317 = vadd.f32 %v282, %v1316
  %v1318 = vpop.f32.mrb[0].mxu0
  %1319 = vmatprep.mubr.bf16.mxu0 %v693
  %1320 = vmatmul.mubr.bf16.gmra.mrb[0].mxu0 %v692
  %v1321 = vpop.f32.mrb[0].mxu0
  %v1322 = vadd.f32 %v282, %v1321
  %v1323 = vpop.f32.mrb[0].mxu0
  %v1324 = vpop.f32.mrb[0].mxu0
  %v1325 = vadd.f32 %v282, %v1324
  %v1326 = vpop.f32.mrb[0].mxu0
  %1327 = vmatprep.mubr.bf16.mxu0 %v701
  %1328 = vmatmul.mubr.bf16.gmra.mrb[0].mxu0 %v700
  %v1329 = vpop.f32.mrb[0].mxu0
  %v1330 = vadd.f32 %v282, %v1329
  %v1331 = vpop.f32.mrb[0].mxu0
  %v1332 = vpop.f32.mrb[0].mxu0
  %v1333 = vadd.f32 %v282, %v1332
  %v1334 = vpop.f32.mrb[0].mxu0
  %1335 = vmatprep.mubr.bf16.mxu0 %v709
  %1336 = vmatmul.mubr.bf16.gmra.mrb[0].mxu0 %v708
  %v1337 = vpop.f32.mrb[0].mxu0
  %v1338 = vadd.f32 %v282, %v1337
  %v1339 = vpop.f32.mrb[0].mxu0
  %v1340 = vpop.f32.mrb[0].mxu0
  %v1341 = vadd.f32 %v282, %v1340
  %v1342 = vpop.f32.mrb[0].mxu0
  %1343 = vmatprep.mubr.bf16.mxu0 %v717
  %1344 = vmatmul.mubr.bf16.gmra.mrb[0].mxu0 %v716
  %v1345 = vpop.f32.mrb[0].mxu0
  %v1346 = vadd.f32 %v282, %v1345
  %v1347 = vpop.f32.mrb[0].mxu0
  %v1348 = vpop.f32.mrb[0].mxu0
  %v1349 = vadd.f32 %v282, %v1348
  %v1350 = vpop.f32.mrb[0].mxu0
  %1351 = vmatprep.mubr.bf16.mxu0 %v725
  %1352 = vmatmul.mubr.bf16.gmra.mrb[0].mxu0 %v724
  %v1353 = vpop.f32.mrb[0].mxu0
  %v1354 = vadd.f32 %v282, %v1353
  %v1355 = vpop.f32.mrb[0].mxu0
  %v1356 = vpop.f32.mrb[0].mxu0
  %v1357 = vadd.f32 %v282, %v1356
  %v1358 = vpop.f32.mrb[0].mxu0
  %1359 = vdwg.mxu0
  %1360 = vmatprep.subr.bf16.mxu0 0
  %1361 = vmatpush1.bf16.msra.mxu0 %v1074
  %1362 = vmatprep.subr.bf16.mxu0 0
  %1363 = vmatpush1.bf16.msra.mxu0 %v1075
  %1364 = vmatprep.subr.bf16.mxu0 0
  %1365 = vmatpush1.bf16.msra.mxu0 %v1076
  %1366 = vmatprep.subr.bf16.mxu0 0
  %1367 = vmatpush1.bf16.msra.mxu0 %v1077
  %1368 = vmatprep.subr.bf16.mxu0 0
  %1369 = vmatpush1.bf16.msra.mxu0 %v1078
  %1370 = vmatprep.subr.bf16.mxu0 0
  %1371 = vmatpush1.bf16.msra.mxu0 %v1079
  %1372 = vmatprep.subr.bf16.mxu0 0
  %1373 = vmatpush1.bf16.msra.mxu0 %v1080
  %1374 = vmatprep.subr.bf16.mxu0 0
  %1375 = vmatpush1.bf16.msra.mxu0 %v1081
  %1376 = vmatprep.subr.bf16.mxu0 0
  %1377 = vmatpush1.bf16.msra.mxu0 %v1082
  %1378 = vmatprep.subr.bf16.mxu0 0
  %1379 = vmatpush1.bf16.msra.mxu0 %v1083
  %1380 = vmatprep.subr.bf16.mxu0 0
  %1381 = vmatpush1.bf16.msra.mxu0 %v1084
  %1382 = vmatprep.subr.bf16.mxu0 0
  %1383 = vmatpush1.bf16.msra.mxu0 %v1085
  %1384 = vmatprep.subr.bf16.mxu0 0
  %1385 = vmatpush1.bf16.msra.mxu0 %v1086
  %1386 = vmatprep.subr.bf16.mxu0 0
  %1387 = vmatpush1.bf16.msra.mxu0 %v1087
  %1388 = vmatprep.subr.bf16.mxu0 0
  %1389 = vmatpush1.bf16.msra.mxu0 %v1088
  %1390 = vmatprep.subr.bf16.mxu0 0
  %1391 = vmatpush1.bf16.msra.mxu0 %v1089
  %1392 = vmatprep.mubr.bf16.mxu0 %v623
  %1393 = vmatmul.mubr.bf16.gmra.mrb[0].mxu0 %v622
  %v1394 = vpop.f32.mrb[0].mxu0
  %v1395 = vadd.f32 %v1250, %v1394
  %v1396 = vpop.f32.mrb[0].mxu0
  %v1397 = vpop.f32.mrb[0].mxu0
  %v1398 = vadd.f32 %v1253, %v1397
  %v1399 = vpop.f32.mrb[0].mxu0
  %1400 = vmatprep.mubr.bf16.mxu0 %v631
  %1401 = vmatmul.mubr.bf16.gmra.mrb[0].mxu0 %v630
  %v1402 = vpop.f32.mrb[0].mxu0
  %v1403 = vadd.f32 %v1258, %v1402
  %v1404 = vpop.f32.mrb[0].mxu0
  %v1405 = vpop.f32.mrb[0].mxu0
  %v1406 = vadd.f32 %v1261, %v1405
  %v1407 = vpop.f32.mrb[0].mxu0
  %1408 = vmatprep.mubr.bf16.mxu0 %v639
  %1409 = vmatmul.mubr.bf16.gmra.mrb[0].mxu0 %v638
  %v1410 = vpop.f32.mrb[0].mxu0
  %v1411 = vadd.f32 %v1266, %v1410
  %v1412 = vpop.f32.mrb[0].mxu0
  %v1413 = vpop.f32.mrb[0].mxu0
  %v1414 = vadd.f32 %v1269, %v1413
  %v1415 = vpop.f32.mrb[0].mxu0
  %1416 = vmatprep.mubr.bf16.mxu0 %v647
  %1417 = vmatmul.mubr.bf16.gmra.mrb[0].mxu0 %v646
  %v1418 = vpop.f32.mrb[0].mxu0
  %v1419 = vadd.f32 %v1274, %v1418
  %v1420 = vpop.f32.mrb[0].mxu0
  %v1421 = vpop.f32.mrb[0].mxu0
  %v1422 = vadd.f32 %v1277, %v1421
  %v1423 = vpop.f32.mrb[0].mxu0
  %1424 = vmatprep.mubr.bf16.mxu0 %v655
  %1425 = vmatmul.mubr.bf16.gmra.mrb[0].mxu0 %v654
  %v1426 = vpop.f32.mrb[0].mxu0
  %v1427 = vadd.f32 %v1282, %v1426
  %v1428 = vpop.f32.mrb[0].mxu0
  %v1429 = vpop.f32.mrb[0].mxu0
  %v1430 = vadd.f32 %v1285, %v1429
  %v1431 = vpop.f32.mrb[0].mxu0
  %1432 = vmatprep.mubr.bf16.mxu0 %v663
  %1433 = vmatmul.mubr.bf16.gmra.mrb[0].mxu0 %v662
  %v1434 = vpop.f32.mrb[0].mxu0
  %v1435 = vadd.f32 %v1290, %v1434
  %v1436 = vpop.f32.mrb[0].mxu0
  %v1437 = vpop.f32.mrb[0].mxu0
  %v1438 = vadd.f32 %v1293, %v1437
  %v1439 = vpop.f32.mrb[0].mxu0
  %1440 = vmatprep.mubr.bf16.mxu0 %v671
  %1441 = vmatmul.mubr.bf16.gmra.mrb[0].mxu0 %v670
  %v1442 = vpop.f32.mrb[0].mxu0
  %v1443 = vadd.f32 %v1298, %v1442
  %v1444 = vpop.f32.mrb[0].mxu0
  %v1445 = vpop.f32.mrb[0].mxu0
  %v1446 = vadd.f32 %v1301, %v1445
  %v1447 = vpop.f32.mrb[0].mxu0
  %1448 = vmatprep.mubr.bf16.mxu0 %v679
  %1449 = vmatmul.mubr.bf16.gmra.mrb[0].mxu0 %v678
  %v1450 = vpop.f32.mrb[0].mxu0
  %v1451 = vadd.f32 %v1306, %v1450
  %v1452 = vpop.f32.mrb[0].mxu0
  %v1453 = vpop.f32.mrb[0].mxu0
  %v1454 = vadd.f32 %v1309, %v1453
  %v1455 = vpop.f32.mrb[0].mxu0
  %1456 = vmatprep.mubr.bf16.mxu0 %v687
  %1457 = vmatmul.mubr.bf16.gmra.mrb[0].mxu0 %v686
  %v1458 = vpop.f32.mrb[0].mxu0
  %v1459 = vadd.f32 %v1314, %v1458
  %v1460 = vpop.f32.mrb[0].mxu0
  %v1461 = vpop.f32.mrb[0].mxu0
  %v1462 = vadd.f32 %v1317, %v1461
  %v1463 = vpop.f32.mrb[0].mxu0
  %1464 = vmatprep.mubr.bf16.mxu0 %v695
  %1465 = vmatmul.mubr.bf16.gmra.mrb[0].mxu0 %v694
  %v1466 = vpop.f32.mrb[0].mxu0
  %v1467 = vadd.f32 %v1322, %v1466
  %v1468 = vpop.f32.mrb[0].mxu0
  %v1469 = vpop.f32.mrb[0].mxu0
  %v1470 = vadd.f32 %v1325, %v1469
  %v1471 = vpop.f32.mrb[0].mxu0
  %1472 = vmatprep.mubr.bf16.mxu0 %v703
  %1473 = vmatmul.mubr.bf16.gmra.mrb[0].mxu0 %v702
  %v1474 = vpop.f32.mrb[0].mxu0
  %v1475 = vadd.f32 %v1330, %v1474
  %v1476 = vpop.f32.mrb[0].mxu0
  %v1477 = vpop.f32.mrb[0].mxu0
  %v1478 = vadd.f32 %v1333, %v1477
  %v1479 = vpop.f32.mrb[0].mxu0
  %1480 = vmatprep.mubr.bf16.mxu0 %v711
  %1481 = vmatmul.mubr.bf16.gmra.mrb[0].mxu0 %v710
  %v1482 = vpop.f32.mrb[0].mxu0
  %v1483 = vadd.f32 %v1338, %v1482
  %v1484 = vpop.f32.mrb[0].mxu0
  %v1485 = vpop.f32.mrb[0].mxu0
  %v1486 = vadd.f32 %v1341, %v1485
  %v1487 = vpop.f32.mrb[0].mxu0
  %1488 = vmatprep.mubr.bf16.mxu0 %v719
  %1489 = vmatmul.mubr.bf16.gmra.mrb[0].mxu0 %v718
  %v1490 = vpop.f32.mrb[0].mxu0
  %v1491 = vadd.f32 %v1346, %v1490
  %v1492 = vpop.f32.mrb[0].mxu0
  %v1493 = vpop.f32.mrb[0].mxu0
  %v1494 = vadd.f32 %v1349, %v1493
  %v1495 = vpop.f32.mrb[0].mxu0
  %1496 = vmatprep.mubr.bf16.mxu0 %v727
  %1497 = vmatmul.mubr.bf16.gmra.mrb[0].mxu0 %v726
  %v1498 = vpop.f32.mrb[0].mxu0
  %v1499 = vadd.f32 %v1354, %v1498
  %v1500 = vpop.f32.mrb[0].mxu0
  %v1501 = vpop.f32.mrb[0].mxu0
  %v1502 = vadd.f32 %v1357, %v1501
  %v1503 = vpop.f32.mrb[0].mxu0
  %1504 = vdwg.mxu0
  %1505 = vmatprep.subr.bf16.mxu0 0
  %1506 = vmatpush1.bf16.msra.mxu0 %v1090
  %1507 = vmatprep.subr.bf16.mxu0 0
  %1508 = vmatpush1.bf16.msra.mxu0 %v1091
  %1509 = vmatprep.subr.bf16.mxu0 0
  %1510 = vmatpush1.bf16.msra.mxu0 %v1092
  %1511 = vmatprep.subr.bf16.mxu0 0
  %1512 = vmatpush1.bf16.msra.mxu0 %v1093
  %1513 = vmatprep.subr.bf16.mxu0 0
  %1514 = vmatpush1.bf16.msra.mxu0 %v1094
  %1515 = vmatprep.subr.bf16.mxu0 0
  %1516 = vmatpush1.bf16.msra.mxu0 %v1095
  %1517 = vmatprep.subr.bf16.mxu0 0
  %1518 = vmatpush1.bf16.msra.mxu0 %v1096
  %1519 = vmatprep.subr.bf16.mxu0 0
  %1520 = vmatpush1.bf16.msra.mxu0 %v1097
  %1521 = vmatprep.subr.bf16.mxu0 0
  %1522 = vmatpush1.bf16.msra.mxu0 %v1098
  %1523 = vmatprep.subr.bf16.mxu0 0
  %1524 = vmatpush1.bf16.msra.mxu0 %v1099
  %1525 = vmatprep.subr.bf16.mxu0 0
  %1526 = vmatpush1.bf16.msra.mxu0 %v1100
  %1527 = vmatprep.subr.bf16.mxu0 0
  %1528 = vmatpush1.bf16.msra.mxu0 %v1101
  %1529 = vmatprep.subr.bf16.mxu0 0
  %1530 = vmatpush1.bf16.msra.mxu0 %v1102
  %1531 = vmatprep.subr.bf16.mxu0 0
  %1532 = vmatpush1.bf16.msra.mxu0 %v1103
  %1533 = vmatprep.subr.bf16.mxu0 0
  %1534 = vmatpush1.bf16.msra.mxu0 %v1104
  %1535 = vmatprep.subr.bf16.mxu0 0
  %1536 = vmatpush1.bf16.msra.mxu0 %v1105
  %1537 = vmatprep.mubr.bf16.mxu0 %v625
  %1538 = vmatmul.mubr.bf16.gmra.mrb[0].mxu0 %v624
  %v1539 = vpop.f32.mrb[0].mxu0
  %v1540 = vadd.f32 %v1395, %v1539
  %v1541 = vpop.f32.mrb[0].mxu0
  %v1542 = vpop.f32.mrb[0].mxu0
  %v1543 = vadd.f32 %v1398, %v1542
  %v1544 = vpop.f32.mrb[0].mxu0
  %1545 = vmatprep.mubr.bf16.mxu0 %v633
  %1546 = vmatmul.mubr.bf16.gmra.mrb[0].mxu0 %v632
  %v1547 = vpop.f32.mrb[0].mxu0
  %v1548 = vadd.f32 %v1403, %v1547
  %v1549 = vpop.f32.mrb[0].mxu0
  %v1550 = vpop.f32.mrb[0].mxu0
  %v1551 = vadd.f32 %v1406, %v1550
  %v1552 = vpop.f32.mrb[0].mxu0
  %1553 = vmatprep.mubr.bf16.mxu0 %v641
  %1554 = vmatmul.mubr.bf16.gmra.mrb[0].mxu0 %v640
  %v1555 = vpop.f32.mrb[0].mxu0
  %v1556 = vadd.f32 %v1411, %v1555
  %v1557 = vpop.f32.mrb[0].mxu0
  %v1558 = vpop.f32.mrb[0].mxu0
  %v1559 = vadd.f32 %v1414, %v1558
  %v1560 = vpop.f32.mrb[0].mxu0
  %1561 = vmatprep.mubr.bf16.mxu0 %v649
  %1562 = vmatmul.mubr.bf16.gmra.mrb[0].mxu0 %v648
  %v1563 = vpop.f32.mrb[0].mxu0
  %v1564 = vadd.f32 %v1419, %v1563
  %v1565 = vpop.f32.mrb[0].mxu0
  %v1566 = vpop.f32.mrb[0].mxu0
  %v1567 = vadd.f32 %v1422, %v1566
  %v1568 = vpop.f32.mrb[0].mxu0
  %1569 = vmatprep.mubr.bf16.mxu0 %v657
  %1570 = vmatmul.mubr.bf16.gmra.mrb[0].mxu0 %v656
  %v1571 = vpop.f32.mrb[0].mxu0
  %v1572 = vadd.f32 %v1427, %v1571
  %v1573 = vpop.f32.mrb[0].mxu0
  %v1574 = vpop.f32.mrb[0].mxu0
  %v1575 = vadd.f32 %v1430, %v1574
  %v1576 = vpop.f32.mrb[0].mxu0
  %1577 = vmatprep.mubr.bf16.mxu0 %v665
  %1578 = vmatmul.mubr.bf16.gmra.mrb[0].mxu0 %v664
  %v1579 = vpop.f32.mrb[0].mxu0
  %v1580 = vadd.f32 %v1435, %v1579
  %v1581 = vpop.f32.mrb[0].mxu0
  %v1582 = vpop.f32.mrb[0].mxu0
  %v1583 = vadd.f32 %v1438, %v1582
  %v1584 = vpop.f32.mrb[0].mxu0
  %1585 = vmatprep.mubr.bf16.mxu0 %v673
  %1586 = vmatmul.mubr.bf16.gmra.mrb[0].mxu0 %v672
  %v1587 = vpop.f32.mrb[0].mxu0
  %v1588 = vadd.f32 %v1443, %v1587
  %v1589 = vpop.f32.mrb[0].mxu0
  %v1590 = vpop.f32.mrb[0].mxu0
  %v1591 = vadd.f32 %v1446, %v1590
  %v1592 = vpop.f32.mrb[0].mxu0
  %1593 = vmatprep.mubr.bf16.mxu0 %v681
  %1594 = vmatmul.mubr.bf16.gmra.mrb[0].mxu0 %v680
  %v1595 = vpop.f32.mrb[0].mxu0
  %v1596 = vadd.f32 %v1451, %v1595
  %v1597 = vpop.f32.mrb[0].mxu0
  %v1598 = vpop.f32.mrb[0].mxu0
  %v1599 = vadd.f32 %v1454, %v1598
  %v1600 = vpop.f32.mrb[0].mxu0
  %1601 = vmatprep.mubr.bf16.mxu0 %v689
  %1602 = vmatmul.mubr.bf16.gmra.mrb[0].mxu0 %v688
  %v1603 = vpop.f32.mrb[0].mxu0
  %v1604 = vadd.f32 %v1459, %v1603
  %v1605 = vpop.f32.mrb[0].mxu0
  %v1606 = vpop.f32.mrb[0].mxu0
  %v1607 = vadd.f32 %v1462, %v1606
  %v1608 = vpop.f32.mrb[0].mxu0
  %1609 = vmatprep.mubr.bf16.mxu0 %v697
  %1610 = vmatmul.mubr.bf16.gmra.mrb[0].mxu0 %v696
  %v1611 = vpop.f32.mrb[0].mxu0
  %v1612 = vadd.f32 %v1467, %v1611
  %v1613 = vpop.f32.mrb[0].mxu0
  %v1614 = vpop.f32.mrb[0].mxu0
  %v1615 = vadd.f32 %v1470, %v1614
  %v1616 = vpop.f32.mrb[0].mxu0
  %1617 = vmatprep.mubr.bf16.mxu0 %v705
  %1618 = vmatmul.mubr.bf16.gmra.mrb[0].mxu0 %v704
  %v1619 = vpop.f32.mrb[0].mxu0
  %v1620 = vadd.f32 %v1475, %v1619
  %v1621 = vpop.f32.mrb[0].mxu0
  %v1622 = vpop.f32.mrb[0].mxu0
  %v1623 = vadd.f32 %v1478, %v1622
  %v1624 = vpop.f32.mrb[0].mxu0
  %1625 = vmatprep.mubr.bf16.mxu0 %v713
  %1626 = vmatmul.mubr.bf16.gmra.mrb[0].mxu0 %v712
  %v1627 = vpop.f32.mrb[0].mxu0
  %v1628 = vadd.f32 %v1483, %v1627
  %v1629 = vpop.f32.mrb[0].mxu0
  %v1630 = vpop.f32.mrb[0].mxu0
  %v1631 = vadd.f32 %v1486, %v1630
  %v1632 = vpop.f32.mrb[0].mxu0
  %1633 = vmatprep.mubr.bf16.mxu0 %v721
  %1634 = vmatmul.mubr.bf16.gmra.mrb[0].mxu0 %v720
  %v1635 = vpop.f32.mrb[0].mxu0
  %v1636 = vadd.f32 %v1491, %v1635
  %v1637 = vpop.f32.mrb[0].mxu0
  %v1638 = vpop.f32.mrb[0].mxu0
  %v1639 = vadd.f32 %v1494, %v1638
  %v1640 = vpop.f32.mrb[0].mxu0
  %1641 = vmatprep.mubr.bf16.mxu0 %v729
  %1642 = vmatmul.mubr.bf16.gmra.mrb[0].mxu0 %v728
  %v1643 = vpop.f32.mrb[0].mxu0
  %v1644 = vadd.f32 %v1499, %v1643
  %v1645 = vpop.f32.mrb[0].mxu0
  %v1646 = vpop.f32.mrb[0].mxu0
  %v1647 = vadd.f32 %v1502, %v1646
  %v1648 = vpop.f32.mrb[0].mxu0
  %1649 = vdwg.mxu0
  %1650 = vmatprep.subr.bf16.mxu0 0
  %1651 = vmatpush1.bf16.msra.mxu0 %v1106
  %1652 = vmatprep.subr.bf16.mxu0 0
  %1653 = vmatpush1.bf16.msra.mxu0 %v1107
  %1654 = vmatprep.subr.bf16.mxu0 0
  %1655 = vmatpush1.bf16.msra.mxu0 %v1108
  %1656 = vmatprep.subr.bf16.mxu0 0
  %1657 = vmatpush1.bf16.msra.mxu0 %v1109
  %1658 = vmatprep.subr.bf16.mxu0 0
  %1659 = vmatpush1.bf16.msra.mxu0 %v1110
  %1660 = vmatprep.subr.bf16.mxu0 0
  %1661 = vmatpush1.bf16.msra.mxu0 %v1111
  %1662 = vmatprep.subr.bf16.mxu0 0
  %1663 = vmatpush1.bf16.msra.mxu0 %v1112
  %1664 = vmatprep.subr.bf16.mxu0 0
  %1665 = vmatpush1.bf16.msra.mxu0 %v1113
  %1666 = vmatprep.subr.bf16.mxu0 0
  %1667 = vmatpush1.bf16.msra.mxu0 %v1114
  %1668 = vmatprep.subr.bf16.mxu0 0
  %1669 = vmatpush1.bf16.msra.mxu0 0
  %1670 = vmatprep.subr.bf16.mxu0 0
  %1671 = vmatpush1.bf16.msra.mxu0 0
  %1672 = vmatprep.subr.bf16.mxu0 0
  %1673 = vmatpush1.bf16.msra.mxu0 0
  %1674 = vmatprep.subr.bf16.mxu0 0
  %1675 = vmatpush1.bf16.msra.mxu0 0
  %1676 = vmatprep.subr.bf16.mxu0 0
  %1677 = vmatpush1.bf16.msra.mxu0 0
  %1678 = vmatprep.subr.bf16.mxu0 0
  %1679 = vmatpush1.bf16.msra.mxu0 0
  %1680 = vmatprep.subr.bf16.mxu0 0
  %1681 = vmatpush1.bf16.msra.mxu0 0
  %1682 = vmatprep.mubr.bf16.mxu0 %v1174
  %1683 = vmatmul.mubr.bf16.gmra.mrb[0].mxu0 %v626
  %v1684 = vpop.f32.mrb[0].mxu0
  %v1685 = vadd.f32 %v1540, %v1684
  %v1686 = vpop.f32.mrb[0].mxu0
  %v1687 = vpop.f32.mrb[0].mxu0
  %v1688 = vadd.f32 %v1543, %v1687
  %v1689 = vpop.f32.mrb[0].mxu0
  %1690 = vmatprep.mubr.bf16.mxu0 %v1177
  %1691 = vmatmul.mubr.bf16.gmra.mrb[0].mxu0 %v634
  %v1692 = vpop.f32.mrb[0].mxu0
  %v1693 = vadd.f32 %v1548, %v1692
  %v1694 = vpop.f32.mrb[0].mxu0
  %v1695 = vpop.f32.mrb[0].mxu0
  %v1696 = vadd.f32 %v1551, %v1695
  %v1697 = vpop.f32.mrb[0].mxu0
  %1698 = vmatprep.mubr.bf16.mxu0 %v1180
  %1699 = vmatmul.mubr.bf16.gmra.mrb[0].mxu0 %v642
  %v1700 = vpop.f32.mrb[0].mxu0
  %v1701 = vadd.f32 %v1556, %v1700
  %v1702 = vpop.f32.mrb[0].mxu0
  %v1703 = vpop.f32.mrb[0].mxu0
  %v1704 = vadd.f32 %v1559, %v1703
  %v1705 = vpop.f32.mrb[0].mxu0
  %1706 = vmatprep.mubr.bf16.mxu0 %v1183
  %1707 = vmatmul.mubr.bf16.gmra.mrb[0].mxu0 %v650
  %v1708 = vpop.f32.mrb[0].mxu0
  %v1709 = vadd.f32 %v1564, %v1708
  %v1710 = vpop.f32.mrb[0].mxu0
  %v1711 = vpop.f32.mrb[0].mxu0
  %v1712 = vadd.f32 %v1567, %v1711
  %v1713 = vpop.f32.mrb[0].mxu0
  %1714 = vmatprep.mubr.bf16.mxu0 %v1186
  %1715 = vmatmul.mubr.bf16.gmra.mrb[0].mxu0 %v658
  %v1716 = vpop.f32.mrb[0].mxu0
  %v1717 = vadd.f32 %v1572, %v1716
  %v1718 = vpop.f32.mrb[0].mxu0
  %v1719 = vpop.f32.mrb[0].mxu0
  %v1720 = vadd.f32 %v1575, %v1719
  %v1721 = vpop.f32.mrb[0].mxu0
  %1722 = vmatprep.mubr.bf16.mxu0 %v1189
  %1723 = vmatmul.mubr.bf16.gmra.mrb[0].mxu0 %v666
  %v1724 = vpop.f32.mrb[0].mxu0
  %v1725 = vadd.f32 %v1580, %v1724
  %v1726 = vpop.f32.mrb[0].mxu0
  %v1727 = vpop.f32.mrb[0].mxu0
  %v1728 = vadd.f32 %v1583, %v1727
  %v1729 = vpop.f32.mrb[0].mxu0
  %1730 = vmatprep.mubr.bf16.mxu0 %v1192
  %1731 = vmatmul.mubr.bf16.gmra.mrb[0].mxu0 %v674
  %v1732 = vpop.f32.mrb[0].mxu0
  %v1733 = vadd.f32 %v1588, %v1732
  %v1734 = vpop.f32.mrb[0].mxu0
  %v1735 = vpop.f32.mrb[0].mxu0
  %v1736 = vadd.f32 %v1591, %v1735
  %v1737 = vpop.f32.mrb[0].mxu0
  %1738 = vmatprep.mubr.bf16.mxu0 %v1195
  %1739 = vmatmul.mubr.bf16.gmra.mrb[0].mxu0 %v682
  %v1740 = vpop.f32.mrb[0].mxu0
  %v1741 = vadd.f32 %v1596, %v1740
  %v1742 = vpop.f32.mrb[0].mxu0
  %v1743 = vpop.f32.mrb[0].mxu0
  %v1744 = vadd.f32 %v1599, %v1743
  %v1745 = vpop.f32.mrb[0].mxu0
  %1746 = vmatprep.mubr.bf16.mxu0 %v1198
  %1747 = vmatmul.mubr.bf16.gmra.mrb[0].mxu0 %v690
  %v1748 = vpop.f32.mrb[0].mxu0
  %v1749 = vadd.f32 %v1604, %v1748
  %v1750 = vpop.f32.mrb[0].mxu0
  %v1751 = vpop.f32.mrb[0].mxu0
  %v1752 = vadd.f32 %v1607, %v1751
  %v1753 = vpop.f32.mrb[0].mxu0
  %1754 = vmatprep.mubr.bf16.mxu0 %v1201
  %1755 = vmatmul.mubr.bf16.gmra.mrb[0].mxu0 %v698
  %v1756 = vpop.f32.mrb[0].mxu0
  %v1757 = vadd.f32 %v1612, %v1756
  %v1758 = vpop.f32.mrb[0].mxu0
  %v1759 = vpop.f32.mrb[0].mxu0
  %v1760 = vadd.f32 %v1615, %v1759
  %v1761 = vpop.f32.mrb[0].mxu0
  %1762 = vmatprep.mubr.bf16.mxu0 %v1204
  %1763 = vmatmul.mubr.bf16.gmra.mrb[0].mxu0 %v706
  %v1764 = vpop.f32.mrb[0].mxu0
  %v1765 = vadd.f32 %v1620, %v1764
  %v1766 = vpop.f32.mrb[0].mxu0
  %v1767 = vpop.f32.mrb[0].mxu0
  %v1768 = vadd.f32 %v1623, %v1767
  %v1769 = vpop.f32.mrb[0].mxu0
  %1770 = vmatprep.mubr.bf16.mxu0 %v1207
  %1771 = vmatmul.mubr.bf16.gmra.mrb[0].mxu0 %v714
  %v1772 = vpop.f32.mrb[0].mxu0
  %v1773 = vadd.f32 %v1628, %v1772
  %v1774 = vpop.f32.mrb[0].mxu0
  %v1775 = vpop.f32.mrb[0].mxu0
  %v1776 = vadd.f32 %v1631, %v1775
  %v1777 = vpop.f32.mrb[0].mxu0
  %1778 = vmatprep.mubr.bf16.mxu0 %v1210
  %1779 = vmatmul.mubr.bf16.gmra.mrb[0].mxu0 %v722
  %v1780 = vpop.f32.mrb[0].mxu0
  %v1781 = vadd.f32 %v1636, %v1780
  %v1782 = vpop.f32.mrb[0].mxu0
  %v1783 = vpop.f32.mrb[0].mxu0
  %v1784 = vadd.f32 %v1639, %v1783
  %v1785 = vpop.f32.mrb[0].mxu0
  %1786 = vmatprep.mubr.bf16.mxu0 %v1213
  %1787 = vmatmul.mubr.bf16.gmra.mrb[0].mxu0 %v730
  %v1788 = vpop.f32.mrb[0].mxu0
  %v1789 = vadd.f32 %v1644, %v1788
  %v1790 = vpop.f32.mrb[0].mxu0
  %v1791 = vpop.f32.mrb[0].mxu0
  %v1792 = vadd.f32 %v1647, %v1791
  %v1793 = vpop.f32.mrb[0].mxu0
  %1794 = vdwg.mxu0
  %vm1795 = vcmask 392192
  %1796 = vst.msk [vmem:[#allocation2] sm:$0xff] %vm1795, %v1685
  %1797 = vst.msk [vmem:[#allocation2 + $0x8] sm:$0xff] %vm1795, %v1688
  %1798 = vst.msk [vmem:[#allocation2 + $0x10] sm:$0xff] %vm1795, %v1693
  %1799 = vst.msk [vmem:[#allocation2 + $0x18] sm:$0xff] %vm1795, %v1696
  %1800 = vst.msk [vmem:[#allocation2 + $0x20] sm:$0xff] %vm1795, %v1701
  %1801 = vst.msk [vmem:[#allocation2 + $0x28] sm:$0xff] %vm1795, %v1704
  %1802 = vst.msk [vmem:[#allocation2 + $0x30] sm:$0xff] %vm1795, %v1709
  %1803 = vst.msk [vmem:[#allocation2 + $0x38] sm:$0xff] %vm1795, %v1712
  %1804 = vst.msk [vmem:[#allocation2 + $0x40] sm:$0xff] %vm1795, %v1717
  %1805 = vst.msk [vmem:[#allocation2 + $0x48] sm:$0xff] %vm1795, %v1720
  %1806 = vst.msk [vmem:[#allocation2 + $0x50] sm:$0xff] %vm1795, %v1725
  %1807 = vst.msk [vmem:[#allocation2 + $0x58] sm:$0xff] %vm1795, %v1728
  %1808 = vst.msk [vmem:[#allocation2 + $0x60] sm:$0xff] %vm1795, %v1733
  %1809 = vst.msk [vmem:[#allocation2 + $0x68] sm:$0xff] %vm1795, %v1736
  %1810 = vst.msk [vmem:[#allocation2 + $0x70] sm:$0xff] %vm1795, %v1741
  %1811 = vst.msk [vmem:[#allocation2 + $0x78] sm:$0xff] %vm1795, %v1744
  %1812 = vst.msk [vmem:[#allocation2 + $0x80] sm:$0xff] %vm1795, %v1749
  %1813 = vst.msk [vmem:[#allocation2 + $0x88] sm:$0xff] %vm1795, %v1752
  %1814 = vst.msk [vmem:[#allocation2 + $0x90] sm:$0xff] %vm1795, %v1757
  %1815 = vst.msk [vmem:[#allocation2 + $0x98] sm:$0xff] %vm1795, %v1760
  %1816 = vst.msk [vmem:[#allocation2 + $0xa0] sm:$0xff] %vm1795, %v1765
  %1817 = vst.msk [vmem:[#allocation2 + $0xa8] sm:$0xff] %vm1795, %v1768
  %1818 = vst.msk [vmem:[#allocation2 + $0xb0] sm:$0xff] %vm1795, %v1773
  %1819 = vst.msk [vmem:[#allocation2 + $0xb8] sm:$0xff] %vm1795, %v1776
  %1820 = vst.msk [vmem:[#allocation2 + $0xc0] sm:$0xff] %vm1795, %v1781
  %1821 = vst.msk [vmem:[#allocation2 + $0xc8] sm:$0xff] %vm1795, %v1784
  %1822 = vst.msk [vmem:[#allocation2 + $0xd0] sm:$0xff] %vm1795, %v1789
  %vm1823 = vcmask 388096
  %1824 = vst.msk [vmem:[#allocation2 + $0xd8] sm:$0xf] %vm1823, %v1792
  %v1825 = vld [vmem:[#allocation2] sm:$0xff]
  %v1826 = vld [vmem:[#allocation2 + $0x8] sm:$0xff]
  %v1827 = vld [vmem:[#allocation2 + $0x10] sm:$0xf]
  %1828 = vst.msk [vmem:[#allocation3] sm:$0xff] %vm1795, %v1825
  %1829 = vst.msk [vmem:[#allocation3 + $0x20] sm:$0xff] %vm1795, %v1826
  %1830 = vst.msk [vmem:[#allocation3 + $0x40] sm:$0xf] %vm1823, %v1827
  %v1831 = vld [vmem:[#allocation2 + $0x1] sm:$0xff]
  %v1832 = vld [vmem:[#allocation2 + $0x9] sm:$0xff]
  %v1833 = vld [vmem:[#allocation2 + $0x11] sm:$0xf]
  %1837 = vrot.lane.b32.xlu0 %v1831, 48
  %v1838 = vpop.permute.xlu0 %1837
  %1839 = vrot.lane.b32.xlu0 %v1832, 48
  %v1840 = vpop.permute.xlu0 %1839
  %1841 = vrot.lane.b32.xlu0 %v1833, 48
  %v1842 = vpop.permute.xlu0 %1841
  %vm1846 = vcmask 785792
  %1847 = vst.msk [vmem:[#allocation3] sm:$0xff] %vm1846, %v1838
  %1848 = vst.msk [vmem:[#allocation3 + $0x20] sm:$0xff] %vm1846, %v1840
  %vm1849 = vcmask 781696
  %1850 = vst.msk [vmem:[#allocation3 + $0x40] sm:$0xf] %vm1849, %v1842
  %v1851 = vld [vmem:[#allocation2 + $0x2] sm:$0xff]
  %v1852 = vld [vmem:[#allocation2 + $0xa] sm:$0xff]
  %v1853 = vld [vmem:[#allocation2 + $0x12] sm:$0xf]
  %1857 = vrot.lane.b32.xlu0 %v1851, 96
  %v1858 = vpop.permute.xlu0 %1857
  %1859 = vrot.lane.b32.xlu0 %v1852, 96
  %v1860 = vpop.permute.xlu0 %1859
  %1861 = vrot.lane.b32.xlu0 %v1853, 96
  %v1862 = vpop.permute.xlu0 %1861
  %vm1866 = vcmask 1048320
  %1867 = vst.msk [vmem:[#allocation3] sm:$0xff] %vm1866, %v1858
  %1868 = vst.msk [vmem:[#allocation3 + $0x8] sm:$0xff] %vm1172, %v1858
  %1869 = vst.msk [vmem:[#allocation3 + $0x20] sm:$0xff] %vm1866, %v1860
  %1870 = vst.msk [vmem:[#allocation3 + $0x28] sm:$0xff] %vm1172, %v1860
  %vm1871 = vcmask 1044224
  %1872 = vst.msk [vmem:[#allocation3 + $0x40] sm:$0xf] %vm1871, %v1862
  %vm1873 = vcmask 125952
  %1874 = vst.msk [vmem:[#allocation3 + $0x48] sm:$0xf] %vm1873, %v1862
  %v1875 = vld [vmem:[#allocation2 + $0x16] sm:$0xff]
  %v1876 = vld [vmem:[#allocation2 + $0x1e] sm:$0xff]
  %v1877 = vld [vmem:[#allocation2 + $0x26] sm:$0xf]
  %1881 = vrot.lane.b32.xlu0 %v1875, 16
  %v1882 = vpop.permute.xlu0 %1881
  %1883 = vrot.lane.b32.xlu0 %v1876, 16
  %v1884 = vpop.permute.xlu0 %1883
  %1885 = vrot.lane.b32.xlu0 %v1877, 16
  %v1886 = vpop.permute.xlu0 %1885
  %vm1890 = vcmask 523392
  %1891 = vst.msk [vmem:[#allocation3 + $0x8] sm:$0xff] %vm1890, %v1882
  %1892 = vst.msk [vmem:[#allocation3 + $0x28] sm:$0xff] %vm1890, %v1884
  %vm1893 = vcmask 519296
  %1894 = vst.msk [vmem:[#allocation3 + $0x48] sm:$0xf] %vm1893, %v1886
  %v1895 = vld [vmem:[#allocation2 + $0x17] sm:$0xff]
  %v1896 = vld [vmem:[#allocation2 + $0x1f] sm:$0xff]
  %v1897 = vld [vmem:[#allocation2 + $0x27] sm:$0xf]
  %1901 = vrot.lane.b32.xlu0 %v1895, 64
  %v1902 = vpop.permute.xlu0 %1901
  %1903 = vrot.lane.b32.xlu0 %v1896, 64
  %v1904 = vpop.permute.xlu0 %1903
  %1905 = vrot.lane.b32.xlu0 %v1897, 64
  %v1906 = vpop.permute.xlu0 %1905
  %vm1910 = vcmask 916992
  %1911 = vst.msk [vmem:[#allocation3 + $0x8] sm:$0xff] %vm1910, %v1902
  %1912 = vst.msk [vmem:[#allocation3 + $0x28] sm:$0xff] %vm1910, %v1904
  %vm1913 = vcmask 912896
  %1914 = vst.msk [vmem:[#allocation3 + $0x48] sm:$0xf] %vm1913, %v1906
  %v1915 = vld [vmem:[#allocation2 + $0x18] sm:$0xff]
  %v1916 = vld [vmem:[#allocation2 + $0x20] sm:$0xff]
  %v1917 = vld [vmem:[#allocation2 + $0x28] sm:$0xf]
  %1921 = vrot.lane.b32.xlu0 %v1915, 112
  %v1922 = vpop.permute.xlu0 %1921
  %1923 = vrot.lane.b32.xlu0 %v1916, 112
  %v1924 = vpop.permute.xlu0 %1923
  %1925 = vrot.lane.b32.xlu0 %v1917, 112
  %v1926 = vpop.permute.xlu0 %1925
  %vm1930 = vcmask 1048448
  %1931 = vst.msk [vmem:[#allocation3 + $0x8] sm:$0xff] %vm1930, %v1922
  %vm1932 = vcmask 261120
  %1933 = vst.msk [vmem:[#allocation3 + $0x10] sm:$0xff] %vm1932, %v1922
  %1934 = vst.msk [vmem:[#allocation3 + $0x28] sm:$0xff] %vm1930, %v1924
  %1935 = vst.msk [vmem:[#allocation3 + $0x30] sm:$0xff] %vm1932, %v1924
  %vm1936 = vcmask 1044352
  %1937 = vst.msk [vmem:[#allocation3 + $0x48] sm:$0xf] %vm1936, %v1926
  %vm1938 = vcmask 257024
  %1939 = vst.msk [vmem:[#allocation3 + $0x50] sm:$0xf] %vm1938, %v1926
  %v1940 = vld [vmem:[#allocation2 + $0x2c] sm:$0xff]
  %v1941 = vld [vmem:[#allocation2 + $0x34] sm:$0xff]
  %v1942 = vld [vmem:[#allocation2 + $0x3c] sm:$0xf]
  %1946 = vrot.lane.b32.xlu0 %v1940, 32
  %v1947 = vpop.permute.xlu0 %1946
  %1948 = vrot.lane.b32.xlu0 %v1941, 32
  %v1949 = vpop.permute.xlu0 %1948
  %1950 = vrot.lane.b32.xlu0 %v1942, 32
  %v1951 = vpop.permute.xlu0 %1950
  %vm1955 = vcmask 654592
  %1956 = vst.msk [vmem:[#allocation3 + $0x10] sm:$0xff] %vm1955, %v1947
  %1957 = vst.msk [vmem:[#allocation3 + $0x30] sm:$0xff] %vm1955, %v1949
  %vm1958 = vcmask 650496
  %1959 = vst.msk [vmem:[#allocation3 + $0x50] sm:$0xf] %vm1958, %v1951
  %v1960 = vld [vmem:[#allocation2 + $0x2d] sm:$0xff]
  %v1961 = vld [vmem:[#allocation2 + $0x35] sm:$0xff]
  %v1962 = vld [vmem:[#allocation2 + $0x3d] sm:$0xf]
  %1966 = vrot.lane.b32.xlu0 %v1960, 80
  %v1967 = vpop.permute.xlu0 %1966
  %1968 = vrot.lane.b32.xlu0 %v1961, 80
  %v1969 = vpop.permute.xlu0 %1968
  %1970 = vrot.lane.b32.xlu0 %v1962, 80
  %v1971 = vpop.permute.xlu0 %1970
  %vm1975 = vcmask 1048192
  %1976 = vst.msk [vmem:[#allocation3 + $0x10] sm:$0xff] %vm1975, %v1967
  %1977 = vst.msk [vmem:[#allocation3 + $0x30] sm:$0xff] %vm1975, %v1969
  %vm1978 = vcmask 1044096
  %1979 = vst.msk [vmem:[#allocation3 + $0x50] sm:$0xf] %vm1978, %v1971
  %v1980 = vld [vmem:[#allocation2 + $0x2e] sm:$0xff]
  %v1981 = vld [vmem:[#allocation2 + $0x36] sm:$0xff]
  %v1982 = vld [vmem:[#allocation2 + $0x3e] sm:$0xf]
  %1983 = vst.msk [vmem:[#allocation3 + $0x18] sm:$0xff] %vm1795, %v1980
  %1984 = vst.msk [vmem:[#allocation3 + $0x38] sm:$0xff] %vm1795, %v1981
  %1985 = vst.msk [vmem:[#allocation3 + $0x58] sm:$0xf] %vm1823, %v1982
  %v1986 = vld [vmem:[#allocation2 + $0x16] sm:$0xff]
  %v1987 = vld [vmem:[#allocation2 + $0x1e] sm:$0xff]
  %v1988 = vld [vmem:[#allocation2 + $0x26] sm:$0xf]
  %vm1992 = vcmask 1043456
  %v1993 = vrot.slane %v1986, 4
  %v1994 = vrot.slane %v1987, 4
  %v1995 = vsel %vm1992, %v1993, %v1994
  %v1996 = vrot.slane %v1988, 4
  %v1997 = vsel %vm1992, %v1994, %v1996
  %vm2001 = vcmask 392196
  %2002 = vst.msk [vmem:[#allocation3 + $0x40] sm:$0xf0] %vm2001, %v1993
  %2003 = vst.msk [vmem:[#allocation3 + $0x60] sm:$0xff] %vm1795, %v1995
  %2004 = vst.msk [vmem:[#allocation3 + $0x80] sm:$0xff] %vm1795, %v1997
  %v2005 = vld [vmem:[#allocation2 + $0x17] sm:$0xff]
  %v2006 = vld [vmem:[#allocation2 + $0x1f] sm:$0xff]
  %v2007 = vld [vmem:[#allocation2 + $0x27] sm:$0xf]
  %v2011 = vrot.slane %v2005, 4
  %v2012 = vrot.slane %v2006, 4
  %v2013 = vsel %vm1992, %v2011, %v2012
  %v2014 = vrot.slane %v2007, 4
  %v2015 = vsel %vm1992, %v2012, %v2014
  %2016 = vrot.lane.b32.xlu0 %v2011, 48
  %v2017 = vpop.permute.xlu0 %2016
  %2018 = vrot.lane.b32.xlu0 %v2013, 48
  %v2019 = vpop.permute.xlu0 %2018
  %2020 = vrot.lane.b32.xlu0 %v2015, 48
  %v2021 = vpop.permute.xlu0 %2020
  %vm2025 = vcmask 785796
  %2026 = vst.msk [vmem:[#allocation3 + $0x40] sm:$0xf0] %vm2025, %v2017
  %2027 = vst.msk [vmem:[#allocation3 + $0x60] sm:$0xff] %vm1846, %v2019
  %2028 = vst.msk [vmem:[#allocation3 + $0x80] sm:$0xff] %vm1846, %v2021
  %v2029 = vld [vmem:[#allocation2 + $0x18] sm:$0xff]
  %v2030 = vld [vmem:[#allocation2 + $0x20] sm:$0xff]
  %v2031 = vld [vmem:[#allocation2 + $0x28] sm:$0xf]
  %v2035 = vrot.slane %v2029, 4
  %v2036 = vrot.slane %v2030, 4
  %v2037 = vsel %vm1992, %v2035, %v2036
  %v2038 = vrot.slane %v2031, 4
  %v2039 = vsel %vm1992, %v2036, %v2038
  %2040 = vrot.lane.b32.xlu0 %v2035, 96
  %v2041 = vpop.permute.xlu0 %2040
  %2042 = vrot.lane.b32.xlu0 %v2037, 96
  %v2043 = vpop.permute.xlu0 %2042
  %2044 = vrot.lane.b32.xlu0 %v2039, 96
  %v2045 = vpop.permute.xlu0 %2044
  %vm2049 = vcmask 1048324
  %2050 = vst.msk [vmem:[#allocation3 + $0x40] sm:$0xf0] %vm2049, %v2041
  %vm2051 = vcmask 130052
  %2052 = vst.msk [vmem:[#allocation3 + $0x48] sm:$0xf0] %vm2051, %v2041
  %2053 = vst.msk [vmem:[#allocation3 + $0x60] sm:$0xff] %vm1866, %v2043
  %2054 = vst.msk [vmem:[#allocation3 + $0x68] sm:$0xff] %vm1172, %v2043
  %2055 = vst.msk [vmem:[#allocation3 + $0x80] sm:$0xff] %vm1866, %v2045
  %2056 = vst.msk [vmem:[#allocation3 + $0x88] sm:$0xff] %vm1172, %v2045
  %v2057 = vld [vmem:[#allocation2 + $0x2c] sm:$0xff]
  %v2058 = vld [vmem:[#allocation2 + $0x34] sm:$0xff]
  %v2059 = vld [vmem:[#allocation2 + $0x3c] sm:$0xf]
  %v2063 = vrot.slane %v2057, 4
  %v2064 = vrot.slane %v2058, 4
  %v2065 = vsel %vm1992, %v2063, %v2064
  %v2066 = vrot.slane %v2059, 4
  %v2067 = vsel %vm1992, %v2064, %v2066
  %2068 = vrot.lane.b32.xlu0 %v2063, 16
  %v2069 = vpop.permute.xlu0 %2068
  %2070 = vrot.lane.b32.xlu0 %v2065, 16
  %v2071 = vpop.permute.xlu0 %2070
  %2072 = vrot.lane.b32.xlu0 %v2067, 16
  %v2073 = vpop.permute.xlu0 %2072
  %vm2077 = vcmask 523396
  %2078 = vst.msk [vmem:[#allocation3 + $0x48] sm:$0xf0] %vm2077, %v2069
  %2079 = vst.msk [vmem:[#allocation3 + $0x68] sm:$0xff] %vm1890, %v2071
  %2080 = vst.msk [vmem:[#allocation3 + $0x88] sm:$0xff] %vm1890, %v2073
  %v2081 = vld [vmem:[#allocation2 + $0x2d] sm:$0xff]
  %v2082 = vld [vmem:[#allocation2 + $0x35] sm:$0xff]
  %v2083 = vld [vmem:[#allocation2 + $0x3d] sm:$0xf]
  %v2087 = vrot.slane %v2081, 4
  %v2088 = vrot.slane %v2082, 4
  %v2089 = vsel %vm1992, %v2087, %v2088
  %v2090 = vrot.slane %v2083, 4
  %v2091 = vsel %vm1992, %v2088, %v2090
  %2092 = vrot.lane.b32.xlu0 %v2087, 64
  %v2093 = vpop.permute.xlu0 %2092
  %2094 = vrot.lane.b32.xlu0 %v2089, 64
  %v2095 = vpop.permute.xlu0 %2094
  %2096 = vrot.lane.b32.xlu0 %v2091, 64
  %v2097 = vpop.permute.xlu0 %2096
  %vm2101 = vcmask 916996
  %2102 = vst.msk [vmem:[#allocation3 + $0x48] sm:$0xf0] %vm2101, %v2093
  %2103 = vst.msk [vmem:[#allocation3 + $0x68] sm:$0xff] %vm1910, %v2095
  %2104 = vst.msk [vmem:[#allocation3 + $0x88] sm:$0xff] %vm1910, %v2097
  %v2105 = vld [vmem:[#allocation2 + $0x2e] sm:$0xff]
  %v2106 = vld [vmem:[#allocation2 + $0x36] sm:$0xff]
  %v2107 = vld [vmem:[#allocation2 + $0x3e] sm:$0xf]
  %v2111 = vrot.slane %v2105, 4
  %v2112 = vrot.slane %v2106, 4
  %v2113 = vsel %vm1992, %v2111, %v2112
  %v2114 = vrot.slane %v2107, 4
  %v2115 = vsel %vm1992, %v2112, %v2114
  %2116 = vrot.lane.b32.xlu0 %v2111, 112
  %v2117 = vpop.permute.xlu0 %2116
  %2118 = vrot.lane.b32.xlu0 %v2113, 112
  %v2119 = vpop.permute.xlu0 %2118
  %2120 = vrot.lane.b32.xlu0 %v2115, 112
  %v2121 = vpop.permute.xlu0 %2120
  %vm2125 = vcmask 1048452
  %2126 = vst.msk [vmem:[#allocation3 + $0x48] sm:$0xf0] %vm2125, %v2117
  %vm2127 = vcmask 261124
  %2128 = vst.msk [vmem:[#allocation3 + $0x50] sm:$0xf0] %vm2127, %v2117
  %2129 = vst.msk [vmem:[#allocation3 + $0x68] sm:$0xff] %vm1930, %v2119
  %2130 = vst.msk [vmem:[#allocation3 + $0x70] sm:$0xff] %vm1932, %v2119
  %2131 = vst.msk [vmem:[#allocation3 + $0x88] sm:$0xff] %vm1930, %v2121
  %2132 = vst.msk [vmem:[#allocation3 + $0x90] sm:$0xff] %vm1932, %v2121
  %v2133 = vld [vmem:[#allocation2 + $0x42] sm:$0xff]
  %v2134 = vld [vmem:[#allocation2 + $0x4a] sm:$0xff]
  %v2135 = vld [vmem:[#allocation2 + $0x52] sm:$0xf]
  %v2139 = vrot.slane %v2133, 4
  %v2140 = vrot.slane %v2134, 4
  %v2141 = vsel %vm1992, %v2139, %v2140
  %v2142 = vrot.slane %v2135, 4
  %v2143 = vsel %vm1992, %v2140, %v2142
  %2144 = vrot.lane.b32.xlu0 %v2139, 32
  %v2145 = vpop.permute.xlu0 %2144
  %2146 = vrot.lane.b32.xlu0 %v2141, 32
  %v2147 = vpop.permute.xlu0 %2146
  %2148 = vrot.lane.b32.xlu0 %v2143, 32
  %v2149 = vpop.permute.xlu0 %2148
  %vm2153 = vcmask 654596
  %2154 = vst.msk [vmem:[#allocation3 + $0x50] sm:$0xf0] %vm2153, %v2145
  %2155 = vst.msk [vmem:[#allocation3 + $0x70] sm:$0xff] %vm1955, %v2147
  %2156 = vst.msk [vmem:[#allocation3 + $0x90] sm:$0xff] %vm1955, %v2149
  %v2157 = vld [vmem:[#allocation2 + $0x43] sm:$0xff]
  %v2158 = vld [vmem:[#allocation2 + $0x4b] sm:$0xff]
  %v2159 = vld [vmem:[#allocation2 + $0x53] sm:$0xf]
  %v2163 = vrot.slane %v2157, 4
  %v2164 = vrot.slane %v2158, 4
  %v2165 = vsel %vm1992, %v2163, %v2164
  %v2166 = vrot.slane %v2159, 4
  %v2167 = vsel %vm1992, %v2164, %v2166
  %2168 = vrot.lane.b32.xlu0 %v2163, 80
  %v2169 = vpop.permute.xlu0 %2168
  %2170 = vrot.lane.b32.xlu0 %v2165, 80
  %v2171 = vpop.permute.xlu0 %2170
  %2172 = vrot.lane.b32.xlu0 %v2167, 80
  %v2173 = vpop.permute.xlu0 %2172
  %vm2177 = vcmask 1048196
  %2178 = vst.msk [vmem:[#allocation3 + $0x50] sm:$0xf0] %vm2177, %v2169
  %2179 = vst.msk [vmem:[#allocation3 + $0x70] sm:$0xff] %vm1975, %v2171
  %2180 = vst.msk [vmem:[#allocation3 + $0x90] sm:$0xff] %vm1975, %v2173
  %v2181 = vld [vmem:[#allocation2 + $0x44] sm:$0xff]
  %v2182 = vld [vmem:[#allocation2 + $0x4c] sm:$0xff]
  %v2183 = vld [vmem:[#allocation2 + $0x54] sm:$0xf]
  %v2187 = vrot.slane %v2181, 4
  %v2188 = vrot.slane %v2182, 4
  %v2189 = vsel %vm1992, %v2187, %v2188
  %v2190 = vrot.slane %v2183, 4
  %v2191 = vsel %vm1992, %v2188, %v2190
  %2195 = vst.msk [vmem:[#allocation3 + $0x58] sm:$0xf0] %vm2001, %v2187
  %2196 = vst.msk [vmem:[#allocation3 + $0x78] sm:$0xff] %vm1795, %v2189
  %2197 = vst.msk [vmem:[#allocation3 + $0x98] sm:$0xff] %vm1795, %v2191
  %v2198 = vld [vmem:[#allocation2 + $0x2c] sm:$0xff]
  %v2199 = vld [vmem:[#allocation2 + $0x34] sm:$0xff]
  %v2200 = vld [vmem:[#allocation2 + $0x3c] sm:$0xf]
  %2201 = vst.msk [vmem:[#allocation3 + $0xa0] sm:$0xff] %vm1795, %v2198
  %2202 = vst.msk [vmem:[#allocation3 + $0xc0] sm:$0xff] %vm1795, %v2199
  %2203 = vst.msk [vmem:[#allocation3 + $0xe0] sm:$0xf] %vm1823, %v2200
  %v2204 = vld [vmem:[#allocation2 + $0x2d] sm:$0xff]
  %v2205 = vld [vmem:[#allocation2 + $0x35] sm:$0xff]
  %v2206 = vld [vmem:[#allocation2 + $0x3d] sm:$0xf]
  %2210 = vrot.lane.b32.xlu0 %v2204, 48
  %v2211 = vpop.permute.xlu0 %2210
  %2212 = vrot.lane.b32.xlu0 %v2205, 48
  %v2213 = vpop.permute.xlu0 %2212
  %2214 = vrot.lane.b32.xlu0 %v2206, 48
  %v2215 = vpop.permute.xlu0 %2214
  %2219 = vst.msk [vmem:[#allocation3 + $0xa0] sm:$0xff] %vm1846, %v2211
  %2220 = vst.msk [vmem:[#allocation3 + $0xc0] sm:$0xff] %vm1846, %v2213
  %2221 = vst.msk [vmem:[#allocation3 + $0xe0] sm:$0xf] %vm1849, %v2215
  %v2222 = vld [vmem:[#allocation2 + $0x2e] sm:$0xff]
  %v2223 = vld [vmem:[#allocation2 + $0x36] sm:$0xff]
  %v2224 = vld [vmem:[#allocation2 + $0x3e] sm:$0xf]
  %2228 = vrot.lane.b32.xlu0 %v2222, 96
  %v2229 = vpop.permute.xlu0 %2228
  %2230 = vrot.lane.b32.xlu0 %v2223, 96
  %v2231 = vpop.permute.xlu0 %2230
  %2232 = vrot.lane.b32.xlu0 %v2224, 96
  %v2233 = vpop.permute.xlu0 %2232
  %2237 = vst.msk [vmem:[#allocation3 + $0xa0] sm:$0xff] %vm1866, %v2229
  %2238 = vst.msk [vmem:[#allocation3 + $0xa8] sm:$0xff] %vm1172, %v2229
  %2239 = vst.msk [vmem:[#allocation3 + $0xc0] sm:$0xff] %vm1866, %v2231
  %2240 = vst.msk [vmem:[#allocation3 + $0xc8] sm:$0xff] %vm1172, %v2231
  %2241 = vst.msk [vmem:[#allocation3 + $0xe0] sm:$0xf] %vm1871, %v2233
  %2242 = vst.msk [vmem:[#allocation3 + $0xe8] sm:$0xf] %vm1873, %v2233
  %v2243 = vld [vmem:[#allocation2 + $0x42] sm:$0xff]
  %v2244 = vld [vmem:[#allocation2 + $0x4a] sm:$0xff]
  %v2245 = vld [vmem:[#allocation2 + $0x52] sm:$0xf]
  %2249 = vrot.lane.b32.xlu0 %v2243, 16
  %v2250 = vpop.permute.xlu0 %2249
  %2251 = vrot.lane.b32.xlu0 %v2244, 16
  %v2252 = vpop.permute.xlu0 %2251
  %2253 = vrot.lane.b32.xlu0 %v2245, 16
  %v2254 = vpop.permute.xlu0 %2253
  %2258 = vst.msk [vmem:[#allocation3 + $0xa8] sm:$0xff] %vm1890, %v2250
  %2259 = vst.msk [vmem:[#allocation3 + $0xc8] sm:$0xff] %vm1890, %v2252
  %2260 = vst.msk [vmem:[#allocation3 + $0xe8] sm:$0xf] %vm1893, %v2254
  %v2261 = vld [vmem:[#allocation2 + $0x43] sm:$0xff]
  %v2262 = vld [vmem:[#allocation2 + $0x4b] sm:$0xff]
  %v2263 = vld [vmem:[#allocation2 + $0x53] sm:$0xf]
  %2267 = vrot.lane.b32.xlu0 %v2261, 64
  %v2268 = vpop.permute.xlu0 %2267
  %2269 = vrot.lane.b32.xlu0 %v2262, 64
  %v2270 = vpop.permute.xlu0 %2269
  %2271 = vrot.lane.b32.xlu0 %v2263, 64
  %v2272 = vpop.permute.xlu0 %2271
  %2276 = vst.msk [vmem:[#allocation3 + $0xa8] sm:$0xff] %vm1910, %v2268
  %2277 = vst.msk [vmem:[#allocation3 + $0xc8] sm:$0xff] %vm1910, %v2270
  %2278 = vst.msk [vmem:[#allocation3 + $0xe8] sm:$0xf] %vm1913, %v2272
  %v2279 = vld [vmem:[#allocation2 + $0x44] sm:$0xff]
  %v2280 = vld [vmem:[#allocation2 + $0x4c] sm:$0xff]
  %v2281 = vld [vmem:[#allocation2 + $0x54] sm:$0xf]
  %2285 = vrot.lane.b32.xlu0 %v2279, 112
  %v2286 = vpop.permute.xlu0 %2285
  %2287 = vrot.lane.b32.xlu0 %v2280, 112
  %v2288 = vpop.permute.xlu0 %2287
  %2289 = vrot.lane.b32.xlu0 %v2281, 112
  %v2290 = vpop.permute.xlu0 %2289
  %2294 = vst.msk [vmem:[#allocation3 + $0xa8] sm:$0xff] %vm1930, %v2286
  %2295 = vst.msk [vmem:[#allocation3 + $0xb0] sm:$0xff] %vm1932, %v2286
  %2296 = vst.msk [vmem:[#allocation3 + $0xc8] sm:$0xff] %vm1930, %v2288
  %2297 = vst.msk [vmem:[#allocation3 + $0xd0] sm:$0xff] %vm1932, %v2288
  %2298 = vst.msk [vmem:[#allocation3 + $0xe8] sm:$0xf] %vm1936, %v2290
  %2299 = vst.msk [vmem:[#allocation3 + $0xf0] sm:$0xf] %vm1938, %v2290
  %v2300 = vld [vmem:[#allocation2 + $0x58] sm:$0xff]
  %v2301 = vld [vmem:[#allocation2 + $0x60] sm:$0xff]
  %v2302 = vld [vmem:[#allocation2 + $0x68] sm:$0xf]
  %2306 = vrot.lane.b32.xlu0 %v2300, 32
  %v2307 = vpop.permute.xlu0 %2306
  %2308 = vrot.lane.b32.xlu0 %v2301, 32
  %v2309 = vpop.permute.xlu0 %2308
  %2310 = vrot.lane.b32.xlu0 %v2302, 32
  %v2311 = vpop.permute.xlu0 %2310
  %2315 = vst.msk [vmem:[#allocation3 + $0xb0] sm:$0xff] %vm1955, %v2307
  %2316 = vst.msk [vmem:[#allocation3 + $0xd0] sm:$0xff] %vm1955, %v2309
  %2317 = vst.msk [vmem:[#allocation3 + $0xf0] sm:$0xf] %vm1958, %v2311
  %v2318 = vld [vmem:[#allocation2 + $0x59] sm:$0xff]
  %v2319 = vld [vmem:[#allocation2 + $0x61] sm:$0xff]
  %v2320 = vld [vmem:[#allocation2 + $0x69] sm:$0xf]
  %2324 = vrot.lane.b32.xlu0 %v2318, 80
  %v2325 = vpop.permute.xlu0 %2324
  %2326 = vrot.lane.b32.xlu0 %v2319, 80
  %v2327 = vpop.permute.xlu0 %2326
  %2328 = vrot.lane.b32.xlu0 %v2320, 80
  %v2329 = vpop.permute.xlu0 %2328
  %2333 = vst.msk [vmem:[#allocation3 + $0xb0] sm:$0xff] %vm1975, %v2325
  %2334 = vst.msk [vmem:[#allocation3 + $0xd0] sm:$0xff] %vm1975, %v2327
  %2335 = vst.msk [vmem:[#allocation3 + $0xf0] sm:$0xf] %vm1978, %v2329
  %v2336 = vld [vmem:[#allocation2 + $0x5a] sm:$0xff]
  %v2337 = vld [vmem:[#allocation2 + $0x62] sm:$0xff]
  %v2338 = vld [vmem:[#allocation2 + $0x6a] sm:$0xf]
  %2339 = vst.msk [vmem:[#allocation3 + $0xb8] sm:$0xff] %vm1795, %v2336
  %2340 = vst.msk [vmem:[#allocation3 + $0xd8] sm:$0xff] %vm1795, %v2337
  %2341 = vst.msk [vmem:[#allocation3 + $0xf8] sm:$0xf] %vm1823, %v2338
  %v2342 = vld [vmem:[#allocation2 + $0x6e] sm:$0xff]
  %v2343 = vld [vmem:[#allocation2 + $0x76] sm:$0xff]
  %v2344 = vld [vmem:[#allocation2 + $0x7e] sm:$0xf]
  %v2348 = vrot.slane %v2342, 4
  %v2349 = vrot.slane %v2343, 4
  %v2350 = vsel %vm1992, %v2348, %v2349
  %v2351 = vrot.slane %v2344, 4
  %v2352 = vsel %vm1992, %v2349, %v2351
  %2356 = vst.msk [vmem:[#allocation3 + $0xe0] sm:$0xf0] %vm2001, %v2348
  %2357 = vst.msk [vmem:[#allocation3 + $0x100] sm:$0xff] %vm1795, %v2350
  %2358 = vst.msk [vmem:[#allocation3 + $0x120] sm:$0xff] %vm1795, %v2352
  %v2359 = vld [vmem:[#allocation2 + $0x6f] sm:$0xff]
  %v2360 = vld [vmem:[#allocation2 + $0x77] sm:$0xff]
  %v2361 = vld [vmem:[#allocation2 + $0x7f] sm:$0xf]
  %v2365 = vrot.slane %v2359, 4
  %v2366 = vrot.slane %v2360, 4
  %v2367 = vsel %vm1992, %v2365, %v2366
  %v2368 = vrot.slane %v2361, 4
  %v2369 = vsel %vm1992, %v2366, %v2368
  %2370 = vrot.lane.b32.xlu0 %v2365, 48
  %v2371 = vpop.permute.xlu0 %2370
  %2372 = vrot.lane.b32.xlu0 %v2367, 48
  %v2373 = vpop.permute.xlu0 %2372
  %2374 = vrot.lane.b32.xlu0 %v2369, 48
  %v2375 = vpop.permute.xlu0 %2374
  %2379 = vst.msk [vmem:[#allocation3 + $0xe0] sm:$0xf0] %vm2025, %v2371
  %2380 = vst.msk [vmem:[#allocation3 + $0x100] sm:$0xff] %vm1846, %v2373
  %2381 = vst.msk [vmem:[#allocation3 + $0x120] sm:$0xff] %vm1846, %v2375
  %v2382 = vld [vmem:[#allocation2 + $0x70] sm:$0xff]
  %v2383 = vld [vmem:[#allocation2 + $0x78] sm:$0xff]
  %v2384 = vld [vmem:[#allocation2 + $0x80] sm:$0xf]
  %v2388 = vrot.slane %v2382, 4
  %v2389 = vrot.slane %v2383, 4
  %v2390 = vsel %vm1992, %v2388, %v2389
  %v2391 = vrot.slane %v2384, 4
  %v2392 = vsel %vm1992, %v2389, %v2391
  %2393 = vrot.lane.b32.xlu0 %v2388, 96
  %v2394 = vpop.permute.xlu0 %2393
  %2395 = vrot.lane.b32.xlu0 %v2390, 96
  %v2396 = vpop.permute.xlu0 %2395
  %2397 = vrot.lane.b32.xlu0 %v2392, 96
  %v2398 = vpop.permute.xlu0 %2397
  %2402 = vst.msk [vmem:[#allocation3 + $0xe0] sm:$0xf0] %vm2049, %v2394
  %2403 = vst.msk [vmem:[#allocation3 + $0xe8] sm:$0xf0] %vm2051, %v2394
  %2404 = vst.msk [vmem:[#allocation3 + $0x100] sm:$0xff] %vm1866, %v2396
  %2405 = vst.msk [vmem:[#allocation3 + $0x108] sm:$0xff] %vm1172, %v2396
  %2406 = vst.msk [vmem:[#allocation3 + $0x120] sm:$0xff] %vm1866, %v2398
  %2407 = vst.msk [vmem:[#allocation3 + $0x128] sm:$0xff] %vm1172, %v2398
  %v2408 = vld [vmem:[#allocation2 + $0x84] sm:$0xff]
  %v2409 = vld [vmem:[#allocation2 + $0x8c] sm:$0xff]
  %v2410 = vld [vmem:[#allocation2 + $0x94] sm:$0xf]
  %v2414 = vrot.slane %v2408, 4
  %v2415 = vrot.slane %v2409, 4
  %v2416 = vsel %vm1992, %v2414, %v2415
  %v2417 = vrot.slane %v2410, 4
  %v2418 = vsel %vm1992, %v2415, %v2417
  %2419 = vrot.lane.b32.xlu0 %v2414, 16
  %v2420 = vpop.permute.xlu0 %2419
  %2421 = vrot.lane.b32.xlu0 %v2416, 16
  %v2422 = vpop.permute.xlu0 %2421
  %2423 = vrot.lane.b32.xlu0 %v2418, 16
  %v2424 = vpop.permute.xlu0 %2423
  %2428 = vst.msk [vmem:[#allocation3 + $0xe8] sm:$0xf0] %vm2077, %v2420
  %2429 = vst.msk [vmem:[#allocation3 + $0x108] sm:$0xff] %vm1890, %v2422
  %2430 = vst.msk [vmem:[#allocation3 + $0x128] sm:$0xff] %vm1890, %v2424
  %v2431 = vld [vmem:[#allocation2 + $0x85] sm:$0xff]
  %v2432 = vld [vmem:[#allocation2 + $0x8d] sm:$0xff]
  %v2433 = vld [vmem:[#allocation2 + $0x95] sm:$0xf]
  %v2437 = vrot.slane %v2431, 4
  %v2438 = vrot.slane %v2432, 4
  %v2439 = vsel %vm1992, %v2437, %v2438
  %v2440 = vrot.slane %v2433, 4
  %v2441 = vsel %vm1992, %v2438, %v2440
  %2442 = vrot.lane.b32.xlu0 %v2437, 64
  %v2443 = vpop.permute.xlu0 %2442
  %2444 = vrot.lane.b32.xlu0 %v2439, 64
  %v2445 = vpop.permute.xlu0 %2444
  %2446 = vrot.lane.b32.xlu0 %v2441, 64
  %v2447 = vpop.permute.xlu0 %2446
  %2451 = vst.msk [vmem:[#allocation3 + $0xe8] sm:$0xf0] %vm2101, %v2443
  %2452 = vst.msk [vmem:[#allocation3 + $0x108] sm:$0xff] %vm1910, %v2445
  %2453 = vst.msk [vmem:[#allocation3 + $0x128] sm:$0xff] %vm1910, %v2447
  %v2454 = vld [vmem:[#allocation2 + $0x86] sm:$0xff]
  %v2455 = vld [vmem:[#allocation2 + $0x8e] sm:$0xff]
  %v2456 = vld [vmem:[#allocation2 + $0x96] sm:$0xf]
  %v2460 = vrot.slane %v2454, 4
  %v2461 = vrot.slane %v2455, 4
  %v2462 = vsel %vm1992, %v2460, %v2461
  %v2463 = vrot.slane %v2456, 4
  %v2464 = vsel %vm1992, %v2461, %v2463
  %2465 = vrot.lane.b32.xlu0 %v2460, 112
  %v2466 = vpop.permute.xlu0 %2465
  %2467 = vrot.lane.b32.xlu0 %v2462, 112
  %v2468 = vpop.permute.xlu0 %2467
  %2469 = vrot.lane.b32.xlu0 %v2464, 112
  %v2470 = vpop.permute.xlu0 %2469
  %2474 = vst.msk [vmem:[#allocation3 + $0xe8] sm:$0xf0] %vm2125, %v2466
  %2475 = vst.msk [vmem:[#allocation3 + $0xf0] sm:$0xf0] %vm2127, %v2466
  %2476 = vst.msk [vmem:[#allocation3 + $0x108] sm:$0xff] %vm1930, %v2468
  %2477 = vst.msk [vmem:[#allocation3 + $0x110] sm:$0xff] %vm1932, %v2468
  %2478 = vst.msk [vmem:[#allocation3 + $0x128] sm:$0xff] %vm1930, %v2470
  %2479 = vst.msk [vmem:[#allocation3 + $0x130] sm:$0xff] %vm1932, %v2470
  %v2480 = vld [vmem:[#allocation2 + $0x9a] sm:$0xff]
  %v2481 = vld [vmem:[#allocation2 + $0xa2] sm:$0xff]
  %v2482 = vld [vmem:[#allocation2 + $0xaa] sm:$0xf]
  %v2486 = vrot.slane %v2480, 4
  %v2487 = vrot.slane %v2481, 4
  %v2488 = vsel %vm1992, %v2486, %v2487
  %v2489 = vrot.slane %v2482, 4
  %v2490 = vsel %vm1992, %v2487, %v2489
  %2491 = vrot.lane.b32.xlu0 %v2486, 32
  %v2492 = vpop.permute.xlu0 %2491
  %2493 = vrot.lane.b32.xlu0 %v2488, 32
  %v2494 = vpop.permute.xlu0 %2493
  %2495 = vrot.lane.b32.xlu0 %v2490, 32
  %v2496 = vpop.permute.xlu0 %2495
  %2500 = vst.msk [vmem:[#allocation3 + $0xf0] sm:$0xf0] %vm2153, %v2492
  %2501 = vst.msk [vmem:[#allocation3 + $0x110] sm:$0xff] %vm1955, %v2494
  %2502 = vst.msk [vmem:[#allocation3 + $0x130] sm:$0xff] %vm1955, %v2496
  %v2503 = vld [vmem:[#allocation2 + $0x9b] sm:$0xff]
  %v2504 = vld [vmem:[#allocation2 + $0xa3] sm:$0xff]
  %v2505 = vld [vmem:[#allocation2 + $0xab] sm:$0xf]
  %v2509 = vrot.slane %v2503, 4
  %v2510 = vrot.slane %v2504, 4
  %v2511 = vsel %vm1992, %v2509, %v2510
  %v2512 = vrot.slane %v2505, 4
  %v2513 = vsel %vm1992, %v2510, %v2512
  %2514 = vrot.lane.b32.xlu0 %v2509, 80
  %v2515 = vpop.permute.xlu0 %2514
  %2516 = vrot.lane.b32.xlu0 %v2511, 80
  %v2517 = vpop.permute.xlu0 %2516
  %2518 = vrot.lane.b32.xlu0 %v2513, 80
  %v2519 = vpop.permute.xlu0 %2518
  %2523 = vst.msk [vmem:[#allocation3 + $0xf0] sm:$0xf0] %vm2177, %v2515
  %2524 = vst.msk [vmem:[#allocation3 + $0x110] sm:$0xff] %vm1975, %v2517
  %2525 = vst.msk [vmem:[#allocation3 + $0x130] sm:$0xff] %vm1975, %v2519
  %v2526 = vld [vmem:[#allocation2 + $0x9c] sm:$0xff]
  %v2527 = vld [vmem:[#allocation2 + $0xa4] sm:$0xff]
  %v2528 = vld [vmem:[#allocation2 + $0xac] sm:$0xf]
  %v2532 = vrot.slane %v2526, 4
  %v2533 = vrot.slane %v2527, 4
  %v2534 = vsel %vm1992, %v2532, %v2533
  %v2535 = vrot.slane %v2528, 4
  %v2536 = vsel %vm1992, %v2533, %v2535
  %2540 = vst.msk [vmem:[#allocation3 + $0xf8] sm:$0xf0] %vm2001, %v2532
  %2541 = vst.msk [vmem:[#allocation3 + $0x118] sm:$0xff] %vm1795, %v2534
  %2542 = vst.msk [vmem:[#allocation3 + $0x138] sm:$0xff] %vm1795, %v2536
  %v2543 = vld [vmem:[#allocation2 + $0x84] sm:$0xff]
  %v2544 = vld [vmem:[#allocation2 + $0x8c] sm:$0xff]
  %v2545 = vld [vmem:[#allocation2 + $0x94] sm:$0xf]
  %2546 = vst.msk [vmem:[#allocation3 + $0x140] sm:$0xff] %vm1795, %v2543
  %2547 = vst.msk [vmem:[#allocation3 + $0x160] sm:$0xff] %vm1795, %v2544
  %2548 = vst.msk [vmem:[#allocation3 + $0x180] sm:$0xf] %vm1823, %v2545
  %v2549 = vld [vmem:[#allocation2 + $0x85] sm:$0xff]
  %v2550 = vld [vmem:[#allocation2 + $0x8d] sm:$0xff]
  %v2551 = vld [vmem:[#allocation2 + $0x95] sm:$0xf]
  %2555 = vrot.lane.b32.xlu0 %v2549, 48
  %v2556 = vpop.permute.xlu0 %2555
  %2557 = vrot.lane.b32.xlu0 %v2550, 48
  %v2558 = vpop.permute.xlu0 %2557
  %2559 = vrot.lane.b32.xlu0 %v2551, 48
  %v2560 = vpop.permute.xlu0 %2559
  %2564 = vst.msk [vmem:[#allocation3 + $0x140] sm:$0xff] %vm1846, %v2556
  %2565 = vst.msk [vmem:[#allocation3 + $0x160] sm:$0xff] %vm1846, %v2558
  %2566 = vst.msk [vmem:[#allocation3 + $0x180] sm:$0xf] %vm1849, %v2560
  %v2567 = vld [vmem:[#allocation2 + $0x86] sm:$0xff]
  %v2568 = vld [vmem:[#allocation2 + $0x8e] sm:$0xff]
  %v2569 = vld [vmem:[#allocation2 + $0x96] sm:$0xf]
  %2573 = vrot.lane.b32.xlu0 %v2567, 96
  %v2574 = vpop.permute.xlu0 %2573
  %2575 = vrot.lane.b32.xlu0 %v2568, 96
  %v2576 = vpop.permute.xlu0 %2575
  %2577 = vrot.lane.b32.xlu0 %v2569, 96
  %v2578 = vpop.permute.xlu0 %2577
  %2582 = vst.msk [vmem:[#allocation3 + $0x140] sm:$0xff] %vm1866, %v2574
  %2583 = vst.msk [vmem:[#allocation3 + $0x148] sm:$0xff] %vm1172, %v2574
  %2584 = vst.msk [vmem:[#allocation3 + $0x160] sm:$0xff] %vm1866, %v2576
  %2585 = vst.msk [vmem:[#allocation3 + $0x168] sm:$0xff] %vm1172, %v2576
  %2586 = vst.msk [vmem:[#allocation3 + $0x180] sm:$0xf] %vm1871, %v2578
  %2587 = vst.msk [vmem:[#allocation3 + $0x188] sm:$0xf] %vm1873, %v2578
  %v2588 = vld [vmem:[#allocation2 + $0x9a] sm:$0xff]
  %v2589 = vld [vmem:[#allocation2 + $0xa2] sm:$0xff]
  %v2590 = vld [vmem:[#allocation2 + $0xaa] sm:$0xf]
  %2594 = vrot.lane.b32.xlu0 %v2588, 16
  %v2595 = vpop.permute.xlu0 %2594
  %2596 = vrot.lane.b32.xlu0 %v2589, 16
  %v2597 = vpop.permute.xlu0 %2596
  %2598 = vrot.lane.b32.xlu0 %v2590, 16
  %v2599 = vpop.permute.xlu0 %2598
  %2603 = vst.msk [vmem:[#allocation3 + $0x148] sm:$0xff] %vm1890, %v2595
  %2604 = vst.msk [vmem:[#allocation3 + $0x168] sm:$0xff] %vm1890, %v2597
  %2605 = vst.msk [vmem:[#allocation3 + $0x188] sm:$0xf] %vm1893, %v2599
  %v2606 = vld [vmem:[#allocation2 + $0x9b] sm:$0xff]
  %v2607 = vld [vmem:[#allocation2 + $0xa3] sm:$0xff]
  %v2608 = vld [vmem:[#allocation2 + $0xab] sm:$0xf]
  %2612 = vrot.lane.b32.xlu0 %v2606, 64
  %v2613 = vpop.permute.xlu0 %2612
  %2614 = vrot.lane.b32.xlu0 %v2607, 64
  %v2615 = vpop.permute.xlu0 %2614
  %2616 = vrot.lane.b32.xlu0 %v2608, 64
  %v2617 = vpop.permute.xlu0 %2616
  %2621 = vst.msk [vmem:[#allocation3 + $0x148] sm:$0xff] %vm1910, %v2613
  %2622 = vst.msk [vmem:[#allocation3 + $0x168] sm:$0xff] %vm1910, %v2615
  %2623 = vst.msk [vmem:[#allocation3 + $0x188] sm:$0xf] %vm1913, %v2617
  %v2624 = vld [vmem:[#allocation2 + $0x9c] sm:$0xff]
  %v2625 = vld [vmem:[#allocation2 + $0xa4] sm:$0xff]
  %v2626 = vld [vmem:[#allocation2 + $0xac] sm:$0xf]
  %2630 = vrot.lane.b32.xlu0 %v2624, 112
  %v2631 = vpop.permute.xlu0 %2630
  %2632 = vrot.lane.b32.xlu0 %v2625, 112
  %v2633 = vpop.permute.xlu0 %2632
  %2634 = vrot.lane.b32.xlu0 %v2626, 112
  %v2635 = vpop.permute.xlu0 %2634
  %2639 = vst.msk [vmem:[#allocation3 + $0x148] sm:$0xff] %vm1930, %v2631
  %2640 = vst.msk [vmem:[#allocation3 + $0x150] sm:$0xff] %vm1932, %v2631
  %2641 = vst.msk [vmem:[#allocation3 + $0x168] sm:$0xff] %vm1930, %v2633
  %2642 = vst.msk [vmem:[#allocation3 + $0x170] sm:$0xff] %vm1932, %v2633
  %2643 = vst.msk [vmem:[#allocation3 + $0x188] sm:$0xf] %vm1936, %v2635
  %2644 = vst.msk [vmem:[#allocation3 + $0x190] sm:$0xf] %vm1938, %v2635
  %v2645 = vld [vmem:[#allocation2 + $0xb0] sm:$0xff]
  %v2646 = vld [vmem:[#allocation2 + $0xb8] sm:$0xff]
  %v2647 = vld [vmem:[#allocation2 + $0xc0] sm:$0xf]
  %2651 = vrot.lane.b32.xlu0 %v2645, 32
  %v2652 = vpop.permute.xlu0 %2651
  %2653 = vrot.lane.b32.xlu0 %v2646, 32
  %v2654 = vpop.permute.xlu0 %2653
  %2655 = vrot.lane.b32.xlu0 %v2647, 32
  %v2656 = vpop.permute.xlu0 %2655
  %2660 = vst.msk [vmem:[#allocation3 + $0x150] sm:$0xff] %vm1955, %v2652
  %2661 = vst.msk [vmem:[#allocation3 + $0x170] sm:$0xff] %vm1955, %v2654
  %2662 = vst.msk [vmem:[#allocation3 + $0x190] sm:$0xf] %vm1958, %v2656
  %v2663 = vld [vmem:[#allocation2 + $0xb1] sm:$0xff]
  %v2664 = vld [vmem:[#allocation2 + $0xb9] sm:$0xff]
  %v2665 = vld [vmem:[#allocation2 + $0xc1] sm:$0xf]
  %2669 = vrot.lane.b32.xlu0 %v2663, 80
  %v2670 = vpop.permute.xlu0 %2669
  %2671 = vrot.lane.b32.xlu0 %v2664, 80
  %v2672 = vpop.permute.xlu0 %2671
  %2673 = vrot.lane.b32.xlu0 %v2665, 80
  %v2674 = vpop.permute.xlu0 %2673
  %2678 = vst.msk [vmem:[#allocation3 + $0x150] sm:$0xff] %vm1975, %v2670
  %2679 = vst.msk [vmem:[#allocation3 + $0x170] sm:$0xff] %vm1975, %v2672
  %2680 = vst.msk [vmem:[#allocation3 + $0x190] sm:$0xf] %vm1978, %v2674
  %v2681 = vld [vmem:[#allocation2 + $0xb2] sm:$0xff]
  %v2682 = vld [vmem:[#allocation2 + $0xba] sm:$0xff]
  %v2683 = vld [vmem:[#allocation2 + $0xc2] sm:$0xf]
  %2684 = vst.msk [vmem:[#allocation3 + $0x158] sm:$0xff] %vm1795, %v2681
  %2685 = vst.msk [vmem:[#allocation3 + $0x178] sm:$0xff] %vm1795, %v2682
  %2686 = vst.msk [vmem:[#allocation3 + $0x198] sm:$0xf] %vm1823, %v2683
  %v2687 = vld [vmem:[#allocation2 + $0x9a] sm:$0xff]
  %v2688 = vld [vmem:[#allocation2 + $0xa2] sm:$0xff]
  %v2689 = vld [vmem:[#allocation2 + $0xaa] sm:$0xf]
  %v2693 = vrot.slane %v2687, 4
  %v2694 = vrot.slane %v2688, 4
  %v2695 = vsel %vm1992, %v2693, %v2694
  %v2696 = vrot.slane %v2689, 4
  %v2697 = vsel %vm1992, %v2694, %v2696
  %2701 = vst.msk [vmem:[#allocation3 + $0x180] sm:$0xf0] %vm2001, %v2693
  %2702 = vst.msk [vmem:[#allocation3 + $0x1a0] sm:$0xff] %vm1795, %v2695
  %2703 = vst.msk [vmem:[#allocation3 + $0x1c0] sm:$0xff] %vm1795, %v2697
  %v2704 = vld [vmem:[#allocation2 + $0x9b] sm:$0xff]
  %v2705 = vld [vmem:[#allocation2 + $0xa3] sm:$0xff]
  %v2706 = vld [vmem:[#allocation2 + $0xab] sm:$0xf]
  %v2710 = vrot.slane %v2704, 4
  %v2711 = vrot.slane %v2705, 4
  %v2712 = vsel %vm1992, %v2710, %v2711
  %v2713 = vrot.slane %v2706, 4
  %v2714 = vsel %vm1992, %v2711, %v2713
  %2715 = vrot.lane.b32.xlu0 %v2710, 48
  %v2716 = vpop.permute.xlu0 %2715
  %2717 = vrot.lane.b32.xlu0 %v2712, 48
  %v2718 = vpop.permute.xlu0 %2717
  %2719 = vrot.lane.b32.xlu0 %v2714, 48
  %v2720 = vpop.permute.xlu0 %2719
  %2724 = vst.msk [vmem:[#allocation3 + $0x180] sm:$0xf0] %vm2025, %v2716
  %2725 = vst.msk [vmem:[#allocation3 + $0x1a0] sm:$0xff] %vm1846, %v2718
  %2726 = vst.msk [vmem:[#allocation3 + $0x1c0] sm:$0xff] %vm1846, %v2720
  %v2727 = vld [vmem:[#allocation2 + $0x9c] sm:$0xff]
  %v2728 = vld [vmem:[#allocation2 + $0xa4] sm:$0xff]
  %v2729 = vld [vmem:[#allocation2 + $0xac] sm:$0xf]
  %v2733 = vrot.slane %v2727, 4
  %v2734 = vrot.slane %v2728, 4
  %v2735 = vsel %vm1992, %v2733, %v2734
  %v2736 = vrot.slane %v2729, 4
  %v2737 = vsel %vm1992, %v2734, %v2736
  %2738 = vrot.lane.b32.xlu0 %v2733, 96
  %v2739 = vpop.permute.xlu0 %2738
  %2740 = vrot.lane.b32.xlu0 %v2735, 96
  %v2741 = vpop.permute.xlu0 %2740
  %2742 = vrot.lane.b32.xlu0 %v2737, 96
  %v2743 = vpop.permute.xlu0 %2742
  %2747 = vst.msk [vmem:[#allocation3 + $0x180] sm:$0xf0] %vm2049, %v2739
  %2748 = vst.msk [vmem:[#allocation3 + $0x188] sm:$0xf0] %vm2051, %v2739
  %2749 = vst.msk [vmem:[#allocation3 + $0x1a0] sm:$0xff] %vm1866, %v2741
  %2750 = vst.msk [vmem:[#allocation3 + $0x1a8] sm:$0xff] %vm1172, %v2741
  %2751 = vst.msk [vmem:[#allocation3 + $0x1c0] sm:$0xff] %vm1866, %v2743
  %2752 = vst.msk [vmem:[#allocation3 + $0x1c8] sm:$0xff] %vm1172, %v2743
  %v2753 = vld [vmem:[#allocation2 + $0xb0] sm:$0xff]
  %v2754 = vld [vmem:[#allocation2 + $0xb8] sm:$0xff]
  %v2755 = vld [vmem:[#allocation2 + $0xc0] sm:$0xf]
  %v2759 = vrot.slane %v2753, 4
  %v2760 = vrot.slane %v2754, 4
  %v2761 = vsel %vm1992, %v2759, %v2760
  %v2762 = vrot.slane %v2755, 4
  %v2763 = vsel %vm1992, %v2760, %v2762
  %2764 = vrot.lane.b32.xlu0 %v2759, 16
  %v2765 = vpop.permute.xlu0 %2764
  %2766 = vrot.lane.b32.xlu0 %v2761, 16
  %v2767 = vpop.permute.xlu0 %2766
  %2768 = vrot.lane.b32.xlu0 %v2763, 16
  %v2769 = vpop.permute.xlu0 %2768
  %2773 = vst.msk [vmem:[#allocation3 + $0x188] sm:$0xf0] %vm2077, %v2765
  %2774 = vst.msk [vmem:[#allocation3 + $0x1a8] sm:$0xff] %vm1890, %v2767
  %2775 = vst.msk [vmem:[#allocation3 + $0x1c8] sm:$0xff] %vm1890, %v2769
  %v2776 = vld [vmem:[#allocation2 + $0xb1] sm:$0xff]
  %v2777 = vld [vmem:[#allocation2 + $0xb9] sm:$0xff]
  %v2778 = vld [vmem:[#allocation2 + $0xc1] sm:$0xf]
  %v2782 = vrot.slane %v2776, 4
  %v2783 = vrot.slane %v2777, 4
  %v2784 = vsel %vm1992, %v2782, %v2783
  %v2785 = vrot.slane %v2778, 4
  %v2786 = vsel %vm1992, %v2783, %v2785
  %2787 = vrot.lane.b32.xlu0 %v2782, 64
  %v2788 = vpop.permute.xlu0 %2787
  %2789 = vrot.lane.b32.xlu0 %v2784, 64
  %v2790 = vpop.permute.xlu0 %2789
  %2791 = vrot.lane.b32.xlu0 %v2786, 64
  %v2792 = vpop.permute.xlu0 %2791
  %2796 = vst.msk [vmem:[#allocation3 + $0x188] sm:$0xf0] %vm2101, %v2788
  %2797 = vst.msk [vmem:[#allocation3 + $0x1a8] sm:$0xff] %vm1910, %v2790
  %2798 = vst.msk [vmem:[#allocation3 + $0x1c8] sm:$0xff] %vm1910, %v2792
  %v2799 = vld [vmem:[#allocation2 + $0xb2] sm:$0xff]
  %v2800 = vld [vmem:[#allocation2 + $0xba] sm:$0xff]
  %v2801 = vld [vmem:[#allocation2 + $0xc2] sm:$0xf]
  %v2805 = vrot.slane %v2799, 4
  %v2806 = vrot.slane %v2800, 4
  %v2807 = vsel %vm1992, %v2805, %v2806
  %v2808 = vrot.slane %v2801, 4
  %v2809 = vsel %vm1992, %v2806, %v2808
  %2810 = vrot.lane.b32.xlu0 %v2805, 112
  %v2811 = vpop.permute.xlu0 %2810
  %2812 = vrot.lane.b32.xlu0 %v2807, 112
  %v2813 = vpop.permute.xlu0 %2812
  %2814 = vrot.lane.b32.xlu0 %v2809, 112
  %v2815 = vpop.permute.xlu0 %2814
  %2819 = vst.msk [vmem:[#allocation3 + $0x188] sm:$0xf0] %vm2125, %v2811
  %2820 = vst.msk [vmem:[#allocation3 + $0x190] sm:$0xf0] %vm2127, %v2811
  %2821 = vst.msk [vmem:[#allocation3 + $0x1a8] sm:$0xff] %vm1930, %v2813
  %2822 = vst.msk [vmem:[#allocation3 + $0x1b0] sm:$0xff] %vm1932, %v2813
  %2823 = vst.msk [vmem:[#allocation3 + $0x1c8] sm:$0xff] %vm1930, %v2815
  %2824 = vst.msk [vmem:[#allocation3 + $0x1d0] sm:$0xff] %vm1932, %v2815
  %v2825 = vld [vmem:[#allocation2 + $0xc6] sm:$0xff]
  %v2826 = vld [vmem:[#allocation2 + $0xce] sm:$0xff]
  %v2827 = vld [vmem:[#allocation2 + $0xd6] sm:$0xf]
  %v2831 = vrot.slane %v2825, 4
  %v2832 = vrot.slane %v2826, 4
  %v2833 = vsel %vm1992, %v2831, %v2832
  %v2834 = vrot.slane %v2827, 4
  %v2835 = vsel %vm1992, %v2832, %v2834
  %2836 = vrot.lane.b32.xlu0 %v2831, 32
  %v2837 = vpop.permute.xlu0 %2836
  %2838 = vrot.lane.b32.xlu0 %v2833, 32
  %v2839 = vpop.permute.xlu0 %2838
  %2840 = vrot.lane.b32.xlu0 %v2835, 32
  %v2841 = vpop.permute.xlu0 %2840
  %2845 = vst.msk [vmem:[#allocation3 + $0x190] sm:$0xf0] %vm2153, %v2837
  %2846 = vst.msk [vmem:[#allocation3 + $0x1b0] sm:$0xff] %vm1955, %v2839
  %2847 = vst.msk [vmem:[#allocation3 + $0x1d0] sm:$0xff] %vm1955, %v2841
  %v2848 = vld [vmem:[#allocation2 + $0xc7] sm:$0xff]
  %v2849 = vld [vmem:[#allocation2 + $0xcf] sm:$0xff]
  %v2850 = vld [vmem:[#allocation2 + $0xd7] sm:$0xf]
  %v2854 = vrot.slane %v2848, 4
  %v2855 = vrot.slane %v2849, 4
  %v2856 = vsel %vm1992, %v2854, %v2855
  %v2857 = vrot.slane %v2850, 4
  %v2858 = vsel %vm1992, %v2855, %v2857
  %2859 = vrot.lane.b32.xlu0 %v2854, 80
  %v2860 = vpop.permute.xlu0 %2859
  %2861 = vrot.lane.b32.xlu0 %v2856, 80
  %v2862 = vpop.permute.xlu0 %2861
  %2863 = vrot.lane.b32.xlu0 %v2858, 80
  %v2864 = vpop.permute.xlu0 %2863
  %2868 = vst.msk [vmem:[#allocation3 + $0x190] sm:$0xf0] %vm2177, %v2860
  %2869 = vst.msk [vmem:[#allocation3 + $0x1b0] sm:$0xff] %vm1975, %v2862
  %2870 = vst.msk [vmem:[#allocation3 + $0x1d0] sm:$0xff] %vm1975, %v2864
  %v2871 = vld [vmem:[#allocation2 + $0xc8] sm:$0xff]
  %v2872 = vld [vmem:[#allocation2 + $0xd0] sm:$0xff]
  %v2873 = vld [vmem:[#allocation2 + $0xd8] sm:$0xf]
  %v2877 = vrot.slane %v2871, 4
  %v2878 = vrot.slane %v2872, 4
  %v2879 = vsel %vm1992, %v2877, %v2878
  %v2880 = vrot.slane %v2873, 4
  %v2881 = vsel %vm1992, %v2878, %v2880
  %2885 = vst.msk [vmem:[#allocation3 + $0x198] sm:$0xf0] %vm2001, %v2877
  %2886 = vst.msk [vmem:[#allocation3 + $0x1b8] sm:$0xff] %vm1795, %v2879
  %2887 = vst.msk [vmem:[#allocation3 + $0x1d8] sm:$0xff] %vm1795, %v2881
  %v2888 = vld [vmem:[#allocation3] sm:$0xff]
  %v2889 = vld [vmem:[#allocation3 + $0x8] sm:$0xff]
  %v2890 = vld [vmem:[#allocation3 + $0x10] sm:$0xff]
  %v2891 = vld [vmem:[#allocation3 + $0x18] sm:$0xff]
  %v2892 = vld [vmem:[#allocation3 + $0x20] sm:$0xff]
  %v2893 = vld [vmem:[#allocation3 + $0x28] sm:$0xff]
  %v2894 = vld [vmem:[#allocation3 + $0x30] sm:$0xff]
  %v2895 = vld [vmem:[#allocation3 + $0x38] sm:$0xff]
  %v2896 = vld [vmem:[#allocation3 + $0x40] sm:$0xff]
  %v2897 = vld [vmem:[#allocation3 + $0x48] sm:$0xff]
  %v2898 = vld [vmem:[#allocation3 + $0x50] sm:$0xff]
  %v2899 = vld [vmem:[#allocation3 + $0x58] sm:$0xff]
  %v2900 = vld [vmem:[#allocation3 + $0x60] sm:$0xff]
  %v2901 = vld [vmem:[#allocation3 + $0x68] sm:$0xff]
  %v2902 = vld [vmem:[#allocation3 + $0x70] sm:$0xff]
  %v2903 = vld [vmem:[#allocation3 + $0x78] sm:$0xff]
  %v2904 = vld [vmem:[#allocation3 + $0x80] sm:$0xff]
  %v2905 = vld [vmem:[#allocation3 + $0x88] sm:$0xff]
  %v2906 = vld [vmem:[#allocation3 + $0x90] sm:$0xff]
  %v2907 = vld [vmem:[#allocation3 + $0x98] sm:$0xff]
  %v2908 = vld [vmem:[#allocation3 + $0xa0] sm:$0xff]
  %v2909 = vld [vmem:[#allocation3 + $0xa8] sm:$0xff]
  %v2910 = vld [vmem:[#allocation3 + $0xb0] sm:$0xff]
  %v2911 = vld [vmem:[#allocation3 + $0xb8] sm:$0xff]
  %v2912 = vld [vmem:[#allocation3 + $0xc0] sm:$0xff]
  %v2913 = vld [vmem:[#allocation3 + $0xc8] sm:$0xff]
  %v2914 = vld [vmem:[#allocation3 + $0xd0] sm:$0xff]
  %v2915 = vld [vmem:[#allocation3 + $0xd8] sm:$0xff]
  %v2916 = vld [vmem:[#allocation3 + $0xe0] sm:$0xff]
  %v2917 = vld [vmem:[#allocation3 + $0xe8] sm:$0xff]
  %v2918 = vld [vmem:[#allocation3 + $0xf0] sm:$0xff]
  %v2919 = vld [vmem:[#allocation3 + $0xf8] sm:$0xff]
  %v2920 = vld [vmem:[#allocation3 + $0x100] sm:$0xff]
  %v2921 = vld [vmem:[#allocation3 + $0x108] sm:$0xff]
  %v2922 = vld [vmem:[#allocation3 + $0x110] sm:$0xff]
  %v2923 = vld [vmem:[#allocation3 + $0x118] sm:$0xff]
  %v2924 = vld [vmem:[#allocation3 + $0x120] sm:$0xff]
  %v2925 = vld [vmem:[#allocation3 + $0x128] sm:$0xff]
  %v2926 = vld [vmem:[#allocation3 + $0x130] sm:$0xff]
  %v2927 = vld [vmem:[#allocation3 + $0x138] sm:$0xff]
  %v2928 = vld [vmem:[#allocation3 + $0x140] sm:$0xff]
  %v2929 = vld [vmem:[#allocation3 + $0x148] sm:$0xff]
  %v2930 = vld [vmem:[#allocation3 + $0x150] sm:$0xff]
  %v2931 = vld [vmem:[#allocation3 + $0x158] sm:$0xff]
  %v2932 = vld [vmem:[#allocation3 + $0x160] sm:$0xff]
  %v2933 = vld [vmem:[#allocation3 + $0x168] sm:$0xff]
  %v2934 = vld [vmem:[#allocation3 + $0x170] sm:$0xff]
  %v2935 = vld [vmem:[#allocation3 + $0x178] sm:$0xff]
  %v2936 = vld [vmem:[#allocation3 + $0x180] sm:$0xff]
  %v2937 = vld [vmem:[#allocation3 + $0x188] sm:$0xff]
  %v2938 = vld [vmem:[#allocation3 + $0x190] sm:$0xff]
  %v2939 = vld [vmem:[#allocation3 + $0x198] sm:$0xff]
  %v2940 = vld [vmem:[#allocation3 + $0x1a0] sm:$0xff]
  %v2941 = vld [vmem:[#allocation3 + $0x1a8] sm:$0xff]
  %v2942 = vld [vmem:[#allocation3 + $0x1b0] sm:$0xff]
  %v2943 = vld [vmem:[#allocation3 + $0x1b8] sm:$0xff]
  %v2944 = vld [vmem:[#allocation3 + $0x1c0] sm:$0xff]
  %v2945 = vld [vmem:[#allocation3 + $0x1c8] sm:$0xff]
  %v2946 = vld [vmem:[#allocation3 + $0x1d0] sm:$0xff]
  %v2947 = vld [vmem:[#allocation3 + $0x1d8] sm:$0xff]
  %v2948 = vpack.c.bf16 %v2892, %v2888
  %v2949 = vpack.c.bf16 %v2893, %v2889
  %v2950 = vpack.c.bf16 %v2894, %v2890
  %v2951 = vpack.c.bf16 %v2895, %v2891
  %v2952 = vpack.c.bf16 %v2900, %v2896
  %v2953 = vpack.c.bf16 %v2901, %v2897
  %v2954 = vpack.c.bf16 %v2902, %v2898
  %v2955 = vpack.c.bf16 %v2903, %v2899
  %v2956 = vpack.c.bf16 %v2908, %v2904
  %v2957 = vpack.c.bf16 %v2909, %v2905
  %v2958 = vpack.c.bf16 %v2910, %v2906
  %v2959 = vpack.c.bf16 %v2911, %v2907
  %v2960 = vpack.c.bf16 %v2916, %v2912
  %v2961 = vpack.c.bf16 %v2917, %v2913
  %v2962 = vpack.c.bf16 %v2918, %v2914
  %v2963 = vpack.c.bf16 %v2919, %v2915
  %v2964 = vpack.c.bf16 %v2924, %v2920
  %v2965 = vpack.c.bf16 %v2925, %v2921
  %v2966 = vpack.c.bf16 %v2926, %v2922
  %v2967 = vpack.c.bf16 %v2927, %v2923
  %v2968 = vpack.c.bf16 %v2932, %v2928
  %v2969 = vpack.c.bf16 %v2933, %v2929
  %v2970 = vpack.c.bf16 %v2934, %v2930
  %v2971 = vpack.c.bf16 %v2935, %v2931
  %v2972 = vpack.c.bf16 %v2940, %v2936
  %v2973 = vpack.c.bf16 %v2941, %v2937
  %v2974 = vpack.c.bf16 %v2942, %v2938
  %v2975 = vpack.c.bf16 %v2943, %v2939
  %v2976 = vpack.c.bf16 %v2944, %v2944
  %v2977 = vpack.c.bf16 %v2945, %v2945
  %v2978 = vpack.c.bf16 %v2946, %v2946
  %v2979 = vpack.c.bf16 %v2947, %v2947
  %v2980 = vld [vmem:[%s3] sm:$0xf]
  %v2981 = vld [vmem:[%s3 + $0x4] sm:$0xf]
  %v2982 = vld [vmem:[%s3 + $0x8] sm:$0xf]
  %v2983 = vld [vmem:[%s3 + $0xc] sm:$0xf]
  %v2984 = vld [vmem:[%s3 + $0x10] sm:$0xf]
  %v2985 = vld [vmem:[%s3 + $0x14] sm:$0xf]
  %v2986 = vld [vmem:[%s3 + $0x18] sm:$0xf]
  %v2987 = vld [vmem:[%s3 + $0x1c] sm:$0xf]
  %v2988 = vld [vmem:[%s3 + $0x20] sm:$0xf]
  %v2989 = vld [vmem:[%s3 + $0x24] sm:$0xf]
  %v2990 = vld [vmem:[%s3 + $0x28] sm:$0xf]
  %v2991 = vld [vmem:[%s3 + $0x2c] sm:$0xf]
  %v2992 = vld [vmem:[%s3 + $0x30] sm:$0xf]
  %v2993 = vld [vmem:[%s3 + $0x34] sm:$0xf]
  %v2994 = vld [vmem:[%s3 + $0x38] sm:$0xf]
  %v2995 = vld [vmem:[%s3 + $0x3c] sm:$0xf]
  %v2996 = vld [vmem:[%s3 + $0x40] sm:$0xf]
  %v2997 = vld [vmem:[%s3 + $0x44] sm:$0xf]
  %v2998 = vld [vmem:[%s3 + $0x48] sm:$0xf]
  %v2999 = vld [vmem:[%s3 + $0x4c] sm:$0xf]
  %v3000 = vld [vmem:[%s3 + $0x50] sm:$0xf]
  %v3001 = vld [vmem:[%s3 + $0x54] sm:$0xf]
  %v3002 = vld [vmem:[%s3 + $0x58] sm:$0xf]
  %v3003 = vld [vmem:[%s3 + $0x5c] sm:$0xf]
  %v3004 = vld [vmem:[%s3 + $0x60] sm:$0xf]
  %v3005 = vld [vmem:[%s3 + $0x64] sm:$0xf]
  %v3006 = vld [vmem:[%s3 + $0x68] sm:$0xf]
  %v3007 = vld [vmem:[%s3 + $0x6c] sm:$0xf]
  %v3008 = vld [vmem:[%s3 + $0x70] sm:$0xf]
  %v3009 = vld [vmem:[%s3 + $0x74] sm:$0xf]
  %v3010 = vld [vmem:[%s3 + $0x78] sm:$0xf]
  %v3011 = vld [vmem:[%s3 + $0x7c] sm:$0xf]
  %v3012 = vld [vmem:[%s3 + $0x80] sm:$0xf]
  %v3013 = vld [vmem:[%s3 + $0x84] sm:$0xf]
  %v3014 = vld [vmem:[%s3 + $0x88] sm:$0xf]
  %v3015 = vld [vmem:[%s3 + $0x8c] sm:$0xf]
  %v3016 = vld [vmem:[%s3 + $0x90] sm:$0xf]
  %v3017 = vld [vmem:[%s3 + $0x94] sm:$0xf]
  %v3018 = vld [vmem:[%s3 + $0x98] sm:$0xf]
  %v3019 = vld [vmem:[%s3 + $0x9c] sm:$0xf]
  %v3020 = vld [vmem:[%s3 + $0xa0] sm:$0xf]
  %v3021 = vld [vmem:[%s3 + $0xa4] sm:$0xf]
  %v3022 = vld [vmem:[%s3 + $0xa8] sm:$0xf]
  %v3023 = vld [vmem:[%s3 + $0xac] sm:$0xf]
  %v3024 = vld [vmem:[%s3 + $0xb0] sm:$0xf]
  %v3025 = vld [vmem:[%s3 + $0xb4] sm:$0xf]
  %v3026 = vld [vmem:[%s3 + $0xb8] sm:$0xf]
  %v3027 = vld [vmem:[%s3 + $0xbc] sm:$0xf]
  %v3028 = vld [vmem:[%s3 + $0xc0] sm:$0xf]
  %v3029 = vld [vmem:[%s3 + $0xc4] sm:$0xf]
  %v3030 = vld [vmem:[%s3 + $0xc8] sm:$0xf]
  %v3031 = vld [vmem:[%s3 + $0xcc] sm:$0xf]
  %v3032 = vld [vmem:[%s3 + $0xd0] sm:$0xf]
  %v3033 = vld [vmem:[%s3 + $0xd4] sm:$0xf]
  %v3034 = vld [vmem:[%s4] sm:$0x1]
  %v3036 = vlaneseq
  %v3037 = vshrl.u32 %v3036, 7
  %v3038 = vsub.s32 0, %v3037
  %v3039 = vrot.slane %v3034, %v3038
  %v3095 = vunpack.c.l.b16 %v2980
  %v3096 = vunpack.c.l.b16 %v2981
  %v3097 = vunpack.c.l.b16 %v2982
  %v3098 = vunpack.c.l.b16 %v2983
  %v3099 = vunpack.c.l.b16 %v2984
  %v3100 = vunpack.c.l.b16 %v2985
  %v3101 = vunpack.c.l.b16 %v2986
  %v3102 = vunpack.c.l.b16 %v2987
  %v3103 = vunpack.c.l.b16 %v2988
  %v3104 = vunpack.c.l.b16 %v2989
  %v3105 = vunpack.c.l.b16 %v2990
  %v3106 = vunpack.c.l.b16 %v2991
  %v3107 = vunpack.c.l.b16 %v2992
  %v3108 = vunpack.c.l.b16 %v2993
  %v3109 = vunpack.c.l.b16 %v2994
  %v3110 = vunpack.c.l.b16 %v2995
  %v3111 = vunpack.c.l.b16 %v2996
  %v3112 = vunpack.c.l.b16 %v2997
  %v3113 = vunpack.c.l.b16 %v2998
  %v3114 = vunpack.c.l.b16 %v2999
  %v3115 = vunpack.c.l.b16 %v3000
  %v3116 = vunpack.c.l.b16 %v3001
  %v3117 = vunpack.c.l.b16 %v3002
  %v3118 = vunpack.c.l.b16 %v3003
  %v3119 = vunpack.c.l.b16 %v3004
  %v3120 = vunpack.c.l.b16 %v3005
  %v3121 = vunpack.c.l.b16 %v3006
  %v3122 = vunpack.c.l.b16 %v3007
  %v3123 = vunpack.c.l.b16 %v3008
  %v3124 = vunpack.c.l.b16 %v3009
  %v3125 = vunpack.c.l.b16 %v3010
  %v3126 = vunpack.c.l.b16 %v3011
  %v3127 = vunpack.c.l.b16 %v3012
  %v3128 = vunpack.c.l.b16 %v3013
  %v3129 = vunpack.c.l.b16 %v3014
  %v3130 = vunpack.c.l.b16 %v3015
  %v3131 = vunpack.c.l.b16 %v3016
  %v3132 = vunpack.c.l.b16 %v3017
  %v3133 = vunpack.c.l.b16 %v3018
  %v3134 = vunpack.c.l.b16 %v3019
  %v3135 = vunpack.c.l.b16 %v3020
  %v3136 = vunpack.c.l.b16 %v3021
  %v3137 = vunpack.c.l.b16 %v3022
  %v3138 = vunpack.c.l.b16 %v3023
  %v3139 = vunpack.c.l.b16 %v3024
  %v3140 = vunpack.c.l.b16 %v3025
  %v3141 = vunpack.c.l.b16 %v3026
  %v3142 = vunpack.c.l.b16 %v3027
  %v3143 = vunpack.c.l.b16 %v3028
  %v3144 = vunpack.c.l.b16 %v3029
  %v3145 = vunpack.c.l.b16 %v3030
  %v3146 = vunpack.c.l.b16 %v3031
  %v3147 = vunpack.c.l.b16 %v3032
  %v3148 = vunpack.c.l.b16 %v3033
  %v3149 = vpack.c.b16 %v3096, %v3095
  %v3150 = vpack.c.b16 %v3098, %v3097
  %v3151 = vpack.c.b16 %v3100, %v3099
  %v3152 = vpack.c.b16 %v3102, %v3101
  %v3153 = vpack.c.b16 %v3104, %v3103
  %v3154 = vpack.c.b16 %v3106, %v3105
  %v3155 = vpack.c.b16 %v3108, %v3107
  %v3156 = vpack.c.b16 %v3110, %v3109
  %v3157 = vpack.c.b16 %v3112, %v3111
  %v3158 = vpack.c.b16 %v3114, %v3113
  %v3159 = vpack.c.b16 %v3116, %v3115
  %v3160 = vpack.c.b16 %v3118, %v3117
  %v3161 = vpack.c.b16 %v3120, %v3119
  %v3162 = vpack.c.b16 %v3122, %v3121
  %v3163 = vpack.c.b16 %v3124, %v3123
  %v3164 = vpack.c.b16 %v3126, %v3125
  %v3165 = vpack.c.b16 %v3128, %v3127
  %v3166 = vpack.c.b16 %v3130, %v3129
  %v3167 = vpack.c.b16 %v3132, %v3131
  %v3168 = vpack.c.b16 %v3134, %v3133
  %v3169 = vpack.c.b16 %v3136, %v3135
  %v3170 = vpack.c.b16 %v3138, %v3137
  %v3171 = vpack.c.b16 %v3140, %v3139
  %v3172 = vpack.c.b16 %v3142, %v3141
  %v3173 = vpack.c.b16 %v3144, %v3143
  %v3174 = vpack.c.b16 %v3146, %v3145
  %v3175 = vpack.c.b16 %v3148, %v3147
  %v3204 = vsel %vm1795, %v2951, 0
  %v3207 = vsel %vm1795, %v2955, 0
  %v3210 = vsel %vm1795, %v2959, 0
  %v3213 = vsel %vm1795, %v2963, 0
  %v3216 = vsel %vm1795, %v2967, 0
  %v3219 = vsel %vm1795, %v2971, 0
  %v3222 = vsel %vm1795, %v2975, 0
  %v3225 = vsel %vm1795, %v2979, 0
  %3227 = vmatprep.subr.bf16.mxu0 0
  %3228 = vmatpush1.bf16.msra.mxu0 %v3149
  %3229 = vmatprep.subr.bf16.mxu0 0
  %3230 = vmatpush1.bf16.msra.mxu0 %v3150
  %3231 = vmatprep.subr.bf16.mxu0 0
  %3232 = vmatpush1.bf16.msra.mxu0 %v3151
  %3233 = vmatprep.subr.bf16.mxu0 0
  %3234 = vmatpush1.bf16.msra.mxu0 %v3152
  %3235 = vmatprep.subr.bf16.mxu0 0
  %3236 = vmatpush1.bf16.msra.mxu0 %v3153
  %3237 = vmatprep.subr.bf16.mxu0 0
  %3238 = vmatpush1.bf16.msra.mxu0 %v3154
  %3239 = vmatprep.subr.bf16.mxu0 0
  %3240 = vmatpush1.bf16.msra.mxu0 %v3155
  %3241 = vmatprep.subr.bf16.mxu0 0
  %3242 = vmatpush1.bf16.msra.mxu0 %v3156
  %3243 = vmatprep.subr.bf16.mxu0 0
  %3244 = vmatpush1.bf16.msra.mxu0 %v3157
  %3245 = vmatprep.subr.bf16.mxu0 0
  %3246 = vmatpush1.bf16.msra.mxu0 %v3158
  %3247 = vmatprep.subr.bf16.mxu0 0
  %3248 = vmatpush1.bf16.msra.mxu0 %v3159
  %3249 = vmatprep.subr.bf16.mxu0 0
  %3250 = vmatpush1.bf16.msra.mxu0 %v3160
  %3251 = vmatprep.subr.bf16.mxu0 0
  %3252 = vmatpush1.bf16.msra.mxu0 %v3161
  %3253 = vmatprep.subr.bf16.mxu0 0
  %3254 = vmatpush1.bf16.msra.mxu0 %v3162
  %3255 = vmatprep.subr.bf16.mxu0 0
  %3256 = vmatpush1.bf16.msra.mxu0 %v3163
  %3257 = vmatprep.subr.bf16.mxu0 0
  %3258 = vmatpush1.bf16.msra.mxu0 %v3164
  %3259 = vmatprep.mubr.bf16.mxu0 %v2949
  %3260 = vmatmul.mubr.bf16.gmra.mrb[0].mxu0 %v2948
  %v3261 = vpop.f32.mrb[0].mxu0
  %v3262 = vadd.f32 %v3039, %v3261
  %v3263 = vpop.f32.mrb[0].mxu0
  %v3264 = vpop.f32.mrb[0].mxu0
  %v3265 = vadd.f32 %v3039, %v3264
  %v3266 = vpop.f32.mrb[0].mxu0
  %3267 = vmatprep.mubr.bf16.mxu0 %v2953
  %3268 = vmatmul.mubr.bf16.gmra.mrb[0].mxu0 %v2952
  %v3269 = vpop.f32.mrb[0].mxu0
  %v3270 = vadd.f32 %v3039, %v3269
  %v3271 = vpop.f32.mrb[0].mxu0
  %v3272 = vpop.f32.mrb[0].mxu0
  %v3273 = vadd.f32 %v3039, %v3272
  %v3274 = vpop.f32.mrb[0].mxu0
  %3275 = vmatprep.mubr.bf16.mxu0 %v2957
  %3276 = vmatmul.mubr.bf16.gmra.mrb[0].mxu0 %v2956
  %v3277 = vpop.f32.mrb[0].mxu0
  %v3278 = vadd.f32 %v3039, %v3277
  %v3279 = vpop.f32.mrb[0].mxu0
  %v3280 = vpop.f32.mrb[0].mxu0
  %v3281 = vadd.f32 %v3039, %v3280
  %v3282 = vpop.f32.mrb[0].mxu0
  %3283 = vmatprep.mubr.bf16.mxu0 %v2961
  %3284 = vmatmul.mubr.bf16.gmra.mrb[0].mxu0 %v2960
  %v3285 = vpop.f32.mrb[0].mxu0
  %v3286 = vadd.f32 %v3039, %v3285
  %v3287 = vpop.f32.mrb[0].mxu0
  %v3288 = vpop.f32.mrb[0].mxu0
  %v3289 = vadd.f32 %v3039, %v3288
  %v3290 = vpop.f32.mrb[0].mxu0
  %3291 = vmatprep.mubr.bf16.mxu0 %v2965
  %3292 = vmatmul.mubr.bf16.gmra.mrb[0].mxu0 %v2964
  %v3293 = vpop.f32.mrb[0].mxu0
  %v3294 = vadd.f32 %v3039, %v3293
  %v3295 = vpop.f32.mrb[0].mxu0
  %v3296 = vpop.f32.mrb[0].mxu0
  %v3297 = vadd.f32 %v3039, %v3296
  %v3298 = vpop.f32.mrb[0].mxu0
  %3299 = vmatprep.mubr.bf16.mxu0 %v2969
  %3300 = vmatmul.mubr.bf16.gmra.mrb[0].mxu0 %v2968
  %v3301 = vpop.f32.mrb[0].mxu0
  %v3302 = vadd.f32 %v3039, %v3301
  %v3303 = vpop.f32.mrb[0].mxu0
  %v3304 = vpop.f32.mrb[0].mxu0
  %v3305 = vadd.f32 %v3039, %v3304
  %v3306 = vpop.f32.mrb[0].mxu0
  %3307 = vmatprep.mubr.bf16.mxu0 %v2973
  %3308 = vmatmul.mubr.bf16.gmra.mrb[0].mxu0 %v2972
  %v3309 = vpop.f32.mrb[0].mxu0
  %v3310 = vadd.f32 %v3039, %v3309
  %v3311 = vpop.f32.mrb[0].mxu0
  %v3312 = vpop.f32.mrb[0].mxu0
  %v3313 = vadd.f32 %v3039, %v3312
  %v3314 = vpop.f32.mrb[0].mxu0
  %3315 = vmatprep.mubr.bf16.mxu0 %v2977
  %3316 = vmatmul.mubr.bf16.gmra.mrb[0].mxu0 %v2976
  %v3317 = vpop.f32.mrb[0].mxu0
  %v3318 = vadd.f32 %v3039, %v3317
  %v3319 = vpop.f32.mrb[0].mxu0
  %v3320 = vpop.f32.mrb[0].mxu0
  %v3321 = vpop.f32.mrb[0].mxu0
  %3322 = vdwg.mxu0
  %3323 = vmatprep.subr.bf16.mxu0 0
  %3324 = vmatpush1.bf16.msra.mxu0 %v3165
  %3325 = vmatprep.subr.bf16.mxu0 0
  %3326 = vmatpush1.bf16.msra.mxu0 %v3166
  %3327 = vmatprep.subr.bf16.mxu0 0
  %3328 = vmatpush1.bf16.msra.mxu0 %v3167
  %3329 = vmatprep.subr.bf16.mxu0 0
  %3330 = vmatpush1.bf16.msra.mxu0 %v3168
  %3331 = vmatprep.subr.bf16.mxu0 0
  %3332 = vmatpush1.bf16.msra.mxu0 %v3169
  %3333 = vmatprep.subr.bf16.mxu0 0
  %3334 = vmatpush1.bf16.msra.mxu0 %v3170
  %3335 = vmatprep.subr.bf16.mxu0 0
  %3336 = vmatpush1.bf16.msra.mxu0 %v3171
  %3337 = vmatprep.subr.bf16.mxu0 0
  %3338 = vmatpush1.bf16.msra.mxu0 %v3172
  %3339 = vmatprep.subr.bf16.mxu0 0
  %3340 = vmatpush1.bf16.msra.mxu0 %v3173
  %3341 = vmatprep.subr.bf16.mxu0 0
  %3342 = vmatpush1.bf16.msra.mxu0 %v3174
  %3343 = vmatprep.subr.bf16.mxu0 0
  %3344 = vmatpush1.bf16.msra.mxu0 %v3175
  %3345 = vmatprep.subr.bf16.mxu0 0
  %3346 = vmatpush1.bf16.msra.mxu0 0
  %3347 = vmatprep.subr.bf16.mxu0 0
  %3348 = vmatpush1.bf16.msra.mxu0 0
  %3349 = vmatprep.subr.bf16.mxu0 0
  %3350 = vmatpush1.bf16.msra.mxu0 0
  %3351 = vmatprep.subr.bf16.mxu0 0
  %3352 = vmatpush1.bf16.msra.mxu0 0
  %3353 = vmatprep.subr.bf16.mxu0 0
  %3354 = vmatpush1.bf16.msra.mxu0 0
  %3355 = vmatprep.mubr.bf16.mxu0 %v3204
  %3356 = vmatmul.mubr.bf16.gmra.mrb[0].mxu0 %v2950
  %v3357 = vpop.f32.mrb[0].mxu0
  %v3358 = vadd.f32 %v3262, %v3357
  %v3359 = vpop.f32.mrb[0].mxu0
  %v3360 = vpop.f32.mrb[0].mxu0
  %v3361 = vadd.f32 %v3265, %v3360
  %v3362 = vpop.f32.mrb[0].mxu0
  %3363 = vmatprep.mubr.bf16.mxu0 %v3207
  %3364 = vmatmul.mubr.bf16.gmra.mrb[0].mxu0 %v2954
  %v3365 = vpop.f32.mrb[0].mxu0
  %v3366 = vadd.f32 %v3270, %v3365
  %v3367 = vpop.f32.mrb[0].mxu0
  %v3368 = vpop.f32.mrb[0].mxu0
  %v3369 = vadd.f32 %v3273, %v3368
  %v3370 = vpop.f32.mrb[0].mxu0
  %3371 = vmatprep.mubr.bf16.mxu0 %v3210
  %3372 = vmatmul.mubr.bf16.gmra.mrb[0].mxu0 %v2958
  %v3373 = vpop.f32.mrb[0].mxu0
  %v3374 = vadd.f32 %v3278, %v3373
  %v3375 = vpop.f32.mrb[0].mxu0
  %v3376 = vpop.f32.mrb[0].mxu0
  %v3377 = vadd.f32 %v3281, %v3376
  %v3378 = vpop.f32.mrb[0].mxu0
  %3379 = vmatprep.mubr.bf16.mxu0 %v3213
  %3380 = vmatmul.mubr.bf16.gmra.mrb[0].mxu0 %v2962
  %v3381 = vpop.f32.mrb[0].mxu0
  %v3382 = vadd.f32 %v3286, %v3381
  %v3383 = vpop.f32.mrb[0].mxu0
  %v3384 = vpop.f32.mrb[0].mxu0
  %v3385 = vadd.f32 %v3289, %v3384
  %v3386 = vpop.f32.mrb[0].mxu0
  %3387 = vmatprep.mubr.bf16.mxu0 %v3216
  %3388 = vmatmul.mubr.bf16.gmra.mrb[0].mxu0 %v2966
  %v3389 = vpop.f32.mrb[0].mxu0
  %v3390 = vadd.f32 %v3294, %v3389
  %v3391 = vpop.f32.mrb[0].mxu0
  %v3392 = vpop.f32.mrb[0].mxu0
  %v3393 = vadd.f32 %v3297, %v3392
  %v3394 = vpop.f32.mrb[0].mxu0
  %3395 = vmatprep.mubr.bf16.mxu0 %v3219
  %3396 = vmatmul.mubr.bf16.gmra.mrb[0].mxu0 %v2970
  %v3397 = vpop.f32.mrb[0].mxu0
  %v3398 = vadd.f32 %v3302, %v3397
  %v3399 = vpop.f32.mrb[0].mxu0
  %v3400 = vpop.f32.mrb[0].mxu0
  %v3401 = vadd.f32 %v3305, %v3400
  %v3402 = vpop.f32.mrb[0].mxu0
  %3403 = vmatprep.mubr.bf16.mxu0 %v3222
  %3404 = vmatmul.mubr.bf16.gmra.mrb[0].mxu0 %v2974
  %v3405 = vpop.f32.mrb[0].mxu0
  %v3406 = vadd.f32 %v3310, %v3405
  %v3407 = vpop.f32.mrb[0].mxu0
  %v3408 = vpop.f32.mrb[0].mxu0
  %v3409 = vadd.f32 %v3313, %v3408
  %v3410 = vpop.f32.mrb[0].mxu0
  %3411 = vmatprep.mubr.bf16.mxu0 %v3225
  %3412 = vmatmul.mubr.bf16.gmra.mrb[0].mxu0 %v2978
  %v3413 = vpop.f32.mrb[0].mxu0
  %v3414 = vadd.f32 %v3318, %v3413
  %v3415 = vpop.f32.mrb[0].mxu0
  %v3416 = vpop.f32.mrb[0].mxu0
  %v3417 = vpop.f32.mrb[0].mxu0
  %3418 = vdwg.mxu0
  %vm3419 = vcmask 523264
  %3420 = vst.msk [vmem:[#allocation4] sm:$0xff] %vm3419, %v3358
  %3421 = vst.msk [vmem:[#allocation4 + $0x8] sm:$0xff] %vm3419, %v3361
  %3422 = vst.msk [vmem:[#allocation4 + $0x10] sm:$0xff] %vm3419, %v3366
  %3423 = vst.msk [vmem:[#allocation4 + $0x18] sm:$0xff] %vm3419, %v3369
  %3424 = vst.msk [vmem:[#allocation4 + $0x20] sm:$0xff] %vm3419, %v3374
  %3425 = vst.msk [vmem:[#allocation4 + $0x28] sm:$0xff] %vm3419, %v3377
  %3426 = vst.msk [vmem:[#allocation4 + $0x30] sm:$0xff] %vm3419, %v3382
  %3427 = vst.msk [vmem:[#allocation4 + $0x38] sm:$0xff] %vm3419, %v3385
  %3428 = vst.msk [vmem:[#allocation4 + $0x40] sm:$0xff] %vm3419, %v3390
  %3429 = vst.msk [vmem:[#allocation4 + $0x48] sm:$0xff] %vm3419, %v3393
  %3430 = vst.msk [vmem:[#allocation4 + $0x50] sm:$0xff] %vm3419, %v3398
  %3431 = vst.msk [vmem:[#allocation4 + $0x58] sm:$0xff] %vm3419, %v3401
  %3432 = vst.msk [vmem:[#allocation4 + $0x60] sm:$0xff] %vm3419, %v3406
  %3433 = vst.msk [vmem:[#allocation4 + $0x68] sm:$0xff] %vm3419, %v3409
  %3434 = vst.msk [vmem:[#allocation4 + $0x70] sm:$0xff] %vm3419, %v3414
  %v3435 = vld [vmem:[#allocation4] sm:$0xff]
  %v3436 = vld [vmem:[#allocation4 + $0x8] sm:$0xff]
  %v3437 = vld [vmem:[#allocation4 + $0x10] sm:$0x3]
  %3438 = vst.msk [vmem:[#allocation5] sm:$0xff] %vm3419, %v3435
  %3439 = vst.msk [vmem:[#allocation5 + $0x28] sm:$0xff] %vm3419, %v3436
  %vm3440 = vcmask 517120
  %3441 = vst.msk [vmem:[#allocation5 + $0x50] sm:$0x3] %vm3440, %v3437
  %v3442 = vld [vmem:[#allocation4 + $0x1] sm:$0xff]
  %v3443 = vld [vmem:[#allocation4 + $0x9] sm:$0xff]
  %v3444 = vld [vmem:[#allocation4 + $0x11] sm:$0x3]
  %3448 = vrot.lane.b32.xlu0 %v3442, 64
  %v3449 = vpop.permute.xlu0 %3448
  %3450 = vrot.lane.b32.xlu0 %v3443, 64
  %v3451 = vpop.permute.xlu0 %3450
  %3452 = vrot.lane.b32.xlu0 %v3444, 64
  %v3453 = vpop.permute.xlu0 %3452
  %vm3457 = vcmask 1048064
  %3458 = vst.msk [vmem:[#allocation5] sm:$0xff] %vm3457, %v3449
  %3459 = vst.msk [vmem:[#allocation5 + $0x28] sm:$0xff] %vm3457, %v3451
  %vm3460 = vcmask 1041920
  %3461 = vst.msk [vmem:[#allocation5 + $0x50] sm:$0x3] %vm3460, %v3453
  %v3462 = vld [vmem:[#allocation4 + $0x2] sm:$0xff]
  %v3463 = vld [vmem:[#allocation4 + $0xa] sm:$0xff]
  %v3464 = vld [vmem:[#allocation4 + $0x12] sm:$0x3]
  %3465 = vst.msk [vmem:[#allocation5 + $0x8] sm:$0xff] %vm3419, %v3462
  %3466 = vst.msk [vmem:[#allocation5 + $0x30] sm:$0xff] %vm3419, %v3463
  %3467 = vst.msk [vmem:[#allocation5 + $0x58] sm:$0x3] %vm3440, %v3464
  %v3468 = vld [vmem:[#allocation4 + $0x14] sm:$0xff]
  %v3469 = vld [vmem:[#allocation4 + $0x1c] sm:$0xff]
  %v3470 = vld [vmem:[#allocation4 + $0x24] sm:$0x3]
  %3474 = vrot.lane.b32.xlu0 %v3468, 64
  %v3475 = vpop.permute.xlu0 %3474
  %3476 = vrot.lane.b32.xlu0 %v3469, 64
  %v3477 = vpop.permute.xlu0 %3476
  %3478 = vrot.lane.b32.xlu0 %v3470, 64
  %v3479 = vpop.permute.xlu0 %3478
  %3483 = vst.msk [vmem:[#allocation5 + $0x8] sm:$0xff] %vm3457, %v3475
  %3484 = vst.msk [vmem:[#allocation5 + $0x30] sm:$0xff] %vm3457, %v3477
  %3485 = vst.msk [vmem:[#allocation5 + $0x58] sm:$0x3] %vm3460, %v3479
  %v3486 = vld [vmem:[#allocation4 + $0x15] sm:$0xff]
  %v3487 = vld [vmem:[#allocation4 + $0x1d] sm:$0xff]
  %v3488 = vld [vmem:[#allocation4 + $0x25] sm:$0x3]
  %3489 = vst.msk [vmem:[#allocation5 + $0x10] sm:$0xff] %vm3419, %v3486
  %3490 = vst.msk [vmem:[#allocation5 + $0x38] sm:$0xff] %vm3419, %v3487
  %3491 = vst.msk [vmem:[#allocation5 + $0x60] sm:$0x3] %vm3440, %v3488
  %v3492 = vld [vmem:[#allocation4 + $0x16] sm:$0xff]
  %v3493 = vld [vmem:[#allocation4 + $0x1e] sm:$0xff]
  %v3494 = vld [vmem:[#allocation4 + $0x26] sm:$0x3]
  %3498 = vrot.lane.b32.xlu0 %v3492, 64
  %v3499 = vpop.permute.xlu0 %3498
  %3500 = vrot.lane.b32.xlu0 %v3493, 64
  %v3501 = vpop.permute.xlu0 %3500
  %3502 = vrot.lane.b32.xlu0 %v3494, 64
  %v3503 = vpop.permute.xlu0 %3502
  %3507 = vst.msk [vmem:[#allocation5 + $0x10] sm:$0xff] %vm3457, %v3499
  %3508 = vst.msk [vmem:[#allocation5 + $0x38] sm:$0xff] %vm3457, %v3501
  %3509 = vst.msk [vmem:[#allocation5 + $0x60] sm:$0x3] %vm3460, %v3503
  %v3510 = vld [vmem:[#allocation4 + $0x28] sm:$0xff]
  %v3511 = vld [vmem:[#allocation4 + $0x30] sm:$0xff]
  %v3512 = vld [vmem:[#allocation4 + $0x38] sm:$0x3]
  %3513 = vst.msk [vmem:[#allocation5 + $0x18] sm:$0xff] %vm3419, %v3510
  %3514 = vst.msk [vmem:[#allocation5 + $0x40] sm:$0xff] %vm3419, %v3511
  %3515 = vst.msk [vmem:[#allocation5 + $0x68] sm:$0x3] %vm3440, %v3512
  %v3516 = vld [vmem:[#allocation4 + $0x29] sm:$0xff]
  %v3517 = vld [vmem:[#allocation4 + $0x31] sm:$0xff]
  %v3518 = vld [vmem:[#allocation4 + $0x39] sm:$0x3]
  %3522 = vrot.lane.b32.xlu0 %v3516, 64
  %v3523 = vpop.permute.xlu0 %3522
  %3524 = vrot.lane.b32.xlu0 %v3517, 64
  %v3525 = vpop.permute.xlu0 %3524
  %3526 = vrot.lane.b32.xlu0 %v3518, 64
  %v3527 = vpop.permute.xlu0 %3526
  %3531 = vst.msk [vmem:[#allocation5 + $0x18] sm:$0xff] %vm3457, %v3523
  %3532 = vst.msk [vmem:[#allocation5 + $0x40] sm:$0xff] %vm3457, %v3525
  %3533 = vst.msk [vmem:[#allocation5 + $0x68] sm:$0x3] %vm3460, %v3527
  %v3534 = vld [vmem:[#allocation4 + $0x2a] sm:$0xff]
  %v3535 = vld [vmem:[#allocation4 + $0x32] sm:$0xff]
  %v3536 = vld [vmem:[#allocation4 + $0x3a] sm:$0x3]
  %3537 = vst.msk [vmem:[#allocation5 + $0x20] sm:$0xff] %vm3419, %v3534
  %3538 = vst.msk [vmem:[#allocation5 + $0x48] sm:$0xff] %vm3419, %v3535
  %3539 = vst.msk [vmem:[#allocation5 + $0x70] sm:$0x3] %vm3440, %v3536
  %v3540 = vld [vmem:[#allocation4 + $0x3c] sm:$0xff]
  %v3541 = vld [vmem:[#allocation4 + $0x44] sm:$0xff]
  %v3542 = vld [vmem:[#allocation4 + $0x4c] sm:$0x3]
  %vm3546 = vcmask 1041408
  %v3547 = vrot.slane %v3540, 6
  %v3548 = vrot.slane %v3541, 6
  %v3549 = vsel %vm3546, %v3547, %v3548
  %v3550 = vrot.slane %v3542, 6
  %v3551 = vsel %vm3546, %v3548, %v3550
  %vm3555 = vcmask 523266
  %3556 = vst.msk [vmem:[#allocation5 + $0x50] sm:$0xfc] %vm3555, %v3547
  %3557 = vst.msk [vmem:[#allocation5 + $0x78] sm:$0xff] %vm3419, %v3549
  %vm3558 = vcmask 519168
  %3559 = vst.msk [vmem:[#allocation5 + $0xa0] sm:$0xf] %vm3558, %v3551
  %v3560 = vld [vmem:[#allocation4 + $0x3d] sm:$0xff]
  %v3561 = vld [vmem:[#allocation4 + $0x45] sm:$0xff]
  %v3562 = vld [vmem:[#allocation4 + $0x4d] sm:$0x3]
  %v3566 = vrot.slane %v3560, 6
  %v3567 = vrot.slane %v3561, 6
  %v3568 = vsel %vm3546, %v3566, %v3567
  %v3569 = vrot.slane %v3562, 6
  %v3570 = vsel %vm3546, %v3567, %v3569
  %3571 = vrot.lane.b32.xlu0 %v3566, 64
  %v3572 = vpop.permute.xlu0 %3571
  %3573 = vrot.lane.b32.xlu0 %v3568, 64
  %v3574 = vpop.permute.xlu0 %3573
  %3575 = vrot.lane.b32.xlu0 %v3570, 64
  %v3576 = vpop.permute.xlu0 %3575
  %vm3580 = vcmask 1048066
  %3581 = vst.msk [vmem:[#allocation5 + $0x50] sm:$0xfc] %vm3580, %v3572
  %3582 = vst.msk [vmem:[#allocation5 + $0x78] sm:$0xff] %vm3457, %v3574
  %vm3583 = vcmask 1043968
  %3584 = vst.msk [vmem:[#allocation5 + $0xa0] sm:$0xf] %vm3583, %v3576
  %v3585 = vld [vmem:[#allocation4 + $0x3e] sm:$0xff]
  %v3586 = vld [vmem:[#allocation4 + $0x46] sm:$0xff]
  %v3587 = vld [vmem:[#allocation4 + $0x4e] sm:$0x3]
  %v3591 = vrot.slane %v3585, 6
  %v3592 = vrot.slane %v3586, 6
  %v3593 = vsel %vm3546, %v3591, %v3592
  %v3594 = vrot.slane %v3587, 6
  %v3595 = vsel %vm3546, %v3592, %v3594
  %3599 = vst.msk [vmem:[#allocation5 + $0x58] sm:$0xfc] %vm3555, %v3591
  %3600 = vst.msk [vmem:[#allocation5 + $0x80] sm:$0xff] %vm3419, %v3593
  %3601 = vst.msk [vmem:[#allocation5 + $0xa8] sm:$0xf] %vm3558, %v3595
  %v3602 = vld [vmem:[#allocation4 + $0x50] sm:$0xff]
  %v3603 = vld [vmem:[#allocation4 + $0x58] sm:$0xff]
  %v3604 = vld [vmem:[#allocation4 + $0x60] sm:$0x3]
  %v3608 = vrot.slane %v3602, 6
  %v3609 = vrot.slane %v3603, 6
  %v3610 = vsel %vm3546, %v3608, %v3609
  %v3611 = vrot.slane %v3604, 6
  %v3612 = vsel %vm3546, %v3609, %v3611
  %3613 = vrot.lane.b32.xlu0 %v3608, 64
  %v3614 = vpop.permute.xlu0 %3613
  %3615 = vrot.lane.b32.xlu0 %v3610, 64
  %v3616 = vpop.permute.xlu0 %3615
  %3617 = vrot.lane.b32.xlu0 %v3612, 64
  %v3618 = vpop.permute.xlu0 %3617
  %3622 = vst.msk [vmem:[#allocation5 + $0x58] sm:$0xfc] %vm3580, %v3614
  %3623 = vst.msk [vmem:[#allocation5 + $0x80] sm:$0xff] %vm3457, %v3616
  %3624 = vst.msk [vmem:[#allocation5 + $0xa8] sm:$0xf] %vm3583, %v3618
  %v3625 = vld [vmem:[#allocation4 + $0x51] sm:$0xff]
  %v3626 = vld [vmem:[#allocation4 + $0x59] sm:$0xff]
  %v3627 = vld [vmem:[#allocation4 + $0x61] sm:$0x3]
  %v3631 = vrot.slane %v3625, 6
  %v3632 = vrot.slane %v3626, 6
  %v3633 = vsel %vm3546, %v3631, %v3632
  %v3634 = vrot.slane %v3627, 6
  %v3635 = vsel %vm3546, %v3632, %v3634
  %3639 = vst.msk [vmem:[#allocation5 + $0x60] sm:$0xfc] %vm3555, %v3631
  %3640 = vst.msk [vmem:[#allocation5 + $0x88] sm:$0xff] %vm3419, %v3633
  %3641 = vst.msk [vmem:[#allocation5 + $0xb0] sm:$0xf] %vm3558, %v3635
  %v3642 = vld [vmem:[#allocation4 + $0x52] sm:$0xff]
  %v3643 = vld [vmem:[#allocation4 + $0x5a] sm:$0xff]
  %v3644 = vld [vmem:[#allocation4 + $0x62] sm:$0x3]
  %v3648 = vrot.slane %v3642, 6
  %v3649 = vrot.slane %v3643, 6
  %v3650 = vsel %vm3546, %v3648, %v3649
  %v3651 = vrot.slane %v3644, 6
  %v3652 = vsel %vm3546, %v3649, %v3651
  %3653 = vrot.lane.b32.xlu0 %v3648, 64
  %v3654 = vpop.permute.xlu0 %3653
  %3655 = vrot.lane.b32.xlu0 %v3650, 64
  %v3656 = vpop.permute.xlu0 %3655
  %3657 = vrot.lane.b32.xlu0 %v3652, 64
  %v3658 = vpop.permute.xlu0 %3657
  %3662 = vst.msk [vmem:[#allocation5 + $0x60] sm:$0xfc] %vm3580, %v3654
  %3663 = vst.msk [vmem:[#allocation5 + $0x88] sm:$0xff] %vm3457, %v3656
  %3664 = vst.msk [vmem:[#allocation5 + $0xb0] sm:$0xf] %vm3583, %v3658
  %v3665 = vld [vmem:[#allocation4 + $0x64] sm:$0xff]
  %v3666 = vld [vmem:[#allocation4 + $0x6c] sm:$0xff]
  %v3667 = vld [vmem:[#allocation4 + $0x74] sm:$0x3]
  %v3671 = vrot.slane %v3665, 6
  %v3672 = vrot.slane %v3666, 6
  %v3673 = vsel %vm3546, %v3671, %v3672
  %v3674 = vrot.slane %v3667, 6
  %v3675 = vsel %vm3546, %v3672, %v3674
  %3679 = vst.msk [vmem:[#allocation5 + $0x68] sm:$0xfc] %vm3555, %v3671
  %3680 = vst.msk [vmem:[#allocation5 + $0x90] sm:$0xff] %vm3419, %v3673
  %3681 = vst.msk [vmem:[#allocation5 + $0xb8] sm:$0xf] %vm3558, %v3675
  %v3682 = vld [vmem:[#allocation4 + $0x65] sm:$0xff]
  %v3683 = vld [vmem:[#allocation4 + $0x6d] sm:$0xff]
  %v3684 = vld [vmem:[#allocation4 + $0x75] sm:$0x3]
  %v3688 = vrot.slane %v3682, 6
  %v3689 = vrot.slane %v3683, 6
  %v3690 = vsel %vm3546, %v3688, %v3689
  %v3691 = vrot.slane %v3684, 6
  %v3692 = vsel %vm3546, %v3689, %v3691
  %3693 = vrot.lane.b32.xlu0 %v3688, 64
  %v3694 = vpop.permute.xlu0 %3693
  %3695 = vrot.lane.b32.xlu0 %v3690, 64
  %v3696 = vpop.permute.xlu0 %3695
  %3697 = vrot.lane.b32.xlu0 %v3692, 64
  %v3698 = vpop.permute.xlu0 %3697
  %3702 = vst.msk [vmem:[#allocation5 + $0x68] sm:$0xfc] %vm3580, %v3694
  %3703 = vst.msk [vmem:[#allocation5 + $0x90] sm:$0xff] %vm3457, %v3696
  %3704 = vst.msk [vmem:[#allocation5 + $0xb8] sm:$0xf] %vm3583, %v3698
  %v3705 = vld [vmem:[#allocation4 + $0x66] sm:$0xff]
  %v3706 = vld [vmem:[#allocation4 + $0x6e] sm:$0xff]
  %v3707 = vld [vmem:[#allocation4 + $0x76] sm:$0x3]
  %v3711 = vrot.slane %v3705, 6
  %v3712 = vrot.slane %v3706, 6
  %v3713 = vsel %vm3546, %v3711, %v3712
  %v3714 = vrot.slane %v3707, 6
  %v3715 = vsel %vm3546, %v3712, %v3714
  %3719 = vst.msk [vmem:[#allocation5 + $0x70] sm:$0xfc] %vm3555, %v3711
  %3720 = vst.msk [vmem:[#allocation5 + $0x98] sm:$0xff] %vm3419, %v3713
  %3721 = vst.msk [vmem:[#allocation5 + $0xc0] sm:$0xf] %vm3558, %v3715
  %v3722 = vld [vmem:[#allocation5] sm:$0xff]
  %v3723 = vld [vmem:[#allocation5 + $0x8] sm:$0xff]
  %v3724 = vld [vmem:[#allocation5 + $0x10] sm:$0xff]
  %v3725 = vld [vmem:[#allocation5 + $0x18] sm:$0xff]
  %v3726 = vld [vmem:[#allocation5 + $0x20] sm:$0xff]
  %v3727 = vld [vmem:[#allocation5 + $0x28] sm:$0xff]
  %v3728 = vld [vmem:[#allocation5 + $0x30] sm:$0xff]
  %v3729 = vld [vmem:[#allocation5 + $0x38] sm:$0xff]
  %v3730 = vld [vmem:[#allocation5 + $0x40] sm:$0xff]
  %v3731 = vld [vmem:[#allocation5 + $0x48] sm:$0xff]
  %v3732 = vld [vmem:[#allocation5 + $0x50] sm:$0xff]
  %v3733 = vld [vmem:[#allocation5 + $0x58] sm:$0xff]
  %v3734 = vld [vmem:[#allocation5 + $0x60] sm:$0xff]
  %v3735 = vld [vmem:[#allocation5 + $0x68] sm:$0xff]
  %v3736 = vld [vmem:[#allocation5 + $0x70] sm:$0xff]
  %v3737 = vld [vmem:[#allocation5 + $0x78] sm:$0xff]
  %v3738 = vld [vmem:[#allocation5 + $0x80] sm:$0xff]
  %v3739 = vld [vmem:[#allocation5 + $0x88] sm:$0xff]
  %v3740 = vld [vmem:[#allocation5 + $0x90] sm:$0xff]
  %v3741 = vld [vmem:[#allocation5 + $0x98] sm:$0xff]
  %v3742 = vld [vmem:[#allocation5 + $0xa0] sm:$0xf]
  %v3743 = vld [vmem:[#allocation5 + $0xa8] sm:$0xf]
  %v3744 = vld [vmem:[#allocation5 + $0xb0] sm:$0xf]
  %v3745 = vld [vmem:[#allocation5 + $0xb8] sm:$0xf]
  %v3746 = vld [vmem:[#allocation5 + $0xc0] sm:$0xf]
  %v3747 = vpack.c.bf16 %v3727, %v3722
  %v3748 = vpack.c.bf16 %v3728, %v3723
  %v3749 = vpack.c.bf16 %v3729, %v3724
  %v3750 = vpack.c.bf16 %v3730, %v3725
  %v3751 = vpack.c.bf16 %v3731, %v3726
  %v3752 = vpack.c.bf16 %v3737, %v3732
  %v3753 = vpack.c.bf16 %v3738, %v3733
  %v3754 = vpack.c.bf16 %v3739, %v3734
  %v3755 = vpack.c.bf16 %v3740, %v3735
  %v3756 = vpack.c.bf16 %v3741, %v3736
  %v3757 = vpack.c.bf16 %v3742, %v3742
  %v3758 = vpack.c.bf16 %v3743, %v3743
  %v3759 = vpack.c.bf16 %v3744, %v3744
  %v3760 = vpack.c.bf16 %v3745, %v3745
  %v3761 = vpack.c.bf16 %v3746, %v3746
  %v3762 = vld [vmem:[%s5] sm:$0xf]
  %v3763 = vld [vmem:[%s5 + $0x4] sm:$0xf]
  %v3764 = vld [vmem:[%s5 + $0x8] sm:$0xf]
  %v3765 = vld [vmem:[%s5 + $0xc] sm:$0xf]
  %v3766 = vld [vmem:[%s5 + $0x10] sm:$0xf]
  %v3767 = vld [vmem:[%s5 + $0x14] sm:$0xf]
  %v3768 = vld [vmem:[%s5 + $0x18] sm:$0xf]
  %v3769 = vld [vmem:[%s5 + $0x1c] sm:$0xf]
  %v3770 = vld [vmem:[%s5 + $0x20] sm:$0xf]
  %v3771 = vld [vmem:[%s5 + $0x24] sm:$0xf]
  %v3772 = vld [vmem:[%s5 + $0x28] sm:$0xf]
  %v3773 = vld [vmem:[%s5 + $0x2c] sm:$0xf]
  %v3774 = vld [vmem:[%s5 + $0x30] sm:$0xf]
  %v3775 = vld [vmem:[%s5 + $0x34] sm:$0xf]
  %v3776 = vld [vmem:[%s5 + $0x38] sm:$0xf]
  %v3777 = vld [vmem:[%s5 + $0x3c] sm:$0xf]
  %v3778 = vld [vmem:[%s5 + $0x40] sm:$0xf]
  %v3779 = vld [vmem:[%s5 + $0x44] sm:$0xf]
  %v3780 = vld [vmem:[%s5 + $0x48] sm:$0xf]
  %v3781 = vld [vmem:[%s5 + $0x4c] sm:$0xf]
  %v3782 = vld [vmem:[%s5 + $0x50] sm:$0xf]
  %v3783 = vld [vmem:[%s5 + $0x54] sm:$0xf]
  %v3784 = vld [vmem:[%s5 + $0x58] sm:$0xf]
  %v3785 = vld [vmem:[%s5 + $0x5c] sm:$0xf]
  %v3786 = vld [vmem:[%s5 + $0x60] sm:$0xf]
  %v3787 = vld [vmem:[%s5 + $0x64] sm:$0xf]
  %v3788 = vld [vmem:[%s5 + $0x68] sm:$0xf]
  %v3789 = vld [vmem:[%s5 + $0x6c] sm:$0xf]
  %v3790 = vld [vmem:[%s5 + $0x70] sm:$0xf]
  %v3791 = vld [vmem:[%s5 + $0x74] sm:$0xf]
  %v3792 = vld [vmem:[%s5 + $0x78] sm:$0xf]
  %v3793 = vld [vmem:[%s5 + $0x7c] sm:$0xf]
  %v3794 = vld [vmem:[%s5 + $0x80] sm:$0xf]
  %v3795 = vld [vmem:[%s5 + $0x84] sm:$0xf]
  %v3796 = vld [vmem:[%s5 + $0x88] sm:$0xf]
  %v3797 = vld [vmem:[%s5 + $0x8c] sm:$0xf]
  %v3798 = vld [vmem:[%s5 + $0x90] sm:$0xf]
  %v3799 = vld [vmem:[%s5 + $0x94] sm:$0xf]
  %v3800 = vld [vmem:[%s5 + $0x98] sm:$0xf]
  %v3801 = vld [vmem:[%s5 + $0x9c] sm:$0xf]
  %v3802 = vld [vmem:[%s5 + $0xa0] sm:$0xf]
  %v3803 = vld [vmem:[%s5 + $0xa4] sm:$0xf]
  %v3804 = vld [vmem:[%s5 + $0xa8] sm:$0xf]
  %v3805 = vld [vmem:[%s5 + $0xac] sm:$0xf]
  %v3806 = vld [vmem:[%s5 + $0xb0] sm:$0xf]
  %v3807 = vld [vmem:[%s5 + $0xb4] sm:$0xf]
  %v3808 = vld [vmem:[%s5 + $0xb8] sm:$0xf]
  %v3809 = vld [vmem:[%s5 + $0xbc] sm:$0xf]
  %v3810 = vld [vmem:[%s5 + $0xc0] sm:$0xf]
  %v3811 = vld [vmem:[%s5 + $0xc4] sm:$0xf]
  %v3812 = vld [vmem:[%s5 + $0xc8] sm:$0xf]
  %v3813 = vld [vmem:[%s5 + $0xcc] sm:$0xf]
  %v3814 = vld [vmem:[%s5 + $0xd0] sm:$0xf]
  %v3815 = vld [vmem:[%s5 + $0xd4] sm:$0xf]
  %v3816 = vld [vmem:[%s5 + $0xd8] sm:$0xf]
  %v3817 = vld [vmem:[%s5 + $0xdc] sm:$0xf]
  %v3818 = vld [vmem:[%s5 + $0xe0] sm:$0xf]
  %v3819 = vld [vmem:[%s5 + $0xe4] sm:$0xf]
  %v3820 = vld [vmem:[%s5 + $0xe8] sm:$0xf]
  %v3821 = vld [vmem:[%s5 + $0xec] sm:$0xf]
  %v3822 = vld [vmem:[%s5 + $0xf0] sm:$0xf]
  %v3823 = vld [vmem:[%s5 + $0xf4] sm:$0xf]
  %v3824 = vld [vmem:[%s5 + $0xf8] sm:$0xf]
  %v3825 = vld [vmem:[%s5 + $0xfc] sm:$0xf]
  %v3826 = vld [vmem:[%s5 + $0x100] sm:$0xf]
  %v3827 = vld [vmem:[%s5 + $0x104] sm:$0xf]
  %v3828 = vld [vmem:[%s5 + $0x108] sm:$0xf]
  %v3829 = vld [vmem:[%s5 + $0x10c] sm:$0xf]
  %v3830 = vld [vmem:[%s5 + $0x110] sm:$0xf]
  %v3831 = vld [vmem:[%s5 + $0x114] sm:$0xf]
  %v3832 = vld [vmem:[%s5 + $0x118] sm:$0xf]
  %v3833 = vld [vmem:[%s5 + $0x11c] sm:$0xf]
  %v3834 = vld [vmem:[%s6] sm:$0x1]
  %v3836 = vlaneseq
  %v3837 = vshrl.u32 %v3836, 7
  %v3838 = vsub.s32 0, %v3837
  %v3839 = vrot.slane %v3834, %v3838
  %v3913 = vunpack.c.l.b16 %v3762
  %v3914 = vunpack.c.l.b16 %v3763
  %v3915 = vunpack.c.l.b16 %v3764
  %v3916 = vunpack.c.l.b16 %v3765
  %v3917 = vunpack.c.l.b16 %v3766
  %v3918 = vunpack.c.l.b16 %v3767
  %v3919 = vunpack.c.l.b16 %v3768
  %v3920 = vunpack.c.l.b16 %v3769
  %v3921 = vunpack.c.l.b16 %v3770
  %v3922 = vunpack.c.l.b16 %v3771
  %v3923 = vunpack.c.l.b16 %v3772
  %v3924 = vunpack.c.l.b16 %v3773
  %v3925 = vunpack.c.l.b16 %v3774
  %v3926 = vunpack.c.l.b16 %v3775
  %v3927 = vunpack.c.l.b16 %v3776
  %v3928 = vunpack.c.l.b16 %v3777
  %v3929 = vunpack.c.l.b16 %v3778
  %v3930 = vunpack.c.l.b16 %v3779
  %v3931 = vunpack.c.l.b16 %v3780
  %v3932 = vunpack.c.l.b16 %v3781
  %v3933 = vunpack.c.l.b16 %v3782
  %v3934 = vunpack.c.l.b16 %v3783
  %v3935 = vunpack.c.l.b16 %v3784
  %v3936 = vunpack.c.l.b16 %v3785
  %v3937 = vunpack.c.l.b16 %v3786
  %v3938 = vunpack.c.l.b16 %v3787
  %v3939 = vunpack.c.l.b16 %v3788
  %v3940 = vunpack.c.l.b16 %v3789
  %v3941 = vunpack.c.l.b16 %v3790
  %v3942 = vunpack.c.l.b16 %v3791
  %v3943 = vunpack.c.l.b16 %v3792
  %v3944 = vunpack.c.l.b16 %v3793
  %v3945 = vunpack.c.l.b16 %v3794
  %v3946 = vunpack.c.l.b16 %v3795
  %v3947 = vunpack.c.l.b16 %v3796
  %v3948 = vunpack.c.l.b16 %v3797
  %v3949 = vunpack.c.l.b16 %v3798
  %v3950 = vunpack.c.l.b16 %v3799
  %v3951 = vunpack.c.l.b16 %v3800
  %v3952 = vunpack.c.l.b16 %v3801
  %v3953 = vunpack.c.l.b16 %v3802
  %v3954 = vunpack.c.l.b16 %v3803
  %v3955 = vunpack.c.l.b16 %v3804
  %v3956 = vunpack.c.l.b16 %v3805
  %v3957 = vunpack.c.l.b16 %v3806
  %v3958 = vunpack.c.l.b16 %v3807
  %v3959 = vunpack.c.l.b16 %v3808
  %v3960 = vunpack.c.l.b16 %v3809
  %v3961 = vunpack.c.l.b16 %v3810
  %v3962 = vunpack.c.l.b16 %v3811
  %v3963 = vunpack.c.l.b16 %v3812
  %v3964 = vunpack.c.l.b16 %v3813
  %v3965 = vunpack.c.l.b16 %v3814
  %v3966 = vunpack.c.l.b16 %v3815
  %v3967 = vunpack.c.l.b16 %v3816
  %v3968 = vunpack.c.l.b16 %v3817
  %v3969 = vunpack.c.l.b16 %v3818
  %v3970 = vunpack.c.l.b16 %v3819
  %v3971 = vunpack.c.l.b16 %v3820
  %v3972 = vunpack.c.l.b16 %v3821
  %v3973 = vunpack.c.l.b16 %v3822
  %v3974 = vunpack.c.l.b16 %v3823
  %v3975 = vunpack.c.l.b16 %v3824
  %v3976 = vunpack.c.l.b16 %v3825
  %v3977 = vunpack.c.l.b16 %v3826
  %v3978 = vunpack.c.l.b16 %v3827
  %v3979 = vunpack.c.l.b16 %v3828
  %v3980 = vunpack.c.l.b16 %v3829
  %v3981 = vunpack.c.l.b16 %v3830
  %v3982 = vunpack.c.l.b16 %v3831
  %v3983 = vunpack.c.l.b16 %v3832
  %v3984 = vunpack.c.l.b16 %v3833
  %v3985 = vpack.c.b16 %v3914, %v3913
  %v3986 = vpack.c.b16 %v3916, %v3915
  %v3987 = vpack.c.b16 %v3918, %v3917
  %v3988 = vpack.c.b16 %v3920, %v3919
  %v3989 = vpack.c.b16 %v3922, %v3921
  %v3990 = vpack.c.b16 %v3924, %v3923
  %v3991 = vpack.c.b16 %v3926, %v3925
  %v3992 = vpack.c.b16 %v3928, %v3927
  %v3993 = vpack.c.b16 %v3930, %v3929
  %v3994 = vpack.c.b16 %v3932, %v3931
  %v3995 = vpack.c.b16 %v3934, %v3933
  %v3996 = vpack.c.b16 %v3936, %v3935
  %v3997 = vpack.c.b16 %v3938, %v3937
  %v3998 = vpack.c.b16 %v3940, %v3939
  %v3999 = vpack.c.b16 %v3942, %v3941
  %v4000 = vpack.c.b16 %v3944, %v3943
  %v4001 = vpack.c.b16 %v3946, %v3945
  %v4002 = vpack.c.b16 %v3948, %v3947
  %v4003 = vpack.c.b16 %v3950, %v3949
  %v4004 = vpack.c.b16 %v3952, %v3951
  %v4005 = vpack.c.b16 %v3954, %v3953
  %v4006 = vpack.c.b16 %v3956, %v3955
  %v4007 = vpack.c.b16 %v3958, %v3957
  %v4008 = vpack.c.b16 %v3960, %v3959
  %v4009 = vpack.c.b16 %v3962, %v3961
  %v4010 = vpack.c.b16 %v3964, %v3963
  %v4011 = vpack.c.b16 %v3966, %v3965
  %v4012 = vpack.c.b16 %v3968, %v3967
  %v4013 = vpack.c.b16 %v3970, %v3969
  %v4014 = vpack.c.b16 %v3972, %v3971
  %v4015 = vpack.c.b16 %v3974, %v3973
  %v4016 = vpack.c.b16 %v3976, %v3975
  %v4017 = vpack.c.b16 %v3978, %v3977
  %v4018 = vpack.c.b16 %v3980, %v3979
  %v4019 = vpack.c.b16 %v3982, %v3981
  %v4020 = vpack.c.b16 %v3984, %v3983
  %v4058 = vsel %vm3419, %v3751, 0
  %v4061 = vsel %vm3419, %v3756, 0
  %v4064 = vsel %vm3419, %v3761, 0
  %4066 = vmatprep.subr.bf16.mxu0 0
  %4067 = vmatpush1.bf16.msra.mxu0 %v3985
  %4068 = vmatprep.subr.bf16.mxu0 0
  %4069 = vmatpush1.bf16.msra.mxu0 %v3986
  %4070 = vmatprep.subr.bf16.mxu0 0
  %4071 = vmatpush1.bf16.msra.mxu0 %v3987
  %4072 = vmatprep.subr.bf16.mxu0 0
  %4073 = vmatpush1.bf16.msra.mxu0 %v3988
  %4074 = vmatprep.subr.bf16.mxu0 0
  %4075 = vmatpush1.bf16.msra.mxu0 %v3989
  %4076 = vmatprep.subr.bf16.mxu0 0
  %4077 = vmatpush1.bf16.msra.mxu0 %v3990
  %4078 = vmatprep.subr.bf16.mxu0 0
  %4079 = vmatpush1.bf16.msra.mxu0 %v3991
  %4080 = vmatprep.subr.bf16.mxu0 0
  %4081 = vmatpush1.bf16.msra.mxu0 %v3992
  %4082 = vmatprep.subr.bf16.mxu0 0
  %4083 = vmatpush1.bf16.msra.mxu0 %v3993
  %4084 = vmatprep.subr.bf16.mxu0 0
  %4085 = vmatpush1.bf16.msra.mxu0 %v3994
  %4086 = vmatprep.subr.bf16.mxu0 0
  %4087 = vmatpush1.bf16.msra.mxu0 %v3995
  %4088 = vmatprep.subr.bf16.mxu0 0
  %4089 = vmatpush1.bf16.msra.mxu0 %v3996
  %4090 = vmatprep.subr.bf16.mxu0 0
  %4091 = vmatpush1.bf16.msra.mxu0 %v3997
  %4092 = vmatprep.subr.bf16.mxu0 0
  %4093 = vmatpush1.bf16.msra.mxu0 %v3998
  %4094 = vmatprep.subr.bf16.mxu0 0
  %4095 = vmatpush1.bf16.msra.mxu0 %v3999
  %4096 = vmatprep.subr.bf16.mxu0 0
  %4097 = vmatpush1.bf16.msra.mxu0 %v4000
  %4098 = vmatprep.mubr.bf16.mxu0 %v3748
  %4099 = vmatmul.mubr.bf16.gmra.mrb[0].mxu0 %v3747
  %v4100 = vpop.f32.mrb[0].mxu0
  %v4101 = vadd.f32 %v3839, %v4100
  %v4102 = vpop.f32.mrb[0].mxu0
  %v4103 = vpop.f32.mrb[0].mxu0
  %v4104 = vadd.f32 %v3839, %v4103
  %v4105 = vpop.f32.mrb[0].mxu0
  %4106 = vmatprep.mubr.bf16.mxu0 %v3753
  %4107 = vmatmul.mubr.bf16.gmra.mrb[0].mxu0 %v3752
  %v4108 = vpop.f32.mrb[0].mxu0
  %v4109 = vadd.f32 %v3839, %v4108
  %v4110 = vpop.f32.mrb[0].mxu0
  %v4111 = vpop.f32.mrb[0].mxu0
  %v4112 = vadd.f32 %v3839, %v4111
  %v4113 = vpop.f32.mrb[0].mxu0
  %4114 = vmatprep.mubr.bf16.mxu0 %v3758
  %4115 = vmatmul.mubr.bf16.gmra.mrb[0].mxu0 %v3757
  %v4116 = vpop.f32.mrb[0].mxu0
  %v4117 = vadd.f32 %v3839, %v4116
  %v4118 = vpop.f32.mrb[0].mxu0
  %v4119 = vpop.f32.mrb[0].mxu0
  %v4120 = vpop.f32.mrb[0].mxu0
  %4121 = vdwg.mxu0
  %4122 = vmatprep.subr.bf16.mxu0 0
  %4123 = vmatpush1.bf16.msra.mxu0 %v4001
  %4124 = vmatprep.subr.bf16.mxu0 0
  %4125 = vmatpush1.bf16.msra.mxu0 %v4002
  %4126 = vmatprep.subr.bf16.mxu0 0
  %4127 = vmatpush1.bf16.msra.mxu0 %v4003
  %4128 = vmatprep.subr.bf16.mxu0 0
  %4129 = vmatpush1.bf16.msra.mxu0 %v4004
  %4130 = vmatprep.subr.bf16.mxu0 0
  %4131 = vmatpush1.bf16.msra.mxu0 %v4005
  %4132 = vmatprep.subr.bf16.mxu0 0
  %4133 = vmatpush1.bf16.msra.mxu0 %v4006
  %4134 = vmatprep.subr.bf16.mxu0 0
  %4135 = vmatpush1.bf16.msra.mxu0 %v4007
  %4136 = vmatprep.subr.bf16.mxu0 0
  %4137 = vmatpush1.bf16.msra.mxu0 %v4008
  %4138 = vmatprep.subr.bf16.mxu0 0
  %4139 = vmatpush1.bf16.msra.mxu0 %v4009
  %4140 = vmatprep.subr.bf16.mxu0 0
  %4141 = vmatpush1.bf16.msra.mxu0 %v4010
  %4142 = vmatprep.subr.bf16.mxu0 0
  %4143 = vmatpush1.bf16.msra.mxu0 %v4011
  %4144 = vmatprep.subr.bf16.mxu0 0
  %4145 = vmatpush1.bf16.msra.mxu0 %v4012
  %4146 = vmatprep.subr.bf16.mxu0 0
  %4147 = vmatpush1.bf16.msra.mxu0 %v4013
  %4148 = vmatprep.subr.bf16.mxu0 0
  %4149 = vmatpush1.bf16.msra.mxu0 %v4014
  %4150 = vmatprep.subr.bf16.mxu0 0
  %4151 = vmatpush1.bf16.msra.mxu0 %v4015
  %4152 = vmatprep.subr.bf16.mxu0 0
  %4153 = vmatpush1.bf16.msra.mxu0 %v4016
  %4154 = vmatprep.mubr.bf16.mxu0 %v3750
  %4155 = vmatmul.mubr.bf16.gmra.mrb[0].mxu0 %v3749
  %v4156 = vpop.f32.mrb[0].mxu0
  %v4157 = vadd.f32 %v4101, %v4156
  %v4158 = vpop.f32.mrb[0].mxu0
  %v4159 = vpop.f32.mrb[0].mxu0
  %v4160 = vadd.f32 %v4104, %v4159
  %v4161 = vpop.f32.mrb[0].mxu0
  %4162 = vmatprep.mubr.bf16.mxu0 %v3755
  %4163 = vmatmul.mubr.bf16.gmra.mrb[0].mxu0 %v3754
  %v4164 = vpop.f32.mrb[0].mxu0
  %v4165 = vadd.f32 %v4109, %v4164
  %v4166 = vpop.f32.mrb[0].mxu0
  %v4167 = vpop.f32.mrb[0].mxu0
  %v4168 = vadd.f32 %v4112, %v4167
  %v4169 = vpop.f32.mrb[0].mxu0
  %4170 = vmatprep.mubr.bf16.mxu0 %v3760
  %4171 = vmatmul.mubr.bf16.gmra.mrb[0].mxu0 %v3759
  %v4172 = vpop.f32.mrb[0].mxu0
  %v4173 = vadd.f32 %v4117, %v4172
  %v4174 = vpop.f32.mrb[0].mxu0
  %v4175 = vpop.f32.mrb[0].mxu0
  %v4176 = vpop.f32.mrb[0].mxu0
  %4177 = vdwg.mxu0
  %4178 = vmatprep.subr.bf16.mxu0 0
  %4179 = vmatpush1.bf16.msra.mxu0 %v4017
  %4180 = vmatprep.subr.bf16.mxu0 0
  %4181 = vmatpush1.bf16.msra.mxu0 %v4018
  %4182 = vmatprep.subr.bf16.mxu0 0
  %4183 = vmatpush1.bf16.msra.mxu0 %v4019
  %4184 = vmatprep.subr.bf16.mxu0 0
  %4185 = vmatpush1.bf16.msra.mxu0 %v4020
  %4186 = vmatprep.subr.bf16.mxu0 0
  %4187 = vmatpush1.bf16.msra.mxu0 0
  %4188 = vmatprep.subr.bf16.mxu0 0
  %4189 = vmatpush1.bf16.msra.mxu0 0
  %4190 = vmatprep.subr.bf16.mxu0 0
  %4191 = vmatpush1.bf16.msra.mxu0 0
  %4192 = vmatprep.subr.bf16.mxu0 0
  %4193 = vmatpush1.bf16.msra.mxu0 0
  %4194 = vmatprep.subr.bf16.mxu0 0
  %4195 = vmatpush1.bf16.msra.mxu0 0
  %4196 = vmatprep.subr.bf16.mxu0 0
  %4197 = vmatpush1.bf16.msra.mxu0 0
  %4198 = vmatprep.subr.bf16.mxu0 0
  %4199 = vmatpush1.bf16.msra.mxu0 0
  %4200 = vmatprep.subr.bf16.mxu0 0
  %4201 = vmatpush1.bf16.msra.mxu0 0
  %4202 = vmatprep.subr.bf16.mxu0 0
  %4203 = vmatpush1.bf16.msra.mxu0 0
  %4204 = vmatprep.subr.bf16.mxu0 0
  %4205 = vmatpush1.bf16.msra.mxu0 0
  %4206 = vmatprep.subr.bf16.mxu0 0
  %4207 = vmatpush1.bf16.msra.mxu0 0
  %4208 = vmatprep.subr.bf16.mxu0 0
  %4209 = vmatpush1.bf16.msra.mxu0 0
  %4210 = vmatprep.mubr.bf16.mxu0 0
  %4211 = vmatmul.mubr.bf16.gmra.mrb[0].mxu0 %v4058
  %v4212 = vpop.f32.mrb[0].mxu0
  %v4213 = vadd.f32 %v4157, %v4212
  %v4214 = vpop.f32.mrb[0].mxu0
  %v4215 = vpop.f32.mrb[0].mxu0
  %v4216 = vadd.f32 %v4160, %v4215
  %v4217 = vpop.f32.mrb[0].mxu0
  %4218 = vmatprep.mubr.bf16.mxu0 0
  %4219 = vmatmul.mubr.bf16.gmra.mrb[0].mxu0 %v4061
  %v4220 = vpop.f32.mrb[0].mxu0
  %v4221 = vadd.f32 %v4165, %v4220
  %v4222 = vpop.f32.mrb[0].mxu0
  %v4223 = vpop.f32.mrb[0].mxu0
  %v4224 = vadd.f32 %v4168, %v4223
  %v4225 = vpop.f32.mrb[0].mxu0
  %4226 = vmatprep.mubr.bf16.mxu0 0
  %4227 = vmatmul.mubr.bf16.gmra.mrb[0].mxu0 %v4064
  %v4228 = vpop.f32.mrb[0].mxu0
  %v4229 = vadd.f32 %v4173, %v4228
  %v4230 = vpop.f32.mrb[0].mxu0
  %v4231 = vpop.f32.mrb[0].mxu0
  %v4232 = vpop.f32.mrb[0].mxu0
  %4233 = vdwg.mxu0
  %4234 = vst.msk [vmem:[#allocation6] sm:$0xff] %vm3419, %v4213
  %4235 = vst.msk [vmem:[#allocation6 + $0x8] sm:$0xff] %vm3419, %v4216
  %4236 = vst.msk [vmem:[#allocation6 + $0x10] sm:$0xff] %vm3419, %v4221
  %4237 = vst.msk [vmem:[#allocation6 + $0x18] sm:$0xff] %vm3419, %v4224
  %4238 = vst.msk [vmem:[#allocation6 + $0x20] sm:$0xf] %vm3558, %v4229
  %v4239 = vld [vmem:[#allocation6] sm:$0x1]
  %vm4240 = vcmask 516096
  %4241 = vst.msk [vmem:[#allocation7] sm:$0x1] %vm4240, %v4239
  %v4242 = vld [vmem:[#allocation6 + $0x1] sm:$0x1]
  %v4245 = vunpack.c.l.s4 1983009808
  %v4246 = vunpack.c.0.s8 %v4245
  %v4247 = vlaneseq
  %v4248 = vshrl.u32 %v4247, 7
  %v4249 = vsub.s32 %v4246, %v4248
  %v4250 = vrot.slane %v4242, %v4249
  %4251 = vrot.lane.b32.xlu0 %v4250, 64
  %v4252 = vpop.permute.xlu0 %4251
  %vm4254 = vcmask 1040896
  %4255 = vst.msk [vmem:[#allocation7] sm:$0x1] %vm4254, %v4252
  %v4256 = vld [vmem:[#allocation6 + $0x2] sm:$0x1]
  %4257 = vst.msk [vmem:[#allocation7 + $0x2] sm:$0x1] %vm4240, %v4256
  %v4258 = vld [vmem:[#allocation6 + $0x3] sm:$0x1]
  %v4261 = vunpack.c.l.s4 1983009808
  %v4262 = vunpack.c.0.s8 %v4261
  %v4263 = vlaneseq
  %v4264 = vshrl.u32 %v4263, 7
  %v4265 = vsub.s32 %v4262, %v4264
  %v4266 = vrot.slane %v4258, %v4265
  %4267 = vrot.lane.b32.xlu0 %v4266, 64
  %v4268 = vpop.permute.xlu0 %4267
  %4270 = vst.msk [vmem:[#allocation7 + $0x2] sm:$0x1] %vm4254, %v4268
  %v4271 = vld [vmem:[#allocation6 + $0x4] sm:$0x1]
  %4272 = vst.msk [vmem:[#allocation7 + $0x4] sm:$0x1] %vm4240, %v4271
  %v4273 = vld [vmem:[#allocation6 + $0x5] sm:$0x1]
  %v4276 = vunpack.c.l.s4 1983009808
  %v4277 = vunpack.c.0.s8 %v4276
  %v4278 = vlaneseq
  %v4279 = vshrl.u32 %v4278, 7
  %v4280 = vsub.s32 %v4277, %v4279
  %v4281 = vrot.slane %v4273, %v4280
  %4282 = vrot.lane.b32.xlu0 %v4281, 64
  %v4283 = vpop.permute.xlu0 %4282
  %4285 = vst.msk [vmem:[#allocation7 + $0x4] sm:$0x1] %vm4254, %v4283
  %v4286 = vld [vmem:[#allocation6 + $0x6] sm:$0x1]
  %4287 = vst.msk [vmem:[#allocation7 + $0x6] sm:$0x1] %vm4240, %v4286
  %v4288 = vld [vmem:[#allocation6 + $0x7] sm:$0x1]
  %v4291 = vunpack.c.l.s4 1983009808
  %v4292 = vunpack.c.0.s8 %v4291
  %v4293 = vlaneseq
  %v4294 = vshrl.u32 %v4293, 7
  %v4295 = vsub.s32 %v4292, %v4294
  %v4296 = vrot.slane %v4288, %v4295
  %4297 = vrot.lane.b32.xlu0 %v4296, 64
  %v4298 = vpop.permute.xlu0 %4297
  %4300 = vst.msk [vmem:[#allocation7 + $0x6] sm:$0x1] %vm4254, %v4298
  %v4301 = vld [vmem:[#allocation6 + $0x8] sm:$0x1]
  %4302 = vst.msk [vmem:[#allocation7 + $0x8] sm:$0x1] %vm4240, %v4301
  %v4303 = vld [vmem:[#allocation6 + $0x9] sm:$0x1]
  %v4306 = vunpack.c.l.s4 1983009808
  %v4307 = vunpack.c.0.s8 %v4306
  %v4308 = vlaneseq
  %v4309 = vshrl.u32 %v4308, 7
  %v4310 = vsub.s32 %v4307, %v4309
  %v4311 = vrot.slane %v4303, %v4310
  %4312 = vrot.lane.b32.xlu0 %v4311, 64
  %v4313 = vpop.permute.xlu0 %4312
  %4315 = vst.msk [vmem:[#allocation7 + $0x8] sm:$0x1] %vm4254, %v4313
  %v4316 = vld [vmem:[#allocation6 + $0xa] sm:$0x1]
  %4317 = vst.msk [vmem:[#allocation7 + $0xa] sm:$0x1] %vm4240, %v4316
  %v4318 = vld [vmem:[#allocation6 + $0xb] sm:$0x1]
  %v4321 = vunpack.c.l.s4 1983009808
  %v4322 = vunpack.c.0.s8 %v4321
  %v4323 = vlaneseq
  %v4324 = vshrl.u32 %v4323, 7
  %v4325 = vsub.s32 %v4322, %v4324
  %v4326 = vrot.slane %v4318, %v4325
  %4327 = vrot.lane.b32.xlu0 %v4326, 64
  %v4328 = vpop.permute.xlu0 %4327
  %4330 = vst.msk [vmem:[#allocation7 + $0xa] sm:$0x1] %vm4254, %v4328
  %v4331 = vld [vmem:[#allocation6 + $0xc] sm:$0x1]
  %4332 = vst.msk [vmem:[#allocation7 + $0xc] sm:$0x1] %vm4240, %v4331
  %v4333 = vld [vmem:[#allocation6 + $0xd] sm:$0x1]
  %v4336 = vunpack.c.l.s4 1983009808
  %v4337 = vunpack.c.0.s8 %v4336
  %v4338 = vlaneseq
  %v4339 = vshrl.u32 %v4338, 7
  %v4340 = vsub.s32 %v4337, %v4339
  %v4341 = vrot.slane %v4333, %v4340
  %4342 = vrot.lane.b32.xlu0 %v4341, 64
  %v4343 = vpop.permute.xlu0 %4342
  %4345 = vst.msk [vmem:[#allocation7 + $0xc] sm:$0x1] %vm4254, %v4343
  %v4346 = vld [vmem:[#allocation6 + $0xe] sm:$0x1]
  %4347 = vst.msk [vmem:[#allocation7 + $0xe] sm:$0x1] %vm4240, %v4346
  %v4348 = vld [vmem:[#allocation6 + $0xf] sm:$0x1]
  %v4351 = vunpack.c.l.s4 1983009808
  %v4352 = vunpack.c.0.s8 %v4351
  %v4353 = vlaneseq
  %v4354 = vshrl.u32 %v4353, 7
  %v4355 = vsub.s32 %v4352, %v4354
  %v4356 = vrot.slane %v4348, %v4355
  %4357 = vrot.lane.b32.xlu0 %v4356, 64
  %v4358 = vpop.permute.xlu0 %4357
  %4360 = vst.msk [vmem:[#allocation7 + $0xe] sm:$0x1] %vm4254, %v4358
  %v4361 = vld [vmem:[#allocation6 + $0x10] sm:$0x1]
  %4362 = vst.msk [vmem:[#allocation7 + $0x10] sm:$0x1] %vm4240, %v4361
  %v4363 = vld [vmem:[#allocation6 + $0x11] sm:$0x1]
  %v4366 = vunpack.c.l.s4 1983009808
  %v4367 = vunpack.c.0.s8 %v4366
  %v4368 = vlaneseq
  %v4369 = vshrl.u32 %v4368, 7
  %v4370 = vsub.s32 %v4367, %v4369
  %v4371 = vrot.slane %v4363, %v4370
  %4372 = vrot.lane.b32.xlu0 %v4371, 64
  %v4373 = vpop.permute.xlu0 %4372
  %4375 = vst.msk [vmem:[#allocation7 + $0x10] sm:$0x1] %vm4254, %v4373
  %v4376 = vld [vmem:[#allocation6 + $0x12] sm:$0x1]
  %4377 = vst.msk [vmem:[#allocation7 + $0x1] sm:$0x1] %vm4240, %v4376
  %v4378 = vld [vmem:[#allocation6 + $0x13] sm:$0x1]
  %v4381 = vunpack.c.l.s4 1983009808
  %v4382 = vunpack.c.0.s8 %v4381
  %v4383 = vlaneseq
  %v4384 = vshrl.u32 %v4383, 7
  %v4385 = vsub.s32 %v4382, %v4384
  %v4386 = vrot.slane %v4378, %v4385
  %4387 = vrot.lane.b32.xlu0 %v4386, 64
  %v4388 = vpop.permute.xlu0 %4387
  %4390 = vst.msk [vmem:[#allocation7 + $0x1] sm:$0x1] %vm4254, %v4388
  %v4391 = vld [vmem:[#allocation6 + $0x14] sm:$0x1]
  %4392 = vst.msk [vmem:[#allocation7 + $0x3] sm:$0x1] %vm4240, %v4391
  %v4393 = vld [vmem:[#allocation6 + $0x15] sm:$0x1]
  %v4396 = vunpack.c.l.s4 1983009808
  %v4397 = vunpack.c.0.s8 %v4396
  %v4398 = vlaneseq
  %v4399 = vshrl.u32 %v4398, 7
  %v4400 = vsub.s32 %v4397, %v4399
  %v4401 = vrot.slane %v4393, %v4400
  %4402 = vrot.lane.b32.xlu0 %v4401, 64
  %v4403 = vpop.permute.xlu0 %4402
  %4405 = vst.msk [vmem:[#allocation7 + $0x3] sm:$0x1] %vm4254, %v4403
  %v4406 = vld [vmem:[#allocation6 + $0x16] sm:$0x1]
  %4407 = vst.msk [vmem:[#allocation7 + $0x5] sm:$0x1] %vm4240, %v4406
  %v4408 = vld [vmem:[#allocation6 + $0x17] sm:$0x1]
  %v4411 = vunpack.c.l.s4 1983009808
  %v4412 = vunpack.c.0.s8 %v4411
  %v4413 = vlaneseq
  %v4414 = vshrl.u32 %v4413, 7
  %v4415 = vsub.s32 %v4412, %v4414
  %v4416 = vrot.slane %v4408, %v4415
  %4417 = vrot.lane.b32.xlu0 %v4416, 64
  %v4418 = vpop.permute.xlu0 %4417
  %4420 = vst.msk [vmem:[#allocation7 + $0x5] sm:$0x1] %vm4254, %v4418
  %v4421 = vld [vmem:[#allocation6 + $0x18] sm:$0x1]
  %4422 = vst.msk [vmem:[#allocation7 + $0x7] sm:$0x1] %vm4240, %v4421
  %v4423 = vld [vmem:[#allocation6 + $0x19] sm:$0x1]
  %v4426 = vunpack.c.l.s4 1983009808
  %v4427 = vunpack.c.0.s8 %v4426
  %v4428 = vlaneseq
  %v4429 = vshrl.u32 %v4428, 7
  %v4430 = vsub.s32 %v4427, %v4429
  %v4431 = vrot.slane %v4423, %v4430
  %4432 = vrot.lane.b32.xlu0 %v4431, 64
  %v4433 = vpop.permute.xlu0 %4432
  %4435 = vst.msk [vmem:[#allocation7 + $0x7] sm:$0x1] %vm4254, %v4433
  %v4436 = vld [vmem:[#allocation6 + $0x1a] sm:$0x1]
  %4437 = vst.msk [vmem:[#allocation7 + $0x9] sm:$0x1] %vm4240, %v4436
  %v4438 = vld [vmem:[#allocation6 + $0x1b] sm:$0x1]
  %v4441 = vunpack.c.l.s4 1983009808
  %v4442 = vunpack.c.0.s8 %v4441
  %v4443 = vlaneseq
  %v4444 = vshrl.u32 %v4443, 7
  %v4445 = vsub.s32 %v4442, %v4444
  %v4446 = vrot.slane %v4438, %v4445
  %4447 = vrot.lane.b32.xlu0 %v4446, 64
  %v4448 = vpop.permute.xlu0 %4447
  %4450 = vst.msk [vmem:[#allocation7 + $0x9] sm:$0x1] %vm4254, %v4448
  %v4451 = vld [vmem:[#allocation6 + $0x1c] sm:$0x1]
  %4452 = vst.msk [vmem:[#allocation7 + $0xb] sm:$0x1] %vm4240, %v4451
  %v4453 = vld [vmem:[#allocation6 + $0x1d] sm:$0x1]
  %v4456 = vunpack.c.l.s4 1983009808
  %v4457 = vunpack.c.0.s8 %v4456
  %v4458 = vlaneseq
  %v4459 = vshrl.u32 %v4458, 7
  %v4460 = vsub.s32 %v4457, %v4459
  %v4461 = vrot.slane %v4453, %v4460
  %4462 = vrot.lane.b32.xlu0 %v4461, 64
  %v4463 = vpop.permute.xlu0 %4462
  %4465 = vst.msk [vmem:[#allocation7 + $0xb] sm:$0x1] %vm4254, %v4463
  %v4466 = vld [vmem:[#allocation6 + $0x1e] sm:$0x1]
  %4467 = vst.msk [vmem:[#allocation7 + $0xd] sm:$0x1] %vm4240, %v4466
  %v4468 = vld [vmem:[#allocation6 + $0x1f] sm:$0x1]
  %v4471 = vunpack.c.l.s4 1983009808
  %v4472 = vunpack.c.0.s8 %v4471
  %v4473 = vlaneseq
  %v4474 = vshrl.u32 %v4473, 7
  %v4475 = vsub.s32 %v4472, %v4474
  %v4476 = vrot.slane %v4468, %v4475
  %4477 = vrot.lane.b32.xlu0 %v4476, 64
  %v4478 = vpop.permute.xlu0 %4477
  %4480 = vst.msk [vmem:[#allocation7 + $0xd] sm:$0x1] %vm4254, %v4478
  %v4481 = vld [vmem:[#allocation6 + $0x20] sm:$0x1]
  %4482 = vst.msk [vmem:[#allocation7 + $0xf] sm:$0x1] %vm4240, %v4481
  %v4483 = vld [vmem:[#allocation6 + $0x21] sm:$0x1]
  %v4486 = vunpack.c.l.s4 1983009808
  %v4487 = vunpack.c.0.s8 %v4486
  %v4488 = vlaneseq
  %v4489 = vshrl.u32 %v4488, 7
  %v4490 = vsub.s32 %v4487, %v4489
  %v4491 = vrot.slane %v4483, %v4490
  %4492 = vrot.lane.b32.xlu0 %v4491, 64
  %v4493 = vpop.permute.xlu0 %4492
  %4495 = vst.msk [vmem:[#allocation7 + $0xf] sm:$0x1] %vm4254, %v4493
  %v4496 = vld [vmem:[#allocation6 + $0x22] sm:$0x1]
  %4497 = vst.msk [vmem:[#allocation7 + $0x11] sm:$0x1] %vm4240, %v4496
  %v4498 = vld [vmem:[#allocation6 + $0x23] sm:$0x1]
  %v4501 = vunpack.c.l.s4 1983009808
  %v4502 = vunpack.c.0.s8 %v4501
  %v4503 = vlaneseq
  %v4504 = vshrl.u32 %v4503, 7
  %v4505 = vsub.s32 %v4502, %v4504
  %v4506 = vrot.slane %v4498, %v4505
  %4507 = vrot.lane.b32.xlu0 %v4506, 64
  %v4508 = vpop.permute.xlu0 %4507
  %4510 = vst.msk [vmem:[#allocation7 + $0x11] sm:$0x1] %vm4254, %v4508
  %v4511 = vld [vmem:[#allocation7] sm:$0xff]
  %v4512 = vld [vmem:[#allocation7 + $0x8] sm:$0xff]
  %v4513 = vld [vmem:[#allocation7 + $0x10] sm:$0x3]
  %v4517 = vcombine.high %v4511, %v4511
  %v4519 = vunpack.c.l.s4 1983009808
  %v4520 = vunpack.c.0.s8 %v4519
  %v4521 = vlaneseq
  %v4522 = vshrl.u32 %v4521, 7
  %v4523 = vsub.s32 %v4520, %v4522
  %v4524 = vrot.slane %v4511, %v4523
  %v4526 = vunpack.c.l.s4 1983009808
  %v4527 = vunpack.c.0.s8 %v4526
  %v4528 = vlaneseq
  %v4529 = vshrl.u32 %v4528, 7
  %v4530 = vsub.s32 %v4527, %v4529
  %v4531 = vrot.slane %v4517, %v4530
  %v4532 = vcombine.high %v4524, %v4524
  %v4533 = vcombine.high %v4531, %v4531
  %v4534 = vcombine.high %v4512, %v4512
  %v4536 = vunpack.c.l.s4 1983009808
  %v4537 = vunpack.c.0.s8 %v4536
  %v4538 = vlaneseq
  %v4539 = vshrl.u32 %v4538, 7
  %v4540 = vsub.s32 %v4537, %v4539
  %v4541 = vrot.slane %v4512, %v4540
  %v4543 = vunpack.c.l.s4 1983009808
  %v4544 = vunpack.c.0.s8 %v4543
  %v4545 = vlaneseq
  %v4546 = vshrl.u32 %v4545, 7
  %v4547 = vsub.s32 %v4544, %v4546
  %v4548 = vrot.slane %v4534, %v4547
  %v4549 = vcombine.high %v4541, %v4541
  %v4550 = vcombine.high %v4548, %v4548
  %v4552 = vunpack.c.l.s4 1983009808
  %v4553 = vunpack.c.0.s8 %v4552
  %v4554 = vlaneseq
  %v4555 = vshrl.u32 %v4554, 7
  %v4556 = vsub.s32 %v4553, %v4555
  %v4557 = vrot.slane %v4513, %v4556
  %v4567 = vpack.c.bf16 %v4524, %v4524
  %v4568 = vpack.c.bf16 %v4532, %v4532
  %v4569 = vpack.c.bf16 %v4531, %v4531
  %v4570 = vpack.c.bf16 %v4533, %v4533
  %v4571 = vpack.c.bf16 %v4541, %v4541
  %v4572 = vpack.c.bf16 %v4549, %v4549
  %v4573 = vpack.c.bf16 %v4548, %v4548
  %v4574 = vpack.c.bf16 %v4550, %v4550
  %v4575 = vpack.c.bf16 %v4557, %v4557
  %v4576 = vld [vmem:[%s7] sm:$0xf]
  %v4577 = vld [vmem:[%s7 + $0x4] sm:$0xf]
  %v4578 = vld [vmem:[%s7 + $0x8] sm:$0xf]
  %v4579 = vld [vmem:[%s7 + $0xc] sm:$0xf]
  %v4580 = vld [vmem:[%s7 + $0x10] sm:$0xf]
  %v4581 = vld [vmem:[%s7 + $0x14] sm:$0xf]
  %v4582 = vld [vmem:[%s7 + $0x18] sm:$0xf]
  %v4583 = vld [vmem:[%s7 + $0x1c] sm:$0xf]
  %v4584 = vld [vmem:[%s7 + $0x20] sm:$0xf]
  %v4585 = vld [vmem:[%s7 + $0x24] sm:$0xf]
  %v4586 = vld [vmem:[%s7 + $0x28] sm:$0xf]
  %v4587 = vld [vmem:[%s7 + $0x2c] sm:$0xf]
  %v4588 = vld [vmem:[%s7 + $0x30] sm:$0xf]
  %v4589 = vld [vmem:[%s7 + $0x34] sm:$0xf]
  %v4590 = vld [vmem:[%s7 + $0x38] sm:$0xf]
  %v4591 = vld [vmem:[%s7 + $0x3c] sm:$0xf]
  %v4592 = vld [vmem:[%s7 + $0x40] sm:$0xf]
  %v4593 = vld [vmem:[%s7 + $0x44] sm:$0xf]
  %v4594 = vld [vmem:[%s7 + $0x48] sm:$0xf]
  %v4595 = vld [vmem:[%s7 + $0x4c] sm:$0xf]
  %v4596 = vld [vmem:[%s7 + $0x50] sm:$0xf]
  %v4597 = vld [vmem:[%s7 + $0x54] sm:$0xf]
  %v4598 = vld [vmem:[%s7 + $0x58] sm:$0xf]
  %v4599 = vld [vmem:[%s7 + $0x5c] sm:$0xf]
  %v4600 = vld [vmem:[%s7 + $0x60] sm:$0xf]
  %v4601 = vld [vmem:[%s7 + $0x64] sm:$0xf]
  %v4602 = vld [vmem:[%s7 + $0x68] sm:$0xf]
  %v4603 = vld [vmem:[%s7 + $0x6c] sm:$0xf]
  %v4604 = vld [vmem:[%s7 + $0x70] sm:$0xf]
  %v4605 = vld [vmem:[%s7 + $0x74] sm:$0xf]
  %v4606 = vld [vmem:[%s7 + $0x78] sm:$0xf]
  %v4607 = vld [vmem:[%s7 + $0x7c] sm:$0xf]
  %v4608 = vld [vmem:[%s7 + $0x80] sm:$0xf]
  %v4609 = vld [vmem:[%s7 + $0x84] sm:$0xf]
  %v4610 = vld [vmem:[%s7 + $0x88] sm:$0xf]
  %v4611 = vld [vmem:[%s7 + $0x8c] sm:$0xf]
  %v4612 = vld [vmem:[%s7 + $0x90] sm:$0xf]
  %v4613 = vld [vmem:[%s7 + $0x94] sm:$0xf]
  %v4614 = vld [vmem:[%s7 + $0x98] sm:$0xf]
  %v4615 = vld [vmem:[%s7 + $0x9c] sm:$0xf]
  %v4616 = vld [vmem:[%s7 + $0xa0] sm:$0xf]
  %v4617 = vld [vmem:[%s7 + $0xa4] sm:$0xf]
  %v4618 = vld [vmem:[%s7 + $0xa8] sm:$0xf]
  %v4619 = vld [vmem:[%s7 + $0xac] sm:$0xf]
  %v4620 = vld [vmem:[%s7 + $0xb0] sm:$0xf]
  %v4621 = vld [vmem:[%s7 + $0xb4] sm:$0xf]
  %v4622 = vld [vmem:[%s7 + $0xb8] sm:$0xf]
  %v4623 = vld [vmem:[%s7 + $0xbc] sm:$0xf]
  %v4624 = vld [vmem:[%s7 + $0xc0] sm:$0xf]
  %v4625 = vld [vmem:[%s7 + $0xc4] sm:$0xf]
  %v4626 = vld [vmem:[%s7 + $0xc8] sm:$0xf]
  %v4627 = vld [vmem:[%s7 + $0xcc] sm:$0xf]
  %v4628 = vld [vmem:[%s7 + $0xd0] sm:$0xf]
  %v4629 = vld [vmem:[%s7 + $0xd4] sm:$0xf]
  %v4630 = vld [vmem:[%s7 + $0xd8] sm:$0xf]
  %v4631 = vld [vmem:[%s7 + $0xdc] sm:$0xf]
  %v4632 = vld [vmem:[%s7 + $0xe0] sm:$0xf]
  %v4633 = vld [vmem:[%s7 + $0xe4] sm:$0xf]
  %v4634 = vld [vmem:[%s7 + $0xe8] sm:$0xf]
  %v4635 = vld [vmem:[%s7 + $0xec] sm:$0xf]
  %v4636 = vld [vmem:[%s7 + $0xf0] sm:$0xf]
  %v4637 = vld [vmem:[%s7 + $0xf4] sm:$0xf]
  %v4638 = vld [vmem:[%s7 + $0xf8] sm:$0xf]
  %v4639 = vld [vmem:[%s7 + $0xfc] sm:$0xf]
  %v4640 = vld [vmem:[%s7 + $0x100] sm:$0xf]
  %v4641 = vld [vmem:[%s7 + $0x104] sm:$0xf]
  %v4642 = vld [vmem:[%s7 + $0x108] sm:$0xf]
  %v4643 = vld [vmem:[%s7 + $0x10c] sm:$0xf]
  %v4644 = vld [vmem:[%s7 + $0x110] sm:$0xf]
  %v4645 = vld [vmem:[%s7 + $0x114] sm:$0xf]
  %v4646 = vld [vmem:[%s7 + $0x118] sm:$0xf]
  %v4647 = vld [vmem:[%s7 + $0x11c] sm:$0xf]
  %v4648 = vld [vmem:[%s7 + $0x120] sm:$0xf]
  %v4649 = vld [vmem:[%s7 + $0x124] sm:$0xf]
  %v4650 = vld [vmem:[%s7 + $0x128] sm:$0xf]
  %v4651 = vld [vmem:[%s7 + $0x12c] sm:$0xf]
  %v4652 = vld [vmem:[%s7 + $0x130] sm:$0xf]
  %v4653 = vld [vmem:[%s7 + $0x134] sm:$0xf]
  %v4654 = vld [vmem:[%s7 + $0x138] sm:$0xf]
  %v4655 = vld [vmem:[%s7 + $0x13c] sm:$0xf]
  %v4656 = vld [vmem:[%s7 + $0x140] sm:$0xf]
  %v4657 = vld [vmem:[%s7 + $0x144] sm:$0xf]
  %v4658 = vld [vmem:[%s7 + $0x148] sm:$0xf]
  %v4659 = vld [vmem:[%s7 + $0x14c] sm:$0xf]
  %v4660 = vld [vmem:[%s7 + $0x150] sm:$0xf]
  %v4661 = vld [vmem:[%s7 + $0x154] sm:$0xf]
  %v4662 = vld [vmem:[%s7 + $0x158] sm:$0xf]
  %v4663 = vld [vmem:[%s7 + $0x15c] sm:$0xf]
  %v4664 = vld [vmem:[%s7 + $0x160] sm:$0xf]
  %v4665 = vld [vmem:[%s7 + $0x164] sm:$0xf]
  %v4666 = vld [vmem:[%s7 + $0x168] sm:$0xf]
  %v4667 = vld [vmem:[%s7 + $0x16c] sm:$0xf]
  %v4668 = vld [vmem:[%s7 + $0x170] sm:$0xf]
  %v4669 = vld [vmem:[%s7 + $0x174] sm:$0xf]
  %v4670 = vld [vmem:[%s7 + $0x178] sm:$0xf]
  %v4671 = vld [vmem:[%s7 + $0x17c] sm:$0xf]
  %v4672 = vld [vmem:[%s7 + $0x180] sm:$0xf]
  %v4673 = vld [vmem:[%s7 + $0x184] sm:$0xf]
  %v4674 = vld [vmem:[%s7 + $0x188] sm:$0xf]
  %v4675 = vld [vmem:[%s7 + $0x18c] sm:$0xf]
  %v4676 = vld [vmem:[%s7 + $0x190] sm:$0xf]
  %v4677 = vld [vmem:[%s7 + $0x194] sm:$0xf]
  %v4678 = vld [vmem:[%s7 + $0x198] sm:$0xf]
  %v4679 = vld [vmem:[%s7 + $0x19c] sm:$0xf]
  %v4680 = vld [vmem:[%s7 + $0x1a0] sm:$0xf]
  %v4681 = vld [vmem:[%s7 + $0x1a4] sm:$0xf]
  %v4682 = vld [vmem:[%s7 + $0x1a8] sm:$0xf]
  %v4683 = vld [vmem:[%s7 + $0x1ac] sm:$0xf]
  %v4684 = vld [vmem:[%s7 + $0x1b0] sm:$0xf]
  %v4685 = vld [vmem:[%s7 + $0x1b4] sm:$0xf]
  %v4686 = vld [vmem:[%s7 + $0x1b8] sm:$0xf]
  %v4687 = vld [vmem:[%s7 + $0x1bc] sm:$0xf]
  %v4688 = vld [vmem:[%s7 + $0x1c0] sm:$0xf]
  %v4689 = vld [vmem:[%s7 + $0x1c4] sm:$0xf]
  %v4690 = vld [vmem:[%s7 + $0x1c8] sm:$0xf]
  %v4691 = vld [vmem:[%s7 + $0x1cc] sm:$0xf]
  %v4692 = vld [vmem:[%s7 + $0x1d0] sm:$0xf]
  %v4693 = vld [vmem:[%s7 + $0x1d4] sm:$0xf]
  %v4694 = vld [vmem:[%s7 + $0x1d8] sm:$0xf]
  %v4695 = vld [vmem:[%s7 + $0x1dc] sm:$0xf]
  %v4696 = vld [vmem:[%s7 + $0x1e0] sm:$0xf]
  %v4697 = vld [vmem:[%s7 + $0x1e4] sm:$0xf]
  %v4698 = vld [vmem:[%s7 + $0x1e8] sm:$0xf]
  %v4699 = vld [vmem:[%s7 + $0x1ec] sm:$0xf]
  %v4700 = vld [vmem:[%s7 + $0x1f0] sm:$0xf]
  %v4701 = vld [vmem:[%s7 + $0x1f4] sm:$0xf]
  %v4702 = vld [vmem:[%s7 + $0x1f8] sm:$0xf]
  %v4703 = vld [vmem:[%s7 + $0x1fc] sm:$0xf]
  %v4704 = vld [vmem:[%s7 + $0x200] sm:$0xf]
  %v4705 = vld [vmem:[%s7 + $0x204] sm:$0xf]
  %v4706 = vld [vmem:[%s7 + $0x208] sm:$0xf]
  %v4707 = vld [vmem:[%s7 + $0x20c] sm:$0xf]
  %v4708 = vld [vmem:[%s7 + $0x210] sm:$0xf]
  %v4709 = vld [vmem:[%s7 + $0x214] sm:$0xf]
  %v4710 = vld [vmem:[%s7 + $0x218] sm:$0xf]
  %v4711 = vld [vmem:[%s7 + $0x21c] sm:$0xf]
  %v4712 = vld [vmem:[%s7 + $0x220] sm:$0xf]
  %v4713 = vld [vmem:[%s7 + $0x224] sm:$0xf]
  %v4714 = vld [vmem:[%s7 + $0x228] sm:$0xf]
  %v4715 = vld [vmem:[%s7 + $0x22c] sm:$0xf]
  %v4716 = vld [vmem:[%s7 + $0x230] sm:$0xf]
  %v4717 = vld [vmem:[%s7 + $0x234] sm:$0xf]
  %v4718 = vld [vmem:[%s7 + $0x238] sm:$0xf]
  %v4719 = vld [vmem:[%s7 + $0x23c] sm:$0xf]
  %v4720 = vld [vmem:[%s8] sm:$0x1]
  %v4722 = vlaneseq
  %v4723 = vshrl.u32 %v4722, 7
  %v4724 = vsub.s32 0, %v4723
  %v4725 = vrot.slane %v4720, %v4724
  %v4871 = vunpack.c.l.b16 %v4576
  %v4872 = vunpack.c.l.b16 %v4577
  %v4873 = vunpack.c.l.b16 %v4578
  %v4874 = vunpack.c.l.b16 %v4579
  %v4875 = vunpack.c.l.b16 %v4580
  %v4876 = vunpack.c.l.b16 %v4581
  %v4877 = vunpack.c.l.b16 %v4582
  %v4878 = vunpack.c.l.b16 %v4583
  %v4879 = vunpack.c.l.b16 %v4584
  %v4880 = vunpack.c.l.b16 %v4585
  %v4881 = vunpack.c.l.b16 %v4586
  %v4882 = vunpack.c.l.b16 %v4587
  %v4883 = vunpack.c.l.b16 %v4588
  %v4884 = vunpack.c.l.b16 %v4589
  %v4885 = vunpack.c.l.b16 %v4590
  %v4886 = vunpack.c.l.b16 %v4591
  %v4887 = vunpack.c.l.b16 %v4592
  %v4888 = vunpack.c.l.b16 %v4593
  %v4889 = vunpack.c.l.b16 %v4594
  %v4890 = vunpack.c.l.b16 %v4595
  %v4891 = vunpack.c.l.b16 %v4596
  %v4892 = vunpack.c.l.b16 %v4597
  %v4893 = vunpack.c.l.b16 %v4598
  %v4894 = vunpack.c.l.b16 %v4599
  %v4895 = vunpack.c.l.b16 %v4600
  %v4896 = vunpack.c.l.b16 %v4601
  %v4897 = vunpack.c.l.b16 %v4602
  %v4898 = vunpack.c.l.b16 %v4603
  %v4899 = vunpack.c.l.b16 %v4604
  %v4900 = vunpack.c.l.b16 %v4605
  %v4901 = vunpack.c.l.b16 %v4606
  %v4902 = vunpack.c.l.b16 %v4607
  %v4903 = vunpack.c.l.b16 %v4608
  %v4904 = vunpack.c.l.b16 %v4609
  %v4905 = vunpack.c.l.b16 %v4610
  %v4906 = vunpack.c.l.b16 %v4611
  %v4907 = vunpack.c.l.b16 %v4612
  %v4908 = vunpack.c.l.b16 %v4613
  %v4909 = vunpack.c.l.b16 %v4614
  %v4910 = vunpack.c.l.b16 %v4615
  %v4911 = vunpack.c.l.b16 %v4616
  %v4912 = vunpack.c.l.b16 %v4617
  %v4913 = vunpack.c.l.b16 %v4618
  %v4914 = vunpack.c.l.b16 %v4619
  %v4915 = vunpack.c.l.b16 %v4620
  %v4916 = vunpack.c.l.b16 %v4621
  %v4917 = vunpack.c.l.b16 %v4622
  %v4918 = vunpack.c.l.b16 %v4623
  %v4919 = vunpack.c.l.b16 %v4624
  %v4920 = vunpack.c.l.b16 %v4625
  %v4921 = vunpack.c.l.b16 %v4626
  %v4922 = vunpack.c.l.b16 %v4627
  %v4923 = vunpack.c.l.b16 %v4628
  %v4924 = vunpack.c.l.b16 %v4629
  %v4925 = vunpack.c.l.b16 %v4630
  %v4926 = vunpack.c.l.b16 %v4631
  %v4927 = vunpack.c.l.b16 %v4632
  %v4928 = vunpack.c.l.b16 %v4633
  %v4929 = vunpack.c.l.b16 %v4634
  %v4930 = vunpack.c.l.b16 %v4635
  %v4931 = vunpack.c.l.b16 %v4636
  %v4932 = vunpack.c.l.b16 %v4637
  %v4933 = vunpack.c.l.b16 %v4638
  %v4934 = vunpack.c.l.b16 %v4639
  %v4935 = vunpack.c.l.b16 %v4640
  %v4936 = vunpack.c.l.b16 %v4641
  %v4937 = vunpack.c.l.b16 %v4642
  %v4938 = vunpack.c.l.b16 %v4643
  %v4939 = vunpack.c.l.b16 %v4644
  %v4940 = vunpack.c.l.b16 %v4645
  %v4941 = vunpack.c.l.b16 %v4646
  %v4942 = vunpack.c.l.b16 %v4647
  %v4943 = vunpack.c.l.b16 %v4648
  %v4944 = vunpack.c.l.b16 %v4649
  %v4945 = vunpack.c.l.b16 %v4650
  %v4946 = vunpack.c.l.b16 %v4651
  %v4947 = vunpack.c.l.b16 %v4652
  %v4948 = vunpack.c.l.b16 %v4653
  %v4949 = vunpack.c.l.b16 %v4654
  %v4950 = vunpack.c.l.b16 %v4655
  %v4951 = vunpack.c.l.b16 %v4656
  %v4952 = vunpack.c.l.b16 %v4657
  %v4953 = vunpack.c.l.b16 %v4658
  %v4954 = vunpack.c.l.b16 %v4659
  %v4955 = vunpack.c.l.b16 %v4660
  %v4956 = vunpack.c.l.b16 %v4661
  %v4957 = vunpack.c.l.b16 %v4662
  %v4958 = vunpack.c.l.b16 %v4663
  %v4959 = vunpack.c.l.b16 %v4664
  %v4960 = vunpack.c.l.b16 %v4665
  %v4961 = vunpack.c.l.b16 %v4666
  %v4962 = vunpack.c.l.b16 %v4667
  %v4963 = vunpack.c.l.b16 %v4668
  %v4964 = vunpack.c.l.b16 %v4669
  %v4965 = vunpack.c.l.b16 %v4670
  %v4966 = vunpack.c.l.b16 %v4671
  %v4967 = vunpack.c.l.b16 %v4672
  %v4968 = vunpack.c.l.b16 %v4673
  %v4969 = vunpack.c.l.b16 %v4674
  %v4970 = vunpack.c.l.b16 %v4675
  %v4971 = vunpack.c.l.b16 %v4676
  %v4972 = vunpack.c.l.b16 %v4677
  %v4973 = vunpack.c.l.b16 %v4678
  %v4974 = vunpack.c.l.b16 %v4679
  %v4975 = vunpack.c.l.b16 %v4680
  %v4976 = vunpack.c.l.b16 %v4681
  %v4977 = vunpack.c.l.b16 %v4682
  %v4978 = vunpack.c.l.b16 %v4683
  %v4979 = vunpack.c.l.b16 %v4684
  %v4980 = vunpack.c.l.b16 %v4685
  %v4981 = vunpack.c.l.b16 %v4686
  %v4982 = vunpack.c.l.b16 %v4687
  %v4983 = vunpack.c.l.b16 %v4688
  %v4984 = vunpack.c.l.b16 %v4689
  %v4985 = vunpack.c.l.b16 %v4690
  %v4986 = vunpack.c.l.b16 %v4691
  %v4987 = vunpack.c.l.b16 %v4692
  %v4988 = vunpack.c.l.b16 %v4693
  %v4989 = vunpack.c.l.b16 %v4694
  %v4990 = vunpack.c.l.b16 %v4695
  %v4991 = vunpack.c.l.b16 %v4696
  %v4992 = vunpack.c.l.b16 %v4697
  %v4993 = vunpack.c.l.b16 %v4698
  %v4994 = vunpack.c.l.b16 %v4699
  %v4995 = vunpack.c.l.b16 %v4700
  %v4996 = vunpack.c.l.b16 %v4701
  %v4997 = vunpack.c.l.b16 %v4702
  %v4998 = vunpack.c.l.b16 %v4703
  %v4999 = vunpack.c.l.b16 %v4704
  %v5000 = vunpack.c.l.b16 %v4705
  %v5001 = vunpack.c.l.b16 %v4706
  %v5002 = vunpack.c.l.b16 %v4707
  %v5003 = vunpack.c.l.b16 %v4708
  %v5004 = vunpack.c.l.b16 %v4709
  %v5005 = vunpack.c.l.b16 %v4710
  %v5006 = vunpack.c.l.b16 %v4711
  %v5007 = vunpack.c.l.b16 %v4712
  %v5008 = vunpack.c.l.b16 %v4713
  %v5009 = vunpack.c.l.b16 %v4714
  %v5010 = vunpack.c.l.b16 %v4715
  %v5011 = vunpack.c.l.b16 %v4716
  %v5012 = vunpack.c.l.b16 %v4717
  %v5013 = vunpack.c.l.b16 %v4718
  %v5014 = vunpack.c.l.b16 %v4719
  %v5015 = vpack.c.b16 %v4872, %v4871
  %v5016 = vpack.c.b16 %v4874, %v4873
  %v5017 = vpack.c.b16 %v4876, %v4875
  %v5018 = vpack.c.b16 %v4878, %v4877
  %v5019 = vpack.c.b16 %v4880, %v4879
  %v5020 = vpack.c.b16 %v4882, %v4881
  %v5021 = vpack.c.b16 %v4884, %v4883
  %v5022 = vpack.c.b16 %v4886, %v4885
  %v5023 = vpack.c.b16 %v4888, %v4887
  %v5024 = vpack.c.b16 %v4890, %v4889
  %v5025 = vpack.c.b16 %v4892, %v4891
  %v5026 = vpack.c.b16 %v4894, %v4893
  %v5027 = vpack.c.b16 %v4896, %v4895
  %v5028 = vpack.c.b16 %v4898, %v4897
  %v5029 = vpack.c.b16 %v4900, %v4899
  %v5030 = vpack.c.b16 %v4902, %v4901
  %v5031 = vpack.c.b16 %v4904, %v4903
  %v5032 = vpack.c.b16 %v4906, %v4905
  %v5033 = vpack.c.b16 %v4908, %v4907
  %v5034 = vpack.c.b16 %v4910, %v4909
  %v5035 = vpack.c.b16 %v4912, %v4911
  %v5036 = vpack.c.b16 %v4914, %v4913
  %v5037 = vpack.c.b16 %v4916, %v4915
  %v5038 = vpack.c.b16 %v4918, %v4917
  %v5039 = vpack.c.b16 %v4920, %v4919
  %v5040 = vpack.c.b16 %v4922, %v4921
  %v5041 = vpack.c.b16 %v4924, %v4923
  %v5042 = vpack.c.b16 %v4926, %v4925
  %v5043 = vpack.c.b16 %v4928, %v4927
  %v5044 = vpack.c.b16 %v4930, %v4929
  %v5045 = vpack.c.b16 %v4932, %v4931
  %v5046 = vpack.c.b16 %v4934, %v4933
  %v5047 = vpack.c.b16 %v4936, %v4935
  %v5048 = vpack.c.b16 %v4938, %v4937
  %v5049 = vpack.c.b16 %v4940, %v4939
  %v5050 = vpack.c.b16 %v4942, %v4941
  %v5051 = vpack.c.b16 %v4944, %v4943
  %v5052 = vpack.c.b16 %v4946, %v4945
  %v5053 = vpack.c.b16 %v4948, %v4947
  %v5054 = vpack.c.b16 %v4950, %v4949
  %v5055 = vpack.c.b16 %v4952, %v4951
  %v5056 = vpack.c.b16 %v4954, %v4953
  %v5057 = vpack.c.b16 %v4956, %v4955
  %v5058 = vpack.c.b16 %v4958, %v4957
  %v5059 = vpack.c.b16 %v4960, %v4959
  %v5060 = vpack.c.b16 %v4962, %v4961
  %v5061 = vpack.c.b16 %v4964, %v4963
  %v5062 = vpack.c.b16 %v4966, %v4965
  %v5063 = vpack.c.b16 %v4968, %v4967
  %v5064 = vpack.c.b16 %v4970, %v4969
  %v5065 = vpack.c.b16 %v4972, %v4971
  %v5066 = vpack.c.b16 %v4974, %v4973
  %v5067 = vpack.c.b16 %v4976, %v4975
  %v5068 = vpack.c.b16 %v4978, %v4977
  %v5069 = vpack.c.b16 %v4980, %v4979
  %v5070 = vpack.c.b16 %v4982, %v4981
  %v5071 = vpack.c.b16 %v4984, %v4983
  %v5072 = vpack.c.b16 %v4986, %v4985
  %v5073 = vpack.c.b16 %v4988, %v4987
  %v5074 = vpack.c.b16 %v4990, %v4989
  %v5075 = vpack.c.b16 %v4992, %v4991
  %v5076 = vpack.c.b16 %v4994, %v4993
  %v5077 = vpack.c.b16 %v4996, %v4995
  %v5078 = vpack.c.b16 %v4998, %v4997
  %v5079 = vpack.c.b16 %v5000, %v4999
  %v5080 = vpack.c.b16 %v5002, %v5001
  %v5081 = vpack.c.b16 %v5004, %v5003
  %v5082 = vpack.c.b16 %v5006, %v5005
  %v5083 = vpack.c.b16 %v5008, %v5007
  %v5084 = vpack.c.b16 %v5010, %v5009
  %v5085 = vpack.c.b16 %v5012, %v5011
  %v5086 = vpack.c.b16 %v5014, %v5013
  %5159 = vmatprep.subr.bf16.mxu0 0
  %5160 = vmatpush1.bf16.msra.mxu0 %v5015
  %5161 = vmatprep.subr.bf16.mxu0 0
  %5162 = vmatpush1.bf16.msra.mxu0 %v5016
  %5163 = vmatprep.subr.bf16.mxu0 0
  %5164 = vmatpush1.bf16.msra.mxu0 %v5017
  %5165 = vmatprep.subr.bf16.mxu0 0
  %5166 = vmatpush1.bf16.msra.mxu0 %v5018
  %5167 = vmatprep.subr.bf16.mxu0 0
  %5168 = vmatpush1.bf16.msra.mxu0 %v5019
  %5169 = vmatprep.subr.bf16.mxu0 0
  %5170 = vmatpush1.bf16.msra.mxu0 %v5020
  %5171 = vmatprep.subr.bf16.mxu0 0
  %5172 = vmatpush1.bf16.msra.mxu0 %v5021
  %5173 = vmatprep.subr.bf16.mxu0 0
  %5174 = vmatpush1.bf16.msra.mxu0 %v5022
  %5175 = vmatprep.subr.bf16.mxu0 0
  %5176 = vmatpush1.bf16.msra.mxu0 %v5023
  %5177 = vmatprep.subr.bf16.mxu0 0
  %5178 = vmatpush1.bf16.msra.mxu0 %v5024
  %5179 = vmatprep.subr.bf16.mxu0 0
  %5180 = vmatpush1.bf16.msra.mxu0 %v5025
  %5181 = vmatprep.subr.bf16.mxu0 0
  %5182 = vmatpush1.bf16.msra.mxu0 %v5026
  %5183 = vmatprep.subr.bf16.mxu0 0
  %5184 = vmatpush1.bf16.msra.mxu0 %v5027
  %5185 = vmatprep.subr.bf16.mxu0 0
  %5186 = vmatpush1.bf16.msra.mxu0 %v5028
  %5187 = vmatprep.subr.bf16.mxu0 0
  %5188 = vmatpush1.bf16.msra.mxu0 %v5029
  %5189 = vmatprep.subr.bf16.mxu0 0
  %5190 = vmatpush1.bf16.msra.mxu0 %v5030
  %5191 = vmatprep.mubr.bf16.mxu0 %v4568
  %5192 = vmatmul.mubr.bf16.gmra.mrb[0].mxu0 %v4567
  %v5193 = vpop.f32.mrb[0].mxu0
  %v5194 = vadd.f32 %v4725, %v5193
  %v5195 = vpop.f32.mrb[0].mxu0
  %v5196 = vpop.f32.mrb[0].mxu0
  %v5197 = vpop.f32.mrb[0].mxu0
  %5198 = vdwg.mxu0
  %5199 = vmatprep.subr.bf16.mxu0 0
  %5200 = vmatpush1.bf16.msra.mxu0 %v5031
  %5201 = vmatprep.subr.bf16.mxu0 0
  %5202 = vmatpush1.bf16.msra.mxu0 %v5032
  %5203 = vmatprep.subr.bf16.mxu0 0
  %5204 = vmatpush1.bf16.msra.mxu0 %v5033
  %5205 = vmatprep.subr.bf16.mxu0 0
  %5206 = vmatpush1.bf16.msra.mxu0 %v5034
  %5207 = vmatprep.subr.bf16.mxu0 0
  %5208 = vmatpush1.bf16.msra.mxu0 %v5035
  %5209 = vmatprep.subr.bf16.mxu0 0
  %5210 = vmatpush1.bf16.msra.mxu0 %v5036
  %5211 = vmatprep.subr.bf16.mxu0 0
  %5212 = vmatpush1.bf16.msra.mxu0 %v5037
  %5213 = vmatprep.subr.bf16.mxu0 0
  %5214 = vmatpush1.bf16.msra.mxu0 %v5038
  %5215 = vmatprep.subr.bf16.mxu0 0
  %5216 = vmatpush1.bf16.msra.mxu0 %v5039
  %5217 = vmatprep.subr.bf16.mxu0 0
  %5218 = vmatpush1.bf16.msra.mxu0 %v5040
  %5219 = vmatprep.subr.bf16.mxu0 0
  %5220 = vmatpush1.bf16.msra.mxu0 %v5041
  %5221 = vmatprep.subr.bf16.mxu0 0
  %5222 = vmatpush1.bf16.msra.mxu0 %v5042
  %5223 = vmatprep.subr.bf16.mxu0 0
  %5224 = vmatpush1.bf16.msra.mxu0 %v5043
  %5225 = vmatprep.subr.bf16.mxu0 0
  %5226 = vmatpush1.bf16.msra.mxu0 %v5044
  %5227 = vmatprep.subr.bf16.mxu0 0
  %5228 = vmatpush1.bf16.msra.mxu0 %v5045
  %5229 = vmatprep.subr.bf16.mxu0 0
  %5230 = vmatpush1.bf16.msra.mxu0 %v5046
  %5231 = vmatprep.mubr.bf16.mxu0 %v4570
  %5232 = vmatmul.mubr.bf16.gmra.mrb[0].mxu0 %v4569
  %v5233 = vpop.f32.mrb[0].mxu0
  %v5234 = vadd.f32 %v5194, %v5233
  %v5235 = vpop.f32.mrb[0].mxu0
  %v5236 = vpop.f32.mrb[0].mxu0
  %v5237 = vpop.f32.mrb[0].mxu0
  %5238 = vdwg.mxu0
  %5239 = vmatprep.subr.bf16.mxu0 0
  %5240 = vmatpush1.bf16.msra.mxu0 %v5047
  %5241 = vmatprep.subr.bf16.mxu0 0
  %5242 = vmatpush1.bf16.msra.mxu0 %v5048
  %5243 = vmatprep.subr.bf16.mxu0 0
  %5244 = vmatpush1.bf16.msra.mxu0 %v5049
  %5245 = vmatprep.subr.bf16.mxu0 0
  %5246 = vmatpush1.bf16.msra.mxu0 %v5050
  %5247 = vmatprep.subr.bf16.mxu0 0
  %5248 = vmatpush1.bf16.msra.mxu0 %v5051
  %5249 = vmatprep.subr.bf16.mxu0 0
  %5250 = vmatpush1.bf16.msra.mxu0 %v5052
  %5251 = vmatprep.subr.bf16.mxu0 0
  %5252 = vmatpush1.bf16.msra.mxu0 %v5053
  %5253 = vmatprep.subr.bf16.mxu0 0
  %5254 = vmatpush1.bf16.msra.mxu0 %v5054
  %5255 = vmatprep.subr.bf16.mxu0 0
  %5256 = vmatpush1.bf16.msra.mxu0 %v5055
  %5257 = vmatprep.subr.bf16.mxu0 0
  %5258 = vmatpush1.bf16.msra.mxu0 %v5056
  %5259 = vmatprep.subr.bf16.mxu0 0
  %5260 = vmatpush1.bf16.msra.mxu0 %v5057
  %5261 = vmatprep.subr.bf16.mxu0 0
  %5262 = vmatpush1.bf16.msra.mxu0 %v5058
  %5263 = vmatprep.subr.bf16.mxu0 0
  %5264 = vmatpush1.bf16.msra.mxu0 %v5059
  %5265 = vmatprep.subr.bf16.mxu0 0
  %5266 = vmatpush1.bf16.msra.mxu0 %v5060
  %5267 = vmatprep.subr.bf16.mxu0 0
  %5268 = vmatpush1.bf16.msra.mxu0 %v5061
  %5269 = vmatprep.subr.bf16.mxu0 0
  %5270 = vmatpush1.bf16.msra.mxu0 %v5062
  %5271 = vmatprep.mubr.bf16.mxu0 %v4572
  %5272 = vmatmul.mubr.bf16.gmra.mrb[0].mxu0 %v4571
  %v5273 = vpop.f32.mrb[0].mxu0
  %v5274 = vadd.f32 %v5234, %v5273
  %v5275 = vpop.f32.mrb[0].mxu0
  %v5276 = vpop.f32.mrb[0].mxu0
  %v5277 = vpop.f32.mrb[0].mxu0
  %5278 = vdwg.mxu0
  %5279 = vmatprep.subr.bf16.mxu0 0
  %5280 = vmatpush1.bf16.msra.mxu0 %v5063
  %5281 = vmatprep.subr.bf16.mxu0 0
  %5282 = vmatpush1.bf16.msra.mxu0 %v5064
  %5283 = vmatprep.subr.bf16.mxu0 0
  %5284 = vmatpush1.bf16.msra.mxu0 %v5065
  %5285 = vmatprep.subr.bf16.mxu0 0
  %5286 = vmatpush1.bf16.msra.mxu0 %v5066
  %5287 = vmatprep.subr.bf16.mxu0 0
  %5288 = vmatpush1.bf16.msra.mxu0 %v5067
  %5289 = vmatprep.subr.bf16.mxu0 0
  %5290 = vmatpush1.bf16.msra.mxu0 %v5068
  %5291 = vmatprep.subr.bf16.mxu0 0
  %5292 = vmatpush1.bf16.msra.mxu0 %v5069
  %5293 = vmatprep.subr.bf16.mxu0 0
  %5294 = vmatpush1.bf16.msra.mxu0 %v5070
  %5295 = vmatprep.subr.bf16.mxu0 0
  %5296 = vmatpush1.bf16.msra.mxu0 %v5071
  %5297 = vmatprep.subr.bf16.mxu0 0
  %5298 = vmatpush1.bf16.msra.mxu0 %v5072
  %5299 = vmatprep.subr.bf16.mxu0 0
  %5300 = vmatpush1.bf16.msra.mxu0 %v5073
  %5301 = vmatprep.subr.bf16.mxu0 0
  %5302 = vmatpush1.bf16.msra.mxu0 %v5074
  %5303 = vmatprep.subr.bf16.mxu0 0
  %5304 = vmatpush1.bf16.msra.mxu0 %v5075
  %5305 = vmatprep.subr.bf16.mxu0 0
  %5306 = vmatpush1.bf16.msra.mxu0 %v5076
  %5307 = vmatprep.subr.bf16.mxu0 0
  %5308 = vmatpush1.bf16.msra.mxu0 %v5077
  %5309 = vmatprep.subr.bf16.mxu0 0
  %5310 = vmatpush1.bf16.msra.mxu0 %v5078
  %5311 = vmatprep.mubr.bf16.mxu0 %v4574
  %5312 = vmatmul.mubr.bf16.gmra.mrb[0].mxu0 %v4573
  %v5313 = vpop.f32.mrb[0].mxu0
  %v5314 = vadd.f32 %v5274, %v5313
  %v5315 = vpop.f32.mrb[0].mxu0
  %v5316 = vpop.f32.mrb[0].mxu0
  %v5317 = vpop.f32.mrb[0].mxu0
  %5318 = vdwg.mxu0
  %5319 = vmatprep.subr.bf16.mxu0 0
  %5320 = vmatpush1.bf16.msra.mxu0 %v5079
  %5321 = vmatprep.subr.bf16.mxu0 0
  %5322 = vmatpush1.bf16.msra.mxu0 %v5080
  %5323 = vmatprep.subr.bf16.mxu0 0
  %5324 = vmatpush1.bf16.msra.mxu0 %v5081
  %5325 = vmatprep.subr.bf16.mxu0 0
  %5326 = vmatpush1.bf16.msra.mxu0 %v5082
  %5327 = vmatprep.subr.bf16.mxu0 0
  %5328 = vmatpush1.bf16.msra.mxu0 %v5083
  %5329 = vmatprep.subr.bf16.mxu0 0
  %5330 = vmatpush1.bf16.msra.mxu0 %v5084
  %5331 = vmatprep.subr.bf16.mxu0 0
  %5332 = vmatpush1.bf16.msra.mxu0 %v5085
  %5333 = vmatprep.subr.bf16.mxu0 0
  %5334 = vmatpush1.bf16.msra.mxu0 %v5086
  %5335 = vmatprep.subr.bf16.mxu0 0
  %5336 = vmatpush1.bf16.msra.mxu0 0
  %5337 = vmatprep.subr.bf16.mxu0 0
  %5338 = vmatpush1.bf16.msra.mxu0 0
  %5339 = vmatprep.subr.bf16.mxu0 0
  %5340 = vmatpush1.bf16.msra.mxu0 0
  %5341 = vmatprep.subr.bf16.mxu0 0
  %5342 = vmatpush1.bf16.msra.mxu0 0
  %5343 = vmatprep.subr.bf16.mxu0 0
  %5344 = vmatpush1.bf16.msra.mxu0 0
  %5345 = vmatprep.subr.bf16.mxu0 0
  %5346 = vmatpush1.bf16.msra.mxu0 0
  %5347 = vmatprep.subr.bf16.mxu0 0
  %5348 = vmatpush1.bf16.msra.mxu0 0
  %5349 = vmatprep.subr.bf16.mxu0 0
  %5350 = vmatpush1.bf16.msra.mxu0 0
  %5351 = vmatprep.mubr.bf16.mxu0 0
  %5352 = vmatmul.mubr.bf16.gmra.mrb[0].mxu0 %v4575
  %v5353 = vpop.f32.mrb[0].mxu0
  %v5354 = vadd.f32 %v5314, %v5353
  %v5355 = vpop.f32.mrb[0].mxu0
  %v5356 = vpop.f32.mrb[0].mxu0
  %v5357 = vpop.f32.mrb[0].mxu0
  %5358 = vdwg.mxu0
  %v5359 = vpack.c.bf16 %v5354, %v5354
  %v5360 = vld [vmem:[%s9] sm:$0xf]
  %v5361 = vld [vmem:[%s9 + $0x4] sm:$0xf]
  %v5362 = vld [vmem:[%s9 + $0x8] sm:$0xf]
  %v5363 = vld [vmem:[%s9 + $0xc] sm:$0xf]
  %v5364 = vld [vmem:[%s9 + $0x10] sm:$0xf]
  %v5365 = vld [vmem:[%s9 + $0x14] sm:$0xf]
  %v5366 = vld [vmem:[%s9 + $0x18] sm:$0xf]
  %v5367 = vld [vmem:[%s9 + $0x1c] sm:$0xf]
  %v5368 = vld [vmem:[%s9 + $0x20] sm:$0xf]
  %v5369 = vld [vmem:[%s9 + $0x24] sm:$0xf]
  %v5370 = vld [vmem:[%s9 + $0x28] sm:$0xf]
  %v5371 = vld [vmem:[%s9 + $0x2c] sm:$0xf]
  %v5372 = vld [vmem:[%s9 + $0x30] sm:$0x3]
  %v5373 = vld [vmem:[%s10] sm:$0x1]
  %v5375 = vlaneseq
  %v5376 = vshrl.u32 %v5375, 7
  %v5377 = vsub.s32 0, %v5376
  %v5378 = vrot.slane %v5373, %v5377
  %v5393 = vunpack.c.l.b16 %v5360
  %v5394 = vunpack.c.l.b16 %v5361
  %v5395 = vunpack.c.l.b16 %v5362
  %v5396 = vunpack.c.l.b16 %v5363
  %v5397 = vunpack.c.l.b16 %v5364
  %v5398 = vunpack.c.l.b16 %v5365
  %v5399 = vunpack.c.l.b16 %v5366
  %v5400 = vunpack.c.l.b16 %v5367
  %v5401 = vunpack.c.l.b16 %v5368
  %v5402 = vunpack.c.l.b16 %v5369
  %v5403 = vunpack.c.l.b16 %v5370
  %v5404 = vunpack.c.l.b16 %v5371
  %v5405 = vunpack.c.l.b16 %v5372
  %v5406 = vpack.c.b16 %v5394, %v5393
  %v5407 = vpack.c.b16 %v5396, %v5395
  %v5408 = vpack.c.b16 %v5398, %v5397
  %v5409 = vpack.c.b16 %v5400, %v5399
  %v5410 = vpack.c.b16 %v5402, %v5401
  %v5411 = vpack.c.b16 %v5404, %v5403
  %v5412 = vpack.c.b16 %v5405, %v5405
  %vm5419 = vcmask 818176
  %v5421 = vsel %vm5419, %v5359, 0
  %v5424 = vsel %vm3546, %v5412, 0
  %5426 = vmatprep.subr.bf16.mxu0 0
  %5427 = vmatpush1.bf16.msra.mxu0 %v5406
  %5428 = vmatprep.subr.bf16.mxu0 0
  %5429 = vmatpush1.bf16.msra.mxu0 %v5407
  %5430 = vmatprep.subr.bf16.mxu0 0
  %5431 = vmatpush1.bf16.msra.mxu0 %v5408
  %5432 = vmatprep.subr.bf16.mxu0 0
  %5433 = vmatpush1.bf16.msra.mxu0 %v5409
  %5434 = vmatprep.subr.bf16.mxu0 0
  %5435 = vmatpush1.bf16.msra.mxu0 %v5410
  %5436 = vmatprep.subr.bf16.mxu0 0
  %5437 = vmatpush1.bf16.msra.mxu0 %v5411
  %5438 = vmatprep.subr.bf16.mxu0 0
  %5439 = vmatpush1.bf16.msra.mxu0 %v5424
  %5440 = vmatprep.subr.bf16.mxu0 0
  %5441 = vmatpush1.bf16.msra.mxu0 0
  %5442 = vmatprep.subr.bf16.mxu0 0
  %5443 = vmatpush1.bf16.msra.mxu0 0
  %5444 = vmatprep.subr.bf16.mxu0 0
  %5445 = vmatpush1.bf16.msra.mxu0 0
  %5446 = vmatprep.subr.bf16.mxu0 0
  %5447 = vmatpush1.bf16.msra.mxu0 0
  %5448 = vmatprep.subr.bf16.mxu0 0
  %5449 = vmatpush1.bf16.msra.mxu0 0
  %5450 = vmatprep.subr.bf16.mxu0 0
  %5451 = vmatpush1.bf16.msra.mxu0 0
  %5452 = vmatprep.subr.bf16.mxu0 0
  %5453 = vmatpush1.bf16.msra.mxu0 0
  %5454 = vmatprep.subr.bf16.mxu0 0
  %5455 = vmatpush1.bf16.msra.mxu0 0
  %5456 = vmatprep.subr.bf16.mxu0 0
  %5457 = vmatpush1.bf16.msra.mxu0 0
  %5458 = vmatprep.mubr.bf16.mxu0 0
  %5459 = vmatmul.mubr.bf16.gmra.mrb[0].mxu0 %v5421
  %v5460 = vpop.f32.mrb[0].mxu0
  %v5461 = vadd.f32 %v5378, %v5460
  %v5462 = vpop.f32.mrb[0].mxu0
  %v5463 = vpop.f32.mrb[0].mxu0
  %v5464 = vpop.f32.mrb[0].mxu0
  %5465 = vdwg.mxu0
  %v5466 = vpack.c.bf16 %v5461, %v5461
  %v5467 = vld [vmem:[%s11] sm:$0xf]
  %v5468 = vld [vmem:[%s11 + $0x4] sm:$0xf]
  %v5469 = vld [vmem:[%s11 + $0x8] sm:$0xf]
  %v5470 = vld [vmem:[%s11 + $0xc] sm:$0xf]
  %v5471 = vld [vmem:[%s11 + $0x10] sm:$0xf]
  %v5472 = vld [vmem:[%s11 + $0x14] sm:$0xf]
  %v5473 = vld [vmem:[%s11 + $0x18] sm:$0x1]
  %v5474 = vld [vmem:[%s12] sm:$0x1]
  %v5476 = vlaneseq
  %v5477 = vshrl.u32 %v5476, 7
  %v5478 = vsub.s32 0, %v5477
  %v5479 = vrot.slane %v5474, %v5478
  %v5488 = vunpack.c.l.b16 %v5467
  %v5489 = vunpack.c.l.b16 %v5468
  %v5490 = vunpack.c.l.b16 %v5469
  %v5491 = vunpack.c.l.b16 %v5470
  %v5492 = vunpack.c.l.b16 %v5471
  %v5493 = vunpack.c.l.b16 %v5472
  %v5494 = vunpack.c.l.b16 %v5473
  %v5495 = vpack.c.b16 %v5489, %v5488
  %v5496 = vpack.c.b16 %v5491, %v5490
  %v5497 = vpack.c.b16 %v5493, %v5492
  %v5498 = vpack.c.b16 %v5494, %v5494
  %vm5502 = vcmask 408576
  %v5504 = vsel %vm5502, %v5466, 0
  %vm5506 = vcmask 1040384
  %v5508 = vsel %vm5506, %v5498, 0
  %5510 = vmatprep.subr.bf16.mxu0 0
  %5511 = vmatpush1.bf16.msra.mxu0 %v5495
  %5512 = vmatprep.subr.bf16.mxu0 0
  %5513 = vmatpush1.bf16.msra.mxu0 %v5496
  %5514 = vmatprep.subr.bf16.mxu0 0
  %5515 = vmatpush1.bf16.msra.mxu0 %v5497
  %5516 = vmatprep.subr.bf16.mxu0 0
  %5517 = vmatpush1.bf16.msra.mxu0 %v5508
  %5518 = vmatprep.subr.bf16.mxu0 0
  %5519 = vmatpush1.bf16.msra.mxu0 0
  %5520 = vmatprep.subr.bf16.mxu0 0
  %5521 = vmatpush1.bf16.msra.mxu0 0
  %5522 = vmatprep.subr.bf16.mxu0 0
  %5523 = vmatpush1.bf16.msra.mxu0 0
  %5524 = vmatprep.subr.bf16.mxu0 0
  %5525 = vmatpush1.bf16.msra.mxu0 0
  %5526 = vmatprep.subr.bf16.mxu0 0
  %5527 = vmatpush1.bf16.msra.mxu0 0
  %5528 = vmatprep.subr.bf16.mxu0 0
  %5529 = vmatpush1.bf16.msra.mxu0 0
  %5530 = vmatprep.subr.bf16.mxu0 0
  %5531 = vmatpush1.bf16.msra.mxu0 0
  %5532 = vmatprep.subr.bf16.mxu0 0
  %5533 = vmatpush1.bf16.msra.mxu0 0
  %5534 = vmatprep.subr.bf16.mxu0 0
  %5535 = vmatpush1.bf16.msra.mxu0 0
  %5536 = vmatprep.subr.bf16.mxu0 0
  %5537 = vmatpush1.bf16.msra.mxu0 0
  %5538 = vmatprep.subr.bf16.mxu0 0
  %5539 = vmatpush1.bf16.msra.mxu0 0
  %5540 = vmatprep.subr.bf16.mxu0 0
  %5541 = vmatpush1.bf16.msra.mxu0 0
  %5542 = vmatprep.mubr.bf16.mxu0 0
  %5543 = vmatmul.mubr.bf16.gmra.mrb[0].mxu0 %v5504
  %v5544 = vpop.f32.mrb[0].mxu0
  %v5545 = vadd.f32 %v5479, %v5544
  %v5546 = vpop.f32.mrb[0].mxu0
  %v5547 = vpop.f32.mrb[0].mxu0
  %v5548 = vpop.f32.mrb[0].mxu0
  %5549 = vdwg.mxu0
  %v5550 = vpack.c.bf16 %v5545, %v5545
  %v5551 = vld [vmem:[%s13] sm:$0xf]
  %v5552 = vld [vmem:[%s13 + $0x4] sm:$0x1]
  %v5553 = vld [vmem:[%s14] sm:$0x1]
  %v5555 = vlaneseq
  %v5556 = vshrl.u32 %v5555, 7
  %v5557 = vsub.s32 0, %v5556
  %v5558 = vrot.slane %v5553, %v5557
  %v5562 = vunpack.c.l.b16 %v5551
  %v5563 = vunpack.c.l.b16 %v5552
  %v5564 = vpack.c.b16 %v5563, %v5562
  %vm5565 = vcmask 80896
  %v5567 = vsel %vm5565, %v5550, 0
  %vm5569 = vcmask 1044480
  %v5571 = vsel %vm5569, %v5564, 0
  %5573 = vmatprep.subr.bf16.mxu0 0
  %5574 = vmatpush1.bf16.msra.mxu0 %v5571
  %5575 = vmatprep.subr.bf16.mxu0 0
  %5576 = vmatpush1.bf16.msra.mxu0 0
  %5577 = vmatprep.subr.bf16.mxu0 0
  %5578 = vmatpush1.bf16.msra.mxu0 0
  %5579 = vmatprep.subr.bf16.mxu0 0
  %5580 = vmatpush1.bf16.msra.mxu0 0
  %5581 = vmatprep.subr.bf16.mxu0 0
  %5582 = vmatpush1.bf16.msra.mxu0 0
  %5583 = vmatprep.subr.bf16.mxu0 0
  %5584 = vmatpush1.bf16.msra.mxu0 0
  %5585 = vmatprep.subr.bf16.mxu0 0
  %5586 = vmatpush1.bf16.msra.mxu0 0
  %5587 = vmatprep.subr.bf16.mxu0 0
  %5588 = vmatpush1.bf16.msra.mxu0 0
  %5589 = vmatprep.subr.bf16.mxu0 0
  %5590 = vmatpush1.bf16.msra.mxu0 0
  %5591 = vmatprep.subr.bf16.mxu0 0
  %5592 = vmatpush1.bf16.msra.mxu0 0
  %5593 = vmatprep.subr.bf16.mxu0 0
  %5594 = vmatpush1.bf16.msra.mxu0 0
  %5595 = vmatprep.subr.bf16.mxu0 0
  %5596 = vmatpush1.bf16.msra.mxu0 0
  %5597 = vmatprep.subr.bf16.mxu0 0
  %5598 = vmatpush1.bf16.msra.mxu0 0
  %5599 = vmatprep.subr.bf16.mxu0 0
  %5600 = vmatpush1.bf16.msra.mxu0 0
  %5601 = vmatprep.subr.bf16.mxu0 0
  %5602 = vmatpush1.bf16.msra.mxu0 0
  %5603 = vmatprep.subr.bf16.mxu0 0
  %5604 = vmatpush1.bf16.msra.mxu0 0
  %5605 = vmatprep.mubr.bf16.mxu0 0
  %5606 = vmatmul.mubr.bf16.gmra.mrb[0].mxu0 %v5567
  %v5607 = vpop.f32.mrb[0].mxu0
  %v5608 = vadd.f32 %v5558, %v5607
  %v5609 = vpop.f32.mrb[0].mxu0
  %v5610 = vpop.f32.mrb[0].mxu0
  %v5611 = vpop.f32.mrb[0].mxu0
  %5612 = vdwg.mxu0
  %5613 = vst [vmem:[%s15] sm:$0x3] %v5608
  // Predicated region
  $region62: #{pilotnet_forward.5} parent=0 // pred_check
    _
  $region63: #{pilotnet_forward.5} parent=0 // pred_check_branch
    %5615 = sbr.rel (0) target = $region65
  $region64: #{pilotnet_forward.5} parent=0 // pred_region
    _
  $region65: #{pilotnet_forward.5} parent=0 // pred_fallthru
    _
  // Predicated region
  $region66: #{pilotnet_forward.5} parent=0 // pred_check
    _
  $region67: #{pilotnet_forward.5} parent=0 // pred_check_branch
    %5617 = sbr.rel (0) target = $region69
  $region68: #{pilotnet_forward.5} parent=0 // pred_region
    _
  $region69: #{pilotnet_forward.5} parent=0 // pred_fallthru
    _

</llo_original>
